<compile_context>
chip_gen: v6e
topology: v6e:2x2x1
jax: 0.10.0
libtpu: 0.0.40
codegen_flags: <defaults>
</compile_context>

<pallas_src>
import functools

import numpy as np
import jax
import jax.numpy as jnp
from jax.experimental import pallas as pl
from jax.experimental.pallas import tpu as pltpu

# ----------------------------- model config ---------------------------------
LATENT_DIM = 64          # d_model (must be divisible by nhead=8)
NHEAD = 8
HEAD_DIM = LATENT_DIM // NHEAD
FFN_DIM = 2048           # hard-coded dim_feedforward in the PyTorch module
SIGN_DIM = 48            # sign_language_dim (small demo value; default is 150)
SIGN_PAD = 128           # lane-dense padded width for the embedding output
NUM_LAYERS = 6
LN_EPS = 1e-5
MAX_LEN = 5000
ATTN_SCALE = 1.0 / float(np.sqrt(HEAD_DIM))


# ------------------------- fused decoder-stack kernel ------------------------
def _decoder_stack_kernel(
    x_in_ref, pe_ref, mem_ref,
    sqkv_w_ref, sqkv_b_ref, sout_w_ref, sout_b_ref,
    cq_w_ref, cq_b_ref, ckv_w_ref, ckv_b_ref, cout_w_ref, cout_b_ref,
    ff_w1_ref, ff_b1_ref, ff_w2_ref, ff_b2_ref,
    ln_g_ref, ln_b_ref, emb_w_ref, emb_b_ref,
    x_re_ref,                 # output: (B, T, SIGN_PAD), written at last layer
    x_state,                  # VMEM scratch: (B, T, D), persists across layers
):
    layer = pl.program_id(0)
    last = pl.num_programs(0) - 1

    @pl.when(layer == 0)
    def _():
        # fused positional-encoding add: X_hat = length_regulated + PE[:T]
        x_state[...] = x_in_ref[...] + pe_ref[...][None, :, :]

    B, T, D = x_state.shape
    Tm = mem_ref.shape[1]
    M = B * T

    ln_g = ln_g_ref[0]                     # (3, D)
    ln_b = ln_b_ref[0]                     # (3, D)

    def layer_norm(h2, idx):
        # post-norm residual block: LayerNorm over the last dim, f32 math.
        g = ln_g[idx:idx + 1, :]           # (1, D)
        b = ln_b[idx:idx + 1, :]           # (1, D)
        mu = jnp.mean(h2, axis=-1, keepdims=True)
        c = h2 - mu
        var = jnp.mean(c * c, axis=-1, keepdims=True)
        return c * jax.lax.rsqrt(var + LN_EPS) * g + b

    def attn_core(q2, k2, v2, Tq, Tk, out_w, out_b):
        # q2: (B*Tq, D), k2/v2: (B*Tk, D); multi-head scaled dot-product.
        q3 = q2.reshape(B, Tq, D)
        k3 = k2.reshape(B, Tk, D)
        v3 = v2.reshape(B, Tk, D)
        heads = []
        for h in range(NHEAD):
            sl = slice(h * HEAD_DIM, (h + 1) * HEAD_DIM)
            s = jnp.einsum("bqd,bkd->bqk", q3[:, :, sl], k3[:, :, sl],
                           preferred_element_type=jnp.float32) * ATTN_SCALE
            s = s - jnp.max(s, axis=-1, keepdims=True)
            p = jnp.exp(s)
            p = p * pl.reciprocal(jnp.sum(p, axis=-1, keepdims=True), approx=True)
            heads.append(jnp.einsum("bqk,bkd->bqd", p, v3[:, :, sl],
                                    preferred_element_type=jnp.float32))
        o2 = jnp.concatenate(heads, axis=-1).reshape(B * Tq, D)
        return jnp.dot(o2, out_w, preferred_element_type=jnp.float32) + out_b

    x2 = x_state[...].reshape(M, D)

    # --- self-attention block (fused QKV matmul) -----------------------------
    qkv = (jnp.dot(x2, sqkv_w_ref[0], preferred_element_type=jnp.float32)
           + sqkv_b_ref[0])
    sa = attn_core(qkv[:, :D], qkv[:, D:2 * D], qkv[:, 2 * D:], T, T,
                   sout_w_ref[0], sout_b_ref[0])
    x2 = layer_norm(x2 + sa, 0)

    # --- cross-attention block (Q from x, fused KV from encoder memory) -----
    mem2 = mem_ref[...].reshape(B * Tm, D)
    q2 = (jnp.dot(x2, cq_w_ref[0], preferred_element_type=jnp.float32)
          + cq_b_ref[0])
    kv = (jnp.dot(mem2, ckv_w_ref[0], preferred_element_type=jnp.float32)
          + ckv_b_ref[0])
    ca = attn_core(q2, kv[:, :D], kv[:, D:], T, Tm,
                   cout_w_ref[0], cout_b_ref[0])
    x2 = layer_norm(x2 + ca, 1)

    # --- feed-forward block (2048-wide intermediate stays in VMEM) ----------
    hidden = jnp.maximum(
        jnp.dot(x2, ff_w1_ref[0], preferred_element_type=jnp.float32)
        + ff_b1_ref[0], 0.0)
    ff = (jnp.dot(hidden, ff_w2_ref[0], preferred_element_type=jnp.float32)
          + ff_b2_ref[0])
    x2 = layer_norm(x2 + ff, 2)

    x_state[...] = x2.reshape(B, T, D)

    # --- final embedding projection fused into the last grid step -----------
    @pl.when(layer == last)
    def _():
        y = (jnp.dot(x2, emb_w_ref[...], preferred_element_type=jnp.float32)
             + emb_b_ref[...])
        x_re_ref[...] = y.reshape(B, T, SIGN_PAD).astype(x_re_ref.dtype)


# ----------------------------- JAX glue --------------------------------------
def sinusoidal_pe(max_len, d):
    pos = np.arange(max_len, dtype=np.float32)[:, None]
    div = np.exp(np.arange(0, d, 2, dtype=np.float32) * (-np.log(10000.0) / d))
    pe = np.zeros((max_len, d), dtype=np.float32)
    pe[:, 0::2] = np.sin(pos * div)
    pe[:, 1::2] = np.cos(pos * div)
    return jnp.asarray(pe)


def length_regulator(z_q, durations, total_len):
    # torch.repeat_interleave(z_q[b], durations[b], dim=0) per batch, then stack.
    # (stacking requires each batch row's durations to sum to the same length)
    rows = []
    for b in range(z_q.shape[0]):
        rows.append(
            jnp.repeat(z_q[b], durations[b], axis=0, total_repeat_length=total_len)
        )
    return jnp.stack(rows, axis=0)


@functools.partial(jax.jit, static_argnames=("total_len",))
def dvqvae_decoder_forward(params, z_quantized, d_t_l, h_t, *, total_len):
    # X_hat = positional_encoding(length_regulator(Z_quantized, D_T_l))
    # (PE addition itself is fused into grid step 0 of the kernel.)
    x = length_regulator(z_quantized, d_t_l, total_len)           # (B, T, D)
    # TODO(synk): dropout (p=0.1) in PositionalEncoding / decoder layers omitted
    #             (deterministic eval-mode forward).

    B, T, D = x.shape
    Tm = h_t.shape[1]

    c3 = lambda l: (0, 0, 0)
    c2 = lambda l: (0, 0)
    per_layer = lambda l: (l, 0, 0)

    grid_spec = pltpu.PrefetchScalarGridSpec(
        num_scalar_prefetch=0,
        grid=(NUM_LAYERS,),
        in_specs=[
            pl.BlockSpec((B, T, D), c3),                    # X_hat (resident)
            pl.BlockSpec((T, D), c2),                       # PE rows 0..T-1
            pl.BlockSpec((B, Tm, D), c3),                   # memory H_T (resident)
            pl.BlockSpec((1, D, 3 * D), per_layer),         # self-attn fused QKV W
            pl.BlockSpec((1, 1, 3 * D), per_layer),         # self-attn fused QKV b
            pl.BlockSpec((1, D, D), per_layer),             # self-attn out W
            pl.BlockSpec((1, 1, D), per_layer),             # self-attn out b
            pl.BlockSpec((1, D, D), per_layer),             # cross-attn Q W
            pl.BlockSpec((1, 1, D), per_layer),             # cross-attn Q b
            pl.BlockSpec((1, D, 2 * D), per_layer),         # cross-attn fused KV W
            pl.BlockSpec((1, 1, 2 * D), per_layer),         # cross-attn fused KV b
            pl.BlockSpec((1, D, D), per_layer),             # cross-attn out W
            pl.BlockSpec((1, 1, D), per_layer),             # cross-attn out b
            pl.BlockSpec((1, D, FFN_DIM), per_layer),       # FFN W1
            pl.BlockSpec((1, 1, FFN_DIM), per_layer),       # FFN b1
            pl.BlockSpec((1, FFN_DIM, D), per_layer),       # FFN W2
            pl.BlockSpec((1, 1, D), per_layer),             # FFN b2
            pl.BlockSpec((1, 3, D), per_layer),             # LN gammas (3 per layer)
            pl.BlockSpec((1, 3, D), per_layer),             # LN betas
            pl.BlockSpec((D, SIGN_PAD), c2),                # embedding W (padded)
            pl.BlockSpec((1, SIGN_PAD), c2),                # embedding b (padded)
        ],
        out_specs=pl.BlockSpec((B, T, SIGN_PAD), c3),
        scratch_shapes=[pltpu.VMEM((B, T, D), jnp.float32)],
    )

    x_re_pad = pl.pallas_call(
        _decoder_stack_kernel,
        grid_spec=grid_spec,
        out_shape=jax.ShapeDtypeStruct((B, T, SIGN_PAD), jnp.float32),
        compiler_params=pltpu.CompilerParams(
            dimension_semantics=("arbitrary",)),   # layer axis is sequential
    )(x, params["pe"], h_t,
      params["self_qkv_w"], params["self_qkv_b"],
      params["self_out_w"], params["self_out_b"],
      params["cross_q_w"], params["cross_q_b"],
      params["cross_kv_w"], params["cross_kv_b"],
      params["cross_out_w"], params["cross_out_b"],
      params["ff_w1"], params["ff_b1"],
      params["ff_w2"], params["ff_b2"],
      params["ln_g"], params["ln_b"],
      params["emb_w"], params["emb_b"])

    # strip the lane padding of the embedding projection
    return x_re_pad[:, :, :SIGN_DIM]


# ----------------------------- parameter init --------------------------------
def _dense(key, fan_in, fan_out):
    kw, kb = jax.random.split(key)
    lim = 1.0 / np.sqrt(fan_in)
    w = jax.random.uniform(kw, (fan_in, fan_out), jnp.float32, -lim, lim)
    b = jax.random.uniform(kb, (fan_out,), jnp.float32, -lim, lim)
    return w, b


def _self_attn_block(key):
    kq, kk, kv, ko = jax.random.split(key, 4)
    wq, bq = _dense(kq, LATENT_DIM, LATENT_DIM)
    wk, bk = _dense(kk, LATENT_DIM, LATENT_DIM)
    wv, bv = _dense(kv, LATENT_DIM, LATENT_DIM)
    wo, bo = _dense(ko, LATENT_DIM, LATENT_DIM)
    qkv_w = jnp.concatenate([wq, wk, wv], axis=1)             # (D, 3D)
    qkv_b = jnp.concatenate([bq, bk, bv], axis=0)[None, :]    # (1, 3D)
    return qkv_w, qkv_b, wo, bo[None, :]


def _cross_attn_block(key):
    kq, kk, kv, ko = jax.random.split(key, 4)
    wq, bq = _dense(kq, LATENT_DIM, LATENT_DIM)
    wk, bk = _dense(kk, LATENT_DIM, LATENT_DIM)
    wv, bv = _dense(kv, LATENT_DIM, LATENT_DIM)
    wo, bo = _dense(ko, LATENT_DIM, LATENT_DIM)
    kv_w = jnp.concatenate([wk, wv], axis=1)                  # (D, 2D)
    kv_b = jnp.concatenate([bk, bv], axis=0)[None, :]         # (1, 2D)
    return wq, bq[None, :], kv_w, kv_b, wo, bo[None, :]


def init_params(key):
    D, F, L = LATENT_DIM, FFN_DIM, NUM_LAYERS
    keys = jax.random.split(key, L + 1)
    names = ("self_qkv_w", "self_qkv_b", "self_out_w", "self_out_b",
             "cross_q_w", "cross_q_b", "cross_kv_w", "cross_kv_b",
             "cross_out_w", "cross_out_b",
             "ff_w1", "ff_b1", "ff_w2", "ff_b2", "ln_g", "ln_b")
    acc = {n: [] for n in names}
    ones3 = jnp.ones((3, D), jnp.float32)
    zeros3 = jnp.zeros((3, D), jnp.float32)
    for l in range(L):
        k_self, k_cross, k_ff1, k_ff2 = jax.random.split(keys[l], 4)
        sq_w, sq_b, so_w, so_b = _self_attn_block(k_self)
        cq_w, cq_b, ckv_w, ckv_b, co_w, co_b = _cross_attn_block(k_cross)
        w1, b1 = _dense(k_ff1, D, F)
        w2, b2 = _dense(k_ff2, F, D)
        acc["self_qkv_w"].append(sq_w);   acc["self_qkv_b"].append(sq_b)
        acc["self_out_w"].append(so_w);   acc["self_out_b"].append(so_b)
        acc["cross_q_w"].append(cq_w);    acc["cross_q_b"].append(cq_b)
        acc["cross_kv_w"].append(ckv_w);  acc["cross_kv_b"].append(ckv_b)
        acc["cross_out_w"].append(co_w);  acc["cross_out_b"].append(co_b)
        acc["ff_w1"].append(w1);          acc["ff_b1"].append(b1[None, :])
        acc["ff_w2"].append(w2);          acc["ff_b2"].append(b2[None, :])
        acc["ln_g"].append(ones3);        acc["ln_b"].append(zeros3)
    params = {n: jnp.stack(v, axis=0) for n, v in acc.items()}

    emb_w, emb_b = _dense(keys[-1], D, SIGN_DIM)
    # pad the final projection to a lane-dense width (sliced back in wrapper)
    params["emb_w"] = jnp.pad(emb_w, ((0, 0), (0, SIGN_PAD - SIGN_DIM)))
    params["emb_b"] = jnp.pad(emb_b, (0, SIGN_PAD - SIGN_DIM))[None, :]
    params["pe"] = sinusoidal_pe(MAX_LEN, D)
    return params


# ----------------------------------- main ------------------------------------
if __name__ == "__main__":
    key = jax.random.PRNGKey(0)
    kp, kz, kh = jax.random.split(key, 3)

    B, T_q, T_mem = 2, 4, 8
    # durations per batch row must sum to the same total (required by torch.stack)
    d_t_l = jnp.array([[2, 3, 2, 1], [1, 4, 2, 1]], dtype=jnp.int32)
    total_len = 8

    z_quantized = jax.random.normal(kz, (B, T_q, LATENT_DIM), jnp.float32)
    h_t = jax.random.normal(kh, (B, T_mem, LATENT_DIM), jnp.float32)

    params = init_params(kp)
    x_re = dvqvae_decoder_forward(params, z_quantized, d_t_l, h_t,
                                  total_len=total_len)
    x_re = jax.block_until_ready(x_re)

    assert x_re.shape == (B, total_len, SIGN_DIM), x_re.shape
    assert bool(jnp.all(jnp.isfinite(x_re)))
    print("KERNEL_OK")
</pallas_src>

<mosaic_0001>
module attributes {stable_mosaic.version = 11 : i64} {
  func.func @_decoder_stack_kernel(%arg0: i32, %arg1: memref<2x8x64xf32, #tpu.memory_space<vmem>>, %arg2: memref<8x64xf32, #tpu.memory_space<vmem>>, %arg3: memref<2x8x64xf32, #tpu.memory_space<vmem>>, %arg4: memref<1x64x192xf32, #tpu.memory_space<vmem>>, %arg5: memref<1x1x192xf32, #tpu.memory_space<vmem>>, %arg6: memref<1x64x64xf32, #tpu.memory_space<vmem>>, %arg7: memref<1x1x64xf32, #tpu.memory_space<vmem>>, %arg8: memref<1x64x64xf32, #tpu.memory_space<vmem>>, %arg9: memref<1x1x64xf32, #tpu.memory_space<vmem>>, %arg10: memref<1x64x128xf32, #tpu.memory_space<vmem>>, %arg11: memref<1x1x128xf32, #tpu.memory_space<vmem>>, %arg12: memref<1x64x64xf32, #tpu.memory_space<vmem>>, %arg13: memref<1x1x64xf32, #tpu.memory_space<vmem>>, %arg14: memref<1x64x2048xf32, #tpu.memory_space<vmem>>, %arg15: memref<1x1x2048xf32, #tpu.memory_space<vmem>>, %arg16: memref<1x2048x64xf32, #tpu.memory_space<vmem>>, %arg17: memref<1x1x64xf32, #tpu.memory_space<vmem>>, %arg18: memref<1x3x64xf32, #tpu.memory_space<vmem>>, %arg19: memref<1x3x64xf32, #tpu.memory_space<vmem>>, %arg20: memref<64x128xf32, #tpu.memory_space<vmem>>, %arg21: memref<1x128xf32, #tpu.memory_space<vmem>>, %arg22: memref<2x8x128xf32, #tpu.memory_space<vmem>>, %arg23: memref<2x8x64xf32, #tpu.memory_space<vmem>>) attributes {dimension_semantics = [#tpu.dimension_semantics<arbitrary>], iteration_bounds = array<i64: 6>, scalar_prefetch = 0 : i64, scratch_operands = 1 : i64, tpu.core_type = #tpu.core_type<tc>, window_params = [{pipeline_mode = #tpu.pipeline_mode<synchronous>, transform_indices = @transform_0, window_bounds = array<i64: 2, 8, 64>}, {transform_indices = @transform_1, window_bounds = array<i64: 8, 64>}, {pipeline_mode = #tpu.pipeline_mode<synchronous>, transform_indices = @transform_2, window_bounds = array<i64: 2, 8, 64>}, {transform_indices = @transform_3, window_bounds = array<i64: 1, 64, 192>}, {transform_indices = @transform_4, window_bounds = array<i64: 1, 1, 192>}, {transform_indices = @transform_5, window_bounds = array<i64: 1, 64, 64>}, {transform_indices = @transform_6, window_bounds = array<i64: 1, 1, 64>}, {transform_indices = @transform_7, window_bounds = array<i64: 1, 64, 64>}, {transform_indices = @transform_8, window_bounds = array<i64: 1, 1, 64>}, {transform_indices = @transform_9, window_bounds = array<i64: 1, 64, 128>}, {transform_indices = @transform_10, window_bounds = array<i64: 1, 1, 128>}, {transform_indices = @transform_11, window_bounds = array<i64: 1, 64, 64>}, {transform_indices = @transform_12, window_bounds = array<i64: 1, 1, 64>}, {transform_indices = @transform_13, window_bounds = array<i64: 1, 64, 2048>}, {transform_indices = @transform_14, window_bounds = array<i64: 1, 1, 2048>}, {transform_indices = @transform_15, window_bounds = array<i64: 1, 2048, 64>}, {transform_indices = @transform_16, window_bounds = array<i64: 1, 1, 64>}, {transform_indices = @transform_17, window_bounds = array<i64: 1, 3, 64>}, {transform_indices = @transform_18, window_bounds = array<i64: 1, 3, 64>}, {pipeline_mode = #tpu.pipeline_mode<synchronous>, transform_indices = @transform_19, window_bounds = array<i64: 64, 128>}, {pipeline_mode = #tpu.pipeline_mode<synchronous>, transform_indices = @transform_20, window_bounds = array<i64: 1, 128>}, {pipeline_mode = #tpu.pipeline_mode<synchronous>, transform_indices = @transform_21, window_bounds = array<i64: 2, 8, 128>}]} {
    %c0_i32 = arith.constant 0 : i32
    %0 = arith.cmpi eq, %arg0, %c0_i32 : i32
    %1 = arith.extui %0 : i1 to i32
    %c0_i32_0 = arith.constant 0 : i32
    %2 = arith.cmpi ne, %1, %c0_i32_0 : i32
    scf.if %2 {
      %c0_160 = arith.constant 0 : index
      %c0_161 = arith.constant 0 : index
      %c0_162 = arith.constant 0 : index
      %423 = vector.load %arg1[%c0_160, %c0_161, %c0_162] : memref<2x8x64xf32, #tpu.memory_space<vmem>>, vector<2x8x64xf32>
      %c0_163 = arith.constant 0 : index
      %c0_164 = arith.constant 0 : index
      %424 = vector.load %arg2[%c0_163, %c0_164] : memref<8x64xf32, #tpu.memory_space<vmem>>, vector<8x64xf32>
      %425 = vector.shape_cast %424 : vector<8x64xf32> to vector<1x8x64xf32>
      %426 = vector.broadcast %425 : vector<1x8x64xf32> to vector<2x8x64xf32>
      %427 = arith.addf %423, %426 : vector<2x8x64xf32>
      %c0_165 = arith.constant 0 : index
      %c0_166 = arith.constant 0 : index
      %c0_167 = arith.constant 0 : index
      %428 = vector.load %arg23[%c0_165, %c0_166, %c0_167] : memref<2x8x64xf32, #tpu.memory_space<vmem>>, vector<2x8x64xf32>
      tpu.vector_store %arg23[%c0_165, %c0_166, %c0_167], %427 {strides = array<i32>} : memref<2x8x64xf32, #tpu.memory_space<vmem>>, vector<2x8x64xf32>,
    } else {
    }
    %c0 = arith.constant 0 : index
    %c0_1 = arith.constant 0 : index
    %c0_2 = arith.constant 0 : index
    %3 = vector.load %arg18[%c0, %c0_1, %c0_2] : memref<1x3x64xf32, #tpu.memory_space<vmem>>, vector<1x3x64xf32>
    %4 = vector.shape_cast %3 : vector<1x3x64xf32> to vector<3x64xf32>
    %c0_3 = arith.constant 0 : index
    %c0_4 = arith.constant 0 : index
    %c0_5 = arith.constant 0 : index
    %5 = vector.load %arg19[%c0_3, %c0_4, %c0_5] : memref<1x3x64xf32, #tpu.memory_space<vmem>>, vector<1x3x64xf32>
    %6 = vector.shape_cast %5 : vector<1x3x64xf32> to vector<3x64xf32>
    %c0_6 = arith.constant 0 : index
    %c0_7 = arith.constant 0 : index
    %c0_8 = arith.constant 0 : index
    %7 = vector.load %arg23[%c0_6, %c0_7, %c0_8] : memref<2x8x64xf32, #tpu.memory_space<vmem>>, vector<2x8x64xf32>
    %8 = vector.shape_cast %7 : vector<2x8x64xf32> to vector<16x64xf32>
    %c0_9 = arith.constant 0 : index
    %c0_10 = arith.constant 0 : index
    %c0_11 = arith.constant 0 : index
    %9 = vector.load %arg4[%c0_9, %c0_10, %c0_11] : memref<1x64x192xf32, #tpu.memory_space<vmem>>, vector<1x64x192xf32>
    %10 = vector.shape_cast %9 : vector<1x64x192xf32> to vector<64x192xf32>
    %cst = arith.constant dense<0.000000e+00> : vector<16x192xf32>
    %11 = tpu.matmul %8, %10, %cst {dimension_numbers = #tpu.dot_dimension_numbers<[1], [0], [0], [1], [0, 0, 1, 1], [], []>} : vector<16x64xf32>, vector<64x192xf32>, vector<16x192xf32> -> vector<16x192xf32>
    %c0_12 = arith.constant 0 : index
    %c0_13 = arith.constant 0 : index
    %c0_14 = arith.constant 0 : index
    %12 = vector.load %arg5[%c0_12, %c0_13, %c0_14] : memref<1x1x192xf32, #tpu.memory_space<vmem>>, vector<1x1x192xf32>
    %13 = vector.shape_cast %12 : vector<1x1x192xf32> to vector<1x192xf32>
    %14 = vector.broadcast %13 : vector<1x192xf32> to vector<16x192xf32>
    %15 = arith.addf %11, %14 : vector<16x192xf32>
    %16 = vector.extract_strided_slice %15 {offsets = [0, 0], sizes = [16, 64], strides = [1, 1]} : vector<16x192xf32> to vector<16x64xf32>
    %17 = vector.extract_strided_slice %15 {offsets = [0, 64], sizes = [16, 64], strides = [1, 1]} : vector<16x192xf32> to vector<16x64xf32>
    %18 = vector.extract_strided_slice %15 {offsets = [0, 128], sizes = [16, 64], strides = [1, 1]} : vector<16x192xf32> to vector<16x64xf32>
    %c0_15 = arith.constant 0 : index
    %c0_16 = arith.constant 0 : index
    %c0_17 = arith.constant 0 : index
    %19 = vector.load %arg6[%c0_15, %c0_16, %c0_17] : memref<1x64x64xf32, #tpu.memory_space<vmem>>, vector<1x64x64xf32>
    %20 = vector.shape_cast %19 : vector<1x64x64xf32> to vector<64x64xf32>
    %c0_18 = arith.constant 0 : index
    %c0_19 = arith.constant 0 : index
    %c0_20 = arith.constant 0 : index
    %21 = vector.load %arg7[%c0_18, %c0_19, %c0_20] : memref<1x1x64xf32, #tpu.memory_space<vmem>>, vector<1x1x64xf32>
    %22 = vector.shape_cast %21 : vector<1x1x64xf32> to vector<1x64xf32>
    %23 = vector.shape_cast %16 : vector<16x64xf32> to vector<2x8x64xf32>
    %24 = vector.shape_cast %17 : vector<16x64xf32> to vector<2x8x64xf32>
    %25 = vector.shape_cast %18 : vector<16x64xf32> to vector<2x8x64xf32>
    %26 = vector.extract_strided_slice %23 {offsets = [0, 0, 0], sizes = [2, 8, 8], strides = [1, 1, 1]} : vector<2x8x64xf32> to vector<2x8x8xf32>
    %27 = vector.extract_strided_slice %24 {offsets = [0, 0, 0], sizes = [2, 8, 8], strides = [1, 1, 1]} : vector<2x8x64xf32> to vector<2x8x8xf32>
    "tpu.trace_start"() <{level = 10 : i32, message = "bqd,bkd->bqk"}> : () -> ()
    %cst_21 = arith.constant dense<0.000000e+00> : vector<2x8x8xf32>
    %28 = tpu.matmul %26, %27, %cst_21 {dimension_numbers = #tpu.dot_dimension_numbers<[2], [2], [1], [1], [0, 0, 0, 1, 1, 1], [0], [0]>} : vector<2x8x8xf32>, vector<2x8x8xf32>, vector<2x8x8xf32> -> vector<2x8x8xf32>
    "tpu.trace_stop"() : () -> ()
    %cst_22 = arith.constant 0.353553385 : f32
    %29 = vector.broadcast %cst_22 : f32 to vector<2x8x8xf32>
    %30 = arith.mulf %28, %29 : vector<2x8x8xf32>
    %cst_23 = arith.constant dense<0xFF800000> : vector<2x8xf32>
    %31 = vector.multi_reduction <maximumf>, %30, %cst_23 [2] : vector<2x8x8xf32> to vector<2x8xf32>
    %32 = vector.shape_cast %31 : vector<2x8xf32> to vector<2x8x1xf32>
    %33 = vector.broadcast %32 : vector<2x8x1xf32> to vector<2x8x8xf32>
    %34 = arith.subf %30, %33 : vector<2x8x8xf32>
    %35 = math.exp %34 : vector<2x8x8xf32>
    %cst_24 = arith.constant dense<0.000000e+00> : vector<2x8xf32>
    %36 = vector.multi_reduction <add>, %35, %cst_24 [2] : vector<2x8x8xf32> to vector<2x8xf32>
    %37 = vector.shape_cast %36 : vector<2x8xf32> to vector<2x8x1xf32>
    %38 = tpu.reciprocal %37 {approx = true} : vector<2x8x1xf32> -> vector<2x8x1xf32>
    %39 = vector.broadcast %38 : vector<2x8x1xf32> to vector<2x8x8xf32>
    %40 = arith.mulf %35, %39 : vector<2x8x8xf32>
    %41 = vector.extract_strided_slice %25 {offsets = [0, 0, 0], sizes = [2, 8, 8], strides = [1, 1, 1]} : vector<2x8x64xf32> to vector<2x8x8xf32>
    "tpu.trace_start"() <{level = 10 : i32, message = "bqk,bkd->bqd"}> : () -> ()
    %cst_25 = arith.constant dense<0.000000e+00> : vector<2x8x8xf32>
    %42 = tpu.matmul %40, %41, %cst_25 {dimension_numbers = #tpu.dot_dimension_numbers<[2], [1], [1], [2], [0, 0, 0, 1, 1, 2], [0], [0]>} : vector<2x8x8xf32>, vector<2x8x8xf32>, vector<2x8x8xf32> -> vector<2x8x8xf32>
    "tpu.trace_stop"() : () -> ()
    %43 = vector.extract_strided_slice %23 {offsets = [0, 0, 8], sizes = [2, 8, 8], strides = [1, 1, 1]} : vector<2x8x64xf32> to vector<2x8x8xf32>
    %44 = vector.extract_strided_slice %24 {offsets = [0, 0, 8], sizes = [2, 8, 8], strides = [1, 1, 1]} : vector<2x8x64xf32> to vector<2x8x8xf32>
    "tpu.trace_start"() <{level = 10 : i32, message = "bqd,bkd->bqk"}> : () -> ()
    %cst_26 = arith.constant dense<0.000000e+00> : vector<2x8x8xf32>
    %45 = tpu.matmul %43, %44, %cst_26 {dimension_numbers = #tpu.dot_dimension_numbers<[2], [2], [1], [1], [0, 0, 0, 1, 1, 1], [0], [0]>} : vector<2x8x8xf32>, vector<2x8x8xf32>, vector<2x8x8xf32> -> vector<2x8x8xf32>
    "tpu.trace_stop"() : () -> ()
    %cst_27 = arith.constant 0.353553385 : f32
    %46 = vector.broadcast %cst_27 : f32 to vector<2x8x8xf32>
    %47 = arith.mulf %45, %46 : vector<2x8x8xf32>
    %cst_28 = arith.constant dense<0xFF800000> : vector<2x8xf32>
    %48 = vector.multi_reduction <maximumf>, %47, %cst_28 [2] : vector<2x8x8xf32> to vector<2x8xf32>
    %49 = vector.shape_cast %48 : vector<2x8xf32> to vector<2x8x1xf32>
    %50 = vector.broadcast %49 : vector<2x8x1xf32> to vector<2x8x8xf32>
    %51 = arith.subf %47, %50 : vector<2x8x8xf32>
    %52 = math.exp %51 : vector<2x8x8xf32>
    %cst_29 = arith.constant dense<0.000000e+00> : vector<2x8xf32>
    %53 = vector.multi_reduction <add>, %52, %cst_29 [2] : vector<2x8x8xf32> to vector<2x8xf32>
    %54 = vector.shape_cast %53 : vector<2x8xf32> to vector<2x8x1xf32>
    %55 = tpu.reciprocal %54 {approx = true} : vector<2x8x1xf32> -> vector<2x8x1xf32>
    %56 = vector.broadcast %55 : vector<2x8x1xf32> to vector<2x8x8xf32>
    %57 = arith.mulf %52, %56 : vector<2x8x8xf32>
    %58 = vector.extract_strided_slice %25 {offsets = [0, 0, 8], sizes = [2, 8, 8], strides = [1, 1, 1]} : vector<2x8x64xf32> to vector<2x8x8xf32>
    "tpu.trace_start"() <{level = 10 : i32, message = "bqk,bkd->bqd"}> : () -> ()
    %cst_30 = arith.constant dense<0.000000e+00> : vector<2x8x8xf32>
    %59 = tpu.matmul %57, %58, %cst_30 {dimension_numbers = #tpu.dot_dimension_numbers<[2], [1], [1], [2], [0, 0, 0, 1, 1, 2], [0], [0]>} : vector<2x8x8xf32>, vector<2x8x8xf32>, vector<2x8x8xf32> -> vector<2x8x8xf32>
    "tpu.trace_stop"() : () -> ()
    %60 = vector.extract_strided_slice %23 {offsets = [0, 0, 16], sizes = [2, 8, 8], strides = [1, 1, 1]} : vector<2x8x64xf32> to vector<2x8x8xf32>
    %61 = vector.extract_strided_slice %24 {offsets = [0, 0, 16], sizes = [2, 8, 8], strides = [1, 1, 1]} : vector<2x8x64xf32> to vector<2x8x8xf32>
    "tpu.trace_start"() <{level = 10 : i32, message = "bqd,bkd->bqk"}> : () -> ()
    %cst_31 = arith.constant dense<0.000000e+00> : vector<2x8x8xf32>
    %62 = tpu.matmul %60, %61, %cst_31 {dimension_numbers = #tpu.dot_dimension_numbers<[2], [2], [1], [1], [0, 0, 0, 1, 1, 1], [0], [0]>} : vector<2x8x8xf32>, vector<2x8x8xf32>, vector<2x8x8xf32> -> vector<2x8x8xf32>
    "tpu.trace_stop"() : () -> ()
    %cst_32 = arith.constant 0.353553385 : f32
    %63 = vector.broadcast %cst_32 : f32 to vector<2x8x8xf32>
    %64 = arith.mulf %62, %63 : vector<2x8x8xf32>
    %cst_33 = arith.constant dense<0xFF800000> : vector<2x8xf32>
    %65 = vector.multi_reduction <maximumf>, %64, %cst_33 [2] : vector<2x8x8xf32> to vector<2x8xf32>
    %66 = vector.shape_cast %65 : vector<2x8xf32> to vector<2x8x1xf32>
    %67 = vector.broadcast %66 : vector<2x8x1xf32> to vector<2x8x8xf32>
    %68 = arith.subf %64, %67 : vector<2x8x8xf32>
    %69 = math.exp %68 : vector<2x8x8xf32>
    %cst_34 = arith.constant dense<0.000000e+00> : vector<2x8xf32>
    %70 = vector.multi_reduction <add>, %69, %cst_34 [2] : vector<2x8x8xf32> to vector<2x8xf32>
    %71 = vector.shape_cast %70 : vector<2x8xf32> to vector<2x8x1xf32>
    %72 = tpu.reciprocal %71 {approx = true} : vector<2x8x1xf32> -> vector<2x8x1xf32>
    %73 = vector.broadcast %72 : vector<2x8x1xf32> to vector<2x8x8xf32>
    %74 = arith.mulf %69, %73 : vector<2x8x8xf32>
    %75 = vector.extract_strided_slice %25 {offsets = [0, 0, 16], sizes = [2, 8, 8], strides = [1, 1, 1]} : vector<2x8x64xf32> to vector<2x8x8xf32>
    "tpu.trace_start"() <{level = 10 : i32, message = "bqk,bkd->bqd"}> : () -> ()
    %cst_35 = arith.constant dense<0.000000e+00> : vector<2x8x8xf32>
    %76 = tpu.matmul %74, %75, %cst_35 {dimension_numbers = #tpu.dot_dimension_numbers<[2], [1], [1], [2], [0, 0, 0, 1, 1, 2], [0], [0]>} : vector<2x8x8xf32>, vector<2x8x8xf32>, vector<2x8x8xf32> -> vector<2x8x8xf32>
    "tpu.trace_stop"() : () -> ()
    %77 = vector.extract_strided_slice %23 {offsets = [0, 0, 24], sizes = [2, 8, 8], strides = [1, 1, 1]} : vector<2x8x64xf32> to vector<2x8x8xf32>
    %78 = vector.extract_strided_slice %24 {offsets = [0, 0, 24], sizes = [2, 8, 8], strides = [1, 1, 1]} : vector<2x8x64xf32> to vector<2x8x8xf32>
    "tpu.trace_start"() <{level = 10 : i32, message = "bqd,bkd->bqk"}> : () -> ()
    %cst_36 = arith.constant dense<0.000000e+00> : vector<2x8x8xf32>
    %79 = tpu.matmul %77, %78, %cst_36 {dimension_numbers = #tpu.dot_dimension_numbers<[2], [2], [1], [1], [0, 0, 0, 1, 1, 1], [0], [0]>} : vector<2x8x8xf32>, vector<2x8x8xf32>, vector<2x8x8xf32> -> vector<2x8x8xf32>
    "tpu.trace_stop"() : () -> ()
    %cst_37 = arith.constant 0.353553385 : f32
    %80 = vector.broadcast %cst_37 : f32 to vector<2x8x8xf32>
    %81 = arith.mulf %79, %80 : vector<2x8x8xf32>
    %cst_38 = arith.constant dense<0xFF800000> : vector<2x8xf32>
    %82 = vector.multi_reduction <maximumf>, %81, %cst_38 [2] : vector<2x8x8xf32> to vector<2x8xf32>
    %83 = vector.shape_cast %82 : vector<2x8xf32> to vector<2x8x1xf32>
    %84 = vector.broadcast %83 : vector<2x8x1xf32> to vector<2x8x8xf32>
    %85 = arith.subf %81, %84 : vector<2x8x8xf32>
    %86 = math.exp %85 : vector<2x8x8xf32>
    %cst_39 = arith.constant dense<0.000000e+00> : vector<2x8xf32>
    %87 = vector.multi_reduction <add>, %86, %cst_39 [2] : vector<2x8x8xf32> to vector<2x8xf32>
    %88 = vector.shape_cast %87 : vector<2x8xf32> to vector<2x8x1xf32>
    %89 = tpu.reciprocal %88 {approx = true} : vector<2x8x1xf32> -> vector<2x8x1xf32>
    %90 = vector.broadcast %89 : vector<2x8x1xf32> to vector<2x8x8xf32>
    %91 = arith.mulf %86, %90 : vector<2x8x8xf32>
    %92 = vector.extract_strided_slice %25 {offsets = [0, 0, 24], sizes = [2, 8, 8], strides = [1, 1, 1]} : vector<2x8x64xf32> to vector<2x8x8xf32>
    "tpu.trace_start"() <{level = 10 : i32, message = "bqk,bkd->bqd"}> : () -> ()
    %cst_40 = arith.constant dense<0.000000e+00> : vector<2x8x8xf32>
    %93 = tpu.matmul %91, %92, %cst_40 {dimension_numbers = #tpu.dot_dimension_numbers<[2], [1], [1], [2], [0, 0, 0, 1, 1, 2], [0], [0]>} : vector<2x8x8xf32>, vector<2x8x8xf32>, vector<2x8x8xf32> -> vector<2x8x8xf32>
    "tpu.trace_stop"() : () -> ()
    %94 = vector.extract_strided_slice %23 {offsets = [0, 0, 32], sizes = [2, 8, 8], strides = [1, 1, 1]} : vector<2x8x64xf32> to vector<2x8x8xf32>
    %95 = vector.extract_strided_slice %24 {offsets = [0, 0, 32], sizes = [2, 8, 8], strides = [1, 1, 1]} : vector<2x8x64xf32> to vector<2x8x8xf32>
    "tpu.trace_start"() <{level = 10 : i32, message = "bqd,bkd->bqk"}> : () -> ()
    %cst_41 = arith.constant dense<0.000000e+00> : vector<2x8x8xf32>
    %96 = tpu.matmul %94, %95, %cst_41 {dimension_numbers = #tpu.dot_dimension_numbers<[2], [2], [1], [1], [0, 0, 0, 1, 1, 1], [0], [0]>} : vector<2x8x8xf32>, vector<2x8x8xf32>, vector<2x8x8xf32> -> vector<2x8x8xf32>
    "tpu.trace_stop"() : () -> ()
    %cst_42 = arith.constant 0.353553385 : f32
    %97 = vector.broadcast %cst_42 : f32 to vector<2x8x8xf32>
    %98 = arith.mulf %96, %97 : vector<2x8x8xf32>
    %cst_43 = arith.constant dense<0xFF800000> : vector<2x8xf32>
    %99 = vector.multi_reduction <maximumf>, %98, %cst_43 [2] : vector<2x8x8xf32> to vector<2x8xf32>
    %100 = vector.shape_cast %99 : vector<2x8xf32> to vector<2x8x1xf32>
    %101 = vector.broadcast %100 : vector<2x8x1xf32> to vector<2x8x8xf32>
    %102 = arith.subf %98, %101 : vector<2x8x8xf32>
    %103 = math.exp %102 : vector<2x8x8xf32>
    %cst_44 = arith.constant dense<0.000000e+00> : vector<2x8xf32>
    %104 = vector.multi_reduction <add>, %103, %cst_44 [2] : vector<2x8x8xf32> to vector<2x8xf32>
    %105 = vector.shape_cast %104 : vector<2x8xf32> to vector<2x8x1xf32>
    %106 = tpu.reciprocal %105 {approx = true} : vector<2x8x1xf32> -> vector<2x8x1xf32>
    %107 = vector.broadcast %106 : vector<2x8x1xf32> to vector<2x8x8xf32>
    %108 = arith.mulf %103, %107 : vector<2x8x8xf32>
    %109 = vector.extract_strided_slice %25 {offsets = [0, 0, 32], sizes = [2, 8, 8], strides = [1, 1, 1]} : vector<2x8x64xf32> to vector<2x8x8xf32>
    "tpu.trace_start"() <{level = 10 : i32, message = "bqk,bkd->bqd"}> : () -> ()
    %cst_45 = arith.constant dense<0.000000e+00> : vector<2x8x8xf32>
    %110 = tpu.matmul %108, %109, %cst_45 {dimension_numbers = #tpu.dot_dimension_numbers<[2], [1], [1], [2], [0, 0, 0, 1, 1, 2], [0], [0]>} : vector<2x8x8xf32>, vector<2x8x8xf32>, vector<2x8x8xf32> -> vector<2x8x8xf32>
    "tpu.trace_stop"() : () -> ()
    %111 = vector.extract_strided_slice %23 {offsets = [0, 0, 40], sizes = [2, 8, 8], strides = [1, 1, 1]} : vector<2x8x64xf32> to vector<2x8x8xf32>
    %112 = vector.extract_strided_slice %24 {offsets = [0, 0, 40], sizes = [2, 8, 8], strides = [1, 1, 1]} : vector<2x8x64xf32> to vector<2x8x8xf32>
    "tpu.trace_start"() <{level = 10 : i32, message = "bqd,bkd->bqk"}> : () -> ()
    %cst_46 = arith.constant dense<0.000000e+00> : vector<2x8x8xf32>
    %113 = tpu.matmul %111, %112, %cst_46 {dimension_numbers = #tpu.dot_dimension_numbers<[2], [2], [1], [1], [0, 0, 0, 1, 1, 1], [0], [0]>} : vector<2x8x8xf32>, vector<2x8x8xf32>, vector<2x8x8xf32> -> vector<2x8x8xf32>
    "tpu.trace_stop"() : () -> ()
    %cst_47 = arith.constant 0.353553385 : f32
    %114 = vector.broadcast %cst_47 : f32 to vector<2x8x8xf32>
    %115 = arith.mulf %113, %114 : vector<2x8x8xf32>
    %cst_48 = arith.constant dense<0xFF800000> : vector<2x8xf32>
    %116 = vector.multi_reduction <maximumf>, %115, %cst_48 [2] : vector<2x8x8xf32> to vector<2x8xf32>
    %117 = vector.shape_cast %116 : vector<2x8xf32> to vector<2x8x1xf32>
    %118 = vector.broadcast %117 : vector<2x8x1xf32> to vector<2x8x8xf32>
    %119 = arith.subf %115, %118 : vector<2x8x8xf32>
    %120 = math.exp %119 : vector<2x8x8xf32>
    %cst_49 = arith.constant dense<0.000000e+00> : vector<2x8xf32>
    %121 = vector.multi_reduction <add>, %120, %cst_49 [2] : vector<2x8x8xf32> to vector<2x8xf32>
    %122 = vector.shape_cast %121 : vector<2x8xf32> to vector<2x8x1xf32>
    %123 = tpu.reciprocal %122 {approx = true} : vector<2x8x1xf32> -> vector<2x8x1xf32>
    %124 = vector.broadcast %123 : vector<2x8x1xf32> to vector<2x8x8xf32>
    %125 = arith.mulf %120, %124 : vector<2x8x8xf32>
    %126 = vector.extract_strided_slice %25 {offsets = [0, 0, 40], sizes = [2, 8, 8], strides = [1, 1, 1]} : vector<2x8x64xf32> to vector<2x8x8xf32>
    "tpu.trace_start"() <{level = 10 : i32, message = "bqk,bkd->bqd"}> : () -> ()
    %cst_50 = arith.constant dense<0.000000e+00> : vector<2x8x8xf32>
    %127 = tpu.matmul %125, %126, %cst_50 {dimension_numbers = #tpu.dot_dimension_numbers<[2], [1], [1], [2], [0, 0, 0, 1, 1, 2], [0], [0]>} : vector<2x8x8xf32>, vector<2x8x8xf32>, vector<2x8x8xf32> -> vector<2x8x8xf32>
    "tpu.trace_stop"() : () -> ()
    %128 = vector.extract_strided_slice %23 {offsets = [0, 0, 48], sizes = [2, 8, 8], strides = [1, 1, 1]} : vector<2x8x64xf32> to vector<2x8x8xf32>
    %129 = vector.extract_strided_slice %24 {offsets = [0, 0, 48], sizes = [2, 8, 8], strides = [1, 1, 1]} : vector<2x8x64xf32> to vector<2x8x8xf32>
    "tpu.trace_start"() <{level = 10 : i32, message = "bqd,bkd->bqk"}> : () -> ()
    %cst_51 = arith.constant dense<0.000000e+00> : vector<2x8x8xf32>
    %130 = tpu.matmul %128, %129, %cst_51 {dimension_numbers = #tpu.dot_dimension_numbers<[2], [2], [1], [1], [0, 0, 0, 1, 1, 1], [0], [0]>} : vector<2x8x8xf32>, vector<2x8x8xf32>, vector<2x8x8xf32> -> vector<2x8x8xf32>
    "tpu.trace_stop"() : () -> ()
    %cst_52 = arith.constant 0.353553385 : f32
    %131 = vector.broadcast %cst_52 : f32 to vector<2x8x8xf32>
    %132 = arith.mulf %130, %131 : vector<2x8x8xf32>
    %cst_53 = arith.constant dense<0xFF800000> : vector<2x8xf32>
    %133 = vector.multi_reduction <maximumf>, %132, %cst_53 [2] : vector<2x8x8xf32> to vector<2x8xf32>
    %134 = vector.shape_cast %133 : vector<2x8xf32> to vector<2x8x1xf32>
    %135 = vector.broadcast %134 : vector<2x8x1xf32> to vector<2x8x8xf32>
    %136 = arith.subf %132, %135 : vector<2x8x8xf32>
    %137 = math.exp %136 : vector<2x8x8xf32>
    %cst_54 = arith.constant dense<0.000000e+00> : vector<2x8xf32>
    %138 = vector.multi_reduction <add>, %137, %cst_54 [2] : vector<2x8x8xf32> to vector<2x8xf32>
    %139 = vector.shape_cast %138 : vector<2x8xf32> to vector<2x8x1xf32>
    %140 = tpu.reciprocal %139 {approx = true} : vector<2x8x1xf32> -> vector<2x8x1xf32>
    %141 = vector.broadcast %140 : vector<2x8x1xf32> to vector<2x8x8xf32>
    %142 = arith.mulf %137, %141 : vector<2x8x8xf32>
    %143 = vector.extract_strided_slice %25 {offsets = [0, 0, 48], sizes = [2, 8, 8], strides = [1, 1, 1]} : vector<2x8x64xf32> to vector<2x8x8xf32>
    "tpu.trace_start"() <{level = 10 : i32, message = "bqk,bkd->bqd"}> : () -> ()
    %cst_55 = arith.constant dense<0.000000e+00> : vector<2x8x8xf32>
    %144 = tpu.matmul %142, %143, %cst_55 {dimension_numbers = #tpu.dot_dimension_numbers<[2], [1], [1], [2], [0, 0, 0, 1, 1, 2], [0], [0]>} : vector<2x8x8xf32>, vector<2x8x8xf32>, vector<2x8x8xf32> -> vector<2x8x8xf32>
    "tpu.trace_stop"() : () -> ()
    %145 = vector.extract_strided_slice %23 {offsets = [0, 0, 56], sizes = [2, 8, 8], strides = [1, 1, 1]} : vector<2x8x64xf32> to vector<2x8x8xf32>
    %146 = vector.extract_strided_slice %24 {offsets = [0, 0, 56], sizes = [2, 8, 8], strides = [1, 1, 1]} : vector<2x8x64xf32> to vector<2x8x8xf32>
    "tpu.trace_start"() <{level = 10 : i32, message = "bqd,bkd->bqk"}> : () -> ()
    %cst_56 = arith.constant dense<0.000000e+00> : vector<2x8x8xf32>
    %147 = tpu.matmul %145, %146, %cst_56 {dimension_numbers = #tpu.dot_dimension_numbers<[2], [2], [1], [1], [0, 0, 0, 1, 1, 1], [0], [0]>} : vector<2x8x8xf32>, vector<2x8x8xf32>, vector<2x8x8xf32> -> vector<2x8x8xf32>
    "tpu.trace_stop"() : () -> ()
    %cst_57 = arith.constant 0.353553385 : f32
    %148 = vector.broadcast %cst_57 : f32 to vector<2x8x8xf32>
    %149 = arith.mulf %147, %148 : vector<2x8x8xf32>
    %cst_58 = arith.constant dense<0xFF800000> : vector<2x8xf32>
    %150 = vector.multi_reduction <maximumf>, %149, %cst_58 [2] : vector<2x8x8xf32> to vector<2x8xf32>
    %151 = vector.shape_cast %150 : vector<2x8xf32> to vector<2x8x1xf32>
    %152 = vector.broadcast %151 : vector<2x8x1xf32> to vector<2x8x8xf32>
    %153 = arith.subf %149, %152 : vector<2x8x8xf32>
    %154 = math.exp %153 : vector<2x8x8xf32>
    %cst_59 = arith.constant dense<0.000000e+00> : vector<2x8xf32>
    %155 = vector.multi_reduction <add>, %154, %cst_59 [2] : vector<2x8x8xf32> to vector<2x8xf32>
    %156 = vector.shape_cast %155 : vector<2x8xf32> to vector<2x8x1xf32>
    %157 = tpu.reciprocal %156 {approx = true} : vector<2x8x1xf32> -> vector<2x8x1xf32>
    %158 = vector.broadcast %157 : vector<2x8x1xf32> to vector<2x8x8xf32>
    %159 = arith.mulf %154, %158 : vector<2x8x8xf32>
    %160 = vector.extract_strided_slice %25 {offsets = [0, 0, 56], sizes = [2, 8, 8], strides = [1, 1, 1]} : vector<2x8x64xf32> to vector<2x8x8xf32>
    "tpu.trace_start"() <{level = 10 : i32, message = "bqk,bkd->bqd"}> : () -> ()
    %cst_60 = arith.constant dense<0.000000e+00> : vector<2x8x8xf32>
    %161 = tpu.matmul %159, %160, %cst_60 {dimension_numbers = #tpu.dot_dimension_numbers<[2], [1], [1], [2], [0, 0, 0, 1, 1, 2], [0], [0]>} : vector<2x8x8xf32>, vector<2x8x8xf32>, vector<2x8x8xf32> -> vector<2x8x8xf32>
    "tpu.trace_stop"() : () -> ()
    %162 = tpu.concatenate %42, %59, %76, %93, %110, %127, %144, %161 in 2 : vector<2x8x8xf32>, vector<2x8x8xf32>, vector<2x8x8xf32>, vector<2x8x8xf32>, vector<2x8x8xf32>, vector<2x8x8xf32>, vector<2x8x8xf32>, vector<2x8x8xf32> -> vector<2x8x64xf32>
    %163 = vector.shape_cast %162 : vector<2x8x64xf32> to vector<16x64xf32>
    %cst_61 = arith.constant dense<0.000000e+00> : vector<16x64xf32>
    %164 = tpu.matmul %163, %20, %cst_61 {dimension_numbers = #tpu.dot_dimension_numbers<[1], [0], [0], [1], [0, 0, 1, 1], [], []>} : vector<16x64xf32>, vector<64x64xf32>, vector<16x64xf32> -> vector<16x64xf32>
    %165 = vector.broadcast %22 : vector<1x64xf32> to vector<16x64xf32>
    %166 = arith.addf %164, %165 : vector<16x64xf32>
    %167 = arith.addf %8, %166 : vector<16x64xf32>
    %168 = vector.extract_strided_slice %4 {offsets = [0, 0], sizes = [1, 64], strides = [1, 1]} : vector<3x64xf32> to vector<1x64xf32>
    %169 = vector.extract_strided_slice %6 {offsets = [0, 0], sizes = [1, 64], strides = [1, 1]} : vector<3x64xf32> to vector<1x64xf32>
    %cst_62 = arith.constant dense<0.000000e+00> : vector<16xf32>
    %170 = vector.multi_reduction <add>, %167, %cst_62 [1] : vector<16x64xf32> to vector<16xf32>
    %171 = vector.shape_cast %170 : vector<16xf32> to vector<16x1xf32>
    %cst_63 = arith.constant 6.400000e+01 : f32
    %172 = vector.broadcast %cst_63 : f32 to vector<16x1xf32>
    %173 = arith.divf %171, %172 : vector<16x1xf32>
    %174 = vector.broadcast %173 : vector<16x1xf32> to vector<16x64xf32>
    %175 = arith.subf %167, %174 : vector<16x64xf32>
    %176 = arith.mulf %175, %175 : vector<16x64xf32>
    %cst_64 = arith.constant dense<0.000000e+00> : vector<16xf32>
    %177 = vector.multi_reduction <add>, %176, %cst_64 [1] : vector<16x64xf32> to vector<16xf32>
    %178 = vector.shape_cast %177 : vector<16xf32> to vector<16x1xf32>
    %cst_65 = arith.constant 6.400000e+01 : f32
    %179 = vector.broadcast %cst_65 : f32 to vector<16x1xf32>
    %180 = arith.divf %178, %179 : vector<16x1xf32>
    %cst_66 = arith.constant 9.99999974E-6 : f32
    %181 = vector.broadcast %cst_66 : f32 to vector<16x1xf32>
    %182 = arith.addf %180, %181 : vector<16x1xf32>
    %183 = math.rsqrt %182 : vector<16x1xf32>
    %184 = vector.broadcast %183 : vector<16x1xf32> to vector<16x64xf32>
    %185 = arith.mulf %175, %184 : vector<16x64xf32>
    %186 = vector.broadcast %168 : vector<1x64xf32> to vector<16x64xf32>
    %187 = arith.mulf %185, %186 : vector<16x64xf32>
    %188 = vector.broadcast %169 : vector<1x64xf32> to vector<16x64xf32>
    %189 = arith.addf %187, %188 : vector<16x64xf32>
    %c0_67 = arith.constant 0 : index
    %c0_68 = arith.constant 0 : index
    %c0_69 = arith.constant 0 : index
    %190 = vector.load %arg3[%c0_67, %c0_68, %c0_69] : memref<2x8x64xf32, #tpu.memory_space<vmem>>, vector<2x8x64xf32>
    %191 = vector.shape_cast %190 : vector<2x8x64xf32> to vector<16x64xf32>
    %c0_70 = arith.constant 0 : index
    %c0_71 = arith.constant 0 : index
    %c0_72 = arith.constant 0 : index
    %192 = vector.load %arg8[%c0_70, %c0_71, %c0_72] : memref<1x64x64xf32, #tpu.memory_space<vmem>>, vector<1x64x64xf32>
    %193 = vector.shape_cast %192 : vector<1x64x64xf32> to vector<64x64xf32>
    %cst_73 = arith.constant dense<0.000000e+00> : vector<16x64xf32>
    %194 = tpu.matmul %189, %193, %cst_73 {dimension_numbers = #tpu.dot_dimension_numbers<[1], [0], [0], [1], [0, 0, 1, 1], [], []>} : vector<16x64xf32>, vector<64x64xf32>, vector<16x64xf32> -> vector<16x64xf32>
    %c0_74 = arith.constant 0 : index
    %c0_75 = arith.constant 0 : index
    %c0_76 = arith.constant 0 : index
    %195 = vector.load %arg9[%c0_74, %c0_75, %c0_76] : memref<1x1x64xf32, #tpu.memory_space<vmem>>, vector<1x1x64xf32>
    %196 = vector.shape_cast %195 : vector<1x1x64xf32> to vector<1x64xf32>
    %197 = vector.broadcast %196 : vector<1x64xf32> to vector<16x64xf32>
    %198 = arith.addf %194, %197 : vector<16x64xf32>
    %c0_77 = arith.constant 0 : index
    %c0_78 = arith.constant 0 : index
    %c0_79 = arith.constant 0 : index
    %199 = vector.load %arg10[%c0_77, %c0_78, %c0_79] : memref<1x64x128xf32, #tpu.memory_space<vmem>>, vector<1x64x128xf32>
    %200 = vector.shape_cast %199 : vector<1x64x128xf32> to vector<64x128xf32>
    %cst_80 = arith.constant dense<0.000000e+00> : vector<16x128xf32>
    %201 = tpu.matmul %191, %200, %cst_80 {dimension_numbers = #tpu.dot_dimension_numbers<[1], [0], [0], [1], [0, 0, 1, 1], [], []>} : vector<16x64xf32>, vector<64x128xf32>, vector<16x128xf32> -> vector<16x128xf32>
    %c0_81 = arith.constant 0 : index
    %c0_82 = arith.constant 0 : index
    %c0_83 = arith.constant 0 : index
    %202 = vector.load %arg11[%c0_81, %c0_82, %c0_83] : memref<1x1x128xf32, #tpu.memory_space<vmem>>, vector<1x1x128xf32>
    %203 = vector.shape_cast %202 : vector<1x1x128xf32> to vector<1x128xf32>
    %204 = vector.broadcast %203 : vector<1x128xf32> to vector<16x128xf32>
    %205 = arith.addf %201, %204 : vector<16x128xf32>
    %206 = vector.extract_strided_slice %205 {offsets = [0, 0], sizes = [16, 64], strides = [1, 1]} : vector<16x128xf32> to vector<16x64xf32>
    %207 = vector.extract_strided_slice %205 {offsets = [0, 64], sizes = [16, 64], strides = [1, 1]} : vector<16x128xf32> to vector<16x64xf32>
    %c0_84 = arith.constant 0 : index
    %c0_85 = arith.constant 0 : index
    %c0_86 = arith.constant 0 : index
    %208 = vector.load %arg12[%c0_84, %c0_85, %c0_86] : memref<1x64x64xf32, #tpu.memory_space<vmem>>, vector<1x64x64xf32>
    %209 = vector.shape_cast %208 : vector<1x64x64xf32> to vector<64x64xf32>
    %c0_87 = arith.constant 0 : index
    %c0_88 = arith.constant 0 : index
    %c0_89 = arith.constant 0 : index
    %210 = vector.load %arg13[%c0_87, %c0_88, %c0_89] : memref<1x1x64xf32, #tpu.memory_space<vmem>>, vector<1x1x64xf32>
    %211 = vector.shape_cast %210 : vector<1x1x64xf32> to vector<1x64xf32>
    %212 = vector.shape_cast %198 : vector<16x64xf32> to vector<2x8x64xf32>
    %213 = vector.shape_cast %206 : vector<16x64xf32> to vector<2x8x64xf32>
    %214 = vector.shape_cast %207 : vector<16x64xf32> to vector<2x8x64xf32>
    %215 = vector.extract_strided_slice %212 {offsets = [0, 0, 0], sizes = [2, 8, 8], strides = [1, 1, 1]} : vector<2x8x64xf32> to vector<2x8x8xf32>
    %216 = vector.extract_strided_slice %213 {offsets = [0, 0, 0], sizes = [2, 8, 8], strides = [1, 1, 1]} : vector<2x8x64xf32> to vector<2x8x8xf32>
    "tpu.trace_start"() <{level = 10 : i32, message = "bqd,bkd->bqk"}> : () -> ()
    %cst_90 = arith.constant dense<0.000000e+00> : vector<2x8x8xf32>
    %217 = tpu.matmul %215, %216, %cst_90 {dimension_numbers = #tpu.dot_dimension_numbers<[2], [2], [1], [1], [0, 0, 0, 1, 1, 1], [0], [0]>} : vector<2x8x8xf32>, vector<2x8x8xf32>, vector<2x8x8xf32> -> vector<2x8x8xf32>
    "tpu.trace_stop"() : () -> ()
    %cst_91 = arith.constant 0.353553385 : f32
    %218 = vector.broadcast %cst_91 : f32 to vector<2x8x8xf32>
    %219 = arith.mulf %217, %218 : vector<2x8x8xf32>
    %cst_92 = arith.constant dense<0xFF800000> : vector<2x8xf32>
    %220 = vector.multi_reduction <maximumf>, %219, %cst_92 [2] : vector<2x8x8xf32> to vector<2x8xf32>
    %221 = vector.shape_cast %220 : vector<2x8xf32> to vector<2x8x1xf32>
    %222 = vector.broadcast %221 : vector<2x8x1xf32> to vector<2x8x8xf32>
    %223 = arith.subf %219, %222 : vector<2x8x8xf32>
    %224 = math.exp %223 : vector<2x8x8xf32>
    %cst_93 = arith.constant dense<0.000000e+00> : vector<2x8xf32>
    %225 = vector.multi_reduction <add>, %224, %cst_93 [2] : vector<2x8x8xf32> to vector<2x8xf32>
    %226 = vector.shape_cast %225 : vector<2x8xf32> to vector<2x8x1xf32>
    %227 = tpu.reciprocal %226 {approx = true} : vector<2x8x1xf32> -> vector<2x8x1xf32>
    %228 = vector.broadcast %227 : vector<2x8x1xf32> to vector<2x8x8xf32>
    %229 = arith.mulf %224, %228 : vector<2x8x8xf32>
    %230 = vector.extract_strided_slice %214 {offsets = [0, 0, 0], sizes = [2, 8, 8], strides = [1, 1, 1]} : vector<2x8x64xf32> to vector<2x8x8xf32>
    "tpu.trace_start"() <{level = 10 : i32, message = "bqk,bkd->bqd"}> : () -> ()
    %cst_94 = arith.constant dense<0.000000e+00> : vector<2x8x8xf32>
    %231 = tpu.matmul %229, %230, %cst_94 {dimension_numbers = #tpu.dot_dimension_numbers<[2], [1], [1], [2], [0, 0, 0, 1, 1, 2], [0], [0]>} : vector<2x8x8xf32>, vector<2x8x8xf32>, vector<2x8x8xf32> -> vector<2x8x8xf32>
    "tpu.trace_stop"() : () -> ()
    %232 = vector.extract_strided_slice %212 {offsets = [0, 0, 8], sizes = [2, 8, 8], strides = [1, 1, 1]} : vector<2x8x64xf32> to vector<2x8x8xf32>
    %233 = vector.extract_strided_slice %213 {offsets = [0, 0, 8], sizes = [2, 8, 8], strides = [1, 1, 1]} : vector<2x8x64xf32> to vector<2x8x8xf32>
    "tpu.trace_start"() <{level = 10 : i32, message = "bqd,bkd->bqk"}> : () -> ()
    %cst_95 = arith.constant dense<0.000000e+00> : vector<2x8x8xf32>
    %234 = tpu.matmul %232, %233, %cst_95 {dimension_numbers = #tpu.dot_dimension_numbers<[2], [2], [1], [1], [0, 0, 0, 1, 1, 1], [0], [0]>} : vector<2x8x8xf32>, vector<2x8x8xf32>, vector<2x8x8xf32> -> vector<2x8x8xf32>
    "tpu.trace_stop"() : () -> ()
    %cst_96 = arith.constant 0.353553385 : f32
    %235 = vector.broadcast %cst_96 : f32 to vector<2x8x8xf32>
    %236 = arith.mulf %234, %235 : vector<2x8x8xf32>
    %cst_97 = arith.constant dense<0xFF800000> : vector<2x8xf32>
    %237 = vector.multi_reduction <maximumf>, %236, %cst_97 [2] : vector<2x8x8xf32> to vector<2x8xf32>
    %238 = vector.shape_cast %237 : vector<2x8xf32> to vector<2x8x1xf32>
    %239 = vector.broadcast %238 : vector<2x8x1xf32> to vector<2x8x8xf32>
    %240 = arith.subf %236, %239 : vector<2x8x8xf32>
    %241 = math.exp %240 : vector<2x8x8xf32>
    %cst_98 = arith.constant dense<0.000000e+00> : vector<2x8xf32>
    %242 = vector.multi_reduction <add>, %241, %cst_98 [2] : vector<2x8x8xf32> to vector<2x8xf32>
    %243 = vector.shape_cast %242 : vector<2x8xf32> to vector<2x8x1xf32>
    %244 = tpu.reciprocal %243 {approx = true} : vector<2x8x1xf32> -> vector<2x8x1xf32>
    %245 = vector.broadcast %244 : vector<2x8x1xf32> to vector<2x8x8xf32>
    %246 = arith.mulf %241, %245 : vector<2x8x8xf32>
    %247 = vector.extract_strided_slice %214 {offsets = [0, 0, 8], sizes = [2, 8, 8], strides = [1, 1, 1]} : vector<2x8x64xf32> to vector<2x8x8xf32>
    "tpu.trace_start"() <{level = 10 : i32, message = "bqk,bkd->bqd"}> : () -> ()
    %cst_99 = arith.constant dense<0.000000e+00> : vector<2x8x8xf32>
    %248 = tpu.matmul %246, %247, %cst_99 {dimension_numbers = #tpu.dot_dimension_numbers<[2], [1], [1], [2], [0, 0, 0, 1, 1, 2], [0], [0]>} : vector<2x8x8xf32>, vector<2x8x8xf32>, vector<2x8x8xf32> -> vector<2x8x8xf32>
    "tpu.trace_stop"() : () -> ()
    %249 = vector.extract_strided_slice %212 {offsets = [0, 0, 16], sizes = [2, 8, 8], strides = [1, 1, 1]} : vector<2x8x64xf32> to vector<2x8x8xf32>
    %250 = vector.extract_strided_slice %213 {offsets = [0, 0, 16], sizes = [2, 8, 8], strides = [1, 1, 1]} : vector<2x8x64xf32> to vector<2x8x8xf32>
    "tpu.trace_start"() <{level = 10 : i32, message = "bqd,bkd->bqk"}> : () -> ()
    %cst_100 = arith.constant dense<0.000000e+00> : vector<2x8x8xf32>
    %251 = tpu.matmul %249, %250, %cst_100 {dimension_numbers = #tpu.dot_dimension_numbers<[2], [2], [1], [1], [0, 0, 0, 1, 1, 1], [0], [0]>} : vector<2x8x8xf32>, vector<2x8x8xf32>, vector<2x8x8xf32> -> vector<2x8x8xf32>
    "tpu.trace_stop"() : () -> ()
    %cst_101 = arith.constant 0.353553385 : f32
    %252 = vector.broadcast %cst_101 : f32 to vector<2x8x8xf32>
    %253 = arith.mulf %251, %252 : vector<2x8x8xf32>
    %cst_102 = arith.constant dense<0xFF800000> : vector<2x8xf32>
    %254 = vector.multi_reduction <maximumf>, %253, %cst_102 [2] : vector<2x8x8xf32> to vector<2x8xf32>
    %255 = vector.shape_cast %254 : vector<2x8xf32> to vector<2x8x1xf32>
    %256 = vector.broadcast %255 : vector<2x8x1xf32> to vector<2x8x8xf32>
    %257 = arith.subf %253, %256 : vector<2x8x8xf32>
    %258 = math.exp %257 : vector<2x8x8xf32>
    %cst_103 = arith.constant dense<0.000000e+00> : vector<2x8xf32>
    %259 = vector.multi_reduction <add>, %258, %cst_103 [2] : vector<2x8x8xf32> to vector<2x8xf32>
    %260 = vector.shape_cast %259 : vector<2x8xf32> to vector<2x8x1xf32>
    %261 = tpu.reciprocal %260 {approx = true} : vector<2x8x1xf32> -> vector<2x8x1xf32>
    %262 = vector.broadcast %261 : vector<2x8x1xf32> to vector<2x8x8xf32>
    %263 = arith.mulf %258, %262 : vector<2x8x8xf32>
    %264 = vector.extract_strided_slice %214 {offsets = [0, 0, 16], sizes = [2, 8, 8], strides = [1, 1, 1]} : vector<2x8x64xf32> to vector<2x8x8xf32>
    "tpu.trace_start"() <{level = 10 : i32, message = "bqk,bkd->bqd"}> : () -> ()
    %cst_104 = arith.constant dense<0.000000e+00> : vector<2x8x8xf32>
    %265 = tpu.matmul %263, %264, %cst_104 {dimension_numbers = #tpu.dot_dimension_numbers<[2], [1], [1], [2], [0, 0, 0, 1, 1, 2], [0], [0]>} : vector<2x8x8xf32>, vector<2x8x8xf32>, vector<2x8x8xf32> -> vector<2x8x8xf32>
    "tpu.trace_stop"() : () -> ()
    %266 = vector.extract_strided_slice %212 {offsets = [0, 0, 24], sizes = [2, 8, 8], strides = [1, 1, 1]} : vector<2x8x64xf32> to vector<2x8x8xf32>
    %267 = vector.extract_strided_slice %213 {offsets = [0, 0, 24], sizes = [2, 8, 8], strides = [1, 1, 1]} : vector<2x8x64xf32> to vector<2x8x8xf32>
    "tpu.trace_start"() <{level = 10 : i32, message = "bqd,bkd->bqk"}> : () -> ()
    %cst_105 = arith.constant dense<0.000000e+00> : vector<2x8x8xf32>
    %268 = tpu.matmul %266, %267, %cst_105 {dimension_numbers = #tpu.dot_dimension_numbers<[2], [2], [1], [1], [0, 0, 0, 1, 1, 1], [0], [0]>} : vector<2x8x8xf32>, vector<2x8x8xf32>, vector<2x8x8xf32> -> vector<2x8x8xf32>
    "tpu.trace_stop"() : () -> ()
    %cst_106 = arith.constant 0.353553385 : f32
    %269 = vector.broadcast %cst_106 : f32 to vector<2x8x8xf32>
    %270 = arith.mulf %268, %269 : vector<2x8x8xf32>
    %cst_107 = arith.constant dense<0xFF800000> : vector<2x8xf32>
    %271 = vector.multi_reduction <maximumf>, %270, %cst_107 [2] : vector<2x8x8xf32> to vector<2x8xf32>
    %272 = vector.shape_cast %271 : vector<2x8xf32> to vector<2x8x1xf32>
    %273 = vector.broadcast %272 : vector<2x8x1xf32> to vector<2x8x8xf32>
    %274 = arith.subf %270, %273 : vector<2x8x8xf32>
    %275 = math.exp %274 : vector<2x8x8xf32>
    %cst_108 = arith.constant dense<0.000000e+00> : vector<2x8xf32>
    %276 = vector.multi_reduction <add>, %275, %cst_108 [2] : vector<2x8x8xf32> to vector<2x8xf32>
    %277 = vector.shape_cast %276 : vector<2x8xf32> to vector<2x8x1xf32>
    %278 = tpu.reciprocal %277 {approx = true} : vector<2x8x1xf32> -> vector<2x8x1xf32>
    %279 = vector.broadcast %278 : vector<2x8x1xf32> to vector<2x8x8xf32>
    %280 = arith.mulf %275, %279 : vector<2x8x8xf32>
    %281 = vector.extract_strided_slice %214 {offsets = [0, 0, 24], sizes = [2, 8, 8], strides = [1, 1, 1]} : vector<2x8x64xf32> to vector<2x8x8xf32>
    "tpu.trace_start"() <{level = 10 : i32, message = "bqk,bkd->bqd"}> : () -> ()
    %cst_109 = arith.constant dense<0.000000e+00> : vector<2x8x8xf32>
    %282 = tpu.matmul %280, %281, %cst_109 {dimension_numbers = #tpu.dot_dimension_numbers<[2], [1], [1], [2], [0, 0, 0, 1, 1, 2], [0], [0]>} : vector<2x8x8xf32>, vector<2x8x8xf32>, vector<2x8x8xf32> -> vector<2x8x8xf32>
    "tpu.trace_stop"() : () -> ()
    %283 = vector.extract_strided_slice %212 {offsets = [0, 0, 32], sizes = [2, 8, 8], strides = [1, 1, 1]} : vector<2x8x64xf32> to vector<2x8x8xf32>
    %284 = vector.extract_strided_slice %213 {offsets = [0, 0, 32], sizes = [2, 8, 8], strides = [1, 1, 1]} : vector<2x8x64xf32> to vector<2x8x8xf32>
    "tpu.trace_start"() <{level = 10 : i32, message = "bqd,bkd->bqk"}> : () -> ()
    %cst_110 = arith.constant dense<0.000000e+00> : vector<2x8x8xf32>
    %285 = tpu.matmul %283, %284, %cst_110 {dimension_numbers = #tpu.dot_dimension_numbers<[2], [2], [1], [1], [0, 0, 0, 1, 1, 1], [0], [0]>} : vector<2x8x8xf32>, vector<2x8x8xf32>, vector<2x8x8xf32> -> vector<2x8x8xf32>
    "tpu.trace_stop"() : () -> ()
    %cst_111 = arith.constant 0.353553385 : f32
    %286 = vector.broadcast %cst_111 : f32 to vector<2x8x8xf32>
    %287 = arith.mulf %285, %286 : vector<2x8x8xf32>
    %cst_112 = arith.constant dense<0xFF800000> : vector<2x8xf32>
    %288 = vector.multi_reduction <maximumf>, %287, %cst_112 [2] : vector<2x8x8xf32> to vector<2x8xf32>
    %289 = vector.shape_cast %288 : vector<2x8xf32> to vector<2x8x1xf32>
    %290 = vector.broadcast %289 : vector<2x8x1xf32> to vector<2x8x8xf32>
    %291 = arith.subf %287, %290 : vector<2x8x8xf32>
    %292 = math.exp %291 : vector<2x8x8xf32>
    %cst_113 = arith.constant dense<0.000000e+00> : vector<2x8xf32>
    %293 = vector.multi_reduction <add>, %292, %cst_113 [2] : vector<2x8x8xf32> to vector<2x8xf32>
    %294 = vector.shape_cast %293 : vector<2x8xf32> to vector<2x8x1xf32>
    %295 = tpu.reciprocal %294 {approx = true} : vector<2x8x1xf32> -> vector<2x8x1xf32>
    %296 = vector.broadcast %295 : vector<2x8x1xf32> to vector<2x8x8xf32>
    %297 = arith.mulf %292, %296 : vector<2x8x8xf32>
    %298 = vector.extract_strided_slice %214 {offsets = [0, 0, 32], sizes = [2, 8, 8], strides = [1, 1, 1]} : vector<2x8x64xf32> to vector<2x8x8xf32>
    "tpu.trace_start"() <{level = 10 : i32, message = "bqk,bkd->bqd"}> : () -> ()
    %cst_114 = arith.constant dense<0.000000e+00> : vector<2x8x8xf32>
    %299 = tpu.matmul %297, %298, %cst_114 {dimension_numbers = #tpu.dot_dimension_numbers<[2], [1], [1], [2], [0, 0, 0, 1, 1, 2], [0], [0]>} : vector<2x8x8xf32>, vector<2x8x8xf32>, vector<2x8x8xf32> -> vector<2x8x8xf32>
    "tpu.trace_stop"() : () -> ()
    %300 = vector.extract_strided_slice %212 {offsets = [0, 0, 40], sizes = [2, 8, 8], strides = [1, 1, 1]} : vector<2x8x64xf32> to vector<2x8x8xf32>
    %301 = vector.extract_strided_slice %213 {offsets = [0, 0, 40], sizes = [2, 8, 8], strides = [1, 1, 1]} : vector<2x8x64xf32> to vector<2x8x8xf32>
    "tpu.trace_start"() <{level = 10 : i32, message = "bqd,bkd->bqk"}> : () -> ()
    %cst_115 = arith.constant dense<0.000000e+00> : vector<2x8x8xf32>
    %302 = tpu.matmul %300, %301, %cst_115 {dimension_numbers = #tpu.dot_dimension_numbers<[2], [2], [1], [1], [0, 0, 0, 1, 1, 1], [0], [0]>} : vector<2x8x8xf32>, vector<2x8x8xf32>, vector<2x8x8xf32> -> vector<2x8x8xf32>
    "tpu.trace_stop"() : () -> ()
    %cst_116 = arith.constant 0.353553385 : f32
    %303 = vector.broadcast %cst_116 : f32 to vector<2x8x8xf32>
    %304 = arith.mulf %302, %303 : vector<2x8x8xf32>
    %cst_117 = arith.constant dense<0xFF800000> : vector<2x8xf32>
    %305 = vector.multi_reduction <maximumf>, %304, %cst_117 [2] : vector<2x8x8xf32> to vector<2x8xf32>
    %306 = vector.shape_cast %305 : vector<2x8xf32> to vector<2x8x1xf32>
    %307 = vector.broadcast %306 : vector<2x8x1xf32> to vector<2x8x8xf32>
    %308 = arith.subf %304, %307 : vector<2x8x8xf32>
    %309 = math.exp %308 : vector<2x8x8xf32>
    %cst_118 = arith.constant dense<0.000000e+00> : vector<2x8xf32>
    %310 = vector.multi_reduction <add>, %309, %cst_118 [2] : vector<2x8x8xf32> to vector<2x8xf32>
    %311 = vector.shape_cast %310 : vector<2x8xf32> to vector<2x8x1xf32>
    %312 = tpu.reciprocal %311 {approx = true} : vector<2x8x1xf32> -> vector<2x8x1xf32>
    %313 = vector.broadcast %312 : vector<2x8x1xf32> to vector<2x8x8xf32>
    %314 = arith.mulf %309, %313 : vector<2x8x8xf32>
    %315 = vector.extract_strided_slice %214 {offsets = [0, 0, 40], sizes = [2, 8, 8], strides = [1, 1, 1]} : vector<2x8x64xf32> to vector<2x8x8xf32>
    "tpu.trace_start"() <{level = 10 : i32, message = "bqk,bkd->bqd"}> : () -> ()
    %cst_119 = arith.constant dense<0.000000e+00> : vector<2x8x8xf32>
    %316 = tpu.matmul %314, %315, %cst_119 {dimension_numbers = #tpu.dot_dimension_numbers<[2], [1], [1], [2], [0, 0, 0, 1, 1, 2], [0], [0]>} : vector<2x8x8xf32>, vector<2x8x8xf32>, vector<2x8x8xf32> -> vector<2x8x8xf32>
    "tpu.trace_stop"() : () -> ()
    %317 = vector.extract_strided_slice %212 {offsets = [0, 0, 48], sizes = [2, 8, 8], strides = [1, 1, 1]} : vector<2x8x64xf32> to vector<2x8x8xf32>
    %318 = vector.extract_strided_slice %213 {offsets = [0, 0, 48], sizes = [2, 8, 8], strides = [1, 1, 1]} : vector<2x8x64xf32> to vector<2x8x8xf32>
    "tpu.trace_start"() <{level = 10 : i32, message = "bqd,bkd->bqk"}> : () -> ()
    %cst_120 = arith.constant dense<0.000000e+00> : vector<2x8x8xf32>
    %319 = tpu.matmul %317, %318, %cst_120 {dimension_numbers = #tpu.dot_dimension_numbers<[2], [2], [1], [1], [0, 0, 0, 1, 1, 1], [0], [0]>} : vector<2x8x8xf32>, vector<2x8x8xf32>, vector<2x8x8xf32> -> vector<2x8x8xf32>
    "tpu.trace_stop"() : () -> ()
    %cst_121 = arith.constant 0.353553385 : f32
    %320 = vector.broadcast %cst_121 : f32 to vector<2x8x8xf32>
    %321 = arith.mulf %319, %320 : vector<2x8x8xf32>
    %cst_122 = arith.constant dense<0xFF800000> : vector<2x8xf32>
    %322 = vector.multi_reduction <maximumf>, %321, %cst_122 [2] : vector<2x8x8xf32> to vector<2x8xf32>
    %323 = vector.shape_cast %322 : vector<2x8xf32> to vector<2x8x1xf32>
    %324 = vector.broadcast %323 : vector<2x8x1xf32> to vector<2x8x8xf32>
    %325 = arith.subf %321, %324 : vector<2x8x8xf32>
    %326 = math.exp %325 : vector<2x8x8xf32>
    %cst_123 = arith.constant dense<0.000000e+00> : vector<2x8xf32>
    %327 = vector.multi_reduction <add>, %326, %cst_123 [2] : vector<2x8x8xf32> to vector<2x8xf32>
    %328 = vector.shape_cast %327 : vector<2x8xf32> to vector<2x8x1xf32>
    %329 = tpu.reciprocal %328 {approx = true} : vector<2x8x1xf32> -> vector<2x8x1xf32>
    %330 = vector.broadcast %329 : vector<2x8x1xf32> to vector<2x8x8xf32>
    %331 = arith.mulf %326, %330 : vector<2x8x8xf32>
    %332 = vector.extract_strided_slice %214 {offsets = [0, 0, 48], sizes = [2, 8, 8], strides = [1, 1, 1]} : vector<2x8x64xf32> to vector<2x8x8xf32>
    "tpu.trace_start"() <{level = 10 : i32, message = "bqk,bkd->bqd"}> : () -> ()
    %cst_124 = arith.constant dense<0.000000e+00> : vector<2x8x8xf32>
    %333 = tpu.matmul %331, %332, %cst_124 {dimension_numbers = #tpu.dot_dimension_numbers<[2], [1], [1], [2], [0, 0, 0, 1, 1, 2], [0], [0]>} : vector<2x8x8xf32>, vector<2x8x8xf32>, vector<2x8x8xf32> -> vector<2x8x8xf32>
    "tpu.trace_stop"() : () -> ()
    %334 = vector.extract_strided_slice %212 {offsets = [0, 0, 56], sizes = [2, 8, 8], strides = [1, 1, 1]} : vector<2x8x64xf32> to vector<2x8x8xf32>
    %335 = vector.extract_strided_slice %213 {offsets = [0, 0, 56], sizes = [2, 8, 8], strides = [1, 1, 1]} : vector<2x8x64xf32> to vector<2x8x8xf32>
    "tpu.trace_start"() <{level = 10 : i32, message = "bqd,bkd->bqk"}> : () -> ()
    %cst_125 = arith.constant dense<0.000000e+00> : vector<2x8x8xf32>
    %336 = tpu.matmul %334, %335, %cst_125 {dimension_numbers = #tpu.dot_dimension_numbers<[2], [2], [1], [1], [0, 0, 0, 1, 1, 1], [0], [0]>} : vector<2x8x8xf32>, vector<2x8x8xf32>, vector<2x8x8xf32> -> vector<2x8x8xf32>
    "tpu.trace_stop"() : () -> ()
    %cst_126 = arith.constant 0.353553385 : f32
    %337 = vector.broadcast %cst_126 : f32 to vector<2x8x8xf32>
    %338 = arith.mulf %336, %337 : vector<2x8x8xf32>
    %cst_127 = arith.constant dense<0xFF800000> : vector<2x8xf32>
    %339 = vector.multi_reduction <maximumf>, %338, %cst_127 [2] : vector<2x8x8xf32> to vector<2x8xf32>
    %340 = vector.shape_cast %339 : vector<2x8xf32> to vector<2x8x1xf32>
    %341 = vector.broadcast %340 : vector<2x8x1xf32> to vector<2x8x8xf32>
    %342 = arith.subf %338, %341 : vector<2x8x8xf32>
    %343 = math.exp %342 : vector<2x8x8xf32>
    %cst_128 = arith.constant dense<0.000000e+00> : vector<2x8xf32>
    %344 = vector.multi_reduction <add>, %343, %cst_128 [2] : vector<2x8x8xf32> to vector<2x8xf32>
    %345 = vector.shape_cast %344 : vector<2x8xf32> to vector<2x8x1xf32>
    %346 = tpu.reciprocal %345 {approx = true} : vector<2x8x1xf32> -> vector<2x8x1xf32>
    %347 = vector.broadcast %346 : vector<2x8x1xf32> to vector<2x8x8xf32>
    %348 = arith.mulf %343, %347 : vector<2x8x8xf32>
    %349 = vector.extract_strided_slice %214 {offsets = [0, 0, 56], sizes = [2, 8, 8], strides = [1, 1, 1]} : vector<2x8x64xf32> to vector<2x8x8xf32>
    "tpu.trace_start"() <{level = 10 : i32, message = "bqk,bkd->bqd"}> : () -> ()
    %cst_129 = arith.constant dense<0.000000e+00> : vector<2x8x8xf32>
    %350 = tpu.matmul %348, %349, %cst_129 {dimension_numbers = #tpu.dot_dimension_numbers<[2], [1], [1], [2], [0, 0, 0, 1, 1, 2], [0], [0]>} : vector<2x8x8xf32>, vector<2x8x8xf32>, vector<2x8x8xf32> -> vector<2x8x8xf32>
    "tpu.trace_stop"() : () -> ()
    %351 = tpu.concatenate %231, %248, %265, %282, %299, %316, %333, %350 in 2 : vector<2x8x8xf32>, vector<2x8x8xf32>, vector<2x8x8xf32>, vector<2x8x8xf32>, vector<2x8x8xf32>, vector<2x8x8xf32>, vector<2x8x8xf32>, vector<2x8x8xf32> -> vector<2x8x64xf32>
    %352 = vector.shape_cast %351 : vector<2x8x64xf32> to vector<16x64xf32>
    %cst_130 = arith.constant dense<0.000000e+00> : vector<16x64xf32>
    %353 = tpu.matmul %352, %209, %cst_130 {dimension_numbers = #tpu.dot_dimension_numbers<[1], [0], [0], [1], [0, 0, 1, 1], [], []>} : vector<16x64xf32>, vector<64x64xf32>, vector<16x64xf32> -> vector<16x64xf32>
    %354 = vector.broadcast %211 : vector<1x64xf32> to vector<16x64xf32>
    %355 = arith.addf %353, %354 : vector<16x64xf32>
    %356 = arith.addf %189, %355 : vector<16x64xf32>
    %357 = vector.extract_strided_slice %4 {offsets = [1, 0], sizes = [1, 64], strides = [1, 1]} : vector<3x64xf32> to vector<1x64xf32>
    %358 = vector.extract_strided_slice %6 {offsets = [1, 0], sizes = [1, 64], strides = [1, 1]} : vector<3x64xf32> to vector<1x64xf32>
    %cst_131 = arith.constant dense<0.000000e+00> : vector<16xf32>
    %359 = vector.multi_reduction <add>, %356, %cst_131 [1] : vector<16x64xf32> to vector<16xf32>
    %360 = vector.shape_cast %359 : vector<16xf32> to vector<16x1xf32>
    %cst_132 = arith.constant 6.400000e+01 : f32
    %361 = vector.broadcast %cst_132 : f32 to vector<16x1xf32>
    %362 = arith.divf %360, %361 : vector<16x1xf32>
    %363 = vector.broadcast %362 : vector<16x1xf32> to vector<16x64xf32>
    %364 = arith.subf %356, %363 : vector<16x64xf32>
    %365 = arith.mulf %364, %364 : vector<16x64xf32>
    %cst_133 = arith.constant dense<0.000000e+00> : vector<16xf32>
    %366 = vector.multi_reduction <add>, %365, %cst_133 [1] : vector<16x64xf32> to vector<16xf32>
    %367 = vector.shape_cast %366 : vector<16xf32> to vector<16x1xf32>
    %cst_134 = arith.constant 6.400000e+01 : f32
    %368 = vector.broadcast %cst_134 : f32 to vector<16x1xf32>
    %369 = arith.divf %367, %368 : vector<16x1xf32>
    %cst_135 = arith.constant 9.99999974E-6 : f32
    %370 = vector.broadcast %cst_135 : f32 to vector<16x1xf32>
    %371 = arith.addf %369, %370 : vector<16x1xf32>
    %372 = math.rsqrt %371 : vector<16x1xf32>
    %373 = vector.broadcast %372 : vector<16x1xf32> to vector<16x64xf32>
    %374 = arith.mulf %364, %373 : vector<16x64xf32>
    %375 = vector.broadcast %357 : vector<1x64xf32> to vector<16x64xf32>
    %376 = arith.mulf %374, %375 : vector<16x64xf32>
    %377 = vector.broadcast %358 : vector<1x64xf32> to vector<16x64xf32>
    %378 = arith.addf %376, %377 : vector<16x64xf32>
    %c0_136 = arith.constant 0 : index
    %c0_137 = arith.constant 0 : index
    %c0_138 = arith.constant 0 : index
    %379 = vector.load %arg14[%c0_136, %c0_137, %c0_138] : memref<1x64x2048xf32, #tpu.memory_space<vmem>>, vector<1x64x2048xf32>
    %380 = vector.shape_cast %379 : vector<1x64x2048xf32> to vector<64x2048xf32>
    %cst_139 = arith.constant dense<0.000000e+00> : vector<16x2048xf32>
    %381 = tpu.matmul %378, %380, %cst_139 {dimension_numbers = #tpu.dot_dimension_numbers<[1], [0], [0], [1], [0, 0, 1, 1], [], []>} : vector<16x64xf32>, vector<64x2048xf32>, vector<16x2048xf32> -> vector<16x2048xf32>
    %c0_140 = arith.constant 0 : index
    %c0_141 = arith.constant 0 : index
    %c0_142 = arith.constant 0 : index
    %382 = vector.load %arg15[%c0_140, %c0_141, %c0_142] : memref<1x1x2048xf32, #tpu.memory_space<vmem>>, vector<1x1x2048xf32>
    %383 = vector.shape_cast %382 : vector<1x1x2048xf32> to vector<1x2048xf32>
    %384 = vector.broadcast %383 : vector<1x2048xf32> to vector<16x2048xf32>
    %385 = arith.addf %381, %384 : vector<16x2048xf32>
    %cst_143 = arith.constant 0.000000e+00 : f32
    %386 = vector.broadcast %cst_143 : f32 to vector<16x2048xf32>
    %387 = arith.maximumf %385, %386 : vector<16x2048xf32>
    %c0_144 = arith.constant 0 : index
    %c0_145 = arith.constant 0 : index
    %c0_146 = arith.constant 0 : index
    %388 = vector.load %arg16[%c0_144, %c0_145, %c0_146] : memref<1x2048x64xf32, #tpu.memory_space<vmem>>, vector<1x2048x64xf32>
    %389 = vector.shape_cast %388 : vector<1x2048x64xf32> to vector<2048x64xf32>
    %cst_147 = arith.constant dense<0.000000e+00> : vector<16x64xf32>
    %390 = tpu.matmul %387, %389, %cst_147 {dimension_numbers = #tpu.dot_dimension_numbers<[1], [0], [0], [1], [0, 0, 1, 1], [], []>} : vector<16x2048xf32>, vector<2048x64xf32>, vector<16x64xf32> -> vector<16x64xf32>
    %c0_148 = arith.constant 0 : index
    %c0_149 = arith.constant 0 : index
    %c0_150 = arith.constant 0 : index
    %391 = vector.load %arg17[%c0_148, %c0_149, %c0_150] : memref<1x1x64xf32, #tpu.memory_space<vmem>>, vector<1x1x64xf32>
    %392 = vector.shape_cast %391 : vector<1x1x64xf32> to vector<1x64xf32>
    %393 = vector.broadcast %392 : vector<1x64xf32> to vector<16x64xf32>
    %394 = arith.addf %390, %393 : vector<16x64xf32>
    %395 = arith.addf %378, %394 : vector<16x64xf32>
    %396 = vector.extract_strided_slice %4 {offsets = [2, 0], sizes = [1, 64], strides = [1, 1]} : vector<3x64xf32> to vector<1x64xf32>
    %397 = vector.extract_strided_slice %6 {offsets = [2, 0], sizes = [1, 64], strides = [1, 1]} : vector<3x64xf32> to vector<1x64xf32>
    %cst_151 = arith.constant dense<0.000000e+00> : vector<16xf32>
    %398 = vector.multi_reduction <add>, %395, %cst_151 [1] : vector<16x64xf32> to vector<16xf32>
    %399 = vector.shape_cast %398 : vector<16xf32> to vector<16x1xf32>
    %cst_152 = arith.constant 6.400000e+01 : f32
    %400 = vector.broadcast %cst_152 : f32 to vector<16x1xf32>
    %401 = arith.divf %399, %400 : vector<16x1xf32>
    %402 = vector.broadcast %401 : vector<16x1xf32> to vector<16x64xf32>
    %403 = arith.subf %395, %402 : vector<16x64xf32>
    %404 = arith.mulf %403, %403 : vector<16x64xf32>
    %cst_153 = arith.constant dense<0.000000e+00> : vector<16xf32>
    %405 = vector.multi_reduction <add>, %404, %cst_153 [1] : vector<16x64xf32> to vector<16xf32>
    %406 = vector.shape_cast %405 : vector<16xf32> to vector<16x1xf32>
    %cst_154 = arith.constant 6.400000e+01 : f32
    %407 = vector.broadcast %cst_154 : f32 to vector<16x1xf32>
    %408 = arith.divf %406, %407 : vector<16x1xf32>
    %cst_155 = arith.constant 9.99999974E-6 : f32
    %409 = vector.broadcast %cst_155 : f32 to vector<16x1xf32>
    %410 = arith.addf %408, %409 : vector<16x1xf32>
    %411 = math.rsqrt %410 : vector<16x1xf32>
    %412 = vector.broadcast %411 : vector<16x1xf32> to vector<16x64xf32>
    %413 = arith.mulf %403, %412 : vector<16x64xf32>
    %414 = vector.broadcast %396 : vector<1x64xf32> to vector<16x64xf32>
    %415 = arith.mulf %413, %414 : vector<16x64xf32>
    %416 = vector.broadcast %397 : vector<1x64xf32> to vector<16x64xf32>
    %417 = arith.addf %415, %416 : vector<16x64xf32>
    %418 = vector.shape_cast %417 : vector<16x64xf32> to vector<2x8x64xf32>
    %c0_156 = arith.constant 0 : index
    %c0_157 = arith.constant 0 : index
    %c0_158 = arith.constant 0 : index
    %419 = vector.load %arg23[%c0_156, %c0_157, %c0_158] : memref<2x8x64xf32, #tpu.memory_space<vmem>>, vector<2x8x64xf32>
    tpu.vector_store %arg23[%c0_156, %c0_157, %c0_158], %418 {strides = array<i32>} : memref<2x8x64xf32, #tpu.memory_space<vmem>>, vector<2x8x64xf32>,
    %c5_i32 = arith.constant 5 : i32
    %420 = arith.cmpi eq, %arg0, %c5_i32 : i32
    %421 = arith.extui %420 : i1 to i32
    %c0_i32_159 = arith.constant 0 : i32
    %422 = arith.cmpi ne, %421, %c0_i32_159 : i32
    scf.if %422 {
      %c0_160 = arith.constant 0 : index
      %c0_161 = arith.constant 0 : index
      %423 = vector.load %arg20[%c0_160, %c0_161] : memref<64x128xf32, #tpu.memory_space<vmem>>, vector<64x128xf32>
      %cst_162 = arith.constant dense<0.000000e+00> : vector<16x128xf32>
      %424 = tpu.matmul %417, %423, %cst_162 {dimension_numbers = #tpu.dot_dimension_numbers<[1], [0], [0], [1], [0, 0, 1, 1], [], []>} : vector<16x64xf32>, vector<64x128xf32>, vector<16x128xf32> -> vector<16x128xf32>
      %c0_163 = arith.constant 0 : index
      %c0_164 = arith.constant 0 : index
      %425 = vector.load %arg21[%c0_163, %c0_164] : memref<1x128xf32, #tpu.memory_space<vmem>>, vector<1x128xf32>
      %426 = vector.broadcast %425 : vector<1x128xf32> to vector<16x128xf32>
      %427 = arith.addf %424, %426 : vector<16x128xf32>
      %428 = vector.shape_cast %427 : vector<16x128xf32> to vector<2x8x128xf32>
      %c0_165 = arith.constant 0 : index
      %c0_166 = arith.constant 0 : index
      %c0_167 = arith.constant 0 : index
      %429 = vector.load %arg22[%c0_165, %c0_166, %c0_167] : memref<2x8x128xf32, #tpu.memory_space<vmem>>, vector<2x8x128xf32>
      tpu.vector_store %arg22[%c0_165, %c0_166, %c0_167], %428 {strides = array<i32>} : memref<2x8x128xf32, #tpu.memory_space<vmem>>, vector<2x8x128xf32>,
    } else {
    }
    return
  }
  func.func @transform_0(%arg0: i32) -> (i32, i32, i32) {
    %c0_i32 = arith.constant 0 : i32
    %c0_i32_0 = arith.constant 0 : i32
    %c0_i32_1 = arith.constant 0 : i32
    %c0_i32_2 = arith.constant 0 : i32
    return %c0_i32, %c0_i32_0, %c0_i32_1 : i32, i32, i32
  }
  func.func @transform_1(%arg0: i32) -> (i32, i32) {
    %c0_i32 = arith.constant 0 : i32
    %c0_i32_0 = arith.constant 0 : i32
    %c0_i32_1 = arith.constant 0 : i32
    return %c0_i32, %c0_i32_0 : i32, i32
  }
  func.func @transform_2(%arg0: i32) -> (i32, i32, i32) {
    %c0_i32 = arith.constant 0 : i32
    %c0_i32_0 = arith.constant 0 : i32
    %c0_i32_1 = arith.constant 0 : i32
    %c0_i32_2 = arith.constant 0 : i32
    return %c0_i32, %c0_i32_0, %c0_i32_1 : i32, i32, i32
  }
  func.func @transform_3(%arg0: i32) -> (i32, i32, i32) {
    %c0_i32 = arith.constant 0 : i32
    %c0_i32_0 = arith.constant 0 : i32
    %c0_i32_1 = arith.constant 0 : i32
    return %arg0, %c0_i32, %c0_i32_0 : i32, i32, i32
  }
  func.func @transform_4(%arg0: i32) -> (i32, i32, i32) {
    %c0_i32 = arith.constant 0 : i32
    %c0_i32_0 = arith.constant 0 : i32
    %c0_i32_1 = arith.constant 0 : i32
    return %arg0, %c0_i32, %c0_i32_0 : i32, i32, i32
  }
  func.func @transform_5(%arg0: i32) -> (i32, i32, i32) {
    %c0_i32 = arith.constant 0 : i32
    %c0_i32_0 = arith.constant 0 : i32
    %c0_i32_1 = arith.constant 0 : i32
    return %arg0, %c0_i32, %c0_i32_0 : i32, i32, i32
  }
  func.func @transform_6(%arg0: i32) -> (i32, i32, i32) {
    %c0_i32 = arith.constant 0 : i32
    %c0_i32_0 = arith.constant 0 : i32
    %c0_i32_1 = arith.constant 0 : i32
    return %arg0, %c0_i32, %c0_i32_0 : i32, i32, i32
  }
  func.func @transform_7(%arg0: i32) -> (i32, i32, i32) {
    %c0_i32 = arith.constant 0 : i32
    %c0_i32_0 = arith.constant 0 : i32
    %c0_i32_1 = arith.constant 0 : i32
    return %arg0, %c0_i32, %c0_i32_0 : i32, i32, i32
  }
  func.func @transform_8(%arg0: i32) -> (i32, i32, i32) {
    %c0_i32 = arith.constant 0 : i32
    %c0_i32_0 = arith.constant 0 : i32
    %c0_i32_1 = arith.constant 0 : i32
    return %arg0, %c0_i32, %c0_i32_0 : i32, i32, i32
  }
  func.func @transform_9(%arg0: i32) -> (i32, i32, i32) {
    %c0_i32 = arith.constant 0 : i32
    %c0_i32_0 = arith.constant 0 : i32
    %c0_i32_1 = arith.constant 0 : i32
    return %arg0, %c0_i32, %c0_i32_0 : i32, i32, i32
  }
  func.func @transform_10(%arg0: i32) -> (i32, i32, i32) {
    %c0_i32 = arith.constant 0 : i32
    %c0_i32_0 = arith.constant 0 : i32
    %c0_i32_1 = arith.constant 0 : i32
    return %arg0, %c0_i32, %c0_i32_0 : i32, i32, i32
  }
  func.func @transform_11(%arg0: i32) -> (i32, i32, i32) {
    %c0_i32 = arith.constant 0 : i32
    %c0_i32_0 = arith.constant 0 : i32
    %c0_i32_1 = arith.constant 0 : i32
    return %arg0, %c0_i32, %c0_i32_0 : i32, i32, i32
  }
  func.func @transform_12(%arg0: i32) -> (i32, i32, i32) {
    %c0_i32 = arith.constant 0 : i32
    %c0_i32_0 = arith.constant 0 : i32
    %c0_i32_1 = arith.constant 0 : i32
    return %arg0, %c0_i32, %c0_i32_0 : i32, i32, i32
  }
  func.func @transform_13(%arg0: i32) -> (i32, i32, i32) {
    %c0_i32 = arith.constant 0 : i32
    %c0_i32_0 = arith.constant 0 : i32
    %c0_i32_1 = arith.constant 0 : i32
    return %arg0, %c0_i32, %c0_i32_0 : i32, i32, i32
  }
  func.func @transform_14(%arg0: i32) -> (i32, i32, i32) {
    %c0_i32 = arith.constant 0 : i32
    %c0_i32_0 = arith.constant 0 : i32
    %c0_i32_1 = arith.constant 0 : i32
    return %arg0, %c0_i32, %c0_i32_0 : i32, i32, i32
  }
  func.func @transform_15(%arg0: i32) -> (i32, i32, i32) {
    %c0_i32 = arith.constant 0 : i32
    %c0_i32_0 = arith.constant 0 : i32
    %c0_i32_1 = arith.constant 0 : i32
    return %arg0, %c0_i32, %c0_i32_0 : i32, i32, i32
  }
  func.func @transform_16(%arg0: i32) -> (i32, i32, i32) {
    %c0_i32 = arith.constant 0 : i32
    %c0_i32_0 = arith.constant 0 : i32
    %c0_i32_1 = arith.constant 0 : i32
    return %arg0, %c0_i32, %c0_i32_0 : i32, i32, i32
  }
  func.func @transform_17(%arg0: i32) -> (i32, i32, i32) {
    %c0_i32 = arith.constant 0 : i32
    %c0_i32_0 = arith.constant 0 : i32
    %c0_i32_1 = arith.constant 0 : i32
    return %arg0, %c0_i32, %c0_i32_0 : i32, i32, i32
  }
  func.func @transform_18(%arg0: i32) -> (i32, i32, i32) {
    %c0_i32 = arith.constant 0 : i32
    %c0_i32_0 = arith.constant 0 : i32
    %c0_i32_1 = arith.constant 0 : i32
    return %arg0, %c0_i32, %c0_i32_0 : i32, i32, i32
  }
  func.func @transform_19(%arg0: i32) -> (i32, i32) {
    %c0_i32 = arith.constant 0 : i32
    %c0_i32_0 = arith.constant 0 : i32
    %c0_i32_1 = arith.constant 0 : i32
    return %c0_i32, %c0_i32_0 : i32, i32
  }
  func.func @transform_20(%arg0: i32) -> (i32, i32) {
    %c0_i32 = arith.constant 0 : i32
    %c0_i32_0 = arith.constant 0 : i32
    %c0_i32_1 = arith.constant 0 : i32
    return %c0_i32, %c0_i32_0 : i32, i32
  }
  func.func @transform_21(%arg0: i32) -> (i32, i32, i32) {
    %c0_i32 = arith.constant 0 : i32
    %c0_i32_0 = arith.constant 0 : i32
    %c0_i32_1 = arith.constant 0 : i32
    %c0_i32_2 = arith.constant 0 : i32
    return %c0_i32, %c0_i32_0, %c0_i32_1 : i32, i32, i32
  }
}

</mosaic_0001>

<llo_original>
// kernel: dvqvae_decoder_forward.1
$region0: #{dvqvae_decoder_forward.1}
  #allocation0 [shape = 'u32[]', space=smem, size = 0x4, offset = 0x4, fixed_abs, tag = 'smem constant byte address 0x4 - core index']
  #allocation1 [shape = 'u32[144,128]{1,0:T(1,128)}', space=vmem, size = 0x12000, scoped, tag = 'internal scratch']
  #allocation2 [shape = 'f32[2,8,64]{2,1,0:T(8,128)}', space=vmem, size = 0x2000, scoped, tag = 'scratch operand']
  %s0 = inlined_call_operand.vmem [shape: f32[2,8,64], index: 0, kind: input, shape index: {}]
  %s1 = inlined_call_operand.vmem [shape: f32[5000,64], index: 1, kind: input, shape index: {}]
  %s2 = inlined_call_operand.vmem [shape: f32[2,8,64], index: 2, kind: input, shape index: {}]
  %s3 = inlined_call_operand.vmem [shape: f32[6,64,192], index: 3, kind: input, shape index: {}]
  %s4 = inlined_call_operand.vmem [shape: f32[6,1,192], index: 4, kind: input, shape index: {}]
  %s5 = inlined_call_operand.vmem [shape: f32[6,64,64], index: 5, kind: input, shape index: {}]
  %s6 = inlined_call_operand.vmem [shape: f32[6,1,64], index: 6, kind: input, shape index: {}]
  %s7 = inlined_call_operand.vmem [shape: f32[6,64,64], index: 7, kind: input, shape index: {}]
  %s8 = inlined_call_operand.vmem [shape: f32[6,1,64], index: 8, kind: input, shape index: {}]
  %s9 = inlined_call_operand.vmem [shape: f32[6,64,128], index: 9, kind: input, shape index: {}]
  %s10 = inlined_call_operand.vmem [shape: f32[6,1,128], index: 10, kind: input, shape index: {}]
  %s11 = inlined_call_operand.vmem [shape: f32[6,64,64], index: 11, kind: input, shape index: {}]
  %s12 = inlined_call_operand.vmem [shape: f32[6,1,64], index: 12, kind: input, shape index: {}]
  %s13 = inlined_call_operand.vmem [shape: f32[6,64,2048], index: 13, kind: input, shape index: {}]
  %s14 = inlined_call_operand.vmem [shape: f32[6,1,2048], index: 14, kind: input, shape index: {}]
  %s15 = inlined_call_operand.vmem [shape: f32[6,2048,64], index: 15, kind: input, shape index: {}]
  %s16 = inlined_call_operand.vmem [shape: f32[6,1,64], index: 16, kind: input, shape index: {}]
  %s17 = inlined_call_operand.vmem [shape: f32[6,3,64], index: 17, kind: input, shape index: {}]
  %s18 = inlined_call_operand.vmem [shape: f32[6,3,64], index: 18, kind: input, shape index: {}]
  %s19 = inlined_call_operand.vmem [shape: f32[64,128], index: 19, kind: input, shape index: {}]
  %s20 = inlined_call_operand.vmem [shape: f32[1,128], index: 20, kind: input, shape index: {}]
  %s21 = inlined_call_operand.hbm [shape: f32[2,8,128], index: 21, kind: output, shape index: {}]
  %s22 = sld [smem:[#allocation0]]
  $region125: #{dvqvae_decoder_forward.1} parent=0
    _
  %s24 = ssub.s32 1, %s22
  %s25 = scalar_select 0, %s24, %s22
  $region1: #{dvqvae_decoder_forward.1} parent=0
    #allocation3 [shape = 'u8[8192]{0}', space=vmem, size = 0x2000, scoped, tag = 'output window, operand 0, single buffered']
    #allocation4 [shape = 's32[2]{0}', space=sflag, size = 0x8, scoped, tag = 'scoped memory for dvqvae_decoder_forward.1']
    %26 = vsyncpa [#allocation4], 0
    loop: start=0, step=1, limit=8
    $region2: #{dvqvae_decoder_forward.1} parent=1 // loop_pre_header
      _
    $region3: #{dvqvae_decoder_forward.1} parent=1 // loop_header
      %s28 = sphi 0, %s32
      %p29 = scmp.ge.s32.totalorder %s28, 8
      %s36 = sphi 0, %s36
      %s38 = sphi 0, %s36
      %s39 = sphi 0, %s38
      %s53 = sphi 0, %s39
      %s57 = sphi 0, %s57
      %s59 = sphi 0, %s57
      %s60 = sphi 0, %s59
      %s74 = sphi 0, %s60
      %s78 = sphi 0, %s78
      %s80 = sphi 0, %s78
      %s81 = sphi 0, %s80
      %s95 = sphi 0, %s81
      %s101 = sphi 0, %s103
      %s104 = sphi 0, %s101
      %s105 = sphi 0, %s104
      %s121 = sphi 0, %s105
      %s127 = sphi 0, %s129
      %s130 = sphi 0, %s127
      %s131 = sphi 0, %s130
      %s147 = sphi 0, %s131
      %s153 = sphi 0, %s155
      %s156 = sphi 0, %s153
      %s157 = sphi 0, %s156
      %s173 = sphi 0, %s157
      %s179 = sphi 0, %s181
      %s182 = sphi 0, %s179
      %s183 = sphi 0, %s182
      %s199 = sphi 0, %s183
      %s205 = sphi 0, %s207
      %s208 = sphi 0, %s205
      %s209 = sphi 0, %s208
      %s225 = sphi 0, %s209
      %s231 = sphi 0, %s233
      %s234 = sphi 0, %s231
      %s235 = sphi 0, %s234
      %s251 = sphi 0, %s235
      %s257 = sphi 0, %s259
      %s260 = sphi 0, %s257
      %s261 = sphi 0, %s260
      %s277 = sphi 0, %s261
      %s283 = sphi 0, %s285
      %s286 = sphi 0, %s283
      %s287 = sphi 0, %s286
      %s303 = sphi 0, %s287
      %s309 = sphi 0, %s311
      %s312 = sphi 0, %s309
      %s313 = sphi 0, %s312
      %s329 = sphi 0, %s313
      %s335 = sphi 0, %s337
      %s338 = sphi 0, %s335
      %s339 = sphi 0, %s338
      %s355 = sphi 0, %s339
      %s361 = sphi 0, %s363
      %s364 = sphi 0, %s361
      %s365 = sphi 0, %s364
      %s381 = sphi 0, %s365
      %s387 = sphi 0, %s389
      %s390 = sphi 0, %s387
      %s391 = sphi 0, %s390
      %s407 = sphi 0, %s391
      %s413 = sphi 0, %s415
      %s416 = sphi 0, %s413
      %s417 = sphi 0, %s416
      %s433 = sphi 0, %s417
      %s439 = sphi 0, %s441
      %s442 = sphi 0, %s439
      %s443 = sphi 0, %s442
      %s459 = sphi 0, %s443
      %s465 = sphi 0, %s467
      %s468 = sphi 0, %s465
      %s469 = sphi 0, %s468
      %s485 = sphi 0, %s469
      %s491 = sphi 0, %s493
      %s494 = sphi 0, %s491
      %s495 = sphi 0, %s494
      %s511 = sphi 0, %s495
      %s515 = sphi 0, %s515
      %s517 = sphi 0, %s515
      %s518 = sphi 0, %s517
      %s532 = sphi 0, %s518
      %s536 = sphi 0, %s536
      %s538 = sphi 0, %s536
      %s539 = sphi 0, %s538
      %s553 = sphi 0, %s539
      %s557 = sphi 0, %s557
      %s559 = sphi 0, %s557
      %s560 = sphi 0, %s559
      %s574 = sphi 0, %s560
    $region4: #{dvqvae_decoder_forward.1} parent=1 // loop_header_branch
      %31 = sbr.rel (%p29) target = $region8
    $region5: #{dvqvae_decoder_forward.1} parent=1 // loop_body
      %s33 = ssub.s32 %s28, 1
      %s34 = ssub.s32 %s28, 2
      %s35 = sadd.s32 %s28, 1
      %s37 = sadd.s32 %s36, 1
      %p40 = scmp.eq.s32.totalorder %s28, 5
      %p41 = scmp.ne.s32.totalorder %s36, %s38
      %p42 = scmp.eq.s32.totalorder %s28, 0
      %p43 = por %p41, %p42
      %p44 = scmp.ne.s32.totalorder %s36, %s38
      %p45 = scmp.eq.s32.totalorder %s33, 5
      %p46 = por %p44, %p45
      %p47 = scmp.ne.s32.totalorder %s38, %s39
      %p48 = scmp.eq.s32.totalorder %s33, 0
      %p49 = por %p47, %p48
      %p50 = scmp.ne.s32.totalorder %s38, %s39
      %p51 = scmp.eq.s32.totalorder %s34, 5
      %p52 = por %p50, %p51
      %p54 = scmp.ne.s32.totalorder %s39, %s53
      %p55 = scmp.eq.s32.totalorder %s34, 0
      %p56 = por %p54, %p55
      %s58 = sadd.s32 %s57, 1
      %p61 = scmp.eq.s32.totalorder %s28, 5
      %p62 = scmp.ne.s32.totalorder %s57, %s59
      %p63 = scmp.eq.s32.totalorder %s28, 0
      %p64 = por %p62, %p63
      %p65 = scmp.ne.s32.totalorder %s57, %s59
      %p66 = scmp.eq.s32.totalorder %s33, 5
      %p67 = por %p65, %p66
      %p68 = scmp.ne.s32.totalorder %s59, %s60
      %p69 = scmp.eq.s32.totalorder %s33, 0
      %p70 = por %p68, %p69
      %p71 = scmp.ne.s32.totalorder %s59, %s60
      %p72 = scmp.eq.s32.totalorder %s34, 5
      %p73 = por %p71, %p72
      %p75 = scmp.ne.s32.totalorder %s60, %s74
      %p76 = scmp.eq.s32.totalorder %s34, 0
      %p77 = por %p75, %p76
      %s79 = sadd.s32 %s78, 1
      %p82 = scmp.eq.s32.totalorder %s28, 5
      %p83 = scmp.ne.s32.totalorder %s78, %s80
      %p84 = scmp.eq.s32.totalorder %s28, 0
      %p85 = por %p83, %p84
      %p86 = scmp.ne.s32.totalorder %s78, %s80
      %p87 = scmp.eq.s32.totalorder %s33, 5
      %p88 = por %p86, %p87
      %p89 = scmp.ne.s32.totalorder %s80, %s81
      %p90 = scmp.eq.s32.totalorder %s33, 0
      %p91 = por %p89, %p90
      %p92 = scmp.ne.s32.totalorder %s80, %s81
      %p93 = scmp.eq.s32.totalorder %s34, 5
      %p94 = por %p92, %p93
      %p96 = scmp.ne.s32.totalorder %s81, %s95
      %p97 = scmp.eq.s32.totalorder %s34, 0
      %p98 = por %p96, %p97
      %s99 = ssub.s32 %s28, %s35
      %p100 = scmp.eq.s32.totalorder %s99, 0
      %s102 = sadd.s32 %s101, 1
      %s103 = scalar_select %p100, %s101, %s102
      %p106 = pneg %p100
      %p107 = scmp.eq.s32.totalorder %s28, 5
      %p108 = por %p106, %p107
      %p109 = scmp.ne.s32.totalorder %s101, %s104
      %p110 = scmp.eq.s32.totalorder %s28, 0
      %p111 = por %p109, %p110
      %p112 = scmp.ne.s32.totalorder %s101, %s104
      %p113 = scmp.eq.s32.totalorder %s33, 5
      %p114 = por %p112, %p113
      %p115 = scmp.ne.s32.totalorder %s104, %s105
      %p116 = scmp.eq.s32.totalorder %s33, 0
      %p117 = por %p115, %p116
      %p118 = scmp.ne.s32.totalorder %s104, %s105
      %p119 = scmp.eq.s32.totalorder %s34, 5
      %p120 = por %p118, %p119
      %p122 = scmp.ne.s32.totalorder %s105, %s121
      %p123 = scmp.eq.s32.totalorder %s34, 0
      %p124 = por %p122, %p123
      %s125 = ssub.s32 %s28, %s35
      %p126 = scmp.eq.s32.totalorder %s125, 0
      %s128 = sadd.s32 %s127, 1
      %s129 = scalar_select %p126, %s127, %s128
      %p132 = pneg %p126
      %p133 = scmp.eq.s32.totalorder %s28, 5
      %p134 = por %p132, %p133
      %p135 = scmp.ne.s32.totalorder %s127, %s130
      %p136 = scmp.eq.s32.totalorder %s28, 0
      %p137 = por %p135, %p136
      %p138 = scmp.ne.s32.totalorder %s127, %s130
      %p139 = scmp.eq.s32.totalorder %s33, 5
      %p140 = por %p138, %p139
      %p141 = scmp.ne.s32.totalorder %s130, %s131
      %p142 = scmp.eq.s32.totalorder %s33, 0
      %p143 = por %p141, %p142
      %p144 = scmp.ne.s32.totalorder %s130, %s131
      %p145 = scmp.eq.s32.totalorder %s34, 5
      %p146 = por %p144, %p145
      %p148 = scmp.ne.s32.totalorder %s131, %s147
      %p149 = scmp.eq.s32.totalorder %s34, 0
      %p150 = por %p148, %p149
      %s151 = ssub.s32 %s28, %s35
      %p152 = scmp.eq.s32.totalorder %s151, 0
      %s154 = sadd.s32 %s153, 1
      %s155 = scalar_select %p152, %s153, %s154
      %p158 = pneg %p152
      %p159 = scmp.eq.s32.totalorder %s28, 5
      %p160 = por %p158, %p159
      %p161 = scmp.ne.s32.totalorder %s153, %s156
      %p162 = scmp.eq.s32.totalorder %s28, 0
      %p163 = por %p161, %p162
      %p164 = scmp.ne.s32.totalorder %s153, %s156
      %p165 = scmp.eq.s32.totalorder %s33, 5
      %p166 = por %p164, %p165
      %p167 = scmp.ne.s32.totalorder %s156, %s157
      %p168 = scmp.eq.s32.totalorder %s33, 0
      %p169 = por %p167, %p168
      %p170 = scmp.ne.s32.totalorder %s156, %s157
      %p171 = scmp.eq.s32.totalorder %s34, 5
      %p172 = por %p170, %p171
      %p174 = scmp.ne.s32.totalorder %s157, %s173
      %p175 = scmp.eq.s32.totalorder %s34, 0
      %p176 = por %p174, %p175
      %s177 = ssub.s32 %s28, %s35
      %p178 = scmp.eq.s32.totalorder %s177, 0
      %s180 = sadd.s32 %s179, 1
      %s181 = scalar_select %p178, %s179, %s180
      %p184 = pneg %p178
      %p185 = scmp.eq.s32.totalorder %s28, 5
      %p186 = por %p184, %p185
      %p187 = scmp.ne.s32.totalorder %s179, %s182
      %p188 = scmp.eq.s32.totalorder %s28, 0
      %p189 = por %p187, %p188
      %p190 = scmp.ne.s32.totalorder %s179, %s182
      %p191 = scmp.eq.s32.totalorder %s33, 5
      %p192 = por %p190, %p191
      %p193 = scmp.ne.s32.totalorder %s182, %s183
      %p194 = scmp.eq.s32.totalorder %s33, 0
      %p195 = por %p193, %p194
      %p196 = scmp.ne.s32.totalorder %s182, %s183
      %p197 = scmp.eq.s32.totalorder %s34, 5
      %p198 = por %p196, %p197
      %p200 = scmp.ne.s32.totalorder %s183, %s199
      %p201 = scmp.eq.s32.totalorder %s34, 0
      %p202 = por %p200, %p201
      %s203 = ssub.s32 %s28, %s35
      %p204 = scmp.eq.s32.totalorder %s203, 0
      %s206 = sadd.s32 %s205, 1
      %s207 = scalar_select %p204, %s205, %s206
      %p210 = pneg %p204
      %p211 = scmp.eq.s32.totalorder %s28, 5
      %p212 = por %p210, %p211
      %p213 = scmp.ne.s32.totalorder %s205, %s208
      %p214 = scmp.eq.s32.totalorder %s28, 0
      %p215 = por %p213, %p214
      %p216 = scmp.ne.s32.totalorder %s205, %s208
      %p217 = scmp.eq.s32.totalorder %s33, 5
      %p218 = por %p216, %p217
      %p219 = scmp.ne.s32.totalorder %s208, %s209
      %p220 = scmp.eq.s32.totalorder %s33, 0
      %p221 = por %p219, %p220
      %p222 = scmp.ne.s32.totalorder %s208, %s209
      %p223 = scmp.eq.s32.totalorder %s34, 5
      %p224 = por %p222, %p223
      %p226 = scmp.ne.s32.totalorder %s209, %s225
      %p227 = scmp.eq.s32.totalorder %s34, 0
      %p228 = por %p226, %p227
      %s229 = ssub.s32 %s28, %s35
      %p230 = scmp.eq.s32.totalorder %s229, 0
      %s232 = sadd.s32 %s231, 1
      %s233 = scalar_select %p230, %s231, %s232
      %p236 = pneg %p230
      %p237 = scmp.eq.s32.totalorder %s28, 5
      %p238 = por %p236, %p237
      %p239 = scmp.ne.s32.totalorder %s231, %s234
      %p240 = scmp.eq.s32.totalorder %s28, 0
      %p241 = por %p239, %p240
      %p242 = scmp.ne.s32.totalorder %s231, %s234
      %p243 = scmp.eq.s32.totalorder %s33, 5
      %p244 = por %p242, %p243
      %p245 = scmp.ne.s32.totalorder %s234, %s235
      %p246 = scmp.eq.s32.totalorder %s33, 0
      %p247 = por %p245, %p246
      %p248 = scmp.ne.s32.totalorder %s234, %s235
      %p249 = scmp.eq.s32.totalorder %s34, 5
      %p250 = por %p248, %p249
      %p252 = scmp.ne.s32.totalorder %s235, %s251
      %p253 = scmp.eq.s32.totalorder %s34, 0
      %p254 = por %p252, %p253
      %s255 = ssub.s32 %s28, %s35
      %p256 = scmp.eq.s32.totalorder %s255, 0
      %s258 = sadd.s32 %s257, 1
      %s259 = scalar_select %p256, %s257, %s258
      %p262 = pneg %p256
      %p263 = scmp.eq.s32.totalorder %s28, 5
      %p264 = por %p262, %p263
      %p265 = scmp.ne.s32.totalorder %s257, %s260
      %p266 = scmp.eq.s32.totalorder %s28, 0
      %p267 = por %p265, %p266
      %p268 = scmp.ne.s32.totalorder %s257, %s260
      %p269 = scmp.eq.s32.totalorder %s33, 5
      %p270 = por %p268, %p269
      %p271 = scmp.ne.s32.totalorder %s260, %s261
      %p272 = scmp.eq.s32.totalorder %s33, 0
      %p273 = por %p271, %p272
      %p274 = scmp.ne.s32.totalorder %s260, %s261
      %p275 = scmp.eq.s32.totalorder %s34, 5
      %p276 = por %p274, %p275
      %p278 = scmp.ne.s32.totalorder %s261, %s277
      %p279 = scmp.eq.s32.totalorder %s34, 0
      %p280 = por %p278, %p279
      %s281 = ssub.s32 %s28, %s35
      %p282 = scmp.eq.s32.totalorder %s281, 0
      %s284 = sadd.s32 %s283, 1
      %s285 = scalar_select %p282, %s283, %s284
      %p288 = pneg %p282
      %p289 = scmp.eq.s32.totalorder %s28, 5
      %p290 = por %p288, %p289
      %p291 = scmp.ne.s32.totalorder %s283, %s286
      %p292 = scmp.eq.s32.totalorder %s28, 0
      %p293 = por %p291, %p292
      %p294 = scmp.ne.s32.totalorder %s283, %s286
      %p295 = scmp.eq.s32.totalorder %s33, 5
      %p296 = por %p294, %p295
      %p297 = scmp.ne.s32.totalorder %s286, %s287
      %p298 = scmp.eq.s32.totalorder %s33, 0
      %p299 = por %p297, %p298
      %p300 = scmp.ne.s32.totalorder %s286, %s287
      %p301 = scmp.eq.s32.totalorder %s34, 5
      %p302 = por %p300, %p301
      %p304 = scmp.ne.s32.totalorder %s287, %s303
      %p305 = scmp.eq.s32.totalorder %s34, 0
      %p306 = por %p304, %p305
      %s307 = ssub.s32 %s28, %s35
      %p308 = scmp.eq.s32.totalorder %s307, 0
      %s310 = sadd.s32 %s309, 1
      %s311 = scalar_select %p308, %s309, %s310
      %p314 = pneg %p308
      %p315 = scmp.eq.s32.totalorder %s28, 5
      %p316 = por %p314, %p315
      %p317 = scmp.ne.s32.totalorder %s309, %s312
      %p318 = scmp.eq.s32.totalorder %s28, 0
      %p319 = por %p317, %p318
      %p320 = scmp.ne.s32.totalorder %s309, %s312
      %p321 = scmp.eq.s32.totalorder %s33, 5
      %p322 = por %p320, %p321
      %p323 = scmp.ne.s32.totalorder %s312, %s313
      %p324 = scmp.eq.s32.totalorder %s33, 0
      %p325 = por %p323, %p324
      %p326 = scmp.ne.s32.totalorder %s312, %s313
      %p327 = scmp.eq.s32.totalorder %s34, 5
      %p328 = por %p326, %p327
      %p330 = scmp.ne.s32.totalorder %s313, %s329
      %p331 = scmp.eq.s32.totalorder %s34, 0
      %p332 = por %p330, %p331
      %s333 = ssub.s32 %s28, %s35
      %p334 = scmp.eq.s32.totalorder %s333, 0
      %s336 = sadd.s32 %s335, 1
      %s337 = scalar_select %p334, %s335, %s336
      %p340 = pneg %p334
      %p341 = scmp.eq.s32.totalorder %s28, 5
      %p342 = por %p340, %p341
      %p343 = scmp.ne.s32.totalorder %s335, %s338
      %p344 = scmp.eq.s32.totalorder %s28, 0
      %p345 = por %p343, %p344
      %p346 = scmp.ne.s32.totalorder %s335, %s338
      %p347 = scmp.eq.s32.totalorder %s33, 5
      %p348 = por %p346, %p347
      %p349 = scmp.ne.s32.totalorder %s338, %s339
      %p350 = scmp.eq.s32.totalorder %s33, 0
      %p351 = por %p349, %p350
      %p352 = scmp.ne.s32.totalorder %s338, %s339
      %p353 = scmp.eq.s32.totalorder %s34, 5
      %p354 = por %p352, %p353
      %p356 = scmp.ne.s32.totalorder %s339, %s355
      %p357 = scmp.eq.s32.totalorder %s34, 0
      %p358 = por %p356, %p357
      %s359 = ssub.s32 %s28, %s35
      %p360 = scmp.eq.s32.totalorder %s359, 0
      %s362 = sadd.s32 %s361, 1
      %s363 = scalar_select %p360, %s361, %s362
      %p366 = pneg %p360
      %p367 = scmp.eq.s32.totalorder %s28, 5
      %p368 = por %p366, %p367
      %p369 = scmp.ne.s32.totalorder %s361, %s364
      %p370 = scmp.eq.s32.totalorder %s28, 0
      %p371 = por %p369, %p370
      %p372 = scmp.ne.s32.totalorder %s361, %s364
      %p373 = scmp.eq.s32.totalorder %s33, 5
      %p374 = por %p372, %p373
      %p375 = scmp.ne.s32.totalorder %s364, %s365
      %p376 = scmp.eq.s32.totalorder %s33, 0
      %p377 = por %p375, %p376
      %p378 = scmp.ne.s32.totalorder %s364, %s365
      %p379 = scmp.eq.s32.totalorder %s34, 5
      %p380 = por %p378, %p379
      %p382 = scmp.ne.s32.totalorder %s365, %s381
      %p383 = scmp.eq.s32.totalorder %s34, 0
      %p384 = por %p382, %p383
      %s385 = ssub.s32 %s28, %s35
      %p386 = scmp.eq.s32.totalorder %s385, 0
      %s388 = sadd.s32 %s387, 1
      %s389 = scalar_select %p386, %s387, %s388
      %p392 = pneg %p386
      %p393 = scmp.eq.s32.totalorder %s28, 5
      %p394 = por %p392, %p393
      %p395 = scmp.ne.s32.totalorder %s387, %s390
      %p396 = scmp.eq.s32.totalorder %s28, 0
      %p397 = por %p395, %p396
      %p398 = scmp.ne.s32.totalorder %s387, %s390
      %p399 = scmp.eq.s32.totalorder %s33, 5
      %p400 = por %p398, %p399
      %p401 = scmp.ne.s32.totalorder %s390, %s391
      %p402 = scmp.eq.s32.totalorder %s33, 0
      %p403 = por %p401, %p402
      %p404 = scmp.ne.s32.totalorder %s390, %s391
      %p405 = scmp.eq.s32.totalorder %s34, 5
      %p406 = por %p404, %p405
      %p408 = scmp.ne.s32.totalorder %s391, %s407
      %p409 = scmp.eq.s32.totalorder %s34, 0
      %p410 = por %p408, %p409
      %s411 = ssub.s32 %s28, %s35
      %p412 = scmp.eq.s32.totalorder %s411, 0
      %s414 = sadd.s32 %s413, 1
      %s415 = scalar_select %p412, %s413, %s414
      %p418 = pneg %p412
      %p419 = scmp.eq.s32.totalorder %s28, 5
      %p420 = por %p418, %p419
      %p421 = scmp.ne.s32.totalorder %s413, %s416
      %p422 = scmp.eq.s32.totalorder %s28, 0
      %p423 = por %p421, %p422
      %p424 = scmp.ne.s32.totalorder %s413, %s416
      %p425 = scmp.eq.s32.totalorder %s33, 5
      %p426 = por %p424, %p425
      %p427 = scmp.ne.s32.totalorder %s416, %s417
      %p428 = scmp.eq.s32.totalorder %s33, 0
      %p429 = por %p427, %p428
      %p430 = scmp.ne.s32.totalorder %s416, %s417
      %p431 = scmp.eq.s32.totalorder %s34, 5
      %p432 = por %p430, %p431
      %p434 = scmp.ne.s32.totalorder %s417, %s433
      %p435 = scmp.eq.s32.totalorder %s34, 0
      %p436 = por %p434, %p435
      %s437 = ssub.s32 %s28, %s35
      %p438 = scmp.eq.s32.totalorder %s437, 0
      %s440 = sadd.s32 %s439, 1
      %s441 = scalar_select %p438, %s439, %s440
      %p444 = pneg %p438
      %p445 = scmp.eq.s32.totalorder %s28, 5
      %p446 = por %p444, %p445
      %p447 = scmp.ne.s32.totalorder %s439, %s442
      %p448 = scmp.eq.s32.totalorder %s28, 0
      %p449 = por %p447, %p448
      %p450 = scmp.ne.s32.totalorder %s439, %s442
      %p451 = scmp.eq.s32.totalorder %s33, 5
      %p452 = por %p450, %p451
      %p453 = scmp.ne.s32.totalorder %s442, %s443
      %p454 = scmp.eq.s32.totalorder %s33, 0
      %p455 = por %p453, %p454
      %p456 = scmp.ne.s32.totalorder %s442, %s443
      %p457 = scmp.eq.s32.totalorder %s34, 5
      %p458 = por %p456, %p457
      %p460 = scmp.ne.s32.totalorder %s443, %s459
      %p461 = scmp.eq.s32.totalorder %s34, 0
      %p462 = por %p460, %p461
      %s463 = ssub.s32 %s28, %s35
      %p464 = scmp.eq.s32.totalorder %s463, 0
      %s466 = sadd.s32 %s465, 1
      %s467 = scalar_select %p464, %s465, %s466
      %p470 = pneg %p464
      %p471 = scmp.eq.s32.totalorder %s28, 5
      %p472 = por %p470, %p471
      %p473 = scmp.ne.s32.totalorder %s465, %s468
      %p474 = scmp.eq.s32.totalorder %s28, 0
      %p475 = por %p473, %p474
      %p476 = scmp.ne.s32.totalorder %s465, %s468
      %p477 = scmp.eq.s32.totalorder %s33, 5
      %p478 = por %p476, %p477
      %p479 = scmp.ne.s32.totalorder %s468, %s469
      %p480 = scmp.eq.s32.totalorder %s33, 0
      %p481 = por %p479, %p480
      %p482 = scmp.ne.s32.totalorder %s468, %s469
      %p483 = scmp.eq.s32.totalorder %s34, 5
      %p484 = por %p482, %p483
      %p486 = scmp.ne.s32.totalorder %s469, %s485
      %p487 = scmp.eq.s32.totalorder %s34, 0
      %p488 = por %p486, %p487
      %s489 = ssub.s32 %s28, %s35
      %p490 = scmp.eq.s32.totalorder %s489, 0
      %s492 = sadd.s32 %s491, 1
      %s493 = scalar_select %p490, %s491, %s492
      %p496 = pneg %p490
      %p497 = scmp.eq.s32.totalorder %s28, 5
      %p498 = por %p496, %p497
      %p499 = scmp.ne.s32.totalorder %s491, %s494
      %p500 = scmp.eq.s32.totalorder %s28, 0
      %p501 = por %p499, %p500
      %p502 = scmp.ne.s32.totalorder %s491, %s494
      %p503 = scmp.eq.s32.totalorder %s33, 5
      %p504 = por %p502, %p503
      %p505 = scmp.ne.s32.totalorder %s494, %s495
      %p506 = scmp.eq.s32.totalorder %s33, 0
      %p507 = por %p505, %p506
      %p508 = scmp.ne.s32.totalorder %s494, %s495
      %p509 = scmp.eq.s32.totalorder %s34, 5
      %p510 = por %p508, %p509
      %p512 = scmp.ne.s32.totalorder %s495, %s511
      %p513 = scmp.eq.s32.totalorder %s34, 0
      %p514 = por %p512, %p513
      %s516 = sadd.s32 %s515, 1
      %p519 = scmp.eq.s32.totalorder %s28, 5
      %p520 = scmp.ne.s32.totalorder %s515, %s517
      %p521 = scmp.eq.s32.totalorder %s28, 0
      %p522 = por %p520, %p521
      %p523 = scmp.ne.s32.totalorder %s515, %s517
      %p524 = scmp.eq.s32.totalorder %s33, 5
      %p525 = por %p523, %p524
      %p526 = scmp.ne.s32.totalorder %s517, %s518
      %p527 = scmp.eq.s32.totalorder %s33, 0
      %p528 = por %p526, %p527
      %p529 = scmp.ne.s32.totalorder %s517, %s518
      %p530 = scmp.eq.s32.totalorder %s34, 5
      %p531 = por %p529, %p530
      %p533 = scmp.ne.s32.totalorder %s518, %s532
      %p534 = scmp.eq.s32.totalorder %s34, 0
      %p535 = por %p533, %p534
      %s537 = sadd.s32 %s536, 1
      %p540 = scmp.eq.s32.totalorder %s28, 5
      %p541 = scmp.ne.s32.totalorder %s536, %s538
      %p542 = scmp.eq.s32.totalorder %s28, 0
      %p543 = por %p541, %p542
      %p544 = scmp.ne.s32.totalorder %s536, %s538
      %p545 = scmp.eq.s32.totalorder %s33, 5
      %p546 = por %p544, %p545
      %p547 = scmp.ne.s32.totalorder %s538, %s539
      %p548 = scmp.eq.s32.totalorder %s33, 0
      %p549 = por %p547, %p548
      %p550 = scmp.ne.s32.totalorder %s538, %s539
      %p551 = scmp.eq.s32.totalorder %s34, 5
      %p552 = por %p550, %p551
      %p554 = scmp.ne.s32.totalorder %s539, %s553
      %p555 = scmp.eq.s32.totalorder %s34, 0
      %p556 = por %p554, %p555
      %s558 = sadd.s32 %s557, 1
      %p561 = scmp.eq.s32.totalorder %s28, 5
      %p562 = scmp.ne.s32.totalorder %s557, %s559
      %p563 = scmp.eq.s32.totalorder %s28, 0
      %p564 = por %p562, %p563
      %p565 = scmp.ne.s32.totalorder %s557, %s559
      %p566 = scmp.eq.s32.totalorder %s33, 5
      %p567 = por %p565, %p566
      %p568 = scmp.ne.s32.totalorder %s559, %s560
      %p569 = scmp.eq.s32.totalorder %s33, 0
      %p570 = por %p568, %p569
      %p571 = scmp.ne.s32.totalorder %s559, %s560
      %p572 = scmp.eq.s32.totalorder %s34, 5
      %p573 = por %p571, %p572
      %p575 = scmp.ne.s32.totalorder %s560, %s574
      %p576 = scmp.eq.s32.totalorder %s34, 0
      %p577 = por %p575, %p576
      %p578 = scmp.le.s32.totalorder 1, %s28
      %p579 = scmp.lt.s32.totalorder %s28, 7
      %p580 = pnand %p578, %p579
      %p581 = pneg %p580
      // Predicated region
      $region9: #{dvqvae_decoder_forward.1} parent=5 // pred_check
        _
      $region10: #{dvqvae_decoder_forward.1} parent=5 // pred_check_branch
        %583 = sbr.rel (%p580) target = $region12
      $region11: #{dvqvae_decoder_forward.1} parent=5 // pred_region
        %s584 = ssub.s32 %s28, 1
        // Predicated region
        $region13: #{dvqvae_decoder_forward.1} parent=11 // pred_check
          %p585 = pneg %p49
        $region14: #{dvqvae_decoder_forward.1} parent=11 // pred_check_branch
          %587 = sbr.rel (%p585) target = $region16
        $region15: #{dvqvae_decoder_forward.1} parent=11 // pred_region
          _
        $region16: #{dvqvae_decoder_forward.1} parent=11 // pred_fallthru
          _
        // Predicated region
        $region17: #{dvqvae_decoder_forward.1} parent=11 // pred_check
          %p588 = pneg %p70
        $region18: #{dvqvae_decoder_forward.1} parent=11 // pred_check_branch
          %590 = sbr.rel (%p588) target = $region20
        $region19: #{dvqvae_decoder_forward.1} parent=11 // pred_region
          _
        $region20: #{dvqvae_decoder_forward.1} parent=11 // pred_fallthru
          _
        // Predicated region
        $region21: #{dvqvae_decoder_forward.1} parent=11 // pred_check
          %p591 = pneg %p91
        $region22: #{dvqvae_decoder_forward.1} parent=11 // pred_check_branch
          %593 = sbr.rel (%p591) target = $region24
        $region23: #{dvqvae_decoder_forward.1} parent=11 // pred_region
          _
        $region24: #{dvqvae_decoder_forward.1} parent=11 // pred_fallthru
          _
        // Predicated region
        $region25: #{dvqvae_decoder_forward.1} parent=11 // pred_check
          %p594 = pneg %p528
        $region26: #{dvqvae_decoder_forward.1} parent=11 // pred_check_branch
          %596 = sbr.rel (%p594) target = $region28
        $region27: #{dvqvae_decoder_forward.1} parent=11 // pred_region
          _
        $region28: #{dvqvae_decoder_forward.1} parent=11 // pred_fallthru
          _
        // Predicated region
        $region29: #{dvqvae_decoder_forward.1} parent=11 // pred_check
          %p597 = pneg %p549
        $region30: #{dvqvae_decoder_forward.1} parent=11 // pred_check_branch
          %599 = sbr.rel (%p597) target = $region32
        $region31: #{dvqvae_decoder_forward.1} parent=11 // pred_region
          _
        $region32: #{dvqvae_decoder_forward.1} parent=11 // pred_fallthru
          _
      $region12: #{dvqvae_decoder_forward.1} parent=5 // pred_fallthru
        _
      %p600 = scmp.lt.s32.totalorder %s28, 6
      // Predicated region
      $region33: #{dvqvae_decoder_forward.1} parent=5 // pred_check
        %p601 = pneg %p600
      $region34: #{dvqvae_decoder_forward.1} parent=5 // pred_check_branch
        %603 = sbr.rel (%p601) target = $region36
      $region35: #{dvqvae_decoder_forward.1} parent=5 // pred_region
        // Predicated region
        $region37: #{dvqvae_decoder_forward.1} parent=35 // pred_check
          %p604 = pneg %p111
        $region38: #{dvqvae_decoder_forward.1} parent=35 // pred_check_branch
          %606 = sbr.rel (%p604) target = $region40
        $region39: #{dvqvae_decoder_forward.1} parent=35 // pred_region
          %p607 = scmp.lt.s32.totalorder %s28, 5
          %s608 = scalar_select %p607, %s28, 5
          %s609 = smul.addr %s608, 16
          %s610 = smul.addr %s609, 8
          %s611 = scalar_lea.vmem %s3, %s610
        $region40: #{dvqvae_decoder_forward.1} parent=35 // pred_fallthru
          _
        // Predicated region
        $region41: #{dvqvae_decoder_forward.1} parent=35 // pred_check
          %p612 = pneg %p137
        $region42: #{dvqvae_decoder_forward.1} parent=35 // pred_check_branch
          %614 = sbr.rel (%p612) target = $region44
        $region43: #{dvqvae_decoder_forward.1} parent=35 // pred_region
          %p615 = scmp.lt.s32.totalorder %s28, 5
          %s616 = scalar_select %p615, %s28, 5
          %s617 = smul.addr %s616, 2
          %s618 = scalar_lea.vmem %s4, %s617
        $region44: #{dvqvae_decoder_forward.1} parent=35 // pred_fallthru
          _
        // Predicated region
        $region45: #{dvqvae_decoder_forward.1} parent=35 // pred_check
          %p619 = pneg %p163
        $region46: #{dvqvae_decoder_forward.1} parent=35 // pred_check_branch
          %621 = sbr.rel (%p619) target = $region48
        $region47: #{dvqvae_decoder_forward.1} parent=35 // pred_region
          %p622 = scmp.lt.s32.totalorder %s28, 5
          %s623 = scalar_select %p622, %s28, 5
          %s624 = smul.addr %s623, 8
          %s625 = smul.addr %s624, 8
          %s626 = scalar_lea.vmem %s5, %s625
        $region48: #{dvqvae_decoder_forward.1} parent=35 // pred_fallthru
          _
        // Predicated region
        $region49: #{dvqvae_decoder_forward.1} parent=35 // pred_check
          %p627 = pneg %p189
        $region50: #{dvqvae_decoder_forward.1} parent=35 // pred_check_branch
          %629 = sbr.rel (%p627) target = $region52
        $region51: #{dvqvae_decoder_forward.1} parent=35 // pred_region
          %p630 = scmp.lt.s32.totalorder %s28, 5
          %s631 = scalar_select %p630, %s28, 5
          %s632 = scalar_lea.vmem %s6, %s631
        $region52: #{dvqvae_decoder_forward.1} parent=35 // pred_fallthru
          _
        // Predicated region
        $region53: #{dvqvae_decoder_forward.1} parent=35 // pred_check
          %p633 = pneg %p215
        $region54: #{dvqvae_decoder_forward.1} parent=35 // pred_check_branch
          %635 = sbr.rel (%p633) target = $region56
        $region55: #{dvqvae_decoder_forward.1} parent=35 // pred_region
          %p636 = scmp.lt.s32.totalorder %s28, 5
          %s637 = scalar_select %p636, %s28, 5
          %s638 = smul.addr %s637, 8
          %s639 = smul.addr %s638, 8
          %s640 = scalar_lea.vmem %s7, %s639
        $region56: #{dvqvae_decoder_forward.1} parent=35 // pred_fallthru
          _
        // Predicated region
        $region57: #{dvqvae_decoder_forward.1} parent=35 // pred_check
          %p641 = pneg %p241
        $region58: #{dvqvae_decoder_forward.1} parent=35 // pred_check_branch
          %643 = sbr.rel (%p641) target = $region60
        $region59: #{dvqvae_decoder_forward.1} parent=35 // pred_region
          %p644 = scmp.lt.s32.totalorder %s28, 5
          %s645 = scalar_select %p644, %s28, 5
          %s646 = scalar_lea.vmem %s8, %s645
        $region60: #{dvqvae_decoder_forward.1} parent=35 // pred_fallthru
          _
        // Predicated region
        $region61: #{dvqvae_decoder_forward.1} parent=35 // pred_check
          %p647 = pneg %p267
        $region62: #{dvqvae_decoder_forward.1} parent=35 // pred_check_branch
          %649 = sbr.rel (%p647) target = $region64
        $region63: #{dvqvae_decoder_forward.1} parent=35 // pred_region
          %p650 = scmp.lt.s32.totalorder %s28, 5
          %s651 = scalar_select %p650, %s28, 5
          %s652 = smul.addr %s651, 8
          %s653 = smul.addr %s652, 8
          %s654 = scalar_lea.vmem %s9, %s653
        $region64: #{dvqvae_decoder_forward.1} parent=35 // pred_fallthru
          _
        // Predicated region
        $region65: #{dvqvae_decoder_forward.1} parent=35 // pred_check
          %p655 = pneg %p293
        $region66: #{dvqvae_decoder_forward.1} parent=35 // pred_check_branch
          %657 = sbr.rel (%p655) target = $region68
        $region67: #{dvqvae_decoder_forward.1} parent=35 // pred_region
          %p658 = scmp.lt.s32.totalorder %s28, 5
          %s659 = scalar_select %p658, %s28, 5
          %s660 = scalar_lea.vmem %s10, %s659
        $region68: #{dvqvae_decoder_forward.1} parent=35 // pred_fallthru
          _
        // Predicated region
        $region69: #{dvqvae_decoder_forward.1} parent=35 // pred_check
          %p661 = pneg %p319
        $region70: #{dvqvae_decoder_forward.1} parent=35 // pred_check_branch
          %663 = sbr.rel (%p661) target = $region72
        $region71: #{dvqvae_decoder_forward.1} parent=35 // pred_region
          %p664 = scmp.lt.s32.totalorder %s28, 5
          %s665 = scalar_select %p664, %s28, 5
          %s666 = smul.addr %s665, 8
          %s667 = smul.addr %s666, 8
          %s668 = scalar_lea.vmem %s11, %s667
        $region72: #{dvqvae_decoder_forward.1} parent=35 // pred_fallthru
          _
        // Predicated region
        $region73: #{dvqvae_decoder_forward.1} parent=35 // pred_check
          %p669 = pneg %p345
        $region74: #{dvqvae_decoder_forward.1} parent=35 // pred_check_branch
          %671 = sbr.rel (%p669) target = $region76
        $region75: #{dvqvae_decoder_forward.1} parent=35 // pred_region
          %p672 = scmp.lt.s32.totalorder %s28, 5
          %s673 = scalar_select %p672, %s28, 5
          %s674 = scalar_lea.vmem %s12, %s673
        $region76: #{dvqvae_decoder_forward.1} parent=35 // pred_fallthru
          _
        // Predicated region
        $region77: #{dvqvae_decoder_forward.1} parent=35 // pred_check
          %p675 = pneg %p371
        $region78: #{dvqvae_decoder_forward.1} parent=35 // pred_check_branch
          %677 = sbr.rel (%p675) target = $region80
        $region79: #{dvqvae_decoder_forward.1} parent=35 // pred_region
          %p678 = scmp.lt.s32.totalorder %s28, 5
          %s679 = scalar_select %p678, %s28, 5
          %s680 = smul.addr %s679, 128
          %s681 = smul.addr %s680, 8
          %s682 = scalar_lea.vmem %s13, %s681
        $region80: #{dvqvae_decoder_forward.1} parent=35 // pred_fallthru
          _
        // Predicated region
        $region81: #{dvqvae_decoder_forward.1} parent=35 // pred_check
          %p683 = pneg %p397
        $region82: #{dvqvae_decoder_forward.1} parent=35 // pred_check_branch
          %685 = sbr.rel (%p683) target = $region84
        $region83: #{dvqvae_decoder_forward.1} parent=35 // pred_region
          %p686 = scmp.lt.s32.totalorder %s28, 5
          %s687 = scalar_select %p686, %s28, 5
          %s688 = smul.addr %s687, 16
          %s689 = scalar_lea.vmem %s14, %s688
        $region84: #{dvqvae_decoder_forward.1} parent=35 // pred_fallthru
          _
        // Predicated region
        $region85: #{dvqvae_decoder_forward.1} parent=35 // pred_check
          %p690 = pneg %p423
        $region86: #{dvqvae_decoder_forward.1} parent=35 // pred_check_branch
          %692 = sbr.rel (%p690) target = $region88
        $region87: #{dvqvae_decoder_forward.1} parent=35 // pred_region
          %p693 = scmp.lt.s32.totalorder %s28, 5
          %s694 = scalar_select %p693, %s28, 5
          %s695 = smul.addr %s694, 256
          %s696 = smul.addr %s695, 8
          %s697 = scalar_lea.vmem %s15, %s696
        $region88: #{dvqvae_decoder_forward.1} parent=35 // pred_fallthru
          _
        // Predicated region
        $region89: #{dvqvae_decoder_forward.1} parent=35 // pred_check
          %p698 = pneg %p449
        $region90: #{dvqvae_decoder_forward.1} parent=35 // pred_check_branch
          %700 = sbr.rel (%p698) target = $region92
        $region91: #{dvqvae_decoder_forward.1} parent=35 // pred_region
          %p701 = scmp.lt.s32.totalorder %s28, 5
          %s702 = scalar_select %p701, %s28, 5
          %s703 = scalar_lea.vmem %s16, %s702
        $region92: #{dvqvae_decoder_forward.1} parent=35 // pred_fallthru
          _
        // Predicated region
        $region93: #{dvqvae_decoder_forward.1} parent=35 // pred_check
          %p704 = pneg %p475
        $region94: #{dvqvae_decoder_forward.1} parent=35 // pred_check_branch
          %706 = sbr.rel (%p704) target = $region96
        $region95: #{dvqvae_decoder_forward.1} parent=35 // pred_region
          %p707 = scmp.lt.s32.totalorder %s28, 5
          %s708 = scalar_select %p707, %s28, 5
          %s709 = smul.addr %s708, 4
          %s710 = scalar_lea.vmem %s17, %s709
        $region96: #{dvqvae_decoder_forward.1} parent=35 // pred_fallthru
          _
        // Predicated region
        $region97: #{dvqvae_decoder_forward.1} parent=35 // pred_check
          %p711 = pneg %p501
        $region98: #{dvqvae_decoder_forward.1} parent=35 // pred_check_branch
          %713 = sbr.rel (%p711) target = $region100
        $region99: #{dvqvae_decoder_forward.1} parent=35 // pred_region
          %p714 = scmp.lt.s32.totalorder %s28, 5
          %s715 = scalar_select %p714, %s28, 5
          %s716 = smul.addr %s715, 4
          %s717 = scalar_lea.vmem %s18, %s716
        $region100: #{dvqvae_decoder_forward.1} parent=35 // pred_fallthru
          _
      $region36: #{dvqvae_decoder_forward.1} parent=5 // pred_fallthru
        _
      %p718 = scmp.le.s32.totalorder 1, %s28
      %p719 = scmp.lt.s32.totalorder %s28, 7
      %p720 = pnand %p718, %p719
      %p721 = pneg %p720
      // Predicated region
      $region101: #{dvqvae_decoder_forward.1} parent=5 // pred_check
        _
      $region102: #{dvqvae_decoder_forward.1} parent=5 // pred_check_branch
        %723 = sbr.rel (%p720) target = $region104
      $region103: #{dvqvae_decoder_forward.1} parent=5 // pred_region
        %s724 = ssub.s32 %s28, 1
        %p725 = pneg %p49
        %p726 = pneg %p46
        %p727 = pneg %p70
        %p728 = pneg %p67
        %p729 = pneg %p91
        %p730 = pneg %p88
        %p731 = scmp.lt.s32.totalorder %s33, 5
        %s732 = scalar_select %p731, %s33, 5
        %s733 = smul.addr %s732, 16
        %s734 = smul.addr %s733, 8
        %s735 = scalar_lea.vmem %s3, %s734
        %p736 = pneg %p117
        %p737 = pneg %p114
        %p738 = scmp.lt.s32.totalorder %s33, 5
        %s739 = scalar_select %p738, %s33, 5
        %s740 = smul.addr %s739, 2
        %s741 = scalar_lea.vmem %s4, %s740
        %p742 = pneg %p143
        %p743 = pneg %p140
        %p744 = scmp.lt.s32.totalorder %s33, 5
        %s745 = scalar_select %p744, %s33, 5
        %s746 = smul.addr %s745, 8
        %s747 = smul.addr %s746, 8
        %s748 = scalar_lea.vmem %s5, %s747
        %p749 = pneg %p169
        %p750 = pneg %p166
        %p751 = scmp.lt.s32.totalorder %s33, 5
        %s752 = scalar_select %p751, %s33, 5
        %s753 = scalar_lea.vmem %s6, %s752
        %p754 = pneg %p195
        %p755 = pneg %p192
        %p756 = scmp.lt.s32.totalorder %s33, 5
        %s757 = scalar_select %p756, %s33, 5
        %s758 = smul.addr %s757, 8
        %s759 = smul.addr %s758, 8
        %s760 = scalar_lea.vmem %s7, %s759
        %p761 = pneg %p221
        %p762 = pneg %p218
        %p763 = scmp.lt.s32.totalorder %s33, 5
        %s764 = scalar_select %p763, %s33, 5
        %s765 = scalar_lea.vmem %s8, %s764
        %p766 = pneg %p247
        %p767 = pneg %p244
        %p768 = scmp.lt.s32.totalorder %s33, 5
        %s769 = scalar_select %p768, %s33, 5
        %s770 = smul.addr %s769, 8
        %s771 = smul.addr %s770, 8
        %s772 = scalar_lea.vmem %s9, %s771
        %p773 = pneg %p273
        %p774 = pneg %p270
        %p775 = scmp.lt.s32.totalorder %s33, 5
        %s776 = scalar_select %p775, %s33, 5
        %s777 = scalar_lea.vmem %s10, %s776
        %p778 = pneg %p299
        %p779 = pneg %p296
        %p780 = scmp.lt.s32.totalorder %s33, 5
        %s781 = scalar_select %p780, %s33, 5
        %s782 = smul.addr %s781, 8
        %s783 = smul.addr %s782, 8
        %s784 = scalar_lea.vmem %s11, %s783
        %p785 = pneg %p325
        %p786 = pneg %p322
        %p787 = scmp.lt.s32.totalorder %s33, 5
        %s788 = scalar_select %p787, %s33, 5
        %s789 = scalar_lea.vmem %s12, %s788
        %p790 = pneg %p351
        %p791 = pneg %p348
        %p792 = scmp.lt.s32.totalorder %s33, 5
        %s793 = scalar_select %p792, %s33, 5
        %s794 = smul.addr %s793, 128
        %s795 = smul.addr %s794, 8
        %s796 = scalar_lea.vmem %s13, %s795
        %p797 = pneg %p377
        %p798 = pneg %p374
        %p799 = scmp.lt.s32.totalorder %s33, 5
        %s800 = scalar_select %p799, %s33, 5
        %s801 = smul.addr %s800, 16
        %s802 = scalar_lea.vmem %s14, %s801
        %p803 = pneg %p403
        %p804 = pneg %p400
        %p805 = scmp.lt.s32.totalorder %s33, 5
        %s806 = scalar_select %p805, %s33, 5
        %s807 = smul.addr %s806, 256
        %s808 = smul.addr %s807, 8
        %s809 = scalar_lea.vmem %s15, %s808
        %p810 = pneg %p429
        %p811 = pneg %p426
        %p812 = scmp.lt.s32.totalorder %s33, 5
        %s813 = scalar_select %p812, %s33, 5
        %s814 = scalar_lea.vmem %s16, %s813
        %p815 = pneg %p455
        %p816 = pneg %p452
        %p817 = scmp.lt.s32.totalorder %s33, 5
        %s818 = scalar_select %p817, %s33, 5
        %s819 = smul.addr %s818, 4
        %s820 = scalar_lea.vmem %s17, %s819
        %p821 = pneg %p481
        %p822 = pneg %p478
        %p823 = scmp.lt.s32.totalorder %s33, 5
        %s824 = scalar_select %p823, %s33, 5
        %s825 = smul.addr %s824, 4
        %s826 = scalar_lea.vmem %s18, %s825
        %p827 = pneg %p507
        %p828 = pneg %p504
        %p829 = pneg %p528
        %p830 = pneg %p525
        %p831 = pneg %p549
        %p832 = pneg %p546
        %p833 = pneg %p570
        %p834 = pneg %p567
        %p835 = scmp.lt.s32.totalorder %s33, 5
        %s836 = scalar_select %p835, %s33, 5
        %s837 = smul.addr %s836, 16
        %s838 = smul.addr %s837, 8
        %s839 = scalar_lea.vmem %s3, %s838
        %p840 = scmp.lt.s32.totalorder %s33, 5
        %s841 = scalar_select %p840, %s33, 5
        %s842 = smul.addr %s841, 2
        %s843 = scalar_lea.vmem %s4, %s842
        %p844 = scmp.lt.s32.totalorder %s33, 5
        %s845 = scalar_select %p844, %s33, 5
        %s846 = smul.addr %s845, 8
        %s847 = smul.addr %s846, 8
        %s848 = scalar_lea.vmem %s5, %s847
        %p849 = scmp.lt.s32.totalorder %s33, 5
        %s850 = scalar_select %p849, %s33, 5
        %s851 = scalar_lea.vmem %s6, %s850
        %p852 = scmp.lt.s32.totalorder %s33, 5
        %s853 = scalar_select %p852, %s33, 5
        %s854 = smul.addr %s853, 8
        %s855 = smul.addr %s854, 8
        %s856 = scalar_lea.vmem %s7, %s855
        %p857 = scmp.lt.s32.totalorder %s33, 5
        %s858 = scalar_select %p857, %s33, 5
        %s859 = scalar_lea.vmem %s8, %s858
        %p860 = scmp.lt.s32.totalorder %s33, 5
        %s861 = scalar_select %p860, %s33, 5
        %s862 = smul.addr %s861, 8
        %s863 = smul.addr %s862, 8
        %s864 = scalar_lea.vmem %s9, %s863
        %p865 = scmp.lt.s32.totalorder %s33, 5
        %s866 = scalar_select %p865, %s33, 5
        %s867 = scalar_lea.vmem %s10, %s866
        %p868 = scmp.lt.s32.totalorder %s33, 5
        %s869 = scalar_select %p868, %s33, 5
        %s870 = smul.addr %s869, 8
        %s871 = smul.addr %s870, 8
        %s872 = scalar_lea.vmem %s11, %s871
        %p873 = scmp.lt.s32.totalorder %s33, 5
        %s874 = scalar_select %p873, %s33, 5
        %s875 = scalar_lea.vmem %s12, %s874
        %p876 = scmp.lt.s32.totalorder %s33, 5
        %s877 = scalar_select %p876, %s33, 5
        %s878 = smul.addr %s877, 128
        %s879 = smul.addr %s878, 8
        %s880 = scalar_lea.vmem %s13, %s879
        %p881 = scmp.lt.s32.totalorder %s33, 5
        %s882 = scalar_select %p881, %s33, 5
        %s883 = smul.addr %s882, 16
        %s884 = scalar_lea.vmem %s14, %s883
        %p885 = scmp.lt.s32.totalorder %s33, 5
        %s886 = scalar_select %p885, %s33, 5
        %s887 = smul.addr %s886, 256
        %s888 = smul.addr %s887, 8
        %s889 = scalar_lea.vmem %s15, %s888
        %p890 = scmp.lt.s32.totalorder %s33, 5
        %s891 = scalar_select %p890, %s33, 5
        %s892 = scalar_lea.vmem %s16, %s891
        %p893 = scmp.lt.s32.totalorder %s33, 5
        %s894 = scalar_select %p893, %s33, 5
        %s895 = smul.addr %s894, 4
        %s896 = scalar_lea.vmem %s17, %s895
        %p897 = scmp.lt.s32.totalorder %s33, 5
        %s898 = scalar_select %p897, %s33, 5
        %s899 = smul.addr %s898, 4
        %s900 = scalar_lea.vmem %s18, %s899
        %p901 = scmp.eq.s32.totalorder %s33, 0
        // Predicated region
        $region105: #{dvqvae_decoder_forward.1} parent=103 // pred_check
          %p902 = pneg %p901
        $region106: #{dvqvae_decoder_forward.1} parent=103 // pred_check_branch
          %904 = sbr.rel (%p902) target = $region108
        $region107: #{dvqvae_decoder_forward.1} parent=103 // pred_region
          %v905 = vld [vmem:[%s0] sm:$0xff]
          %v906 = vld [vmem:[%s0 + $0x8] sm:$0xff]
          %v907 = vld [vmem:[%s1] sm:$0xff]
          %v908 = vadd.f32 %v905, %v907
          %v909 = vadd.f32 %v906, %v907
          %vm910 = vcmask 523264
          %911 = vst.msk [vmem:[#allocation2] sm:$0xff] %vm910, %v908
          %912 = vst.msk [vmem:[#allocation2 + $0x8] sm:$0xff] %vm910, %v909
        $region108: #{dvqvae_decoder_forward.1} parent=103 // pred_fallthru
          _
        %v913 = vld [vmem:[%s896] sm:$0x7]
        %v914 = vld [vmem:[%s900] sm:$0x7]
        %v915 = vld [vmem:[#allocation2] sm:$0xff]
        %v916 = vld [vmem:[#allocation2 + $0x8] sm:$0xff]
        %v917 = vld [vmem:[%s839] sm:$0xff]
        %v918 = vld [vmem:[%s839 + $0x8] sm:$0xff]
        %v919 = vld [vmem:[%s839 + $0x10] sm:$0xff]
        %v920 = vld [vmem:[%s839 + $0x18] sm:$0xff]
        %v921 = vld [vmem:[%s839 + $0x20] sm:$0xff]
        %v922 = vld [vmem:[%s839 + $0x28] sm:$0xff]
        %v923 = vld [vmem:[%s839 + $0x30] sm:$0xff]
        %v924 = vld [vmem:[%s839 + $0x38] sm:$0xff]
        %v925 = vld [vmem:[%s839 + $0x40] sm:$0xff]
        %v926 = vld [vmem:[%s839 + $0x48] sm:$0xff]
        %v927 = vld [vmem:[%s839 + $0x50] sm:$0xff]
        %v928 = vld [vmem:[%s839 + $0x58] sm:$0xff]
        %v929 = vld [vmem:[%s839 + $0x60] sm:$0xff]
        %v930 = vld [vmem:[%s839 + $0x68] sm:$0xff]
        %v931 = vld [vmem:[%s839 + $0x70] sm:$0xff]
        %v932 = vld [vmem:[%s839 + $0x78] sm:$0xff]
        %v933 = vld [vmem:[%s843] sm:$0x3]
        %v935 = vlaneseq
        %v936 = vshrl.u32 %v935, 7
        %v937 = vsub.s32 0, %v936
        %v938 = vrot.slane %v933, %v937
        %v939 = vlaneseq
        %v940 = vshrl.u32 %v939, 7
        %v941 = vsub.s32 1, %v940
        %v942 = vrot.slane %v933, %v941
        %vm945 = vcmask 523264
        %v947 = vsel %vm945, %v915, 0
        %v950 = vsel %vm945, %v916, 0
        %952 = vmatprep.subr.mxu0 0.0
        %953 = vmatpush1.msra.mxu0 0.0
        %954 = vmatprep.subr.mxu0 0.0
        %955 = vmatpush1.msra.mxu0 0.0
        %956 = vmatprep.subr.mxu0 0.0
        %957 = vmatpush1.msra.mxu0 0.0
        %958 = vmatprep.subr.mxu0 0.0
        %959 = vmatpush1.msra.mxu0 0.0
        %960 = vmatprep.subr.mxu0 0.0
        %961 = vmatpush1.msra.mxu0 0.0
        %962 = vmatprep.subr.mxu0 0.0
        %963 = vmatpush1.msra.mxu0 0.0
        %964 = vmatprep.subr.mxu0 0.0
        %965 = vmatpush1.msra.mxu0 0.0
        %966 = vmatprep.subr.mxu0 0.0
        %967 = vmatpush1.msra.mxu0 0.0
        %968 = vmatprep.subr.mxu0 %v932
        %969 = vmatpush1.msra.mxu0 %v931
        %970 = vmatprep.subr.mxu0 %v930
        %971 = vmatpush1.msra.mxu0 %v929
        %972 = vmatprep.subr.mxu0 %v928
        %973 = vmatpush1.msra.mxu0 %v927
        %974 = vmatprep.subr.mxu0 %v926
        %975 = vmatpush1.msra.mxu0 %v925
        %976 = vmatprep.subr.mxu0 %v924
        %977 = vmatpush1.msra.mxu0 %v923
        %978 = vmatprep.subr.mxu0 %v922
        %979 = vmatpush1.msra.mxu0 %v921
        %980 = vmatprep.subr.mxu0 %v920
        %981 = vmatpush1.msra.mxu0 %v919
        %982 = vmatprep.subr.mxu0 %v918
        %983 = vmatpush1.msra.mxu0 %v917
        %984 = vmatprep.subr.mxu0 0.0
        %985 = vmatpush2.msra.mxu0 0.0
        %986 = vmatprep.subr.mxu0 0.0
        %987 = vmatpush2.msra.mxu0 0.0
        %988 = vmatprep.subr.mxu0 0.0
        %989 = vmatpush2.msra.mxu0 0.0
        %990 = vmatprep.subr.mxu0 0.0
        %991 = vmatpush2.msra.mxu0 0.0
        %992 = vmatprep.subr.mxu0 0.0
        %993 = vmatpush2.msra.mxu0 0.0
        %994 = vmatprep.subr.mxu0 0.0
        %995 = vmatpush2.msra.mxu0 0.0
        %996 = vmatprep.subr.mxu0 0.0
        %997 = vmatpush2.msra.mxu0 0.0
        %998 = vmatprep.subr.mxu0 0.0
        %999 = vmatpush2.msra.mxu0 0.0
        %1000 = vmatprep.subr.mxu0 0.0
        %1001 = vmatpush2.msra.mxu0 0.0
        %1002 = vmatprep.subr.mxu0 0.0
        %1003 = vmatpush2.msra.mxu0 0.0
        %1004 = vmatprep.subr.mxu0 0.0
        %1005 = vmatpush2.msra.mxu0 0.0
        %1006 = vmatprep.subr.mxu0 0.0
        %1007 = vmatpush2.msra.mxu0 0.0
        %1008 = vmatprep.subr.mxu0 0.0
        %1009 = vmatpush2.msra.mxu0 0.0
        %1010 = vmatprep.subr.mxu0 0.0
        %1011 = vmatpush2.msra.mxu0 0.0
        %1012 = vmatprep.subr.mxu0 0.0
        %1013 = vmatpush2.msra.mxu0 0.0
        %1014 = vmatprep.subr.mxu0 0.0
        %1015 = vmatpush2.msra.mxu0 0.0
        %1016 = vmatprep.mubr.f32.mxu0 0.0
        %1017 = vmatmul.mubr.f32.gmra.mxu0 %v947
        %v1018 = vpop.f32.mrf.mxu0
        %v1019 = vadd.f32 %v938, %v1018
        %v1020 = vpop.f32.mrf.mxu0
        %v1021 = vadd.f32 %v942, %v1020
        %1022 = vmatprep.mubr.f32.mxu0 0.0
        %1023 = vmatmul.mubr.f32.gmra.mxu0 %v950
        %v1024 = vpop.f32.mrf.mxu0
        %v1025 = vadd.f32 %v938, %v1024
        %v1026 = vpop.f32.mrf.mxu0
        %v1027 = vadd.f32 %v942, %v1026
        %1028 = vdwg.mxu0
        %v1029 = vld [vmem:[%s848] sm:$0xff]
        %v1030 = vld [vmem:[%s848 + $0x8] sm:$0xff]
        %v1031 = vld [vmem:[%s848 + $0x10] sm:$0xff]
        %v1032 = vld [vmem:[%s848 + $0x18] sm:$0xff]
        %v1033 = vld [vmem:[%s848 + $0x20] sm:$0xff]
        %v1034 = vld [vmem:[%s848 + $0x28] sm:$0xff]
        %v1035 = vld [vmem:[%s848 + $0x30] sm:$0xff]
        %v1036 = vld [vmem:[%s848 + $0x38] sm:$0xff]
        %v1037 = vld [vmem:[%s851] sm:$0x1]
        %1039 = vrot.lane.b32.xlu0 %v1019, 64
        %v1040 = vpop.permute.xlu0 %1039
        %vm1041 = vcmask 64512
        %v1042 = vsel %vm1041, %v1019, 0
        %v1044 = vsel %vm1041, %v1040, 0
        %1046 = vmatprep.subr.mxu0 0.0
        %1047 = vmatpush1.xpose.msra.mxu0 0.0
        %1048 = vmatprep.subr.mxu0 0.0
        %1049 = vmatpush1.xpose.msra.mxu0 0.0
        %1050 = vmatprep.subr.mxu0 0.0
        %1051 = vmatpush1.xpose.msra.mxu0 0.0
        %1052 = vmatprep.subr.mxu0 0.0
        %1053 = vmatpush1.xpose.msra.mxu0 0.0
        %1054 = vmatprep.subr.mxu0 0.0
        %1055 = vmatpush1.xpose.msra.mxu0 0.0
        %1056 = vmatprep.subr.mxu0 0.0
        %1057 = vmatpush1.xpose.msra.mxu0 0.0
        %1058 = vmatprep.subr.mxu0 0.0
        %1059 = vmatpush1.xpose.msra.mxu0 0.0
        %1060 = vmatprep.subr.mxu0 0.0
        %1061 = vmatpush1.xpose.msra.mxu0 0.0
        %1062 = vmatprep.subr.mxu0 0.0
        %1063 = vmatpush1.xpose.msra.mxu0 0.0
        %1064 = vmatprep.subr.mxu0 0.0
        %1065 = vmatpush1.xpose.msra.mxu0 0.0
        %1066 = vmatprep.subr.mxu0 0.0
        %1067 = vmatpush1.xpose.msra.mxu0 0.0
        %1068 = vmatprep.subr.mxu0 0.0
        %1069 = vmatpush1.xpose.msra.mxu0 0.0
        %1070 = vmatprep.subr.mxu0 0.0
        %1071 = vmatpush1.xpose.msra.mxu0 0.0
        %1072 = vmatprep.subr.mxu0 0.0
        %1073 = vmatpush1.xpose.msra.mxu0 0.0
        %1074 = vmatprep.subr.mxu0 0.0
        %1075 = vmatpush1.xpose.msra.mxu0 0.0
        %1076 = vmatprep.subr.mxu0 0.0
        %1077 = vmatpush1.xpose.msra.mxu0 %v1044
        %1078 = vmatprep.subr.mxu0 0.0
        %1079 = vmatpush2.xpose.msra.mxu0 0.0
        %1080 = vmatprep.subr.mxu0 0.0
        %1081 = vmatpush2.xpose.msra.mxu0 0.0
        %1082 = vmatprep.subr.mxu0 0.0
        %1083 = vmatpush2.xpose.msra.mxu0 0.0
        %1084 = vmatprep.subr.mxu0 0.0
        %1085 = vmatpush2.xpose.msra.mxu0 0.0
        %1086 = vmatprep.subr.mxu0 0.0
        %1087 = vmatpush2.xpose.msra.mxu0 0.0
        %1088 = vmatprep.subr.mxu0 0.0
        %1089 = vmatpush2.xpose.msra.mxu0 0.0
        %1090 = vmatprep.subr.mxu0 0.0
        %1091 = vmatpush2.xpose.msra.mxu0 0.0
        %1092 = vmatprep.subr.mxu0 0.0
        %1093 = vmatpush2.xpose.msra.mxu0 0.0
        %1094 = vmatprep.subr.mxu0 0.0
        %1095 = vmatpush2.xpose.msra.mxu0 0.0
        %1096 = vmatprep.subr.mxu0 0.0
        %1097 = vmatpush2.xpose.msra.mxu0 0.0
        %1098 = vmatprep.subr.mxu0 0.0
        %1099 = vmatpush2.xpose.msra.mxu0 0.0
        %1100 = vmatprep.subr.mxu0 0.0
        %1101 = vmatpush2.xpose.msra.mxu0 0.0
        %1102 = vmatprep.subr.mxu0 0.0
        %1103 = vmatpush2.xpose.msra.mxu0 0.0
        %1104 = vmatprep.subr.mxu0 0.0
        %1105 = vmatpush2.xpose.msra.mxu0 0.0
        %1106 = vmatprep.subr.mxu0 0.0
        %1107 = vmatpush2.xpose.msra.mxu0 0.0
        %1108 = vmatprep.subr.mxu0 0.0
        %1109 = vmatpush2.xpose.msra.mxu0 0.0
        %1110 = vmatprep.mubr.f32.mxu0 0.0
        %1111 = vmatmul.mubr.f32.gmra.mxu0 %v1042
        %v1112 = vpop.f32.mrf.mxu0
        %v1113 = vadd.f32 0.0, %v1112
        %v1114 = vpop.f32.mrf.mxu0
        %1115 = vdwg.mxu0
        %1117 = vrot.lane.b32.xlu0 %v1025, 64
        %v1118 = vpop.permute.xlu0 %1117
        %v1119 = vsel %vm1041, %v1025, 0
        %v1121 = vsel %vm1041, %v1118, 0
        %1123 = vmatprep.subr.mxu0 0.0
        %1124 = vmatpush1.xpose.msra.mxu0 0.0
        %1125 = vmatprep.subr.mxu0 0.0
        %1126 = vmatpush1.xpose.msra.mxu0 0.0
        %1127 = vmatprep.subr.mxu0 0.0
        %1128 = vmatpush1.xpose.msra.mxu0 0.0
        %1129 = vmatprep.subr.mxu0 0.0
        %1130 = vmatpush1.xpose.msra.mxu0 0.0
        %1131 = vmatprep.subr.mxu0 0.0
        %1132 = vmatpush1.xpose.msra.mxu0 0.0
        %1133 = vmatprep.subr.mxu0 0.0
        %1134 = vmatpush1.xpose.msra.mxu0 0.0
        %1135 = vmatprep.subr.mxu0 0.0
        %1136 = vmatpush1.xpose.msra.mxu0 0.0
        %1137 = vmatprep.subr.mxu0 0.0
        %1138 = vmatpush1.xpose.msra.mxu0 0.0
        %1139 = vmatprep.subr.mxu0 0.0
        %1140 = vmatpush1.xpose.msra.mxu0 0.0
        %1141 = vmatprep.subr.mxu0 0.0
        %1142 = vmatpush1.xpose.msra.mxu0 0.0
        %1143 = vmatprep.subr.mxu0 0.0
        %1144 = vmatpush1.xpose.msra.mxu0 0.0
        %1145 = vmatprep.subr.mxu0 0.0
        %1146 = vmatpush1.xpose.msra.mxu0 0.0
        %1147 = vmatprep.subr.mxu0 0.0
        %1148 = vmatpush1.xpose.msra.mxu0 0.0
        %1149 = vmatprep.subr.mxu0 0.0
        %1150 = vmatpush1.xpose.msra.mxu0 0.0
        %1151 = vmatprep.subr.mxu0 0.0
        %1152 = vmatpush1.xpose.msra.mxu0 0.0
        %1153 = vmatprep.subr.mxu0 0.0
        %1154 = vmatpush1.xpose.msra.mxu0 %v1121
        %1155 = vmatprep.subr.mxu0 0.0
        %1156 = vmatpush2.xpose.msra.mxu0 0.0
        %1157 = vmatprep.subr.mxu0 0.0
        %1158 = vmatpush2.xpose.msra.mxu0 0.0
        %1159 = vmatprep.subr.mxu0 0.0
        %1160 = vmatpush2.xpose.msra.mxu0 0.0
        %1161 = vmatprep.subr.mxu0 0.0
        %1162 = vmatpush2.xpose.msra.mxu0 0.0
        %1163 = vmatprep.subr.mxu0 0.0
        %1164 = vmatpush2.xpose.msra.mxu0 0.0
        %1165 = vmatprep.subr.mxu0 0.0
        %1166 = vmatpush2.xpose.msra.mxu0 0.0
        %1167 = vmatprep.subr.mxu0 0.0
        %1168 = vmatpush2.xpose.msra.mxu0 0.0
        %1169 = vmatprep.subr.mxu0 0.0
        %1170 = vmatpush2.xpose.msra.mxu0 0.0
        %1171 = vmatprep.subr.mxu0 0.0
        %1172 = vmatpush2.xpose.msra.mxu0 0.0
        %1173 = vmatprep.subr.mxu0 0.0
        %1174 = vmatpush2.xpose.msra.mxu0 0.0
        %1175 = vmatprep.subr.mxu0 0.0
        %1176 = vmatpush2.xpose.msra.mxu0 0.0
        %1177 = vmatprep.subr.mxu0 0.0
        %1178 = vmatpush2.xpose.msra.mxu0 0.0
        %1179 = vmatprep.subr.mxu0 0.0
        %1180 = vmatpush2.xpose.msra.mxu0 0.0
        %1181 = vmatprep.subr.mxu0 0.0
        %1182 = vmatpush2.xpose.msra.mxu0 0.0
        %1183 = vmatprep.subr.mxu0 0.0
        %1184 = vmatpush2.xpose.msra.mxu0 0.0
        %1185 = vmatprep.subr.mxu0 0.0
        %1186 = vmatpush2.xpose.msra.mxu0 0.0
        %1187 = vmatprep.mubr.f32.mxu0 0.0
        %1188 = vmatmul.mubr.f32.gmra.mxu0 %v1119
        %v1189 = vpop.f32.mrf.mxu0
        %v1190 = vadd.f32 0.0, %v1189
        %v1191 = vpop.f32.mrf.mxu0
        %1192 = vdwg.mxu0
        %v1193 = vmul.f32 %v1113, 0.35355338
        %v1194 = vmul.f32 %v1190, 0.35355338
        %v1195 = vsel %vm1041, %v1193, -inf
        %1196 = vmax.xlane.f32.xlu0 %v1195
        %v1197 = vpop.xlane.xlu0 %1196
        %v1198 = vsel %vm1041, %v1194, -inf
        %1199 = vmax.xlane.f32.xlu0 %v1198
        %v1200 = vpop.xlane.xlu0 %1199
        %v1201 = vsub.f32 %v1193, %v1197
        %v1202 = vsub.f32 %v1194, %v1200
        %v1203 = vmul.f32 %v1201, 1.442695
        %v1204 = vpow.pop %v1203
        %v1205 = vmul.f32 %v1202, 1.442695
        %v1206 = vpow.pop %v1205
        %v1207 = vsel %vm1041, %v1204, 0.0
        %1208 = vadd.xlane.f32.xlu0 %v1207
        %v1209 = vpop.xlane.xlu0 %1208
        %v1210 = vsel %vm1041, %v1206, 0.0
        %1211 = vadd.xlane.f32.xlu0 %v1210
        %v1212 = vpop.xlane.xlu0 %1211
        %v1213 = vrcp.pop %v1209
        %v1214 = vrcp.pop %v1212
        %v1215 = vmul.f32 %v1204, %v1213
        %v1216 = vmul.f32 %v1206, %v1214
        %v1218 = vsel %vm1041, %v1215, 0
        %1220 = vmatprep.subr.mxu0 0.0
        %1221 = vmatpush1.msra.mxu0 0.0
        %1222 = vmatprep.subr.mxu0 0.0
        %1223 = vmatpush1.msra.mxu0 0.0
        %1224 = vmatprep.subr.mxu0 0.0
        %1225 = vmatpush1.msra.mxu0 0.0
        %1226 = vmatprep.subr.mxu0 0.0
        %1227 = vmatpush1.msra.mxu0 0.0
        %1228 = vmatprep.subr.mxu0 0.0
        %1229 = vmatpush1.msra.mxu0 0.0
        %1230 = vmatprep.subr.mxu0 0.0
        %1231 = vmatpush1.msra.mxu0 0.0
        %1232 = vmatprep.subr.mxu0 0.0
        %1233 = vmatpush1.msra.mxu0 0.0
        %1234 = vmatprep.subr.mxu0 0.0
        %1235 = vmatpush1.msra.mxu0 0.0
        %1236 = vmatprep.subr.mxu0 0.0
        %1237 = vmatpush1.msra.mxu0 0.0
        %1238 = vmatprep.subr.mxu0 0.0
        %1239 = vmatpush1.msra.mxu0 0.0
        %1240 = vmatprep.subr.mxu0 0.0
        %1241 = vmatpush1.msra.mxu0 0.0
        %1242 = vmatprep.subr.mxu0 0.0
        %1243 = vmatpush1.msra.mxu0 0.0
        %1244 = vmatprep.subr.mxu0 0.0
        %1245 = vmatpush1.msra.mxu0 0.0
        %1246 = vmatprep.subr.mxu0 0.0
        %1247 = vmatpush1.msra.mxu0 0.0
        %1248 = vmatprep.subr.mxu0 0.0
        %1249 = vmatpush1.msra.mxu0 0.0
        %1250 = vmatprep.subr.mxu0 0.0
        %1251 = vmatpush1.msra.mxu0 %v1021
        %1252 = vmatprep.subr.mxu0 0.0
        %1253 = vmatpush2.msra.mxu0 0.0
        %1254 = vmatprep.subr.mxu0 0.0
        %1255 = vmatpush2.msra.mxu0 0.0
        %1256 = vmatprep.subr.mxu0 0.0
        %1257 = vmatpush2.msra.mxu0 0.0
        %1258 = vmatprep.subr.mxu0 0.0
        %1259 = vmatpush2.msra.mxu0 0.0
        %1260 = vmatprep.subr.mxu0 0.0
        %1261 = vmatpush2.msra.mxu0 0.0
        %1262 = vmatprep.subr.mxu0 0.0
        %1263 = vmatpush2.msra.mxu0 0.0
        %1264 = vmatprep.subr.mxu0 0.0
        %1265 = vmatpush2.msra.mxu0 0.0
        %1266 = vmatprep.subr.mxu0 0.0
        %1267 = vmatpush2.msra.mxu0 0.0
        %1268 = vmatprep.subr.mxu0 0.0
        %1269 = vmatpush2.msra.mxu0 0.0
        %1270 = vmatprep.subr.mxu0 0.0
        %1271 = vmatpush2.msra.mxu0 0.0
        %1272 = vmatprep.subr.mxu0 0.0
        %1273 = vmatpush2.msra.mxu0 0.0
        %1274 = vmatprep.subr.mxu0 0.0
        %1275 = vmatpush2.msra.mxu0 0.0
        %1276 = vmatprep.subr.mxu0 0.0
        %1277 = vmatpush2.msra.mxu0 0.0
        %1278 = vmatprep.subr.mxu0 0.0
        %1279 = vmatpush2.msra.mxu0 0.0
        %1280 = vmatprep.subr.mxu0 0.0
        %1281 = vmatpush2.msra.mxu0 0.0
        %1282 = vmatprep.subr.mxu0 0.0
        %1283 = vmatpush2.msra.mxu0 0.0
        %1284 = vmatprep.mubr.f32.mxu0 0.0
        %1285 = vmatmul.mubr.f32.gmra.mxu0 %v1218
        %v1286 = vpop.f32.mrf.mxu0
        %v1287 = vadd.f32 0.0, %v1286
        %v1288 = vpop.f32.mrf.mxu0
        %1289 = vdwg.mxu0
        %v1291 = vsel %vm1041, %v1216, 0
        %1293 = vmatprep.subr.mxu0 0.0
        %1294 = vmatpush1.msra.mxu0 0.0
        %1295 = vmatprep.subr.mxu0 0.0
        %1296 = vmatpush1.msra.mxu0 0.0
        %1297 = vmatprep.subr.mxu0 0.0
        %1298 = vmatpush1.msra.mxu0 0.0
        %1299 = vmatprep.subr.mxu0 0.0
        %1300 = vmatpush1.msra.mxu0 0.0
        %1301 = vmatprep.subr.mxu0 0.0
        %1302 = vmatpush1.msra.mxu0 0.0
        %1303 = vmatprep.subr.mxu0 0.0
        %1304 = vmatpush1.msra.mxu0 0.0
        %1305 = vmatprep.subr.mxu0 0.0
        %1306 = vmatpush1.msra.mxu0 0.0
        %1307 = vmatprep.subr.mxu0 0.0
        %1308 = vmatpush1.msra.mxu0 0.0
        %1309 = vmatprep.subr.mxu0 0.0
        %1310 = vmatpush1.msra.mxu0 0.0
        %1311 = vmatprep.subr.mxu0 0.0
        %1312 = vmatpush1.msra.mxu0 0.0
        %1313 = vmatprep.subr.mxu0 0.0
        %1314 = vmatpush1.msra.mxu0 0.0
        %1315 = vmatprep.subr.mxu0 0.0
        %1316 = vmatpush1.msra.mxu0 0.0
        %1317 = vmatprep.subr.mxu0 0.0
        %1318 = vmatpush1.msra.mxu0 0.0
        %1319 = vmatprep.subr.mxu0 0.0
        %1320 = vmatpush1.msra.mxu0 0.0
        %1321 = vmatprep.subr.mxu0 0.0
        %1322 = vmatpush1.msra.mxu0 0.0
        %1323 = vmatprep.subr.mxu0 0.0
        %1324 = vmatpush1.msra.mxu0 %v1027
        %1325 = vmatprep.subr.mxu0 0.0
        %1326 = vmatpush2.msra.mxu0 0.0
        %1327 = vmatprep.subr.mxu0 0.0
        %1328 = vmatpush2.msra.mxu0 0.0
        %1329 = vmatprep.subr.mxu0 0.0
        %1330 = vmatpush2.msra.mxu0 0.0
        %1331 = vmatprep.subr.mxu0 0.0
        %1332 = vmatpush2.msra.mxu0 0.0
        %1333 = vmatprep.subr.mxu0 0.0
        %1334 = vmatpush2.msra.mxu0 0.0
        %1335 = vmatprep.subr.mxu0 0.0
        %1336 = vmatpush2.msra.mxu0 0.0
        %1337 = vmatprep.subr.mxu0 0.0
        %1338 = vmatpush2.msra.mxu0 0.0
        %1339 = vmatprep.subr.mxu0 0.0
        %1340 = vmatpush2.msra.mxu0 0.0
        %1341 = vmatprep.subr.mxu0 0.0
        %1342 = vmatpush2.msra.mxu0 0.0
        %1343 = vmatprep.subr.mxu0 0.0
        %1344 = vmatpush2.msra.mxu0 0.0
        %1345 = vmatprep.subr.mxu0 0.0
        %1346 = vmatpush2.msra.mxu0 0.0
        %1347 = vmatprep.subr.mxu0 0.0
        %1348 = vmatpush2.msra.mxu0 0.0
        %1349 = vmatprep.subr.mxu0 0.0
        %1350 = vmatpush2.msra.mxu0 0.0
        %1351 = vmatprep.subr.mxu0 0.0
        %1352 = vmatpush2.msra.mxu0 0.0
        %1353 = vmatprep.subr.mxu0 0.0
        %1354 = vmatpush2.msra.mxu0 0.0
        %1355 = vmatprep.subr.mxu0 0.0
        %1356 = vmatpush2.msra.mxu0 0.0
        %1357 = vmatprep.mubr.f32.mxu0 0.0
        %1358 = vmatmul.mubr.f32.gmra.mxu0 %v1291
        %v1359 = vpop.f32.mrf.mxu0
        %v1360 = vadd.f32 0.0, %v1359
        %v1361 = vpop.f32.mrf.mxu0
        %1362 = vdwg.mxu0
        %1363 = vrot.lane.b32.xlu0 %v1019, 120
        %v1364 = vpop.permute.xlu0 %1363
        %1365 = vrot.lane.b32.xlu0 %v1019, 56
        %v1366 = vpop.permute.xlu0 %1365
        %v1367 = vsel %vm1041, %v1364, 0
        %v1369 = vsel %vm1041, %v1366, 0
        %1371 = vmatprep.subr.mxu0 0.0
        %1372 = vmatpush1.xpose.msra.mxu0 0.0
        %1373 = vmatprep.subr.mxu0 0.0
        %1374 = vmatpush1.xpose.msra.mxu0 0.0
        %1375 = vmatprep.subr.mxu0 0.0
        %1376 = vmatpush1.xpose.msra.mxu0 0.0
        %1377 = vmatprep.subr.mxu0 0.0
        %1378 = vmatpush1.xpose.msra.mxu0 0.0
        %1379 = vmatprep.subr.mxu0 0.0
        %1380 = vmatpush1.xpose.msra.mxu0 0.0
        %1381 = vmatprep.subr.mxu0 0.0
        %1382 = vmatpush1.xpose.msra.mxu0 0.0
        %1383 = vmatprep.subr.mxu0 0.0
        %1384 = vmatpush1.xpose.msra.mxu0 0.0
        %1385 = vmatprep.subr.mxu0 0.0
        %1386 = vmatpush1.xpose.msra.mxu0 0.0
        %1387 = vmatprep.subr.mxu0 0.0
        %1388 = vmatpush1.xpose.msra.mxu0 0.0
        %1389 = vmatprep.subr.mxu0 0.0
        %1390 = vmatpush1.xpose.msra.mxu0 0.0
        %1391 = vmatprep.subr.mxu0 0.0
        %1392 = vmatpush1.xpose.msra.mxu0 0.0
        %1393 = vmatprep.subr.mxu0 0.0
        %1394 = vmatpush1.xpose.msra.mxu0 0.0
        %1395 = vmatprep.subr.mxu0 0.0
        %1396 = vmatpush1.xpose.msra.mxu0 0.0
        %1397 = vmatprep.subr.mxu0 0.0
        %1398 = vmatpush1.xpose.msra.mxu0 0.0
        %1399 = vmatprep.subr.mxu0 0.0
        %1400 = vmatpush1.xpose.msra.mxu0 0.0
        %1401 = vmatprep.subr.mxu0 0.0
        %1402 = vmatpush1.xpose.msra.mxu0 %v1369
        %1403 = vmatprep.subr.mxu0 0.0
        %1404 = vmatpush2.xpose.msra.mxu0 0.0
        %1405 = vmatprep.subr.mxu0 0.0
        %1406 = vmatpush2.xpose.msra.mxu0 0.0
        %1407 = vmatprep.subr.mxu0 0.0
        %1408 = vmatpush2.xpose.msra.mxu0 0.0
        %1409 = vmatprep.subr.mxu0 0.0
        %1410 = vmatpush2.xpose.msra.mxu0 0.0
        %1411 = vmatprep.subr.mxu0 0.0
        %1412 = vmatpush2.xpose.msra.mxu0 0.0
        %1413 = vmatprep.subr.mxu0 0.0
        %1414 = vmatpush2.xpose.msra.mxu0 0.0
        %1415 = vmatprep.subr.mxu0 0.0
        %1416 = vmatpush2.xpose.msra.mxu0 0.0
        %1417 = vmatprep.subr.mxu0 0.0
        %1418 = vmatpush2.xpose.msra.mxu0 0.0
        %1419 = vmatprep.subr.mxu0 0.0
        %1420 = vmatpush2.xpose.msra.mxu0 0.0
        %1421 = vmatprep.subr.mxu0 0.0
        %1422 = vmatpush2.xpose.msra.mxu0 0.0
        %1423 = vmatprep.subr.mxu0 0.0
        %1424 = vmatpush2.xpose.msra.mxu0 0.0
        %1425 = vmatprep.subr.mxu0 0.0
        %1426 = vmatpush2.xpose.msra.mxu0 0.0
        %1427 = vmatprep.subr.mxu0 0.0
        %1428 = vmatpush2.xpose.msra.mxu0 0.0
        %1429 = vmatprep.subr.mxu0 0.0
        %1430 = vmatpush2.xpose.msra.mxu0 0.0
        %1431 = vmatprep.subr.mxu0 0.0
        %1432 = vmatpush2.xpose.msra.mxu0 0.0
        %1433 = vmatprep.subr.mxu0 0.0
        %1434 = vmatpush2.xpose.msra.mxu0 0.0
        %1435 = vmatprep.mubr.f32.mxu0 0.0
        %1436 = vmatmul.mubr.f32.gmra.mxu0 %v1367
        %v1437 = vpop.f32.mrf.mxu0
        %v1438 = vadd.f32 0.0, %v1437
        %v1439 = vpop.f32.mrf.mxu0
        %1440 = vdwg.mxu0
        %1441 = vrot.lane.b32.xlu0 %v1025, 120
        %v1442 = vpop.permute.xlu0 %1441
        %1443 = vrot.lane.b32.xlu0 %v1025, 56
        %v1444 = vpop.permute.xlu0 %1443
        %v1445 = vsel %vm1041, %v1442, 0
        %v1447 = vsel %vm1041, %v1444, 0
        %1449 = vmatprep.subr.mxu0 0.0
        %1450 = vmatpush1.xpose.msra.mxu0 0.0
        %1451 = vmatprep.subr.mxu0 0.0
        %1452 = vmatpush1.xpose.msra.mxu0 0.0
        %1453 = vmatprep.subr.mxu0 0.0
        %1454 = vmatpush1.xpose.msra.mxu0 0.0
        %1455 = vmatprep.subr.mxu0 0.0
        %1456 = vmatpush1.xpose.msra.mxu0 0.0
        %1457 = vmatprep.subr.mxu0 0.0
        %1458 = vmatpush1.xpose.msra.mxu0 0.0
        %1459 = vmatprep.subr.mxu0 0.0
        %1460 = vmatpush1.xpose.msra.mxu0 0.0
        %1461 = vmatprep.subr.mxu0 0.0
        %1462 = vmatpush1.xpose.msra.mxu0 0.0
        %1463 = vmatprep.subr.mxu0 0.0
        %1464 = vmatpush1.xpose.msra.mxu0 0.0
        %1465 = vmatprep.subr.mxu0 0.0
        %1466 = vmatpush1.xpose.msra.mxu0 0.0
        %1467 = vmatprep.subr.mxu0 0.0
        %1468 = vmatpush1.xpose.msra.mxu0 0.0
        %1469 = vmatprep.subr.mxu0 0.0
        %1470 = vmatpush1.xpose.msra.mxu0 0.0
        %1471 = vmatprep.subr.mxu0 0.0
        %1472 = vmatpush1.xpose.msra.mxu0 0.0
        %1473 = vmatprep.subr.mxu0 0.0
        %1474 = vmatpush1.xpose.msra.mxu0 0.0
        %1475 = vmatprep.subr.mxu0 0.0
        %1476 = vmatpush1.xpose.msra.mxu0 0.0
        %1477 = vmatprep.subr.mxu0 0.0
        %1478 = vmatpush1.xpose.msra.mxu0 0.0
        %1479 = vmatprep.subr.mxu0 0.0
        %1480 = vmatpush1.xpose.msra.mxu0 %v1447
        %1481 = vmatprep.subr.mxu0 0.0
        %1482 = vmatpush2.xpose.msra.mxu0 0.0
        %1483 = vmatprep.subr.mxu0 0.0
        %1484 = vmatpush2.xpose.msra.mxu0 0.0
        %1485 = vmatprep.subr.mxu0 0.0
        %1486 = vmatpush2.xpose.msra.mxu0 0.0
        %1487 = vmatprep.subr.mxu0 0.0
        %1488 = vmatpush2.xpose.msra.mxu0 0.0
        %1489 = vmatprep.subr.mxu0 0.0
        %1490 = vmatpush2.xpose.msra.mxu0 0.0
        %1491 = vmatprep.subr.mxu0 0.0
        %1492 = vmatpush2.xpose.msra.mxu0 0.0
        %1493 = vmatprep.subr.mxu0 0.0
        %1494 = vmatpush2.xpose.msra.mxu0 0.0
        %1495 = vmatprep.subr.mxu0 0.0
        %1496 = vmatpush2.xpose.msra.mxu0 0.0
        %1497 = vmatprep.subr.mxu0 0.0
        %1498 = vmatpush2.xpose.msra.mxu0 0.0
        %1499 = vmatprep.subr.mxu0 0.0
        %1500 = vmatpush2.xpose.msra.mxu0 0.0
        %1501 = vmatprep.subr.mxu0 0.0
        %1502 = vmatpush2.xpose.msra.mxu0 0.0
        %1503 = vmatprep.subr.mxu0 0.0
        %1504 = vmatpush2.xpose.msra.mxu0 0.0
        %1505 = vmatprep.subr.mxu0 0.0
        %1506 = vmatpush2.xpose.msra.mxu0 0.0
        %1507 = vmatprep.subr.mxu0 0.0
        %1508 = vmatpush2.xpose.msra.mxu0 0.0
        %1509 = vmatprep.subr.mxu0 0.0
        %1510 = vmatpush2.xpose.msra.mxu0 0.0
        %1511 = vmatprep.subr.mxu0 0.0
        %1512 = vmatpush2.xpose.msra.mxu0 0.0
        %1513 = vmatprep.mubr.f32.mxu0 0.0
        %1514 = vmatmul.mubr.f32.gmra.mxu0 %v1445
        %v1515 = vpop.f32.mrf.mxu0
        %v1516 = vadd.f32 0.0, %v1515
        %v1517 = vpop.f32.mrf.mxu0
        %1518 = vdwg.mxu0
        %v1519 = vmul.f32 %v1438, 0.35355338
        %v1520 = vmul.f32 %v1516, 0.35355338
        %v1521 = vsel %vm1041, %v1519, -inf
        %1522 = vmax.xlane.f32.xlu0 %v1521
        %v1523 = vpop.xlane.xlu0 %1522
        %v1524 = vsel %vm1041, %v1520, -inf
        %1525 = vmax.xlane.f32.xlu0 %v1524
        %v1526 = vpop.xlane.xlu0 %1525
        %v1527 = vsub.f32 %v1519, %v1523
        %v1528 = vsub.f32 %v1520, %v1526
        %v1529 = vmul.f32 %v1527, 1.442695
        %v1530 = vpow.pop %v1529
        %v1531 = vmul.f32 %v1528, 1.442695
        %v1532 = vpow.pop %v1531
        %v1533 = vsel %vm1041, %v1530, 0.0
        %1534 = vadd.xlane.f32.xlu0 %v1533
        %v1535 = vpop.xlane.xlu0 %1534
        %v1536 = vsel %vm1041, %v1532, 0.0
        %1537 = vadd.xlane.f32.xlu0 %v1536
        %v1538 = vpop.xlane.xlu0 %1537
        %v1539 = vrcp.pop %v1535
        %v1540 = vrcp.pop %v1538
        %v1541 = vmul.f32 %v1530, %v1539
        %v1542 = vmul.f32 %v1532, %v1540
        %1544 = vrot.lane.b32.xlu0 %v1021, 120
        %v1545 = vpop.permute.xlu0 %1544
        %v1548 = vsel %vm1041, %v1541, 0
        %1550 = vmatprep.subr.mxu0 0.0
        %1551 = vmatpush1.msra.mxu0 0.0
        %1552 = vmatprep.subr.mxu0 0.0
        %1553 = vmatpush1.msra.mxu0 0.0
        %1554 = vmatprep.subr.mxu0 0.0
        %1555 = vmatpush1.msra.mxu0 0.0
        %1556 = vmatprep.subr.mxu0 0.0
        %1557 = vmatpush1.msra.mxu0 0.0
        %1558 = vmatprep.subr.mxu0 0.0
        %1559 = vmatpush1.msra.mxu0 0.0
        %1560 = vmatprep.subr.mxu0 0.0
        %1561 = vmatpush1.msra.mxu0 0.0
        %1562 = vmatprep.subr.mxu0 0.0
        %1563 = vmatpush1.msra.mxu0 0.0
        %1564 = vmatprep.subr.mxu0 0.0
        %1565 = vmatpush1.msra.mxu0 0.0
        %1566 = vmatprep.subr.mxu0 0.0
        %1567 = vmatpush1.msra.mxu0 0.0
        %1568 = vmatprep.subr.mxu0 0.0
        %1569 = vmatpush1.msra.mxu0 0.0
        %1570 = vmatprep.subr.mxu0 0.0
        %1571 = vmatpush1.msra.mxu0 0.0
        %1572 = vmatprep.subr.mxu0 0.0
        %1573 = vmatpush1.msra.mxu0 0.0
        %1574 = vmatprep.subr.mxu0 0.0
        %1575 = vmatpush1.msra.mxu0 0.0
        %1576 = vmatprep.subr.mxu0 0.0
        %1577 = vmatpush1.msra.mxu0 0.0
        %1578 = vmatprep.subr.mxu0 0.0
        %1579 = vmatpush1.msra.mxu0 0.0
        %1580 = vmatprep.subr.mxu0 0.0
        %1581 = vmatpush1.msra.mxu0 %v1545
        %1582 = vmatprep.subr.mxu0 0.0
        %1583 = vmatpush2.msra.mxu0 0.0
        %1584 = vmatprep.subr.mxu0 0.0
        %1585 = vmatpush2.msra.mxu0 0.0
        %1586 = vmatprep.subr.mxu0 0.0
        %1587 = vmatpush2.msra.mxu0 0.0
        %1588 = vmatprep.subr.mxu0 0.0
        %1589 = vmatpush2.msra.mxu0 0.0
        %1590 = vmatprep.subr.mxu0 0.0
        %1591 = vmatpush2.msra.mxu0 0.0
        %1592 = vmatprep.subr.mxu0 0.0
        %1593 = vmatpush2.msra.mxu0 0.0
        %1594 = vmatprep.subr.mxu0 0.0
        %1595 = vmatpush2.msra.mxu0 0.0
        %1596 = vmatprep.subr.mxu0 0.0
        %1597 = vmatpush2.msra.mxu0 0.0
        %1598 = vmatprep.subr.mxu0 0.0
        %1599 = vmatpush2.msra.mxu0 0.0
        %1600 = vmatprep.subr.mxu0 0.0
        %1601 = vmatpush2.msra.mxu0 0.0
        %1602 = vmatprep.subr.mxu0 0.0
        %1603 = vmatpush2.msra.mxu0 0.0
        %1604 = vmatprep.subr.mxu0 0.0
        %1605 = vmatpush2.msra.mxu0 0.0
        %1606 = vmatprep.subr.mxu0 0.0
        %1607 = vmatpush2.msra.mxu0 0.0
        %1608 = vmatprep.subr.mxu0 0.0
        %1609 = vmatpush2.msra.mxu0 0.0
        %1610 = vmatprep.subr.mxu0 0.0
        %1611 = vmatpush2.msra.mxu0 0.0
        %1612 = vmatprep.subr.mxu0 0.0
        %1613 = vmatpush2.msra.mxu0 0.0
        %1614 = vmatprep.mubr.f32.mxu0 0.0
        %1615 = vmatmul.mubr.f32.gmra.mxu0 %v1548
        %v1616 = vpop.f32.mrf.mxu0
        %v1617 = vadd.f32 0.0, %v1616
        %v1618 = vpop.f32.mrf.mxu0
        %1619 = vdwg.mxu0
        %1621 = vrot.lane.b32.xlu0 %v1027, 120
        %v1622 = vpop.permute.xlu0 %1621
        %v1625 = vsel %vm1041, %v1542, 0
        %1627 = vmatprep.subr.mxu0 0.0
        %1628 = vmatpush1.msra.mxu0 0.0
        %1629 = vmatprep.subr.mxu0 0.0
        %1630 = vmatpush1.msra.mxu0 0.0
        %1631 = vmatprep.subr.mxu0 0.0
        %1632 = vmatpush1.msra.mxu0 0.0
        %1633 = vmatprep.subr.mxu0 0.0
        %1634 = vmatpush1.msra.mxu0 0.0
        %1635 = vmatprep.subr.mxu0 0.0
        %1636 = vmatpush1.msra.mxu0 0.0
        %1637 = vmatprep.subr.mxu0 0.0
        %1638 = vmatpush1.msra.mxu0 0.0
        %1639 = vmatprep.subr.mxu0 0.0
        %1640 = vmatpush1.msra.mxu0 0.0
        %1641 = vmatprep.subr.mxu0 0.0
        %1642 = vmatpush1.msra.mxu0 0.0
        %1643 = vmatprep.subr.mxu0 0.0
        %1644 = vmatpush1.msra.mxu0 0.0
        %1645 = vmatprep.subr.mxu0 0.0
        %1646 = vmatpush1.msra.mxu0 0.0
        %1647 = vmatprep.subr.mxu0 0.0
        %1648 = vmatpush1.msra.mxu0 0.0
        %1649 = vmatprep.subr.mxu0 0.0
        %1650 = vmatpush1.msra.mxu0 0.0
        %1651 = vmatprep.subr.mxu0 0.0
        %1652 = vmatpush1.msra.mxu0 0.0
        %1653 = vmatprep.subr.mxu0 0.0
        %1654 = vmatpush1.msra.mxu0 0.0
        %1655 = vmatprep.subr.mxu0 0.0
        %1656 = vmatpush1.msra.mxu0 0.0
        %1657 = vmatprep.subr.mxu0 0.0
        %1658 = vmatpush1.msra.mxu0 %v1622
        %1659 = vmatprep.subr.mxu0 0.0
        %1660 = vmatpush2.msra.mxu0 0.0
        %1661 = vmatprep.subr.mxu0 0.0
        %1662 = vmatpush2.msra.mxu0 0.0
        %1663 = vmatprep.subr.mxu0 0.0
        %1664 = vmatpush2.msra.mxu0 0.0
        %1665 = vmatprep.subr.mxu0 0.0
        %1666 = vmatpush2.msra.mxu0 0.0
        %1667 = vmatprep.subr.mxu0 0.0
        %1668 = vmatpush2.msra.mxu0 0.0
        %1669 = vmatprep.subr.mxu0 0.0
        %1670 = vmatpush2.msra.mxu0 0.0
        %1671 = vmatprep.subr.mxu0 0.0
        %1672 = vmatpush2.msra.mxu0 0.0
        %1673 = vmatprep.subr.mxu0 0.0
        %1674 = vmatpush2.msra.mxu0 0.0
        %1675 = vmatprep.subr.mxu0 0.0
        %1676 = vmatpush2.msra.mxu0 0.0
        %1677 = vmatprep.subr.mxu0 0.0
        %1678 = vmatpush2.msra.mxu0 0.0
        %1679 = vmatprep.subr.mxu0 0.0
        %1680 = vmatpush2.msra.mxu0 0.0
        %1681 = vmatprep.subr.mxu0 0.0
        %1682 = vmatpush2.msra.mxu0 0.0
        %1683 = vmatprep.subr.mxu0 0.0
        %1684 = vmatpush2.msra.mxu0 0.0
        %1685 = vmatprep.subr.mxu0 0.0
        %1686 = vmatpush2.msra.mxu0 0.0
        %1687 = vmatprep.subr.mxu0 0.0
        %1688 = vmatpush2.msra.mxu0 0.0
        %1689 = vmatprep.subr.mxu0 0.0
        %1690 = vmatpush2.msra.mxu0 0.0
        %1691 = vmatprep.mubr.f32.mxu0 0.0
        %1692 = vmatmul.mubr.f32.gmra.mxu0 %v1625
        %v1693 = vpop.f32.mrf.mxu0
        %v1694 = vadd.f32 0.0, %v1693
        %v1695 = vpop.f32.mrf.mxu0
        %1696 = vdwg.mxu0
        %1697 = vrot.lane.b32.xlu0 %v1019, 112
        %v1698 = vpop.permute.xlu0 %1697
        %1699 = vrot.lane.b32.xlu0 %v1019, 48
        %v1700 = vpop.permute.xlu0 %1699
        %v1701 = vsel %vm1041, %v1698, 0
        %v1703 = vsel %vm1041, %v1700, 0
        %1705 = vmatprep.subr.mxu0 0.0
        %1706 = vmatpush1.xpose.msra.mxu0 0.0
        %1707 = vmatprep.subr.mxu0 0.0
        %1708 = vmatpush1.xpose.msra.mxu0 0.0
        %1709 = vmatprep.subr.mxu0 0.0
        %1710 = vmatpush1.xpose.msra.mxu0 0.0
        %1711 = vmatprep.subr.mxu0 0.0
        %1712 = vmatpush1.xpose.msra.mxu0 0.0
        %1713 = vmatprep.subr.mxu0 0.0
        %1714 = vmatpush1.xpose.msra.mxu0 0.0
        %1715 = vmatprep.subr.mxu0 0.0
        %1716 = vmatpush1.xpose.msra.mxu0 0.0
        %1717 = vmatprep.subr.mxu0 0.0
        %1718 = vmatpush1.xpose.msra.mxu0 0.0
        %1719 = vmatprep.subr.mxu0 0.0
        %1720 = vmatpush1.xpose.msra.mxu0 0.0
        %1721 = vmatprep.subr.mxu0 0.0
        %1722 = vmatpush1.xpose.msra.mxu0 0.0
        %1723 = vmatprep.subr.mxu0 0.0
        %1724 = vmatpush1.xpose.msra.mxu0 0.0
        %1725 = vmatprep.subr.mxu0 0.0
        %1726 = vmatpush1.xpose.msra.mxu0 0.0
        %1727 = vmatprep.subr.mxu0 0.0
        %1728 = vmatpush1.xpose.msra.mxu0 0.0
        %1729 = vmatprep.subr.mxu0 0.0
        %1730 = vmatpush1.xpose.msra.mxu0 0.0
        %1731 = vmatprep.subr.mxu0 0.0
        %1732 = vmatpush1.xpose.msra.mxu0 0.0
        %1733 = vmatprep.subr.mxu0 0.0
        %1734 = vmatpush1.xpose.msra.mxu0 0.0
        %1735 = vmatprep.subr.mxu0 0.0
        %1736 = vmatpush1.xpose.msra.mxu0 %v1703
        %1737 = vmatprep.subr.mxu0 0.0
        %1738 = vmatpush2.xpose.msra.mxu0 0.0
        %1739 = vmatprep.subr.mxu0 0.0
        %1740 = vmatpush2.xpose.msra.mxu0 0.0
        %1741 = vmatprep.subr.mxu0 0.0
        %1742 = vmatpush2.xpose.msra.mxu0 0.0
        %1743 = vmatprep.subr.mxu0 0.0
        %1744 = vmatpush2.xpose.msra.mxu0 0.0
        %1745 = vmatprep.subr.mxu0 0.0
        %1746 = vmatpush2.xpose.msra.mxu0 0.0
        %1747 = vmatprep.subr.mxu0 0.0
        %1748 = vmatpush2.xpose.msra.mxu0 0.0
        %1749 = vmatprep.subr.mxu0 0.0
        %1750 = vmatpush2.xpose.msra.mxu0 0.0
        %1751 = vmatprep.subr.mxu0 0.0
        %1752 = vmatpush2.xpose.msra.mxu0 0.0
        %1753 = vmatprep.subr.mxu0 0.0
        %1754 = vmatpush2.xpose.msra.mxu0 0.0
        %1755 = vmatprep.subr.mxu0 0.0
        %1756 = vmatpush2.xpose.msra.mxu0 0.0
        %1757 = vmatprep.subr.mxu0 0.0
        %1758 = vmatpush2.xpose.msra.mxu0 0.0
        %1759 = vmatprep.subr.mxu0 0.0
        %1760 = vmatpush2.xpose.msra.mxu0 0.0
        %1761 = vmatprep.subr.mxu0 0.0
        %1762 = vmatpush2.xpose.msra.mxu0 0.0
        %1763 = vmatprep.subr.mxu0 0.0
        %1764 = vmatpush2.xpose.msra.mxu0 0.0
        %1765 = vmatprep.subr.mxu0 0.0
        %1766 = vmatpush2.xpose.msra.mxu0 0.0
        %1767 = vmatprep.subr.mxu0 0.0
        %1768 = vmatpush2.xpose.msra.mxu0 0.0
        %1769 = vmatprep.mubr.f32.mxu0 0.0
        %1770 = vmatmul.mubr.f32.gmra.mxu0 %v1701
        %v1771 = vpop.f32.mrf.mxu0
        %v1772 = vadd.f32 0.0, %v1771
        %v1773 = vpop.f32.mrf.mxu0
        %1774 = vdwg.mxu0
        %1775 = vrot.lane.b32.xlu0 %v1025, 112
        %v1776 = vpop.permute.xlu0 %1775
        %1777 = vrot.lane.b32.xlu0 %v1025, 48
        %v1778 = vpop.permute.xlu0 %1777
        %v1779 = vsel %vm1041, %v1776, 0
        %v1781 = vsel %vm1041, %v1778, 0
        %1783 = vmatprep.subr.mxu0 0.0
        %1784 = vmatpush1.xpose.msra.mxu0 0.0
        %1785 = vmatprep.subr.mxu0 0.0
        %1786 = vmatpush1.xpose.msra.mxu0 0.0
        %1787 = vmatprep.subr.mxu0 0.0
        %1788 = vmatpush1.xpose.msra.mxu0 0.0
        %1789 = vmatprep.subr.mxu0 0.0
        %1790 = vmatpush1.xpose.msra.mxu0 0.0
        %1791 = vmatprep.subr.mxu0 0.0
        %1792 = vmatpush1.xpose.msra.mxu0 0.0
        %1793 = vmatprep.subr.mxu0 0.0
        %1794 = vmatpush1.xpose.msra.mxu0 0.0
        %1795 = vmatprep.subr.mxu0 0.0
        %1796 = vmatpush1.xpose.msra.mxu0 0.0
        %1797 = vmatprep.subr.mxu0 0.0
        %1798 = vmatpush1.xpose.msra.mxu0 0.0
        %1799 = vmatprep.subr.mxu0 0.0
        %1800 = vmatpush1.xpose.msra.mxu0 0.0
        %1801 = vmatprep.subr.mxu0 0.0
        %1802 = vmatpush1.xpose.msra.mxu0 0.0
        %1803 = vmatprep.subr.mxu0 0.0
        %1804 = vmatpush1.xpose.msra.mxu0 0.0
        %1805 = vmatprep.subr.mxu0 0.0
        %1806 = vmatpush1.xpose.msra.mxu0 0.0
        %1807 = vmatprep.subr.mxu0 0.0
        %1808 = vmatpush1.xpose.msra.mxu0 0.0
        %1809 = vmatprep.subr.mxu0 0.0
        %1810 = vmatpush1.xpose.msra.mxu0 0.0
        %1811 = vmatprep.subr.mxu0 0.0
        %1812 = vmatpush1.xpose.msra.mxu0 0.0
        %1813 = vmatprep.subr.mxu0 0.0
        %1814 = vmatpush1.xpose.msra.mxu0 %v1781
        %1815 = vmatprep.subr.mxu0 0.0
        %1816 = vmatpush2.xpose.msra.mxu0 0.0
        %1817 = vmatprep.subr.mxu0 0.0
        %1818 = vmatpush2.xpose.msra.mxu0 0.0
        %1819 = vmatprep.subr.mxu0 0.0
        %1820 = vmatpush2.xpose.msra.mxu0 0.0
        %1821 = vmatprep.subr.mxu0 0.0
        %1822 = vmatpush2.xpose.msra.mxu0 0.0
        %1823 = vmatprep.subr.mxu0 0.0
        %1824 = vmatpush2.xpose.msra.mxu0 0.0
        %1825 = vmatprep.subr.mxu0 0.0
        %1826 = vmatpush2.xpose.msra.mxu0 0.0
        %1827 = vmatprep.subr.mxu0 0.0
        %1828 = vmatpush2.xpose.msra.mxu0 0.0
        %1829 = vmatprep.subr.mxu0 0.0
        %1830 = vmatpush2.xpose.msra.mxu0 0.0
        %1831 = vmatprep.subr.mxu0 0.0
        %1832 = vmatpush2.xpose.msra.mxu0 0.0
        %1833 = vmatprep.subr.mxu0 0.0
        %1834 = vmatpush2.xpose.msra.mxu0 0.0
        %1835 = vmatprep.subr.mxu0 0.0
        %1836 = vmatpush2.xpose.msra.mxu0 0.0
        %1837 = vmatprep.subr.mxu0 0.0
        %1838 = vmatpush2.xpose.msra.mxu0 0.0
        %1839 = vmatprep.subr.mxu0 0.0
        %1840 = vmatpush2.xpose.msra.mxu0 0.0
        %1841 = vmatprep.subr.mxu0 0.0
        %1842 = vmatpush2.xpose.msra.mxu0 0.0
        %1843 = vmatprep.subr.mxu0 0.0
        %1844 = vmatpush2.xpose.msra.mxu0 0.0
        %1845 = vmatprep.subr.mxu0 0.0
        %1846 = vmatpush2.xpose.msra.mxu0 0.0
        %1847 = vmatprep.mubr.f32.mxu0 0.0
        %1848 = vmatmul.mubr.f32.gmra.mxu0 %v1779
        %v1849 = vpop.f32.mrf.mxu0
        %v1850 = vadd.f32 0.0, %v1849
        %v1851 = vpop.f32.mrf.mxu0
        %1852 = vdwg.mxu0
        %v1853 = vmul.f32 %v1772, 0.35355338
        %v1854 = vmul.f32 %v1850, 0.35355338
        %v1855 = vsel %vm1041, %v1853, -inf
        %1856 = vmax.xlane.f32.xlu0 %v1855
        %v1857 = vpop.xlane.xlu0 %1856
        %v1858 = vsel %vm1041, %v1854, -inf
        %1859 = vmax.xlane.f32.xlu0 %v1858
        %v1860 = vpop.xlane.xlu0 %1859
        %v1861 = vsub.f32 %v1853, %v1857
        %v1862 = vsub.f32 %v1854, %v1860
        %v1863 = vmul.f32 %v1861, 1.442695
        %v1864 = vpow.pop %v1863
        %v1865 = vmul.f32 %v1862, 1.442695
        %v1866 = vpow.pop %v1865
        %v1867 = vsel %vm1041, %v1864, 0.0
        %1868 = vadd.xlane.f32.xlu0 %v1867
        %v1869 = vpop.xlane.xlu0 %1868
        %v1870 = vsel %vm1041, %v1866, 0.0
        %1871 = vadd.xlane.f32.xlu0 %v1870
        %v1872 = vpop.xlane.xlu0 %1871
        %v1873 = vrcp.pop %v1869
        %v1874 = vrcp.pop %v1872
        %v1875 = vmul.f32 %v1864, %v1873
        %v1876 = vmul.f32 %v1866, %v1874
        %1877 = vrot.lane.b32.xlu0 %v1021, 112
        %v1878 = vpop.permute.xlu0 %1877
        %v1881 = vsel %vm1041, %v1875, 0
        %1883 = vmatprep.subr.mxu0 0.0
        %1884 = vmatpush1.msra.mxu0 0.0
        %1885 = vmatprep.subr.mxu0 0.0
        %1886 = vmatpush1.msra.mxu0 0.0
        %1887 = vmatprep.subr.mxu0 0.0
        %1888 = vmatpush1.msra.mxu0 0.0
        %1889 = vmatprep.subr.mxu0 0.0
        %1890 = vmatpush1.msra.mxu0 0.0
        %1891 = vmatprep.subr.mxu0 0.0
        %1892 = vmatpush1.msra.mxu0 0.0
        %1893 = vmatprep.subr.mxu0 0.0
        %1894 = vmatpush1.msra.mxu0 0.0
        %1895 = vmatprep.subr.mxu0 0.0
        %1896 = vmatpush1.msra.mxu0 0.0
        %1897 = vmatprep.subr.mxu0 0.0
        %1898 = vmatpush1.msra.mxu0 0.0
        %1899 = vmatprep.subr.mxu0 0.0
        %1900 = vmatpush1.msra.mxu0 0.0
        %1901 = vmatprep.subr.mxu0 0.0
        %1902 = vmatpush1.msra.mxu0 0.0
        %1903 = vmatprep.subr.mxu0 0.0
        %1904 = vmatpush1.msra.mxu0 0.0
        %1905 = vmatprep.subr.mxu0 0.0
        %1906 = vmatpush1.msra.mxu0 0.0
        %1907 = vmatprep.subr.mxu0 0.0
        %1908 = vmatpush1.msra.mxu0 0.0
        %1909 = vmatprep.subr.mxu0 0.0
        %1910 = vmatpush1.msra.mxu0 0.0
        %1911 = vmatprep.subr.mxu0 0.0
        %1912 = vmatpush1.msra.mxu0 0.0
        %1913 = vmatprep.subr.mxu0 0.0
        %1914 = vmatpush1.msra.mxu0 %v1878
        %1915 = vmatprep.subr.mxu0 0.0
        %1916 = vmatpush2.msra.mxu0 0.0
        %1917 = vmatprep.subr.mxu0 0.0
        %1918 = vmatpush2.msra.mxu0 0.0
        %1919 = vmatprep.subr.mxu0 0.0
        %1920 = vmatpush2.msra.mxu0 0.0
        %1921 = vmatprep.subr.mxu0 0.0
        %1922 = vmatpush2.msra.mxu0 0.0
        %1923 = vmatprep.subr.mxu0 0.0
        %1924 = vmatpush2.msra.mxu0 0.0
        %1925 = vmatprep.subr.mxu0 0.0
        %1926 = vmatpush2.msra.mxu0 0.0
        %1927 = vmatprep.subr.mxu0 0.0
        %1928 = vmatpush2.msra.mxu0 0.0
        %1929 = vmatprep.subr.mxu0 0.0
        %1930 = vmatpush2.msra.mxu0 0.0
        %1931 = vmatprep.subr.mxu0 0.0
        %1932 = vmatpush2.msra.mxu0 0.0
        %1933 = vmatprep.subr.mxu0 0.0
        %1934 = vmatpush2.msra.mxu0 0.0
        %1935 = vmatprep.subr.mxu0 0.0
        %1936 = vmatpush2.msra.mxu0 0.0
        %1937 = vmatprep.subr.mxu0 0.0
        %1938 = vmatpush2.msra.mxu0 0.0
        %1939 = vmatprep.subr.mxu0 0.0
        %1940 = vmatpush2.msra.mxu0 0.0
        %1941 = vmatprep.subr.mxu0 0.0
        %1942 = vmatpush2.msra.mxu0 0.0
        %1943 = vmatprep.subr.mxu0 0.0
        %1944 = vmatpush2.msra.mxu0 0.0
        %1945 = vmatprep.subr.mxu0 0.0
        %1946 = vmatpush2.msra.mxu0 0.0
        %1947 = vmatprep.mubr.f32.mxu0 0.0
        %1948 = vmatmul.mubr.f32.gmra.mxu0 %v1881
        %v1949 = vpop.f32.mrf.mxu0
        %v1950 = vadd.f32 0.0, %v1949
        %v1951 = vpop.f32.mrf.mxu0
        %1952 = vdwg.mxu0
        %1953 = vrot.lane.b32.xlu0 %v1027, 112
        %v1954 = vpop.permute.xlu0 %1953
        %v1957 = vsel %vm1041, %v1876, 0
        %1959 = vmatprep.subr.mxu0 0.0
        %1960 = vmatpush1.msra.mxu0 0.0
        %1961 = vmatprep.subr.mxu0 0.0
        %1962 = vmatpush1.msra.mxu0 0.0
        %1963 = vmatprep.subr.mxu0 0.0
        %1964 = vmatpush1.msra.mxu0 0.0
        %1965 = vmatprep.subr.mxu0 0.0
        %1966 = vmatpush1.msra.mxu0 0.0
        %1967 = vmatprep.subr.mxu0 0.0
        %1968 = vmatpush1.msra.mxu0 0.0
        %1969 = vmatprep.subr.mxu0 0.0
        %1970 = vmatpush1.msra.mxu0 0.0
        %1971 = vmatprep.subr.mxu0 0.0
        %1972 = vmatpush1.msra.mxu0 0.0
        %1973 = vmatprep.subr.mxu0 0.0
        %1974 = vmatpush1.msra.mxu0 0.0
        %1975 = vmatprep.subr.mxu0 0.0
        %1976 = vmatpush1.msra.mxu0 0.0
        %1977 = vmatprep.subr.mxu0 0.0
        %1978 = vmatpush1.msra.mxu0 0.0
        %1979 = vmatprep.subr.mxu0 0.0
        %1980 = vmatpush1.msra.mxu0 0.0
        %1981 = vmatprep.subr.mxu0 0.0
        %1982 = vmatpush1.msra.mxu0 0.0
        %1983 = vmatprep.subr.mxu0 0.0
        %1984 = vmatpush1.msra.mxu0 0.0
        %1985 = vmatprep.subr.mxu0 0.0
        %1986 = vmatpush1.msra.mxu0 0.0
        %1987 = vmatprep.subr.mxu0 0.0
        %1988 = vmatpush1.msra.mxu0 0.0
        %1989 = vmatprep.subr.mxu0 0.0
        %1990 = vmatpush1.msra.mxu0 %v1954
        %1991 = vmatprep.subr.mxu0 0.0
        %1992 = vmatpush2.msra.mxu0 0.0
        %1993 = vmatprep.subr.mxu0 0.0
        %1994 = vmatpush2.msra.mxu0 0.0
        %1995 = vmatprep.subr.mxu0 0.0
        %1996 = vmatpush2.msra.mxu0 0.0
        %1997 = vmatprep.subr.mxu0 0.0
        %1998 = vmatpush2.msra.mxu0 0.0
        %1999 = vmatprep.subr.mxu0 0.0
        %2000 = vmatpush2.msra.mxu0 0.0
        %2001 = vmatprep.subr.mxu0 0.0
        %2002 = vmatpush2.msra.mxu0 0.0
        %2003 = vmatprep.subr.mxu0 0.0
        %2004 = vmatpush2.msra.mxu0 0.0
        %2005 = vmatprep.subr.mxu0 0.0
        %2006 = vmatpush2.msra.mxu0 0.0
        %2007 = vmatprep.subr.mxu0 0.0
        %2008 = vmatpush2.msra.mxu0 0.0
        %2009 = vmatprep.subr.mxu0 0.0
        %2010 = vmatpush2.msra.mxu0 0.0
        %2011 = vmatprep.subr.mxu0 0.0
        %2012 = vmatpush2.msra.mxu0 0.0
        %2013 = vmatprep.subr.mxu0 0.0
        %2014 = vmatpush2.msra.mxu0 0.0
        %2015 = vmatprep.subr.mxu0 0.0
        %2016 = vmatpush2.msra.mxu0 0.0
        %2017 = vmatprep.subr.mxu0 0.0
        %2018 = vmatpush2.msra.mxu0 0.0
        %2019 = vmatprep.subr.mxu0 0.0
        %2020 = vmatpush2.msra.mxu0 0.0
        %2021 = vmatprep.subr.mxu0 0.0
        %2022 = vmatpush2.msra.mxu0 0.0
        %2023 = vmatprep.mubr.f32.mxu0 0.0
        %2024 = vmatmul.mubr.f32.gmra.mxu0 %v1957
        %v2025 = vpop.f32.mrf.mxu0
        %v2026 = vadd.f32 0.0, %v2025
        %v2027 = vpop.f32.mrf.mxu0
        %2028 = vdwg.mxu0
        %2029 = vrot.lane.b32.xlu0 %v1019, 104
        %v2030 = vpop.permute.xlu0 %2029
        %2031 = vrot.lane.b32.xlu0 %v1019, 40
        %v2032 = vpop.permute.xlu0 %2031
        %v2033 = vsel %vm1041, %v2030, 0
        %v2035 = vsel %vm1041, %v2032, 0
        %2037 = vmatprep.subr.mxu0 0.0
        %2038 = vmatpush1.xpose.msra.mxu0 0.0
        %2039 = vmatprep.subr.mxu0 0.0
        %2040 = vmatpush1.xpose.msra.mxu0 0.0
        %2041 = vmatprep.subr.mxu0 0.0
        %2042 = vmatpush1.xpose.msra.mxu0 0.0
        %2043 = vmatprep.subr.mxu0 0.0
        %2044 = vmatpush1.xpose.msra.mxu0 0.0
        %2045 = vmatprep.subr.mxu0 0.0
        %2046 = vmatpush1.xpose.msra.mxu0 0.0
        %2047 = vmatprep.subr.mxu0 0.0
        %2048 = vmatpush1.xpose.msra.mxu0 0.0
        %2049 = vmatprep.subr.mxu0 0.0
        %2050 = vmatpush1.xpose.msra.mxu0 0.0
        %2051 = vmatprep.subr.mxu0 0.0
        %2052 = vmatpush1.xpose.msra.mxu0 0.0
        %2053 = vmatprep.subr.mxu0 0.0
        %2054 = vmatpush1.xpose.msra.mxu0 0.0
        %2055 = vmatprep.subr.mxu0 0.0
        %2056 = vmatpush1.xpose.msra.mxu0 0.0
        %2057 = vmatprep.subr.mxu0 0.0
        %2058 = vmatpush1.xpose.msra.mxu0 0.0
        %2059 = vmatprep.subr.mxu0 0.0
        %2060 = vmatpush1.xpose.msra.mxu0 0.0
        %2061 = vmatprep.subr.mxu0 0.0
        %2062 = vmatpush1.xpose.msra.mxu0 0.0
        %2063 = vmatprep.subr.mxu0 0.0
        %2064 = vmatpush1.xpose.msra.mxu0 0.0
        %2065 = vmatprep.subr.mxu0 0.0
        %2066 = vmatpush1.xpose.msra.mxu0 0.0
        %2067 = vmatprep.subr.mxu0 0.0
        %2068 = vmatpush1.xpose.msra.mxu0 %v2035
        %2069 = vmatprep.subr.mxu0 0.0
        %2070 = vmatpush2.xpose.msra.mxu0 0.0
        %2071 = vmatprep.subr.mxu0 0.0
        %2072 = vmatpush2.xpose.msra.mxu0 0.0
        %2073 = vmatprep.subr.mxu0 0.0
        %2074 = vmatpush2.xpose.msra.mxu0 0.0
        %2075 = vmatprep.subr.mxu0 0.0
        %2076 = vmatpush2.xpose.msra.mxu0 0.0
        %2077 = vmatprep.subr.mxu0 0.0
        %2078 = vmatpush2.xpose.msra.mxu0 0.0
        %2079 = vmatprep.subr.mxu0 0.0
        %2080 = vmatpush2.xpose.msra.mxu0 0.0
        %2081 = vmatprep.subr.mxu0 0.0
        %2082 = vmatpush2.xpose.msra.mxu0 0.0
        %2083 = vmatprep.subr.mxu0 0.0
        %2084 = vmatpush2.xpose.msra.mxu0 0.0
        %2085 = vmatprep.subr.mxu0 0.0
        %2086 = vmatpush2.xpose.msra.mxu0 0.0
        %2087 = vmatprep.subr.mxu0 0.0
        %2088 = vmatpush2.xpose.msra.mxu0 0.0
        %2089 = vmatprep.subr.mxu0 0.0
        %2090 = vmatpush2.xpose.msra.mxu0 0.0
        %2091 = vmatprep.subr.mxu0 0.0
        %2092 = vmatpush2.xpose.msra.mxu0 0.0
        %2093 = vmatprep.subr.mxu0 0.0
        %2094 = vmatpush2.xpose.msra.mxu0 0.0
        %2095 = vmatprep.subr.mxu0 0.0
        %2096 = vmatpush2.xpose.msra.mxu0 0.0
        %2097 = vmatprep.subr.mxu0 0.0
        %2098 = vmatpush2.xpose.msra.mxu0 0.0
        %2099 = vmatprep.subr.mxu0 0.0
        %2100 = vmatpush2.xpose.msra.mxu0 0.0
        %2101 = vmatprep.mubr.f32.mxu0 0.0
        %2102 = vmatmul.mubr.f32.gmra.mxu0 %v2033
        %v2103 = vpop.f32.mrf.mxu0
        %v2104 = vadd.f32 0.0, %v2103
        %v2105 = vpop.f32.mrf.mxu0
        %2106 = vdwg.mxu0
        %2107 = vrot.lane.b32.xlu0 %v1025, 104
        %v2108 = vpop.permute.xlu0 %2107
        %2109 = vrot.lane.b32.xlu0 %v1025, 40
        %v2110 = vpop.permute.xlu0 %2109
        %v2111 = vsel %vm1041, %v2108, 0
        %v2113 = vsel %vm1041, %v2110, 0
        %2115 = vmatprep.subr.mxu0 0.0
        %2116 = vmatpush1.xpose.msra.mxu0 0.0
        %2117 = vmatprep.subr.mxu0 0.0
        %2118 = vmatpush1.xpose.msra.mxu0 0.0
        %2119 = vmatprep.subr.mxu0 0.0
        %2120 = vmatpush1.xpose.msra.mxu0 0.0
        %2121 = vmatprep.subr.mxu0 0.0
        %2122 = vmatpush1.xpose.msra.mxu0 0.0
        %2123 = vmatprep.subr.mxu0 0.0
        %2124 = vmatpush1.xpose.msra.mxu0 0.0
        %2125 = vmatprep.subr.mxu0 0.0
        %2126 = vmatpush1.xpose.msra.mxu0 0.0
        %2127 = vmatprep.subr.mxu0 0.0
        %2128 = vmatpush1.xpose.msra.mxu0 0.0
        %2129 = vmatprep.subr.mxu0 0.0
        %2130 = vmatpush1.xpose.msra.mxu0 0.0
        %2131 = vmatprep.subr.mxu0 0.0
        %2132 = vmatpush1.xpose.msra.mxu0 0.0
        %2133 = vmatprep.subr.mxu0 0.0
        %2134 = vmatpush1.xpose.msra.mxu0 0.0
        %2135 = vmatprep.subr.mxu0 0.0
        %2136 = vmatpush1.xpose.msra.mxu0 0.0
        %2137 = vmatprep.subr.mxu0 0.0
        %2138 = vmatpush1.xpose.msra.mxu0 0.0
        %2139 = vmatprep.subr.mxu0 0.0
        %2140 = vmatpush1.xpose.msra.mxu0 0.0
        %2141 = vmatprep.subr.mxu0 0.0
        %2142 = vmatpush1.xpose.msra.mxu0 0.0
        %2143 = vmatprep.subr.mxu0 0.0
        %2144 = vmatpush1.xpose.msra.mxu0 0.0
        %2145 = vmatprep.subr.mxu0 0.0
        %2146 = vmatpush1.xpose.msra.mxu0 %v2113
        %2147 = vmatprep.subr.mxu0 0.0
        %2148 = vmatpush2.xpose.msra.mxu0 0.0
        %2149 = vmatprep.subr.mxu0 0.0
        %2150 = vmatpush2.xpose.msra.mxu0 0.0
        %2151 = vmatprep.subr.mxu0 0.0
        %2152 = vmatpush2.xpose.msra.mxu0 0.0
        %2153 = vmatprep.subr.mxu0 0.0
        %2154 = vmatpush2.xpose.msra.mxu0 0.0
        %2155 = vmatprep.subr.mxu0 0.0
        %2156 = vmatpush2.xpose.msra.mxu0 0.0
        %2157 = vmatprep.subr.mxu0 0.0
        %2158 = vmatpush2.xpose.msra.mxu0 0.0
        %2159 = vmatprep.subr.mxu0 0.0
        %2160 = vmatpush2.xpose.msra.mxu0 0.0
        %2161 = vmatprep.subr.mxu0 0.0
        %2162 = vmatpush2.xpose.msra.mxu0 0.0
        %2163 = vmatprep.subr.mxu0 0.0
        %2164 = vmatpush2.xpose.msra.mxu0 0.0
        %2165 = vmatprep.subr.mxu0 0.0
        %2166 = vmatpush2.xpose.msra.mxu0 0.0
        %2167 = vmatprep.subr.mxu0 0.0
        %2168 = vmatpush2.xpose.msra.mxu0 0.0
        %2169 = vmatprep.subr.mxu0 0.0
        %2170 = vmatpush2.xpose.msra.mxu0 0.0
        %2171 = vmatprep.subr.mxu0 0.0
        %2172 = vmatpush2.xpose.msra.mxu0 0.0
        %2173 = vmatprep.subr.mxu0 0.0
        %2174 = vmatpush2.xpose.msra.mxu0 0.0
        %2175 = vmatprep.subr.mxu0 0.0
        %2176 = vmatpush2.xpose.msra.mxu0 0.0
        %2177 = vmatprep.subr.mxu0 0.0
        %2178 = vmatpush2.xpose.msra.mxu0 0.0
        %2179 = vmatprep.mubr.f32.mxu0 0.0
        %2180 = vmatmul.mubr.f32.gmra.mxu0 %v2111
        %v2181 = vpop.f32.mrf.mxu0
        %v2182 = vadd.f32 0.0, %v2181
        %v2183 = vpop.f32.mrf.mxu0
        %2184 = vdwg.mxu0
        %v2185 = vmul.f32 %v2104, 0.35355338
        %v2186 = vmul.f32 %v2182, 0.35355338
        %v2187 = vsel %vm1041, %v2185, -inf
        %2188 = vmax.xlane.f32.xlu0 %v2187
        %v2189 = vpop.xlane.xlu0 %2188
        %v2190 = vsel %vm1041, %v2186, -inf
        %2191 = vmax.xlane.f32.xlu0 %v2190
        %v2192 = vpop.xlane.xlu0 %2191
        %v2193 = vsub.f32 %v2185, %v2189
        %v2194 = vsub.f32 %v2186, %v2192
        %v2195 = vmul.f32 %v2193, 1.442695
        %v2196 = vpow.pop %v2195
        %v2197 = vmul.f32 %v2194, 1.442695
        %v2198 = vpow.pop %v2197
        %v2199 = vsel %vm1041, %v2196, 0.0
        %2200 = vadd.xlane.f32.xlu0 %v2199
        %v2201 = vpop.xlane.xlu0 %2200
        %v2202 = vsel %vm1041, %v2198, 0.0
        %2203 = vadd.xlane.f32.xlu0 %v2202
        %v2204 = vpop.xlane.xlu0 %2203
        %v2205 = vrcp.pop %v2201
        %v2206 = vrcp.pop %v2204
        %v2207 = vmul.f32 %v2196, %v2205
        %v2208 = vmul.f32 %v2198, %v2206
        %2209 = vrot.lane.b32.xlu0 %v1021, 104
        %v2210 = vpop.permute.xlu0 %2209
        %v2213 = vsel %vm1041, %v2207, 0
        %2215 = vmatprep.subr.mxu0 0.0
        %2216 = vmatpush1.msra.mxu0 0.0
        %2217 = vmatprep.subr.mxu0 0.0
        %2218 = vmatpush1.msra.mxu0 0.0
        %2219 = vmatprep.subr.mxu0 0.0
        %2220 = vmatpush1.msra.mxu0 0.0
        %2221 = vmatprep.subr.mxu0 0.0
        %2222 = vmatpush1.msra.mxu0 0.0
        %2223 = vmatprep.subr.mxu0 0.0
        %2224 = vmatpush1.msra.mxu0 0.0
        %2225 = vmatprep.subr.mxu0 0.0
        %2226 = vmatpush1.msra.mxu0 0.0
        %2227 = vmatprep.subr.mxu0 0.0
        %2228 = vmatpush1.msra.mxu0 0.0
        %2229 = vmatprep.subr.mxu0 0.0
        %2230 = vmatpush1.msra.mxu0 0.0
        %2231 = vmatprep.subr.mxu0 0.0
        %2232 = vmatpush1.msra.mxu0 0.0
        %2233 = vmatprep.subr.mxu0 0.0
        %2234 = vmatpush1.msra.mxu0 0.0
        %2235 = vmatprep.subr.mxu0 0.0
        %2236 = vmatpush1.msra.mxu0 0.0
        %2237 = vmatprep.subr.mxu0 0.0
        %2238 = vmatpush1.msra.mxu0 0.0
        %2239 = vmatprep.subr.mxu0 0.0
        %2240 = vmatpush1.msra.mxu0 0.0
        %2241 = vmatprep.subr.mxu0 0.0
        %2242 = vmatpush1.msra.mxu0 0.0
        %2243 = vmatprep.subr.mxu0 0.0
        %2244 = vmatpush1.msra.mxu0 0.0
        %2245 = vmatprep.subr.mxu0 0.0
        %2246 = vmatpush1.msra.mxu0 %v2210
        %2247 = vmatprep.subr.mxu0 0.0
        %2248 = vmatpush2.msra.mxu0 0.0
        %2249 = vmatprep.subr.mxu0 0.0
        %2250 = vmatpush2.msra.mxu0 0.0
        %2251 = vmatprep.subr.mxu0 0.0
        %2252 = vmatpush2.msra.mxu0 0.0
        %2253 = vmatprep.subr.mxu0 0.0
        %2254 = vmatpush2.msra.mxu0 0.0
        %2255 = vmatprep.subr.mxu0 0.0
        %2256 = vmatpush2.msra.mxu0 0.0
        %2257 = vmatprep.subr.mxu0 0.0
        %2258 = vmatpush2.msra.mxu0 0.0
        %2259 = vmatprep.subr.mxu0 0.0
        %2260 = vmatpush2.msra.mxu0 0.0
        %2261 = vmatprep.subr.mxu0 0.0
        %2262 = vmatpush2.msra.mxu0 0.0
        %2263 = vmatprep.subr.mxu0 0.0
        %2264 = vmatpush2.msra.mxu0 0.0
        %2265 = vmatprep.subr.mxu0 0.0
        %2266 = vmatpush2.msra.mxu0 0.0
        %2267 = vmatprep.subr.mxu0 0.0
        %2268 = vmatpush2.msra.mxu0 0.0
        %2269 = vmatprep.subr.mxu0 0.0
        %2270 = vmatpush2.msra.mxu0 0.0
        %2271 = vmatprep.subr.mxu0 0.0
        %2272 = vmatpush2.msra.mxu0 0.0
        %2273 = vmatprep.subr.mxu0 0.0
        %2274 = vmatpush2.msra.mxu0 0.0
        %2275 = vmatprep.subr.mxu0 0.0
        %2276 = vmatpush2.msra.mxu0 0.0
        %2277 = vmatprep.subr.mxu0 0.0
        %2278 = vmatpush2.msra.mxu0 0.0
        %2279 = vmatprep.mubr.f32.mxu0 0.0
        %2280 = vmatmul.mubr.f32.gmra.mxu0 %v2213
        %v2281 = vpop.f32.mrf.mxu0
        %v2282 = vadd.f32 0.0, %v2281
        %v2283 = vpop.f32.mrf.mxu0
        %2284 = vdwg.mxu0
        %2285 = vrot.lane.b32.xlu0 %v1027, 104
        %v2286 = vpop.permute.xlu0 %2285
        %v2289 = vsel %vm1041, %v2208, 0
        %2291 = vmatprep.subr.mxu0 0.0
        %2292 = vmatpush1.msra.mxu0 0.0
        %2293 = vmatprep.subr.mxu0 0.0
        %2294 = vmatpush1.msra.mxu0 0.0
        %2295 = vmatprep.subr.mxu0 0.0
        %2296 = vmatpush1.msra.mxu0 0.0
        %2297 = vmatprep.subr.mxu0 0.0
        %2298 = vmatpush1.msra.mxu0 0.0
        %2299 = vmatprep.subr.mxu0 0.0
        %2300 = vmatpush1.msra.mxu0 0.0
        %2301 = vmatprep.subr.mxu0 0.0
        %2302 = vmatpush1.msra.mxu0 0.0
        %2303 = vmatprep.subr.mxu0 0.0
        %2304 = vmatpush1.msra.mxu0 0.0
        %2305 = vmatprep.subr.mxu0 0.0
        %2306 = vmatpush1.msra.mxu0 0.0
        %2307 = vmatprep.subr.mxu0 0.0
        %2308 = vmatpush1.msra.mxu0 0.0
        %2309 = vmatprep.subr.mxu0 0.0
        %2310 = vmatpush1.msra.mxu0 0.0
        %2311 = vmatprep.subr.mxu0 0.0
        %2312 = vmatpush1.msra.mxu0 0.0
        %2313 = vmatprep.subr.mxu0 0.0
        %2314 = vmatpush1.msra.mxu0 0.0
        %2315 = vmatprep.subr.mxu0 0.0
        %2316 = vmatpush1.msra.mxu0 0.0
        %2317 = vmatprep.subr.mxu0 0.0
        %2318 = vmatpush1.msra.mxu0 0.0
        %2319 = vmatprep.subr.mxu0 0.0
        %2320 = vmatpush1.msra.mxu0 0.0
        %2321 = vmatprep.subr.mxu0 0.0
        %2322 = vmatpush1.msra.mxu0 %v2286
        %2323 = vmatprep.subr.mxu0 0.0
        %2324 = vmatpush2.msra.mxu0 0.0
        %2325 = vmatprep.subr.mxu0 0.0
        %2326 = vmatpush2.msra.mxu0 0.0
        %2327 = vmatprep.subr.mxu0 0.0
        %2328 = vmatpush2.msra.mxu0 0.0
        %2329 = vmatprep.subr.mxu0 0.0
        %2330 = vmatpush2.msra.mxu0 0.0
        %2331 = vmatprep.subr.mxu0 0.0
        %2332 = vmatpush2.msra.mxu0 0.0
        %2333 = vmatprep.subr.mxu0 0.0
        %2334 = vmatpush2.msra.mxu0 0.0
        %2335 = vmatprep.subr.mxu0 0.0
        %2336 = vmatpush2.msra.mxu0 0.0
        %2337 = vmatprep.subr.mxu0 0.0
        %2338 = vmatpush2.msra.mxu0 0.0
        %2339 = vmatprep.subr.mxu0 0.0
        %2340 = vmatpush2.msra.mxu0 0.0
        %2341 = vmatprep.subr.mxu0 0.0
        %2342 = vmatpush2.msra.mxu0 0.0
        %2343 = vmatprep.subr.mxu0 0.0
        %2344 = vmatpush2.msra.mxu0 0.0
        %2345 = vmatprep.subr.mxu0 0.0
        %2346 = vmatpush2.msra.mxu0 0.0
        %2347 = vmatprep.subr.mxu0 0.0
        %2348 = vmatpush2.msra.mxu0 0.0
        %2349 = vmatprep.subr.mxu0 0.0
        %2350 = vmatpush2.msra.mxu0 0.0
        %2351 = vmatprep.subr.mxu0 0.0
        %2352 = vmatpush2.msra.mxu0 0.0
        %2353 = vmatprep.subr.mxu0 0.0
        %2354 = vmatpush2.msra.mxu0 0.0
        %2355 = vmatprep.mubr.f32.mxu0 0.0
        %2356 = vmatmul.mubr.f32.gmra.mxu0 %v2289
        %v2357 = vpop.f32.mrf.mxu0
        %v2358 = vadd.f32 0.0, %v2357
        %v2359 = vpop.f32.mrf.mxu0
        %2360 = vdwg.mxu0
        %2361 = vrot.lane.b32.xlu0 %v1019, 96
        %v2362 = vpop.permute.xlu0 %2361
        %2363 = vrot.lane.b32.xlu0 %v1019, 32
        %v2364 = vpop.permute.xlu0 %2363
        %v2365 = vsel %vm1041, %v2362, 0
        %v2367 = vsel %vm1041, %v2364, 0
        %2369 = vmatprep.subr.mxu0 0.0
        %2370 = vmatpush1.xpose.msra.mxu0 0.0
        %2371 = vmatprep.subr.mxu0 0.0
        %2372 = vmatpush1.xpose.msra.mxu0 0.0
        %2373 = vmatprep.subr.mxu0 0.0
        %2374 = vmatpush1.xpose.msra.mxu0 0.0
        %2375 = vmatprep.subr.mxu0 0.0
        %2376 = vmatpush1.xpose.msra.mxu0 0.0
        %2377 = vmatprep.subr.mxu0 0.0
        %2378 = vmatpush1.xpose.msra.mxu0 0.0
        %2379 = vmatprep.subr.mxu0 0.0
        %2380 = vmatpush1.xpose.msra.mxu0 0.0
        %2381 = vmatprep.subr.mxu0 0.0
        %2382 = vmatpush1.xpose.msra.mxu0 0.0
        %2383 = vmatprep.subr.mxu0 0.0
        %2384 = vmatpush1.xpose.msra.mxu0 0.0
        %2385 = vmatprep.subr.mxu0 0.0
        %2386 = vmatpush1.xpose.msra.mxu0 0.0
        %2387 = vmatprep.subr.mxu0 0.0
        %2388 = vmatpush1.xpose.msra.mxu0 0.0
        %2389 = vmatprep.subr.mxu0 0.0
        %2390 = vmatpush1.xpose.msra.mxu0 0.0
        %2391 = vmatprep.subr.mxu0 0.0
        %2392 = vmatpush1.xpose.msra.mxu0 0.0
        %2393 = vmatprep.subr.mxu0 0.0
        %2394 = vmatpush1.xpose.msra.mxu0 0.0
        %2395 = vmatprep.subr.mxu0 0.0
        %2396 = vmatpush1.xpose.msra.mxu0 0.0
        %2397 = vmatprep.subr.mxu0 0.0
        %2398 = vmatpush1.xpose.msra.mxu0 0.0
        %2399 = vmatprep.subr.mxu0 0.0
        %2400 = vmatpush1.xpose.msra.mxu0 %v2367
        %2401 = vmatprep.subr.mxu0 0.0
        %2402 = vmatpush2.xpose.msra.mxu0 0.0
        %2403 = vmatprep.subr.mxu0 0.0
        %2404 = vmatpush2.xpose.msra.mxu0 0.0
        %2405 = vmatprep.subr.mxu0 0.0
        %2406 = vmatpush2.xpose.msra.mxu0 0.0
        %2407 = vmatprep.subr.mxu0 0.0
        %2408 = vmatpush2.xpose.msra.mxu0 0.0
        %2409 = vmatprep.subr.mxu0 0.0
        %2410 = vmatpush2.xpose.msra.mxu0 0.0
        %2411 = vmatprep.subr.mxu0 0.0
        %2412 = vmatpush2.xpose.msra.mxu0 0.0
        %2413 = vmatprep.subr.mxu0 0.0
        %2414 = vmatpush2.xpose.msra.mxu0 0.0
        %2415 = vmatprep.subr.mxu0 0.0
        %2416 = vmatpush2.xpose.msra.mxu0 0.0
        %2417 = vmatprep.subr.mxu0 0.0
        %2418 = vmatpush2.xpose.msra.mxu0 0.0
        %2419 = vmatprep.subr.mxu0 0.0
        %2420 = vmatpush2.xpose.msra.mxu0 0.0
        %2421 = vmatprep.subr.mxu0 0.0
        %2422 = vmatpush2.xpose.msra.mxu0 0.0
        %2423 = vmatprep.subr.mxu0 0.0
        %2424 = vmatpush2.xpose.msra.mxu0 0.0
        %2425 = vmatprep.subr.mxu0 0.0
        %2426 = vmatpush2.xpose.msra.mxu0 0.0
        %2427 = vmatprep.subr.mxu0 0.0
        %2428 = vmatpush2.xpose.msra.mxu0 0.0
        %2429 = vmatprep.subr.mxu0 0.0
        %2430 = vmatpush2.xpose.msra.mxu0 0.0
        %2431 = vmatprep.subr.mxu0 0.0
        %2432 = vmatpush2.xpose.msra.mxu0 0.0
        %2433 = vmatprep.mubr.f32.mxu0 0.0
        %2434 = vmatmul.mubr.f32.gmra.mxu0 %v2365
        %v2435 = vpop.f32.mrf.mxu0
        %v2436 = vadd.f32 0.0, %v2435
        %v2437 = vpop.f32.mrf.mxu0
        %2438 = vdwg.mxu0
        %2439 = vrot.lane.b32.xlu0 %v1025, 96
        %v2440 = vpop.permute.xlu0 %2439
        %2441 = vrot.lane.b32.xlu0 %v1025, 32
        %v2442 = vpop.permute.xlu0 %2441
        %v2443 = vsel %vm1041, %v2440, 0
        %v2445 = vsel %vm1041, %v2442, 0
        %2447 = vmatprep.subr.mxu0 0.0
        %2448 = vmatpush1.xpose.msra.mxu0 0.0
        %2449 = vmatprep.subr.mxu0 0.0
        %2450 = vmatpush1.xpose.msra.mxu0 0.0
        %2451 = vmatprep.subr.mxu0 0.0
        %2452 = vmatpush1.xpose.msra.mxu0 0.0
        %2453 = vmatprep.subr.mxu0 0.0
        %2454 = vmatpush1.xpose.msra.mxu0 0.0
        %2455 = vmatprep.subr.mxu0 0.0
        %2456 = vmatpush1.xpose.msra.mxu0 0.0
        %2457 = vmatprep.subr.mxu0 0.0
        %2458 = vmatpush1.xpose.msra.mxu0 0.0
        %2459 = vmatprep.subr.mxu0 0.0
        %2460 = vmatpush1.xpose.msra.mxu0 0.0
        %2461 = vmatprep.subr.mxu0 0.0
        %2462 = vmatpush1.xpose.msra.mxu0 0.0
        %2463 = vmatprep.subr.mxu0 0.0
        %2464 = vmatpush1.xpose.msra.mxu0 0.0
        %2465 = vmatprep.subr.mxu0 0.0
        %2466 = vmatpush1.xpose.msra.mxu0 0.0
        %2467 = vmatprep.subr.mxu0 0.0
        %2468 = vmatpush1.xpose.msra.mxu0 0.0
        %2469 = vmatprep.subr.mxu0 0.0
        %2470 = vmatpush1.xpose.msra.mxu0 0.0
        %2471 = vmatprep.subr.mxu0 0.0
        %2472 = vmatpush1.xpose.msra.mxu0 0.0
        %2473 = vmatprep.subr.mxu0 0.0
        %2474 = vmatpush1.xpose.msra.mxu0 0.0
        %2475 = vmatprep.subr.mxu0 0.0
        %2476 = vmatpush1.xpose.msra.mxu0 0.0
        %2477 = vmatprep.subr.mxu0 0.0
        %2478 = vmatpush1.xpose.msra.mxu0 %v2445
        %2479 = vmatprep.subr.mxu0 0.0
        %2480 = vmatpush2.xpose.msra.mxu0 0.0
        %2481 = vmatprep.subr.mxu0 0.0
        %2482 = vmatpush2.xpose.msra.mxu0 0.0
        %2483 = vmatprep.subr.mxu0 0.0
        %2484 = vmatpush2.xpose.msra.mxu0 0.0
        %2485 = vmatprep.subr.mxu0 0.0
        %2486 = vmatpush2.xpose.msra.mxu0 0.0
        %2487 = vmatprep.subr.mxu0 0.0
        %2488 = vmatpush2.xpose.msra.mxu0 0.0
        %2489 = vmatprep.subr.mxu0 0.0
        %2490 = vmatpush2.xpose.msra.mxu0 0.0
        %2491 = vmatprep.subr.mxu0 0.0
        %2492 = vmatpush2.xpose.msra.mxu0 0.0
        %2493 = vmatprep.subr.mxu0 0.0
        %2494 = vmatpush2.xpose.msra.mxu0 0.0
        %2495 = vmatprep.subr.mxu0 0.0
        %2496 = vmatpush2.xpose.msra.mxu0 0.0
        %2497 = vmatprep.subr.mxu0 0.0
        %2498 = vmatpush2.xpose.msra.mxu0 0.0
        %2499 = vmatprep.subr.mxu0 0.0
        %2500 = vmatpush2.xpose.msra.mxu0 0.0
        %2501 = vmatprep.subr.mxu0 0.0
        %2502 = vmatpush2.xpose.msra.mxu0 0.0
        %2503 = vmatprep.subr.mxu0 0.0
        %2504 = vmatpush2.xpose.msra.mxu0 0.0
        %2505 = vmatprep.subr.mxu0 0.0
        %2506 = vmatpush2.xpose.msra.mxu0 0.0
        %2507 = vmatprep.subr.mxu0 0.0
        %2508 = vmatpush2.xpose.msra.mxu0 0.0
        %2509 = vmatprep.subr.mxu0 0.0
        %2510 = vmatpush2.xpose.msra.mxu0 0.0
        %2511 = vmatprep.mubr.f32.mxu0 0.0
        %2512 = vmatmul.mubr.f32.gmra.mxu0 %v2443
        %v2513 = vpop.f32.mrf.mxu0
        %v2514 = vadd.f32 0.0, %v2513
        %v2515 = vpop.f32.mrf.mxu0
        %2516 = vdwg.mxu0
        %v2517 = vmul.f32 %v2436, 0.35355338
        %v2518 = vmul.f32 %v2514, 0.35355338
        %v2519 = vsel %vm1041, %v2517, -inf
        %2520 = vmax.xlane.f32.xlu0 %v2519
        %v2521 = vpop.xlane.xlu0 %2520
        %v2522 = vsel %vm1041, %v2518, -inf
        %2523 = vmax.xlane.f32.xlu0 %v2522
        %v2524 = vpop.xlane.xlu0 %2523
        %v2525 = vsub.f32 %v2517, %v2521
        %v2526 = vsub.f32 %v2518, %v2524
        %v2527 = vmul.f32 %v2525, 1.442695
        %v2528 = vpow.pop %v2527
        %v2529 = vmul.f32 %v2526, 1.442695
        %v2530 = vpow.pop %v2529
        %v2531 = vsel %vm1041, %v2528, 0.0
        %2532 = vadd.xlane.f32.xlu0 %v2531
        %v2533 = vpop.xlane.xlu0 %2532
        %v2534 = vsel %vm1041, %v2530, 0.0
        %2535 = vadd.xlane.f32.xlu0 %v2534
        %v2536 = vpop.xlane.xlu0 %2535
        %v2537 = vrcp.pop %v2533
        %v2538 = vrcp.pop %v2536
        %v2539 = vmul.f32 %v2528, %v2537
        %v2540 = vmul.f32 %v2530, %v2538
        %2541 = vrot.lane.b32.xlu0 %v1021, 96
        %v2542 = vpop.permute.xlu0 %2541
        %v2545 = vsel %vm1041, %v2539, 0
        %2547 = vmatprep.subr.mxu0 0.0
        %2548 = vmatpush1.msra.mxu0 0.0
        %2549 = vmatprep.subr.mxu0 0.0
        %2550 = vmatpush1.msra.mxu0 0.0
        %2551 = vmatprep.subr.mxu0 0.0
        %2552 = vmatpush1.msra.mxu0 0.0
        %2553 = vmatprep.subr.mxu0 0.0
        %2554 = vmatpush1.msra.mxu0 0.0
        %2555 = vmatprep.subr.mxu0 0.0
        %2556 = vmatpush1.msra.mxu0 0.0
        %2557 = vmatprep.subr.mxu0 0.0
        %2558 = vmatpush1.msra.mxu0 0.0
        %2559 = vmatprep.subr.mxu0 0.0
        %2560 = vmatpush1.msra.mxu0 0.0
        %2561 = vmatprep.subr.mxu0 0.0
        %2562 = vmatpush1.msra.mxu0 0.0
        %2563 = vmatprep.subr.mxu0 0.0
        %2564 = vmatpush1.msra.mxu0 0.0
        %2565 = vmatprep.subr.mxu0 0.0
        %2566 = vmatpush1.msra.mxu0 0.0
        %2567 = vmatprep.subr.mxu0 0.0
        %2568 = vmatpush1.msra.mxu0 0.0
        %2569 = vmatprep.subr.mxu0 0.0
        %2570 = vmatpush1.msra.mxu0 0.0
        %2571 = vmatprep.subr.mxu0 0.0
        %2572 = vmatpush1.msra.mxu0 0.0
        %2573 = vmatprep.subr.mxu0 0.0
        %2574 = vmatpush1.msra.mxu0 0.0
        %2575 = vmatprep.subr.mxu0 0.0
        %2576 = vmatpush1.msra.mxu0 0.0
        %2577 = vmatprep.subr.mxu0 0.0
        %2578 = vmatpush1.msra.mxu0 %v2542
        %2579 = vmatprep.subr.mxu0 0.0
        %2580 = vmatpush2.msra.mxu0 0.0
        %2581 = vmatprep.subr.mxu0 0.0
        %2582 = vmatpush2.msra.mxu0 0.0
        %2583 = vmatprep.subr.mxu0 0.0
        %2584 = vmatpush2.msra.mxu0 0.0
        %2585 = vmatprep.subr.mxu0 0.0
        %2586 = vmatpush2.msra.mxu0 0.0
        %2587 = vmatprep.subr.mxu0 0.0
        %2588 = vmatpush2.msra.mxu0 0.0
        %2589 = vmatprep.subr.mxu0 0.0
        %2590 = vmatpush2.msra.mxu0 0.0
        %2591 = vmatprep.subr.mxu0 0.0
        %2592 = vmatpush2.msra.mxu0 0.0
        %2593 = vmatprep.subr.mxu0 0.0
        %2594 = vmatpush2.msra.mxu0 0.0
        %2595 = vmatprep.subr.mxu0 0.0
        %2596 = vmatpush2.msra.mxu0 0.0
        %2597 = vmatprep.subr.mxu0 0.0
        %2598 = vmatpush2.msra.mxu0 0.0
        %2599 = vmatprep.subr.mxu0 0.0
        %2600 = vmatpush2.msra.mxu0 0.0
        %2601 = vmatprep.subr.mxu0 0.0
        %2602 = vmatpush2.msra.mxu0 0.0
        %2603 = vmatprep.subr.mxu0 0.0
        %2604 = vmatpush2.msra.mxu0 0.0
        %2605 = vmatprep.subr.mxu0 0.0
        %2606 = vmatpush2.msra.mxu0 0.0
        %2607 = vmatprep.subr.mxu0 0.0
        %2608 = vmatpush2.msra.mxu0 0.0
        %2609 = vmatprep.subr.mxu0 0.0
        %2610 = vmatpush2.msra.mxu0 0.0
        %2611 = vmatprep.mubr.f32.mxu0 0.0
        %2612 = vmatmul.mubr.f32.gmra.mxu0 %v2545
        %v2613 = vpop.f32.mrf.mxu0
        %v2614 = vadd.f32 0.0, %v2613
        %v2615 = vpop.f32.mrf.mxu0
        %2616 = vdwg.mxu0
        %2617 = vrot.lane.b32.xlu0 %v1027, 96
        %v2618 = vpop.permute.xlu0 %2617
        %v2621 = vsel %vm1041, %v2540, 0
        %2623 = vmatprep.subr.mxu0 0.0
        %2624 = vmatpush1.msra.mxu0 0.0
        %2625 = vmatprep.subr.mxu0 0.0
        %2626 = vmatpush1.msra.mxu0 0.0
        %2627 = vmatprep.subr.mxu0 0.0
        %2628 = vmatpush1.msra.mxu0 0.0
        %2629 = vmatprep.subr.mxu0 0.0
        %2630 = vmatpush1.msra.mxu0 0.0
        %2631 = vmatprep.subr.mxu0 0.0
        %2632 = vmatpush1.msra.mxu0 0.0
        %2633 = vmatprep.subr.mxu0 0.0
        %2634 = vmatpush1.msra.mxu0 0.0
        %2635 = vmatprep.subr.mxu0 0.0
        %2636 = vmatpush1.msra.mxu0 0.0
        %2637 = vmatprep.subr.mxu0 0.0
        %2638 = vmatpush1.msra.mxu0 0.0
        %2639 = vmatprep.subr.mxu0 0.0
        %2640 = vmatpush1.msra.mxu0 0.0
        %2641 = vmatprep.subr.mxu0 0.0
        %2642 = vmatpush1.msra.mxu0 0.0
        %2643 = vmatprep.subr.mxu0 0.0
        %2644 = vmatpush1.msra.mxu0 0.0
        %2645 = vmatprep.subr.mxu0 0.0
        %2646 = vmatpush1.msra.mxu0 0.0
        %2647 = vmatprep.subr.mxu0 0.0
        %2648 = vmatpush1.msra.mxu0 0.0
        %2649 = vmatprep.subr.mxu0 0.0
        %2650 = vmatpush1.msra.mxu0 0.0
        %2651 = vmatprep.subr.mxu0 0.0
        %2652 = vmatpush1.msra.mxu0 0.0
        %2653 = vmatprep.subr.mxu0 0.0
        %2654 = vmatpush1.msra.mxu0 %v2618
        %2655 = vmatprep.subr.mxu0 0.0
        %2656 = vmatpush2.msra.mxu0 0.0
        %2657 = vmatprep.subr.mxu0 0.0
        %2658 = vmatpush2.msra.mxu0 0.0
        %2659 = vmatprep.subr.mxu0 0.0
        %2660 = vmatpush2.msra.mxu0 0.0
        %2661 = vmatprep.subr.mxu0 0.0
        %2662 = vmatpush2.msra.mxu0 0.0
        %2663 = vmatprep.subr.mxu0 0.0
        %2664 = vmatpush2.msra.mxu0 0.0
        %2665 = vmatprep.subr.mxu0 0.0
        %2666 = vmatpush2.msra.mxu0 0.0
        %2667 = vmatprep.subr.mxu0 0.0
        %2668 = vmatpush2.msra.mxu0 0.0
        %2669 = vmatprep.subr.mxu0 0.0
        %2670 = vmatpush2.msra.mxu0 0.0
        %2671 = vmatprep.subr.mxu0 0.0
        %2672 = vmatpush2.msra.mxu0 0.0
        %2673 = vmatprep.subr.mxu0 0.0
        %2674 = vmatpush2.msra.mxu0 0.0
        %2675 = vmatprep.subr.mxu0 0.0
        %2676 = vmatpush2.msra.mxu0 0.0
        %2677 = vmatprep.subr.mxu0 0.0
        %2678 = vmatpush2.msra.mxu0 0.0
        %2679 = vmatprep.subr.mxu0 0.0
        %2680 = vmatpush2.msra.mxu0 0.0
        %2681 = vmatprep.subr.mxu0 0.0
        %2682 = vmatpush2.msra.mxu0 0.0
        %2683 = vmatprep.subr.mxu0 0.0
        %2684 = vmatpush2.msra.mxu0 0.0
        %2685 = vmatprep.subr.mxu0 0.0
        %2686 = vmatpush2.msra.mxu0 0.0
        %2687 = vmatprep.mubr.f32.mxu0 0.0
        %2688 = vmatmul.mubr.f32.gmra.mxu0 %v2621
        %v2689 = vpop.f32.mrf.mxu0
        %v2690 = vadd.f32 0.0, %v2689
        %v2691 = vpop.f32.mrf.mxu0
        %2692 = vdwg.mxu0
        %2693 = vrot.lane.b32.xlu0 %v1019, 88
        %v2694 = vpop.permute.xlu0 %2693
        %2695 = vrot.lane.b32.xlu0 %v1019, 24
        %v2696 = vpop.permute.xlu0 %2695
        %v2697 = vsel %vm1041, %v2694, 0
        %v2699 = vsel %vm1041, %v2696, 0
        %2701 = vmatprep.subr.mxu0 0.0
        %2702 = vmatpush1.xpose.msra.mxu0 0.0
        %2703 = vmatprep.subr.mxu0 0.0
        %2704 = vmatpush1.xpose.msra.mxu0 0.0
        %2705 = vmatprep.subr.mxu0 0.0
        %2706 = vmatpush1.xpose.msra.mxu0 0.0
        %2707 = vmatprep.subr.mxu0 0.0
        %2708 = vmatpush1.xpose.msra.mxu0 0.0
        %2709 = vmatprep.subr.mxu0 0.0
        %2710 = vmatpush1.xpose.msra.mxu0 0.0
        %2711 = vmatprep.subr.mxu0 0.0
        %2712 = vmatpush1.xpose.msra.mxu0 0.0
        %2713 = vmatprep.subr.mxu0 0.0
        %2714 = vmatpush1.xpose.msra.mxu0 0.0
        %2715 = vmatprep.subr.mxu0 0.0
        %2716 = vmatpush1.xpose.msra.mxu0 0.0
        %2717 = vmatprep.subr.mxu0 0.0
        %2718 = vmatpush1.xpose.msra.mxu0 0.0
        %2719 = vmatprep.subr.mxu0 0.0
        %2720 = vmatpush1.xpose.msra.mxu0 0.0
        %2721 = vmatprep.subr.mxu0 0.0
        %2722 = vmatpush1.xpose.msra.mxu0 0.0
        %2723 = vmatprep.subr.mxu0 0.0
        %2724 = vmatpush1.xpose.msra.mxu0 0.0
        %2725 = vmatprep.subr.mxu0 0.0
        %2726 = vmatpush1.xpose.msra.mxu0 0.0
        %2727 = vmatprep.subr.mxu0 0.0
        %2728 = vmatpush1.xpose.msra.mxu0 0.0
        %2729 = vmatprep.subr.mxu0 0.0
        %2730 = vmatpush1.xpose.msra.mxu0 0.0
        %2731 = vmatprep.subr.mxu0 0.0
        %2732 = vmatpush1.xpose.msra.mxu0 %v2699
        %2733 = vmatprep.subr.mxu0 0.0
        %2734 = vmatpush2.xpose.msra.mxu0 0.0
        %2735 = vmatprep.subr.mxu0 0.0
        %2736 = vmatpush2.xpose.msra.mxu0 0.0
        %2737 = vmatprep.subr.mxu0 0.0
        %2738 = vmatpush2.xpose.msra.mxu0 0.0
        %2739 = vmatprep.subr.mxu0 0.0
        %2740 = vmatpush2.xpose.msra.mxu0 0.0
        %2741 = vmatprep.subr.mxu0 0.0
        %2742 = vmatpush2.xpose.msra.mxu0 0.0
        %2743 = vmatprep.subr.mxu0 0.0
        %2744 = vmatpush2.xpose.msra.mxu0 0.0
        %2745 = vmatprep.subr.mxu0 0.0
        %2746 = vmatpush2.xpose.msra.mxu0 0.0
        %2747 = vmatprep.subr.mxu0 0.0
        %2748 = vmatpush2.xpose.msra.mxu0 0.0
        %2749 = vmatprep.subr.mxu0 0.0
        %2750 = vmatpush2.xpose.msra.mxu0 0.0
        %2751 = vmatprep.subr.mxu0 0.0
        %2752 = vmatpush2.xpose.msra.mxu0 0.0
        %2753 = vmatprep.subr.mxu0 0.0
        %2754 = vmatpush2.xpose.msra.mxu0 0.0
        %2755 = vmatprep.subr.mxu0 0.0
        %2756 = vmatpush2.xpose.msra.mxu0 0.0
        %2757 = vmatprep.subr.mxu0 0.0
        %2758 = vmatpush2.xpose.msra.mxu0 0.0
        %2759 = vmatprep.subr.mxu0 0.0
        %2760 = vmatpush2.xpose.msra.mxu0 0.0
        %2761 = vmatprep.subr.mxu0 0.0
        %2762 = vmatpush2.xpose.msra.mxu0 0.0
        %2763 = vmatprep.subr.mxu0 0.0
        %2764 = vmatpush2.xpose.msra.mxu0 0.0
        %2765 = vmatprep.mubr.f32.mxu0 0.0
        %2766 = vmatmul.mubr.f32.gmra.mxu0 %v2697
        %v2767 = vpop.f32.mrf.mxu0
        %v2768 = vadd.f32 0.0, %v2767
        %v2769 = vpop.f32.mrf.mxu0
        %2770 = vdwg.mxu0
        %2771 = vrot.lane.b32.xlu0 %v1025, 88
        %v2772 = vpop.permute.xlu0 %2771
        %2773 = vrot.lane.b32.xlu0 %v1025, 24
        %v2774 = vpop.permute.xlu0 %2773
        %v2775 = vsel %vm1041, %v2772, 0
        %v2777 = vsel %vm1041, %v2774, 0
        %2779 = vmatprep.subr.mxu0 0.0
        %2780 = vmatpush1.xpose.msra.mxu0 0.0
        %2781 = vmatprep.subr.mxu0 0.0
        %2782 = vmatpush1.xpose.msra.mxu0 0.0
        %2783 = vmatprep.subr.mxu0 0.0
        %2784 = vmatpush1.xpose.msra.mxu0 0.0
        %2785 = vmatprep.subr.mxu0 0.0
        %2786 = vmatpush1.xpose.msra.mxu0 0.0
        %2787 = vmatprep.subr.mxu0 0.0
        %2788 = vmatpush1.xpose.msra.mxu0 0.0
        %2789 = vmatprep.subr.mxu0 0.0
        %2790 = vmatpush1.xpose.msra.mxu0 0.0
        %2791 = vmatprep.subr.mxu0 0.0
        %2792 = vmatpush1.xpose.msra.mxu0 0.0
        %2793 = vmatprep.subr.mxu0 0.0
        %2794 = vmatpush1.xpose.msra.mxu0 0.0
        %2795 = vmatprep.subr.mxu0 0.0
        %2796 = vmatpush1.xpose.msra.mxu0 0.0
        %2797 = vmatprep.subr.mxu0 0.0
        %2798 = vmatpush1.xpose.msra.mxu0 0.0
        %2799 = vmatprep.subr.mxu0 0.0
        %2800 = vmatpush1.xpose.msra.mxu0 0.0
        %2801 = vmatprep.subr.mxu0 0.0
        %2802 = vmatpush1.xpose.msra.mxu0 0.0
        %2803 = vmatprep.subr.mxu0 0.0
        %2804 = vmatpush1.xpose.msra.mxu0 0.0
        %2805 = vmatprep.subr.mxu0 0.0
        %2806 = vmatpush1.xpose.msra.mxu0 0.0
        %2807 = vmatprep.subr.mxu0 0.0
        %2808 = vmatpush1.xpose.msra.mxu0 0.0
        %2809 = vmatprep.subr.mxu0 0.0
        %2810 = vmatpush1.xpose.msra.mxu0 %v2777
        %2811 = vmatprep.subr.mxu0 0.0
        %2812 = vmatpush2.xpose.msra.mxu0 0.0
        %2813 = vmatprep.subr.mxu0 0.0
        %2814 = vmatpush2.xpose.msra.mxu0 0.0
        %2815 = vmatprep.subr.mxu0 0.0
        %2816 = vmatpush2.xpose.msra.mxu0 0.0
        %2817 = vmatprep.subr.mxu0 0.0
        %2818 = vmatpush2.xpose.msra.mxu0 0.0
        %2819 = vmatprep.subr.mxu0 0.0
        %2820 = vmatpush2.xpose.msra.mxu0 0.0
        %2821 = vmatprep.subr.mxu0 0.0
        %2822 = vmatpush2.xpose.msra.mxu0 0.0
        %2823 = vmatprep.subr.mxu0 0.0
        %2824 = vmatpush2.xpose.msra.mxu0 0.0
        %2825 = vmatprep.subr.mxu0 0.0
        %2826 = vmatpush2.xpose.msra.mxu0 0.0
        %2827 = vmatprep.subr.mxu0 0.0
        %2828 = vmatpush2.xpose.msra.mxu0 0.0
        %2829 = vmatprep.subr.mxu0 0.0
        %2830 = vmatpush2.xpose.msra.mxu0 0.0
        %2831 = vmatprep.subr.mxu0 0.0
        %2832 = vmatpush2.xpose.msra.mxu0 0.0
        %2833 = vmatprep.subr.mxu0 0.0
        %2834 = vmatpush2.xpose.msra.mxu0 0.0
        %2835 = vmatprep.subr.mxu0 0.0
        %2836 = vmatpush2.xpose.msra.mxu0 0.0
        %2837 = vmatprep.subr.mxu0 0.0
        %2838 = vmatpush2.xpose.msra.mxu0 0.0
        %2839 = vmatprep.subr.mxu0 0.0
        %2840 = vmatpush2.xpose.msra.mxu0 0.0
        %2841 = vmatprep.subr.mxu0 0.0
        %2842 = vmatpush2.xpose.msra.mxu0 0.0
        %2843 = vmatprep.mubr.f32.mxu0 0.0
        %2844 = vmatmul.mubr.f32.gmra.mxu0 %v2775
        %v2845 = vpop.f32.mrf.mxu0
        %v2846 = vadd.f32 0.0, %v2845
        %v2847 = vpop.f32.mrf.mxu0
        %2848 = vdwg.mxu0
        %v2849 = vmul.f32 %v2768, 0.35355338
        %v2850 = vmul.f32 %v2846, 0.35355338
        %v2851 = vsel %vm1041, %v2849, -inf
        %2852 = vmax.xlane.f32.xlu0 %v2851
        %v2853 = vpop.xlane.xlu0 %2852
        %v2854 = vsel %vm1041, %v2850, -inf
        %2855 = vmax.xlane.f32.xlu0 %v2854
        %v2856 = vpop.xlane.xlu0 %2855
        %v2857 = vsub.f32 %v2849, %v2853
        %v2858 = vsub.f32 %v2850, %v2856
        %v2859 = vmul.f32 %v2857, 1.442695
        %v2860 = vpow.pop %v2859
        %v2861 = vmul.f32 %v2858, 1.442695
        %v2862 = vpow.pop %v2861
        %v2863 = vsel %vm1041, %v2860, 0.0
        %2864 = vadd.xlane.f32.xlu0 %v2863
        %v2865 = vpop.xlane.xlu0 %2864
        %v2866 = vsel %vm1041, %v2862, 0.0
        %2867 = vadd.xlane.f32.xlu0 %v2866
        %v2868 = vpop.xlane.xlu0 %2867
        %v2869 = vrcp.pop %v2865
        %v2870 = vrcp.pop %v2868
        %v2871 = vmul.f32 %v2860, %v2869
        %v2872 = vmul.f32 %v2862, %v2870
        %2873 = vrot.lane.b32.xlu0 %v1021, 88
        %v2874 = vpop.permute.xlu0 %2873
        %v2877 = vsel %vm1041, %v2871, 0
        %2879 = vmatprep.subr.mxu0 0.0
        %2880 = vmatpush1.msra.mxu0 0.0
        %2881 = vmatprep.subr.mxu0 0.0
        %2882 = vmatpush1.msra.mxu0 0.0
        %2883 = vmatprep.subr.mxu0 0.0
        %2884 = vmatpush1.msra.mxu0 0.0
        %2885 = vmatprep.subr.mxu0 0.0
        %2886 = vmatpush1.msra.mxu0 0.0
        %2887 = vmatprep.subr.mxu0 0.0
        %2888 = vmatpush1.msra.mxu0 0.0
        %2889 = vmatprep.subr.mxu0 0.0
        %2890 = vmatpush1.msra.mxu0 0.0
        %2891 = vmatprep.subr.mxu0 0.0
        %2892 = vmatpush1.msra.mxu0 0.0
        %2893 = vmatprep.subr.mxu0 0.0
        %2894 = vmatpush1.msra.mxu0 0.0
        %2895 = vmatprep.subr.mxu0 0.0
        %2896 = vmatpush1.msra.mxu0 0.0
        %2897 = vmatprep.subr.mxu0 0.0
        %2898 = vmatpush1.msra.mxu0 0.0
        %2899 = vmatprep.subr.mxu0 0.0
        %2900 = vmatpush1.msra.mxu0 0.0
        %2901 = vmatprep.subr.mxu0 0.0
        %2902 = vmatpush1.msra.mxu0 0.0
        %2903 = vmatprep.subr.mxu0 0.0
        %2904 = vmatpush1.msra.mxu0 0.0
        %2905 = vmatprep.subr.mxu0 0.0
        %2906 = vmatpush1.msra.mxu0 0.0
        %2907 = vmatprep.subr.mxu0 0.0
        %2908 = vmatpush1.msra.mxu0 0.0
        %2909 = vmatprep.subr.mxu0 0.0
        %2910 = vmatpush1.msra.mxu0 %v2874
        %2911 = vmatprep.subr.mxu0 0.0
        %2912 = vmatpush2.msra.mxu0 0.0
        %2913 = vmatprep.subr.mxu0 0.0
        %2914 = vmatpush2.msra.mxu0 0.0
        %2915 = vmatprep.subr.mxu0 0.0
        %2916 = vmatpush2.msra.mxu0 0.0
        %2917 = vmatprep.subr.mxu0 0.0
        %2918 = vmatpush2.msra.mxu0 0.0
        %2919 = vmatprep.subr.mxu0 0.0
        %2920 = vmatpush2.msra.mxu0 0.0
        %2921 = vmatprep.subr.mxu0 0.0
        %2922 = vmatpush2.msra.mxu0 0.0
        %2923 = vmatprep.subr.mxu0 0.0
        %2924 = vmatpush2.msra.mxu0 0.0
        %2925 = vmatprep.subr.mxu0 0.0
        %2926 = vmatpush2.msra.mxu0 0.0
        %2927 = vmatprep.subr.mxu0 0.0
        %2928 = vmatpush2.msra.mxu0 0.0
        %2929 = vmatprep.subr.mxu0 0.0
        %2930 = vmatpush2.msra.mxu0 0.0
        %2931 = vmatprep.subr.mxu0 0.0
        %2932 = vmatpush2.msra.mxu0 0.0
        %2933 = vmatprep.subr.mxu0 0.0
        %2934 = vmatpush2.msra.mxu0 0.0
        %2935 = vmatprep.subr.mxu0 0.0
        %2936 = vmatpush2.msra.mxu0 0.0
        %2937 = vmatprep.subr.mxu0 0.0
        %2938 = vmatpush2.msra.mxu0 0.0
        %2939 = vmatprep.subr.mxu0 0.0
        %2940 = vmatpush2.msra.mxu0 0.0
        %2941 = vmatprep.subr.mxu0 0.0
        %2942 = vmatpush2.msra.mxu0 0.0
        %2943 = vmatprep.mubr.f32.mxu0 0.0
        %2944 = vmatmul.mubr.f32.gmra.mxu0 %v2877
        %v2945 = vpop.f32.mrf.mxu0
        %v2946 = vadd.f32 0.0, %v2945
        %v2947 = vpop.f32.mrf.mxu0
        %2948 = vdwg.mxu0
        %2949 = vrot.lane.b32.xlu0 %v1027, 88
        %v2950 = vpop.permute.xlu0 %2949
        %v2953 = vsel %vm1041, %v2872, 0
        %2955 = vmatprep.subr.mxu0 0.0
        %2956 = vmatpush1.msra.mxu0 0.0
        %2957 = vmatprep.subr.mxu0 0.0
        %2958 = vmatpush1.msra.mxu0 0.0
        %2959 = vmatprep.subr.mxu0 0.0
        %2960 = vmatpush1.msra.mxu0 0.0
        %2961 = vmatprep.subr.mxu0 0.0
        %2962 = vmatpush1.msra.mxu0 0.0
        %2963 = vmatprep.subr.mxu0 0.0
        %2964 = vmatpush1.msra.mxu0 0.0
        %2965 = vmatprep.subr.mxu0 0.0
        %2966 = vmatpush1.msra.mxu0 0.0
        %2967 = vmatprep.subr.mxu0 0.0
        %2968 = vmatpush1.msra.mxu0 0.0
        %2969 = vmatprep.subr.mxu0 0.0
        %2970 = vmatpush1.msra.mxu0 0.0
        %2971 = vmatprep.subr.mxu0 0.0
        %2972 = vmatpush1.msra.mxu0 0.0
        %2973 = vmatprep.subr.mxu0 0.0
        %2974 = vmatpush1.msra.mxu0 0.0
        %2975 = vmatprep.subr.mxu0 0.0
        %2976 = vmatpush1.msra.mxu0 0.0
        %2977 = vmatprep.subr.mxu0 0.0
        %2978 = vmatpush1.msra.mxu0 0.0
        %2979 = vmatprep.subr.mxu0 0.0
        %2980 = vmatpush1.msra.mxu0 0.0
        %2981 = vmatprep.subr.mxu0 0.0
        %2982 = vmatpush1.msra.mxu0 0.0
        %2983 = vmatprep.subr.mxu0 0.0
        %2984 = vmatpush1.msra.mxu0 0.0
        %2985 = vmatprep.subr.mxu0 0.0
        %2986 = vmatpush1.msra.mxu0 %v2950
        %2987 = vmatprep.subr.mxu0 0.0
        %2988 = vmatpush2.msra.mxu0 0.0
        %2989 = vmatprep.subr.mxu0 0.0
        %2990 = vmatpush2.msra.mxu0 0.0
        %2991 = vmatprep.subr.mxu0 0.0
        %2992 = vmatpush2.msra.mxu0 0.0
        %2993 = vmatprep.subr.mxu0 0.0
        %2994 = vmatpush2.msra.mxu0 0.0
        %2995 = vmatprep.subr.mxu0 0.0
        %2996 = vmatpush2.msra.mxu0 0.0
        %2997 = vmatprep.subr.mxu0 0.0
        %2998 = vmatpush2.msra.mxu0 0.0
        %2999 = vmatprep.subr.mxu0 0.0
        %3000 = vmatpush2.msra.mxu0 0.0
        %3001 = vmatprep.subr.mxu0 0.0
        %3002 = vmatpush2.msra.mxu0 0.0
        %3003 = vmatprep.subr.mxu0 0.0
        %3004 = vmatpush2.msra.mxu0 0.0
        %3005 = vmatprep.subr.mxu0 0.0
        %3006 = vmatpush2.msra.mxu0 0.0
        %3007 = vmatprep.subr.mxu0 0.0
        %3008 = vmatpush2.msra.mxu0 0.0
        %3009 = vmatprep.subr.mxu0 0.0
        %3010 = vmatpush2.msra.mxu0 0.0
        %3011 = vmatprep.subr.mxu0 0.0
        %3012 = vmatpush2.msra.mxu0 0.0
        %3013 = vmatprep.subr.mxu0 0.0
        %3014 = vmatpush2.msra.mxu0 0.0
        %3015 = vmatprep.subr.mxu0 0.0
        %3016 = vmatpush2.msra.mxu0 0.0
        %3017 = vmatprep.subr.mxu0 0.0
        %3018 = vmatpush2.msra.mxu0 0.0
        %3019 = vmatprep.mubr.f32.mxu0 0.0
        %3020 = vmatmul.mubr.f32.gmra.mxu0 %v2953
        %v3021 = vpop.f32.mrf.mxu0
        %v3022 = vadd.f32 0.0, %v3021
        %v3023 = vpop.f32.mrf.mxu0
        %3024 = vdwg.mxu0
        %3025 = vrot.lane.b32.xlu0 %v1019, 80
        %v3026 = vpop.permute.xlu0 %3025
        %3027 = vrot.lane.b32.xlu0 %v1019, 16
        %v3028 = vpop.permute.xlu0 %3027
        %v3029 = vsel %vm1041, %v3026, 0
        %v3031 = vsel %vm1041, %v3028, 0
        %3033 = vmatprep.subr.mxu0 0.0
        %3034 = vmatpush1.xpose.msra.mxu0 0.0
        %3035 = vmatprep.subr.mxu0 0.0
        %3036 = vmatpush1.xpose.msra.mxu0 0.0
        %3037 = vmatprep.subr.mxu0 0.0
        %3038 = vmatpush1.xpose.msra.mxu0 0.0
        %3039 = vmatprep.subr.mxu0 0.0
        %3040 = vmatpush1.xpose.msra.mxu0 0.0
        %3041 = vmatprep.subr.mxu0 0.0
        %3042 = vmatpush1.xpose.msra.mxu0 0.0
        %3043 = vmatprep.subr.mxu0 0.0
        %3044 = vmatpush1.xpose.msra.mxu0 0.0
        %3045 = vmatprep.subr.mxu0 0.0
        %3046 = vmatpush1.xpose.msra.mxu0 0.0
        %3047 = vmatprep.subr.mxu0 0.0
        %3048 = vmatpush1.xpose.msra.mxu0 0.0
        %3049 = vmatprep.subr.mxu0 0.0
        %3050 = vmatpush1.xpose.msra.mxu0 0.0
        %3051 = vmatprep.subr.mxu0 0.0
        %3052 = vmatpush1.xpose.msra.mxu0 0.0
        %3053 = vmatprep.subr.mxu0 0.0
        %3054 = vmatpush1.xpose.msra.mxu0 0.0
        %3055 = vmatprep.subr.mxu0 0.0
        %3056 = vmatpush1.xpose.msra.mxu0 0.0
        %3057 = vmatprep.subr.mxu0 0.0
        %3058 = vmatpush1.xpose.msra.mxu0 0.0
        %3059 = vmatprep.subr.mxu0 0.0
        %3060 = vmatpush1.xpose.msra.mxu0 0.0
        %3061 = vmatprep.subr.mxu0 0.0
        %3062 = vmatpush1.xpose.msra.mxu0 0.0
        %3063 = vmatprep.subr.mxu0 0.0
        %3064 = vmatpush1.xpose.msra.mxu0 %v3031
        %3065 = vmatprep.subr.mxu0 0.0
        %3066 = vmatpush2.xpose.msra.mxu0 0.0
        %3067 = vmatprep.subr.mxu0 0.0
        %3068 = vmatpush2.xpose.msra.mxu0 0.0
        %3069 = vmatprep.subr.mxu0 0.0
        %3070 = vmatpush2.xpose.msra.mxu0 0.0
        %3071 = vmatprep.subr.mxu0 0.0
        %3072 = vmatpush2.xpose.msra.mxu0 0.0
        %3073 = vmatprep.subr.mxu0 0.0
        %3074 = vmatpush2.xpose.msra.mxu0 0.0
        %3075 = vmatprep.subr.mxu0 0.0
        %3076 = vmatpush2.xpose.msra.mxu0 0.0
        %3077 = vmatprep.subr.mxu0 0.0
        %3078 = vmatpush2.xpose.msra.mxu0 0.0
        %3079 = vmatprep.subr.mxu0 0.0
        %3080 = vmatpush2.xpose.msra.mxu0 0.0
        %3081 = vmatprep.subr.mxu0 0.0
        %3082 = vmatpush2.xpose.msra.mxu0 0.0
        %3083 = vmatprep.subr.mxu0 0.0
        %3084 = vmatpush2.xpose.msra.mxu0 0.0
        %3085 = vmatprep.subr.mxu0 0.0
        %3086 = vmatpush2.xpose.msra.mxu0 0.0
        %3087 = vmatprep.subr.mxu0 0.0
        %3088 = vmatpush2.xpose.msra.mxu0 0.0
        %3089 = vmatprep.subr.mxu0 0.0
        %3090 = vmatpush2.xpose.msra.mxu0 0.0
        %3091 = vmatprep.subr.mxu0 0.0
        %3092 = vmatpush2.xpose.msra.mxu0 0.0
        %3093 = vmatprep.subr.mxu0 0.0
        %3094 = vmatpush2.xpose.msra.mxu0 0.0
        %3095 = vmatprep.subr.mxu0 0.0
        %3096 = vmatpush2.xpose.msra.mxu0 0.0
        %3097 = vmatprep.mubr.f32.mxu0 0.0
        %3098 = vmatmul.mubr.f32.gmra.mxu0 %v3029
        %v3099 = vpop.f32.mrf.mxu0
        %v3100 = vadd.f32 0.0, %v3099
        %v3101 = vpop.f32.mrf.mxu0
        %3102 = vdwg.mxu0
        %3103 = vrot.lane.b32.xlu0 %v1025, 80
        %v3104 = vpop.permute.xlu0 %3103
        %3105 = vrot.lane.b32.xlu0 %v1025, 16
        %v3106 = vpop.permute.xlu0 %3105
        %v3107 = vsel %vm1041, %v3104, 0
        %v3109 = vsel %vm1041, %v3106, 0
        %3111 = vmatprep.subr.mxu0 0.0
        %3112 = vmatpush1.xpose.msra.mxu0 0.0
        %3113 = vmatprep.subr.mxu0 0.0
        %3114 = vmatpush1.xpose.msra.mxu0 0.0
        %3115 = vmatprep.subr.mxu0 0.0
        %3116 = vmatpush1.xpose.msra.mxu0 0.0
        %3117 = vmatprep.subr.mxu0 0.0
        %3118 = vmatpush1.xpose.msra.mxu0 0.0
        %3119 = vmatprep.subr.mxu0 0.0
        %3120 = vmatpush1.xpose.msra.mxu0 0.0
        %3121 = vmatprep.subr.mxu0 0.0
        %3122 = vmatpush1.xpose.msra.mxu0 0.0
        %3123 = vmatprep.subr.mxu0 0.0
        %3124 = vmatpush1.xpose.msra.mxu0 0.0
        %3125 = vmatprep.subr.mxu0 0.0
        %3126 = vmatpush1.xpose.msra.mxu0 0.0
        %3127 = vmatprep.subr.mxu0 0.0
        %3128 = vmatpush1.xpose.msra.mxu0 0.0
        %3129 = vmatprep.subr.mxu0 0.0
        %3130 = vmatpush1.xpose.msra.mxu0 0.0
        %3131 = vmatprep.subr.mxu0 0.0
        %3132 = vmatpush1.xpose.msra.mxu0 0.0
        %3133 = vmatprep.subr.mxu0 0.0
        %3134 = vmatpush1.xpose.msra.mxu0 0.0
        %3135 = vmatprep.subr.mxu0 0.0
        %3136 = vmatpush1.xpose.msra.mxu0 0.0
        %3137 = vmatprep.subr.mxu0 0.0
        %3138 = vmatpush1.xpose.msra.mxu0 0.0
        %3139 = vmatprep.subr.mxu0 0.0
        %3140 = vmatpush1.xpose.msra.mxu0 0.0
        %3141 = vmatprep.subr.mxu0 0.0
        %3142 = vmatpush1.xpose.msra.mxu0 %v3109
        %3143 = vmatprep.subr.mxu0 0.0
        %3144 = vmatpush2.xpose.msra.mxu0 0.0
        %3145 = vmatprep.subr.mxu0 0.0
        %3146 = vmatpush2.xpose.msra.mxu0 0.0
        %3147 = vmatprep.subr.mxu0 0.0
        %3148 = vmatpush2.xpose.msra.mxu0 0.0
        %3149 = vmatprep.subr.mxu0 0.0
        %3150 = vmatpush2.xpose.msra.mxu0 0.0
        %3151 = vmatprep.subr.mxu0 0.0
        %3152 = vmatpush2.xpose.msra.mxu0 0.0
        %3153 = vmatprep.subr.mxu0 0.0
        %3154 = vmatpush2.xpose.msra.mxu0 0.0
        %3155 = vmatprep.subr.mxu0 0.0
        %3156 = vmatpush2.xpose.msra.mxu0 0.0
        %3157 = vmatprep.subr.mxu0 0.0
        %3158 = vmatpush2.xpose.msra.mxu0 0.0
        %3159 = vmatprep.subr.mxu0 0.0
        %3160 = vmatpush2.xpose.msra.mxu0 0.0
        %3161 = vmatprep.subr.mxu0 0.0
        %3162 = vmatpush2.xpose.msra.mxu0 0.0
        %3163 = vmatprep.subr.mxu0 0.0
        %3164 = vmatpush2.xpose.msra.mxu0 0.0
        %3165 = vmatprep.subr.mxu0 0.0
        %3166 = vmatpush2.xpose.msra.mxu0 0.0
        %3167 = vmatprep.subr.mxu0 0.0
        %3168 = vmatpush2.xpose.msra.mxu0 0.0
        %3169 = vmatprep.subr.mxu0 0.0
        %3170 = vmatpush2.xpose.msra.mxu0 0.0
        %3171 = vmatprep.subr.mxu0 0.0
        %3172 = vmatpush2.xpose.msra.mxu0 0.0
        %3173 = vmatprep.subr.mxu0 0.0
        %3174 = vmatpush2.xpose.msra.mxu0 0.0
        %3175 = vmatprep.mubr.f32.mxu0 0.0
        %3176 = vmatmul.mubr.f32.gmra.mxu0 %v3107
        %v3177 = vpop.f32.mrf.mxu0
        %v3178 = vadd.f32 0.0, %v3177
        %v3179 = vpop.f32.mrf.mxu0
        %3180 = vdwg.mxu0
        %v3181 = vmul.f32 %v3100, 0.35355338
        %v3182 = vmul.f32 %v3178, 0.35355338
        %v3183 = vsel %vm1041, %v3181, -inf
        %3184 = vmax.xlane.f32.xlu0 %v3183
        %v3185 = vpop.xlane.xlu0 %3184
        %v3186 = vsel %vm1041, %v3182, -inf
        %3187 = vmax.xlane.f32.xlu0 %v3186
        %v3188 = vpop.xlane.xlu0 %3187
        %v3189 = vsub.f32 %v3181, %v3185
        %v3190 = vsub.f32 %v3182, %v3188
        %v3191 = vmul.f32 %v3189, 1.442695
        %v3192 = vpow.pop %v3191
        %v3193 = vmul.f32 %v3190, 1.442695
        %v3194 = vpow.pop %v3193
        %v3195 = vsel %vm1041, %v3192, 0.0
        %3196 = vadd.xlane.f32.xlu0 %v3195
        %v3197 = vpop.xlane.xlu0 %3196
        %v3198 = vsel %vm1041, %v3194, 0.0
        %3199 = vadd.xlane.f32.xlu0 %v3198
        %v3200 = vpop.xlane.xlu0 %3199
        %v3201 = vrcp.pop %v3197
        %v3202 = vrcp.pop %v3200
        %v3203 = vmul.f32 %v3192, %v3201
        %v3204 = vmul.f32 %v3194, %v3202
        %3205 = vrot.lane.b32.xlu0 %v1021, 80
        %v3206 = vpop.permute.xlu0 %3205
        %v3209 = vsel %vm1041, %v3203, 0
        %3211 = vmatprep.subr.mxu0 0.0
        %3212 = vmatpush1.msra.mxu0 0.0
        %3213 = vmatprep.subr.mxu0 0.0
        %3214 = vmatpush1.msra.mxu0 0.0
        %3215 = vmatprep.subr.mxu0 0.0
        %3216 = vmatpush1.msra.mxu0 0.0
        %3217 = vmatprep.subr.mxu0 0.0
        %3218 = vmatpush1.msra.mxu0 0.0
        %3219 = vmatprep.subr.mxu0 0.0
        %3220 = vmatpush1.msra.mxu0 0.0
        %3221 = vmatprep.subr.mxu0 0.0
        %3222 = vmatpush1.msra.mxu0 0.0
        %3223 = vmatprep.subr.mxu0 0.0
        %3224 = vmatpush1.msra.mxu0 0.0
        %3225 = vmatprep.subr.mxu0 0.0
        %3226 = vmatpush1.msra.mxu0 0.0
        %3227 = vmatprep.subr.mxu0 0.0
        %3228 = vmatpush1.msra.mxu0 0.0
        %3229 = vmatprep.subr.mxu0 0.0
        %3230 = vmatpush1.msra.mxu0 0.0
        %3231 = vmatprep.subr.mxu0 0.0
        %3232 = vmatpush1.msra.mxu0 0.0
        %3233 = vmatprep.subr.mxu0 0.0
        %3234 = vmatpush1.msra.mxu0 0.0
        %3235 = vmatprep.subr.mxu0 0.0
        %3236 = vmatpush1.msra.mxu0 0.0
        %3237 = vmatprep.subr.mxu0 0.0
        %3238 = vmatpush1.msra.mxu0 0.0
        %3239 = vmatprep.subr.mxu0 0.0
        %3240 = vmatpush1.msra.mxu0 0.0
        %3241 = vmatprep.subr.mxu0 0.0
        %3242 = vmatpush1.msra.mxu0 %v3206
        %3243 = vmatprep.subr.mxu0 0.0
        %3244 = vmatpush2.msra.mxu0 0.0
        %3245 = vmatprep.subr.mxu0 0.0
        %3246 = vmatpush2.msra.mxu0 0.0
        %3247 = vmatprep.subr.mxu0 0.0
        %3248 = vmatpush2.msra.mxu0 0.0
        %3249 = vmatprep.subr.mxu0 0.0
        %3250 = vmatpush2.msra.mxu0 0.0
        %3251 = vmatprep.subr.mxu0 0.0
        %3252 = vmatpush2.msra.mxu0 0.0
        %3253 = vmatprep.subr.mxu0 0.0
        %3254 = vmatpush2.msra.mxu0 0.0
        %3255 = vmatprep.subr.mxu0 0.0
        %3256 = vmatpush2.msra.mxu0 0.0
        %3257 = vmatprep.subr.mxu0 0.0
        %3258 = vmatpush2.msra.mxu0 0.0
        %3259 = vmatprep.subr.mxu0 0.0
        %3260 = vmatpush2.msra.mxu0 0.0
        %3261 = vmatprep.subr.mxu0 0.0
        %3262 = vmatpush2.msra.mxu0 0.0
        %3263 = vmatprep.subr.mxu0 0.0
        %3264 = vmatpush2.msra.mxu0 0.0
        %3265 = vmatprep.subr.mxu0 0.0
        %3266 = vmatpush2.msra.mxu0 0.0
        %3267 = vmatprep.subr.mxu0 0.0
        %3268 = vmatpush2.msra.mxu0 0.0
        %3269 = vmatprep.subr.mxu0 0.0
        %3270 = vmatpush2.msra.mxu0 0.0
        %3271 = vmatprep.subr.mxu0 0.0
        %3272 = vmatpush2.msra.mxu0 0.0
        %3273 = vmatprep.subr.mxu0 0.0
        %3274 = vmatpush2.msra.mxu0 0.0
        %3275 = vmatprep.mubr.f32.mxu0 0.0
        %3276 = vmatmul.mubr.f32.gmra.mxu0 %v3209
        %v3277 = vpop.f32.mrf.mxu0
        %v3278 = vadd.f32 0.0, %v3277
        %v3279 = vpop.f32.mrf.mxu0
        %3280 = vdwg.mxu0
        %3281 = vrot.lane.b32.xlu0 %v1027, 80
        %v3282 = vpop.permute.xlu0 %3281
        %v3285 = vsel %vm1041, %v3204, 0
        %3287 = vmatprep.subr.mxu0 0.0
        %3288 = vmatpush1.msra.mxu0 0.0
        %3289 = vmatprep.subr.mxu0 0.0
        %3290 = vmatpush1.msra.mxu0 0.0
        %3291 = vmatprep.subr.mxu0 0.0
        %3292 = vmatpush1.msra.mxu0 0.0
        %3293 = vmatprep.subr.mxu0 0.0
        %3294 = vmatpush1.msra.mxu0 0.0
        %3295 = vmatprep.subr.mxu0 0.0
        %3296 = vmatpush1.msra.mxu0 0.0
        %3297 = vmatprep.subr.mxu0 0.0
        %3298 = vmatpush1.msra.mxu0 0.0
        %3299 = vmatprep.subr.mxu0 0.0
        %3300 = vmatpush1.msra.mxu0 0.0
        %3301 = vmatprep.subr.mxu0 0.0
        %3302 = vmatpush1.msra.mxu0 0.0
        %3303 = vmatprep.subr.mxu0 0.0
        %3304 = vmatpush1.msra.mxu0 0.0
        %3305 = vmatprep.subr.mxu0 0.0
        %3306 = vmatpush1.msra.mxu0 0.0
        %3307 = vmatprep.subr.mxu0 0.0
        %3308 = vmatpush1.msra.mxu0 0.0
        %3309 = vmatprep.subr.mxu0 0.0
        %3310 = vmatpush1.msra.mxu0 0.0
        %3311 = vmatprep.subr.mxu0 0.0
        %3312 = vmatpush1.msra.mxu0 0.0
        %3313 = vmatprep.subr.mxu0 0.0
        %3314 = vmatpush1.msra.mxu0 0.0
        %3315 = vmatprep.subr.mxu0 0.0
        %3316 = vmatpush1.msra.mxu0 0.0
        %3317 = vmatprep.subr.mxu0 0.0
        %3318 = vmatpush1.msra.mxu0 %v3282
        %3319 = vmatprep.subr.mxu0 0.0
        %3320 = vmatpush2.msra.mxu0 0.0
        %3321 = vmatprep.subr.mxu0 0.0
        %3322 = vmatpush2.msra.mxu0 0.0
        %3323 = vmatprep.subr.mxu0 0.0
        %3324 = vmatpush2.msra.mxu0 0.0
        %3325 = vmatprep.subr.mxu0 0.0
        %3326 = vmatpush2.msra.mxu0 0.0
        %3327 = vmatprep.subr.mxu0 0.0
        %3328 = vmatpush2.msra.mxu0 0.0
        %3329 = vmatprep.subr.mxu0 0.0
        %3330 = vmatpush2.msra.mxu0 0.0
        %3331 = vmatprep.subr.mxu0 0.0
        %3332 = vmatpush2.msra.mxu0 0.0
        %3333 = vmatprep.subr.mxu0 0.0
        %3334 = vmatpush2.msra.mxu0 0.0
        %3335 = vmatprep.subr.mxu0 0.0
        %3336 = vmatpush2.msra.mxu0 0.0
        %3337 = vmatprep.subr.mxu0 0.0
        %3338 = vmatpush2.msra.mxu0 0.0
        %3339 = vmatprep.subr.mxu0 0.0
        %3340 = vmatpush2.msra.mxu0 0.0
        %3341 = vmatprep.subr.mxu0 0.0
        %3342 = vmatpush2.msra.mxu0 0.0
        %3343 = vmatprep.subr.mxu0 0.0
        %3344 = vmatpush2.msra.mxu0 0.0
        %3345 = vmatprep.subr.mxu0 0.0
        %3346 = vmatpush2.msra.mxu0 0.0
        %3347 = vmatprep.subr.mxu0 0.0
        %3348 = vmatpush2.msra.mxu0 0.0
        %3349 = vmatprep.subr.mxu0 0.0
        %3350 = vmatpush2.msra.mxu0 0.0
        %3351 = vmatprep.mubr.f32.mxu0 0.0
        %3352 = vmatmul.mubr.f32.gmra.mxu0 %v3285
        %v3353 = vpop.f32.mrf.mxu0
        %v3354 = vadd.f32 0.0, %v3353
        %v3355 = vpop.f32.mrf.mxu0
        %3356 = vdwg.mxu0
        %3357 = vrot.lane.b32.xlu0 %v1019, 72
        %v3358 = vpop.permute.xlu0 %3357
        %3359 = vrot.lane.b32.xlu0 %v1019, 8
        %v3360 = vpop.permute.xlu0 %3359
        %v3361 = vsel %vm1041, %v3358, 0
        %v3363 = vsel %vm1041, %v3360, 0
        %3365 = vmatprep.subr.mxu0 0.0
        %3366 = vmatpush1.xpose.msra.mxu0 0.0
        %3367 = vmatprep.subr.mxu0 0.0
        %3368 = vmatpush1.xpose.msra.mxu0 0.0
        %3369 = vmatprep.subr.mxu0 0.0
        %3370 = vmatpush1.xpose.msra.mxu0 0.0
        %3371 = vmatprep.subr.mxu0 0.0
        %3372 = vmatpush1.xpose.msra.mxu0 0.0
        %3373 = vmatprep.subr.mxu0 0.0
        %3374 = vmatpush1.xpose.msra.mxu0 0.0
        %3375 = vmatprep.subr.mxu0 0.0
        %3376 = vmatpush1.xpose.msra.mxu0 0.0
        %3377 = vmatprep.subr.mxu0 0.0
        %3378 = vmatpush1.xpose.msra.mxu0 0.0
        %3379 = vmatprep.subr.mxu0 0.0
        %3380 = vmatpush1.xpose.msra.mxu0 0.0
        %3381 = vmatprep.subr.mxu0 0.0
        %3382 = vmatpush1.xpose.msra.mxu0 0.0
        %3383 = vmatprep.subr.mxu0 0.0
        %3384 = vmatpush1.xpose.msra.mxu0 0.0
        %3385 = vmatprep.subr.mxu0 0.0
        %3386 = vmatpush1.xpose.msra.mxu0 0.0
        %3387 = vmatprep.subr.mxu0 0.0
        %3388 = vmatpush1.xpose.msra.mxu0 0.0
        %3389 = vmatprep.subr.mxu0 0.0
        %3390 = vmatpush1.xpose.msra.mxu0 0.0
        %3391 = vmatprep.subr.mxu0 0.0
        %3392 = vmatpush1.xpose.msra.mxu0 0.0
        %3393 = vmatprep.subr.mxu0 0.0
        %3394 = vmatpush1.xpose.msra.mxu0 0.0
        %3395 = vmatprep.subr.mxu0 0.0
        %3396 = vmatpush1.xpose.msra.mxu0 %v3363
        %3397 = vmatprep.subr.mxu0 0.0
        %3398 = vmatpush2.xpose.msra.mxu0 0.0
        %3399 = vmatprep.subr.mxu0 0.0
        %3400 = vmatpush2.xpose.msra.mxu0 0.0
        %3401 = vmatprep.subr.mxu0 0.0
        %3402 = vmatpush2.xpose.msra.mxu0 0.0
        %3403 = vmatprep.subr.mxu0 0.0
        %3404 = vmatpush2.xpose.msra.mxu0 0.0
        %3405 = vmatprep.subr.mxu0 0.0
        %3406 = vmatpush2.xpose.msra.mxu0 0.0
        %3407 = vmatprep.subr.mxu0 0.0
        %3408 = vmatpush2.xpose.msra.mxu0 0.0
        %3409 = vmatprep.subr.mxu0 0.0
        %3410 = vmatpush2.xpose.msra.mxu0 0.0
        %3411 = vmatprep.subr.mxu0 0.0
        %3412 = vmatpush2.xpose.msra.mxu0 0.0
        %3413 = vmatprep.subr.mxu0 0.0
        %3414 = vmatpush2.xpose.msra.mxu0 0.0
        %3415 = vmatprep.subr.mxu0 0.0
        %3416 = vmatpush2.xpose.msra.mxu0 0.0
        %3417 = vmatprep.subr.mxu0 0.0
        %3418 = vmatpush2.xpose.msra.mxu0 0.0
        %3419 = vmatprep.subr.mxu0 0.0
        %3420 = vmatpush2.xpose.msra.mxu0 0.0
        %3421 = vmatprep.subr.mxu0 0.0
        %3422 = vmatpush2.xpose.msra.mxu0 0.0
        %3423 = vmatprep.subr.mxu0 0.0
        %3424 = vmatpush2.xpose.msra.mxu0 0.0
        %3425 = vmatprep.subr.mxu0 0.0
        %3426 = vmatpush2.xpose.msra.mxu0 0.0
        %3427 = vmatprep.subr.mxu0 0.0
        %3428 = vmatpush2.xpose.msra.mxu0 0.0
        %3429 = vmatprep.mubr.f32.mxu0 0.0
        %3430 = vmatmul.mubr.f32.gmra.mxu0 %v3361
        %v3431 = vpop.f32.mrf.mxu0
        %v3432 = vadd.f32 0.0, %v3431
        %v3433 = vpop.f32.mrf.mxu0
        %3434 = vdwg.mxu0
        %3435 = vrot.lane.b32.xlu0 %v1025, 72
        %v3436 = vpop.permute.xlu0 %3435
        %3437 = vrot.lane.b32.xlu0 %v1025, 8
        %v3438 = vpop.permute.xlu0 %3437
        %v3439 = vsel %vm1041, %v3436, 0
        %v3441 = vsel %vm1041, %v3438, 0
        %3443 = vmatprep.subr.mxu0 0.0
        %3444 = vmatpush1.xpose.msra.mxu0 0.0
        %3445 = vmatprep.subr.mxu0 0.0
        %3446 = vmatpush1.xpose.msra.mxu0 0.0
        %3447 = vmatprep.subr.mxu0 0.0
        %3448 = vmatpush1.xpose.msra.mxu0 0.0
        %3449 = vmatprep.subr.mxu0 0.0
        %3450 = vmatpush1.xpose.msra.mxu0 0.0
        %3451 = vmatprep.subr.mxu0 0.0
        %3452 = vmatpush1.xpose.msra.mxu0 0.0
        %3453 = vmatprep.subr.mxu0 0.0
        %3454 = vmatpush1.xpose.msra.mxu0 0.0
        %3455 = vmatprep.subr.mxu0 0.0
        %3456 = vmatpush1.xpose.msra.mxu0 0.0
        %3457 = vmatprep.subr.mxu0 0.0
        %3458 = vmatpush1.xpose.msra.mxu0 0.0
        %3459 = vmatprep.subr.mxu0 0.0
        %3460 = vmatpush1.xpose.msra.mxu0 0.0
        %3461 = vmatprep.subr.mxu0 0.0
        %3462 = vmatpush1.xpose.msra.mxu0 0.0
        %3463 = vmatprep.subr.mxu0 0.0
        %3464 = vmatpush1.xpose.msra.mxu0 0.0
        %3465 = vmatprep.subr.mxu0 0.0
        %3466 = vmatpush1.xpose.msra.mxu0 0.0
        %3467 = vmatprep.subr.mxu0 0.0
        %3468 = vmatpush1.xpose.msra.mxu0 0.0
        %3469 = vmatprep.subr.mxu0 0.0
        %3470 = vmatpush1.xpose.msra.mxu0 0.0
        %3471 = vmatprep.subr.mxu0 0.0
        %3472 = vmatpush1.xpose.msra.mxu0 0.0
        %3473 = vmatprep.subr.mxu0 0.0
        %3474 = vmatpush1.xpose.msra.mxu0 %v3441
        %3475 = vmatprep.subr.mxu0 0.0
        %3476 = vmatpush2.xpose.msra.mxu0 0.0
        %3477 = vmatprep.subr.mxu0 0.0
        %3478 = vmatpush2.xpose.msra.mxu0 0.0
        %3479 = vmatprep.subr.mxu0 0.0
        %3480 = vmatpush2.xpose.msra.mxu0 0.0
        %3481 = vmatprep.subr.mxu0 0.0
        %3482 = vmatpush2.xpose.msra.mxu0 0.0
        %3483 = vmatprep.subr.mxu0 0.0
        %3484 = vmatpush2.xpose.msra.mxu0 0.0
        %3485 = vmatprep.subr.mxu0 0.0
        %3486 = vmatpush2.xpose.msra.mxu0 0.0
        %3487 = vmatprep.subr.mxu0 0.0
        %3488 = vmatpush2.xpose.msra.mxu0 0.0
        %3489 = vmatprep.subr.mxu0 0.0
        %3490 = vmatpush2.xpose.msra.mxu0 0.0
        %3491 = vmatprep.subr.mxu0 0.0
        %3492 = vmatpush2.xpose.msra.mxu0 0.0
        %3493 = vmatprep.subr.mxu0 0.0
        %3494 = vmatpush2.xpose.msra.mxu0 0.0
        %3495 = vmatprep.subr.mxu0 0.0
        %3496 = vmatpush2.xpose.msra.mxu0 0.0
        %3497 = vmatprep.subr.mxu0 0.0
        %3498 = vmatpush2.xpose.msra.mxu0 0.0
        %3499 = vmatprep.subr.mxu0 0.0
        %3500 = vmatpush2.xpose.msra.mxu0 0.0
        %3501 = vmatprep.subr.mxu0 0.0
        %3502 = vmatpush2.xpose.msra.mxu0 0.0
        %3503 = vmatprep.subr.mxu0 0.0
        %3504 = vmatpush2.xpose.msra.mxu0 0.0
        %3505 = vmatprep.subr.mxu0 0.0
        %3506 = vmatpush2.xpose.msra.mxu0 0.0
        %3507 = vmatprep.mubr.f32.mxu0 0.0
        %3508 = vmatmul.mubr.f32.gmra.mxu0 %v3439
        %v3509 = vpop.f32.mrf.mxu0
        %v3510 = vadd.f32 0.0, %v3509
        %v3511 = vpop.f32.mrf.mxu0
        %3512 = vdwg.mxu0
        %v3513 = vmul.f32 %v3432, 0.35355338
        %v3514 = vmul.f32 %v3510, 0.35355338
        %v3515 = vsel %vm1041, %v3513, -inf
        %3516 = vmax.xlane.f32.xlu0 %v3515
        %v3517 = vpop.xlane.xlu0 %3516
        %v3518 = vsel %vm1041, %v3514, -inf
        %3519 = vmax.xlane.f32.xlu0 %v3518
        %v3520 = vpop.xlane.xlu0 %3519
        %v3521 = vsub.f32 %v3513, %v3517
        %v3522 = vsub.f32 %v3514, %v3520
        %v3523 = vmul.f32 %v3521, 1.442695
        %v3524 = vpow.pop %v3523
        %v3525 = vmul.f32 %v3522, 1.442695
        %v3526 = vpow.pop %v3525
        %v3527 = vsel %vm1041, %v3524, 0.0
        %3528 = vadd.xlane.f32.xlu0 %v3527
        %v3529 = vpop.xlane.xlu0 %3528
        %v3530 = vsel %vm1041, %v3526, 0.0
        %3531 = vadd.xlane.f32.xlu0 %v3530
        %v3532 = vpop.xlane.xlu0 %3531
        %v3533 = vrcp.pop %v3529
        %v3534 = vrcp.pop %v3532
        %v3535 = vmul.f32 %v3524, %v3533
        %v3536 = vmul.f32 %v3526, %v3534
        %3537 = vrot.lane.b32.xlu0 %v1021, 72
        %v3538 = vpop.permute.xlu0 %3537
        %v3541 = vsel %vm1041, %v3535, 0
        %3543 = vmatprep.subr.mxu0 0.0
        %3544 = vmatpush1.msra.mxu0 0.0
        %3545 = vmatprep.subr.mxu0 0.0
        %3546 = vmatpush1.msra.mxu0 0.0
        %3547 = vmatprep.subr.mxu0 0.0
        %3548 = vmatpush1.msra.mxu0 0.0
        %3549 = vmatprep.subr.mxu0 0.0
        %3550 = vmatpush1.msra.mxu0 0.0
        %3551 = vmatprep.subr.mxu0 0.0
        %3552 = vmatpush1.msra.mxu0 0.0
        %3553 = vmatprep.subr.mxu0 0.0
        %3554 = vmatpush1.msra.mxu0 0.0
        %3555 = vmatprep.subr.mxu0 0.0
        %3556 = vmatpush1.msra.mxu0 0.0
        %3557 = vmatprep.subr.mxu0 0.0
        %3558 = vmatpush1.msra.mxu0 0.0
        %3559 = vmatprep.subr.mxu0 0.0
        %3560 = vmatpush1.msra.mxu0 0.0
        %3561 = vmatprep.subr.mxu0 0.0
        %3562 = vmatpush1.msra.mxu0 0.0
        %3563 = vmatprep.subr.mxu0 0.0
        %3564 = vmatpush1.msra.mxu0 0.0
        %3565 = vmatprep.subr.mxu0 0.0
        %3566 = vmatpush1.msra.mxu0 0.0
        %3567 = vmatprep.subr.mxu0 0.0
        %3568 = vmatpush1.msra.mxu0 0.0
        %3569 = vmatprep.subr.mxu0 0.0
        %3570 = vmatpush1.msra.mxu0 0.0
        %3571 = vmatprep.subr.mxu0 0.0
        %3572 = vmatpush1.msra.mxu0 0.0
        %3573 = vmatprep.subr.mxu0 0.0
        %3574 = vmatpush1.msra.mxu0 %v3538
        %3575 = vmatprep.subr.mxu0 0.0
        %3576 = vmatpush2.msra.mxu0 0.0
        %3577 = vmatprep.subr.mxu0 0.0
        %3578 = vmatpush2.msra.mxu0 0.0
        %3579 = vmatprep.subr.mxu0 0.0
        %3580 = vmatpush2.msra.mxu0 0.0
        %3581 = vmatprep.subr.mxu0 0.0
        %3582 = vmatpush2.msra.mxu0 0.0
        %3583 = vmatprep.subr.mxu0 0.0
        %3584 = vmatpush2.msra.mxu0 0.0
        %3585 = vmatprep.subr.mxu0 0.0
        %3586 = vmatpush2.msra.mxu0 0.0
        %3587 = vmatprep.subr.mxu0 0.0
        %3588 = vmatpush2.msra.mxu0 0.0
        %3589 = vmatprep.subr.mxu0 0.0
        %3590 = vmatpush2.msra.mxu0 0.0
        %3591 = vmatprep.subr.mxu0 0.0
        %3592 = vmatpush2.msra.mxu0 0.0
        %3593 = vmatprep.subr.mxu0 0.0
        %3594 = vmatpush2.msra.mxu0 0.0
        %3595 = vmatprep.subr.mxu0 0.0
        %3596 = vmatpush2.msra.mxu0 0.0
        %3597 = vmatprep.subr.mxu0 0.0
        %3598 = vmatpush2.msra.mxu0 0.0
        %3599 = vmatprep.subr.mxu0 0.0
        %3600 = vmatpush2.msra.mxu0 0.0
        %3601 = vmatprep.subr.mxu0 0.0
        %3602 = vmatpush2.msra.mxu0 0.0
        %3603 = vmatprep.subr.mxu0 0.0
        %3604 = vmatpush2.msra.mxu0 0.0
        %3605 = vmatprep.subr.mxu0 0.0
        %3606 = vmatpush2.msra.mxu0 0.0
        %3607 = vmatprep.mubr.f32.mxu0 0.0
        %3608 = vmatmul.mubr.f32.gmra.mxu0 %v3541
        %v3609 = vpop.f32.mrf.mxu0
        %v3610 = vadd.f32 0.0, %v3609
        %v3611 = vpop.f32.mrf.mxu0
        %3612 = vdwg.mxu0
        %3613 = vrot.lane.b32.xlu0 %v1027, 72
        %v3614 = vpop.permute.xlu0 %3613
        %v3617 = vsel %vm1041, %v3536, 0
        %3619 = vmatprep.subr.mxu0 0.0
        %3620 = vmatpush1.msra.mxu0 0.0
        %3621 = vmatprep.subr.mxu0 0.0
        %3622 = vmatpush1.msra.mxu0 0.0
        %3623 = vmatprep.subr.mxu0 0.0
        %3624 = vmatpush1.msra.mxu0 0.0
        %3625 = vmatprep.subr.mxu0 0.0
        %3626 = vmatpush1.msra.mxu0 0.0
        %3627 = vmatprep.subr.mxu0 0.0
        %3628 = vmatpush1.msra.mxu0 0.0
        %3629 = vmatprep.subr.mxu0 0.0
        %3630 = vmatpush1.msra.mxu0 0.0
        %3631 = vmatprep.subr.mxu0 0.0
        %3632 = vmatpush1.msra.mxu0 0.0
        %3633 = vmatprep.subr.mxu0 0.0
        %3634 = vmatpush1.msra.mxu0 0.0
        %3635 = vmatprep.subr.mxu0 0.0
        %3636 = vmatpush1.msra.mxu0 0.0
        %3637 = vmatprep.subr.mxu0 0.0
        %3638 = vmatpush1.msra.mxu0 0.0
        %3639 = vmatprep.subr.mxu0 0.0
        %3640 = vmatpush1.msra.mxu0 0.0
        %3641 = vmatprep.subr.mxu0 0.0
        %3642 = vmatpush1.msra.mxu0 0.0
        %3643 = vmatprep.subr.mxu0 0.0
        %3644 = vmatpush1.msra.mxu0 0.0
        %3645 = vmatprep.subr.mxu0 0.0
        %3646 = vmatpush1.msra.mxu0 0.0
        %3647 = vmatprep.subr.mxu0 0.0
        %3648 = vmatpush1.msra.mxu0 0.0
        %3649 = vmatprep.subr.mxu0 0.0
        %3650 = vmatpush1.msra.mxu0 %v3614
        %3651 = vmatprep.subr.mxu0 0.0
        %3652 = vmatpush2.msra.mxu0 0.0
        %3653 = vmatprep.subr.mxu0 0.0
        %3654 = vmatpush2.msra.mxu0 0.0
        %3655 = vmatprep.subr.mxu0 0.0
        %3656 = vmatpush2.msra.mxu0 0.0
        %3657 = vmatprep.subr.mxu0 0.0
        %3658 = vmatpush2.msra.mxu0 0.0
        %3659 = vmatprep.subr.mxu0 0.0
        %3660 = vmatpush2.msra.mxu0 0.0
        %3661 = vmatprep.subr.mxu0 0.0
        %3662 = vmatpush2.msra.mxu0 0.0
        %3663 = vmatprep.subr.mxu0 0.0
        %3664 = vmatpush2.msra.mxu0 0.0
        %3665 = vmatprep.subr.mxu0 0.0
        %3666 = vmatpush2.msra.mxu0 0.0
        %3667 = vmatprep.subr.mxu0 0.0
        %3668 = vmatpush2.msra.mxu0 0.0
        %3669 = vmatprep.subr.mxu0 0.0
        %3670 = vmatpush2.msra.mxu0 0.0
        %3671 = vmatprep.subr.mxu0 0.0
        %3672 = vmatpush2.msra.mxu0 0.0
        %3673 = vmatprep.subr.mxu0 0.0
        %3674 = vmatpush2.msra.mxu0 0.0
        %3675 = vmatprep.subr.mxu0 0.0
        %3676 = vmatpush2.msra.mxu0 0.0
        %3677 = vmatprep.subr.mxu0 0.0
        %3678 = vmatpush2.msra.mxu0 0.0
        %3679 = vmatprep.subr.mxu0 0.0
        %3680 = vmatpush2.msra.mxu0 0.0
        %3681 = vmatprep.subr.mxu0 0.0
        %3682 = vmatpush2.msra.mxu0 0.0
        %3683 = vmatprep.mubr.f32.mxu0 0.0
        %3684 = vmatmul.mubr.f32.gmra.mxu0 %v3617
        %v3685 = vpop.f32.mrf.mxu0
        %v3686 = vadd.f32 0.0, %v3685
        %v3687 = vpop.f32.mrf.mxu0
        %3688 = vdwg.mxu0
        %3691 = vrot.lane.b32.xlu0 %v1617, 8
        %v3692 = vpop.permute.xlu0 %3691
        %3693 = vrot.lane.b32.xlu0 %v1694, 8
        %v3694 = vpop.permute.xlu0 %3693
        %3699 = vrot.lane.b32.xlu0 %v1950, 16
        %v3700 = vpop.permute.xlu0 %3699
        %3701 = vrot.lane.b32.xlu0 %v2026, 16
        %v3702 = vpop.permute.xlu0 %3701
        %3707 = vrot.lane.b32.xlu0 %v2282, 24
        %v3708 = vpop.permute.xlu0 %3707
        %3709 = vrot.lane.b32.xlu0 %v2358, 24
        %v3710 = vpop.permute.xlu0 %3709
        %3715 = vrot.lane.b32.xlu0 %v2614, 32
        %v3716 = vpop.permute.xlu0 %3715
        %3717 = vrot.lane.b32.xlu0 %v2690, 32
        %v3718 = vpop.permute.xlu0 %3717
        %3723 = vrot.lane.b32.xlu0 %v2946, 40
        %v3724 = vpop.permute.xlu0 %3723
        %3725 = vrot.lane.b32.xlu0 %v3022, 40
        %v3726 = vpop.permute.xlu0 %3725
        %3731 = vrot.lane.b32.xlu0 %v3278, 48
        %v3732 = vpop.permute.xlu0 %3731
        %3733 = vrot.lane.b32.xlu0 %v3354, 48
        %v3734 = vpop.permute.xlu0 %3733
        %3739 = vrot.lane.b32.xlu0 %v3610, 56
        %v3740 = vpop.permute.xlu0 %3739
        %3741 = vrot.lane.b32.xlu0 %v3686, 56
        %v3742 = vpop.permute.xlu0 %3741
        %v3745 = vsel %vm1041, %v1287, %v3692
        %v3746 = vsel %vm1041, %v1360, %v3694
        %vm3747 = vcmask 130048
        %v3748 = vsel %vm3747, %v3745, %v3700
        %v3749 = vsel %vm3747, %v3746, %v3702
        %vm3750 = vcmask 195584
        %v3751 = vsel %vm3750, %v3748, %v3708
        %v3752 = vsel %vm3750, %v3749, %v3710
        %vm3753 = vcmask 261120
        %v3754 = vsel %vm3753, %v3751, %v3716
        %v3755 = vsel %vm3753, %v3752, %v3718
        %vm3756 = vcmask 326656
        %v3757 = vsel %vm3756, %v3754, %v3724
        %v3758 = vsel %vm3756, %v3755, %v3726
        %vm3759 = vcmask 392192
        %v3760 = vsel %vm3759, %v3757, %v3732
        %v3761 = vsel %vm3759, %v3758, %v3734
        %vm3762 = vcmask 457728
        %v3763 = vsel %vm3762, %v3760, %v3740
        %v3764 = vsel %vm3762, %v3761, %v3742
        %v3766 = vlaneseq
        %v3767 = vshrl.u32 %v3766, 7
        %v3768 = vsub.s32 0, %v3767
        %v3769 = vrot.slane %v1037, %v3768
        %v3772 = vsel %vm945, %v3763, 0
        %v3775 = vsel %vm945, %v3764, 0
        %3777 = vmatprep.subr.mxu0 0.0
        %3778 = vmatpush1.msra.mxu0 0.0
        %3779 = vmatprep.subr.mxu0 0.0
        %3780 = vmatpush1.msra.mxu0 0.0
        %3781 = vmatprep.subr.mxu0 0.0
        %3782 = vmatpush1.msra.mxu0 0.0
        %3783 = vmatprep.subr.mxu0 0.0
        %3784 = vmatpush1.msra.mxu0 0.0
        %3785 = vmatprep.subr.mxu0 0.0
        %3786 = vmatpush1.msra.mxu0 0.0
        %3787 = vmatprep.subr.mxu0 0.0
        %3788 = vmatpush1.msra.mxu0 0.0
        %3789 = vmatprep.subr.mxu0 0.0
        %3790 = vmatpush1.msra.mxu0 0.0
        %3791 = vmatprep.subr.mxu0 0.0
        %3792 = vmatpush1.msra.mxu0 0.0
        %3793 = vmatprep.subr.mxu0 0.0
        %3794 = vmatpush1.msra.mxu0 %v1036
        %3795 = vmatprep.subr.mxu0 0.0
        %3796 = vmatpush1.msra.mxu0 %v1035
        %3797 = vmatprep.subr.mxu0 0.0
        %3798 = vmatpush1.msra.mxu0 %v1034
        %3799 = vmatprep.subr.mxu0 0.0
        %3800 = vmatpush1.msra.mxu0 %v1033
        %3801 = vmatprep.subr.mxu0 0.0
        %3802 = vmatpush1.msra.mxu0 %v1032
        %3803 = vmatprep.subr.mxu0 0.0
        %3804 = vmatpush1.msra.mxu0 %v1031
        %3805 = vmatprep.subr.mxu0 0.0
        %3806 = vmatpush1.msra.mxu0 %v1030
        %3807 = vmatprep.subr.mxu0 0.0
        %3808 = vmatpush1.msra.mxu0 %v1029
        %3809 = vmatprep.subr.mxu0 0.0
        %3810 = vmatpush2.msra.mxu0 0.0
        %3811 = vmatprep.subr.mxu0 0.0
        %3812 = vmatpush2.msra.mxu0 0.0
        %3813 = vmatprep.subr.mxu0 0.0
        %3814 = vmatpush2.msra.mxu0 0.0
        %3815 = vmatprep.subr.mxu0 0.0
        %3816 = vmatpush2.msra.mxu0 0.0
        %3817 = vmatprep.subr.mxu0 0.0
        %3818 = vmatpush2.msra.mxu0 0.0
        %3819 = vmatprep.subr.mxu0 0.0
        %3820 = vmatpush2.msra.mxu0 0.0
        %3821 = vmatprep.subr.mxu0 0.0
        %3822 = vmatpush2.msra.mxu0 0.0
        %3823 = vmatprep.subr.mxu0 0.0
        %3824 = vmatpush2.msra.mxu0 0.0
        %3825 = vmatprep.subr.mxu0 0.0
        %3826 = vmatpush2.msra.mxu0 0.0
        %3827 = vmatprep.subr.mxu0 0.0
        %3828 = vmatpush2.msra.mxu0 0.0
        %3829 = vmatprep.subr.mxu0 0.0
        %3830 = vmatpush2.msra.mxu0 0.0
        %3831 = vmatprep.subr.mxu0 0.0
        %3832 = vmatpush2.msra.mxu0 0.0
        %3833 = vmatprep.subr.mxu0 0.0
        %3834 = vmatpush2.msra.mxu0 0.0
        %3835 = vmatprep.subr.mxu0 0.0
        %3836 = vmatpush2.msra.mxu0 0.0
        %3837 = vmatprep.subr.mxu0 0.0
        %3838 = vmatpush2.msra.mxu0 0.0
        %3839 = vmatprep.subr.mxu0 0.0
        %3840 = vmatpush2.msra.mxu0 0.0
        %3841 = vmatprep.mubr.f32.mxu0 0.0
        %3842 = vmatmul.mubr.f32.gmra.mxu0 %v3772
        %v3843 = vpop.f32.mrf.mxu0
        %v3844 = vadd.f32 %v3769, %v3843
        %v3845 = vpop.f32.mrf.mxu0
        %3846 = vmatprep.mubr.f32.mxu0 0.0
        %3847 = vmatmul.mubr.f32.gmra.mxu0 %v3775
        %v3848 = vpop.f32.mrf.mxu0
        %v3849 = vadd.f32 %v3769, %v3848
        %v3850 = vpop.f32.mrf.mxu0
        %3851 = vdwg.mxu0
        %v3852 = vadd.f32 %v915, %v3844
        %v3853 = vadd.f32 %v916, %v3849
        %v3854 = vsel %vm945, %v3852, 0.0
        %3855 = vadd.xlane.f32.xlu0 %v3854
        %v3856 = vpop.xlane.xlu0 %3855
        %v3857 = vsel %vm945, %v3853, 0.0
        %3858 = vadd.xlane.f32.xlu0 %v3857
        %v3859 = vpop.xlane.xlu0 %3858
        %v3860 = vrcp.pop 64.0
        %v3861 = vmul.f32 %v3856, %v3860
        %v3862 = vmul.f32 %v3859, %v3860
        %v3863 = vsub.f32 %v3852, %v3861
        %v3864 = vsub.f32 %v3853, %v3862
        %v3865 = vmul.f32 %v3863, %v3863
        %v3866 = vmul.f32 %v3864, %v3864
        %v3867 = vsel %vm945, %v3865, 0.0
        %3868 = vadd.xlane.f32.xlu0 %v3867
        %v3869 = vpop.xlane.xlu0 %3868
        %v3870 = vsel %vm945, %v3866, 0.0
        %3871 = vadd.xlane.f32.xlu0 %v3870
        %v3872 = vpop.xlane.xlu0 %3871
        %v3873 = vmul.f32 %v3869, %v3860
        %v3874 = vmul.f32 %v3872, %v3860
        %v3875 = vadd.f32 %v3873, 1e-05
        %v3876 = vadd.f32 %v3874, 1e-05
        %v3877 = vrsqrt.pop %v3875
        %v3878 = vrsqrt.pop %v3876
        %v3879 = vmul.f32 %v3863, %v3877
        %v3880 = vmul.f32 %v3864, %v3878
        %v3881 = vlaneseq
        %v3882 = vshrl.u32 %v3881, 7
        %v3883 = vsub.s32 0, %v3882
        %v3884 = vrot.slane %v913, %v3883
        %v3885 = vmul.f32 %v3879, %v3884
        %v3886 = vmul.f32 %v3880, %v3884
        %v3887 = vlaneseq
        %v3888 = vshrl.u32 %v3887, 7
        %v3889 = vsub.s32 0, %v3888
        %v3890 = vrot.slane %v914, %v3889
        %v3891 = vadd.f32 %v3885, %v3890
        %v3892 = vadd.f32 %v3886, %v3890
        %v3893 = vld [vmem:[%s2] sm:$0xff]
        %v3894 = vld [vmem:[%s2 + $0x8] sm:$0xff]
        %v3895 = vld [vmem:[%s856] sm:$0xff]
        %v3896 = vld [vmem:[%s856 + $0x8] sm:$0xff]
        %v3897 = vld [vmem:[%s856 + $0x10] sm:$0xff]
        %v3898 = vld [vmem:[%s856 + $0x18] sm:$0xff]
        %v3899 = vld [vmem:[%s856 + $0x20] sm:$0xff]
        %v3900 = vld [vmem:[%s856 + $0x28] sm:$0xff]
        %v3901 = vld [vmem:[%s856 + $0x30] sm:$0xff]
        %v3902 = vld [vmem:[%s856 + $0x38] sm:$0xff]
        %v3903 = vld [vmem:[%s859] sm:$0x1]
        %v3905 = vlaneseq
        %v3906 = vshrl.u32 %v3905, 7
        %v3907 = vsub.s32 0, %v3906
        %v3908 = vrot.slane %v3903, %v3907
        %v3911 = vsel %vm945, %v3891, 0
        %v3914 = vsel %vm945, %v3892, 0
        %3916 = vmatprep.subr.mxu0 0.0
        %3917 = vmatpush1.msra.mxu0 0.0
        %3918 = vmatprep.subr.mxu0 0.0
        %3919 = vmatpush1.msra.mxu0 0.0
        %3920 = vmatprep.subr.mxu0 0.0
        %3921 = vmatpush1.msra.mxu0 0.0
        %3922 = vmatprep.subr.mxu0 0.0
        %3923 = vmatpush1.msra.mxu0 0.0
        %3924 = vmatprep.subr.mxu0 0.0
        %3925 = vmatpush1.msra.mxu0 0.0
        %3926 = vmatprep.subr.mxu0 0.0
        %3927 = vmatpush1.msra.mxu0 0.0
        %3928 = vmatprep.subr.mxu0 0.0
        %3929 = vmatpush1.msra.mxu0 0.0
        %3930 = vmatprep.subr.mxu0 0.0
        %3931 = vmatpush1.msra.mxu0 0.0
        %3932 = vmatprep.subr.mxu0 0.0
        %3933 = vmatpush1.msra.mxu0 %v3902
        %3934 = vmatprep.subr.mxu0 0.0
        %3935 = vmatpush1.msra.mxu0 %v3901
        %3936 = vmatprep.subr.mxu0 0.0
        %3937 = vmatpush1.msra.mxu0 %v3900
        %3938 = vmatprep.subr.mxu0 0.0
        %3939 = vmatpush1.msra.mxu0 %v3899
        %3940 = vmatprep.subr.mxu0 0.0
        %3941 = vmatpush1.msra.mxu0 %v3898
        %3942 = vmatprep.subr.mxu0 0.0
        %3943 = vmatpush1.msra.mxu0 %v3897
        %3944 = vmatprep.subr.mxu0 0.0
        %3945 = vmatpush1.msra.mxu0 %v3896
        %3946 = vmatprep.subr.mxu0 0.0
        %3947 = vmatpush1.msra.mxu0 %v3895
        %3948 = vmatprep.subr.mxu0 0.0
        %3949 = vmatpush2.msra.mxu0 0.0
        %3950 = vmatprep.subr.mxu0 0.0
        %3951 = vmatpush2.msra.mxu0 0.0
        %3952 = vmatprep.subr.mxu0 0.0
        %3953 = vmatpush2.msra.mxu0 0.0
        %3954 = vmatprep.subr.mxu0 0.0
        %3955 = vmatpush2.msra.mxu0 0.0
        %3956 = vmatprep.subr.mxu0 0.0
        %3957 = vmatpush2.msra.mxu0 0.0
        %3958 = vmatprep.subr.mxu0 0.0
        %3959 = vmatpush2.msra.mxu0 0.0
        %3960 = vmatprep.subr.mxu0 0.0
        %3961 = vmatpush2.msra.mxu0 0.0
        %3962 = vmatprep.subr.mxu0 0.0
        %3963 = vmatpush2.msra.mxu0 0.0
        %3964 = vmatprep.subr.mxu0 0.0
        %3965 = vmatpush2.msra.mxu0 0.0
        %3966 = vmatprep.subr.mxu0 0.0
        %3967 = vmatpush2.msra.mxu0 0.0
        %3968 = vmatprep.subr.mxu0 0.0
        %3969 = vmatpush2.msra.mxu0 0.0
        %3970 = vmatprep.subr.mxu0 0.0
        %3971 = vmatpush2.msra.mxu0 0.0
        %3972 = vmatprep.subr.mxu0 0.0
        %3973 = vmatpush2.msra.mxu0 0.0
        %3974 = vmatprep.subr.mxu0 0.0
        %3975 = vmatpush2.msra.mxu0 0.0
        %3976 = vmatprep.subr.mxu0 0.0
        %3977 = vmatpush2.msra.mxu0 0.0
        %3978 = vmatprep.subr.mxu0 0.0
        %3979 = vmatpush2.msra.mxu0 0.0
        %3980 = vmatprep.mubr.f32.mxu0 0.0
        %3981 = vmatmul.mubr.f32.gmra.mxu0 %v3911
        %v3982 = vpop.f32.mrf.mxu0
        %v3983 = vadd.f32 %v3908, %v3982
        %v3984 = vpop.f32.mrf.mxu0
        %3985 = vmatprep.mubr.f32.mxu0 0.0
        %3986 = vmatmul.mubr.f32.gmra.mxu0 %v3914
        %v3987 = vpop.f32.mrf.mxu0
        %v3988 = vadd.f32 %v3908, %v3987
        %v3989 = vpop.f32.mrf.mxu0
        %3990 = vdwg.mxu0
        %v3991 = vld [vmem:[%s864] sm:$0xff]
        %v3992 = vld [vmem:[%s864 + $0x8] sm:$0xff]
        %v3993 = vld [vmem:[%s864 + $0x10] sm:$0xff]
        %v3994 = vld [vmem:[%s864 + $0x18] sm:$0xff]
        %v3995 = vld [vmem:[%s864 + $0x20] sm:$0xff]
        %v3996 = vld [vmem:[%s864 + $0x28] sm:$0xff]
        %v3997 = vld [vmem:[%s864 + $0x30] sm:$0xff]
        %v3998 = vld [vmem:[%s864 + $0x38] sm:$0xff]
        %v3999 = vld [vmem:[%s867] sm:$0x1]
        %v4001 = vlaneseq
        %v4002 = vshrl.u32 %v4001, 7
        %v4003 = vsub.s32 0, %v4002
        %v4004 = vrot.slane %v3999, %v4003
        %v4007 = vsel %vm945, %v3893, 0
        %v4010 = vsel %vm945, %v3894, 0
        %4012 = vmatprep.subr.mxu0 0.0
        %4013 = vmatpush1.msra.mxu0 0.0
        %4014 = vmatprep.subr.mxu0 0.0
        %4015 = vmatpush1.msra.mxu0 0.0
        %4016 = vmatprep.subr.mxu0 0.0
        %4017 = vmatpush1.msra.mxu0 0.0
        %4018 = vmatprep.subr.mxu0 0.0
        %4019 = vmatpush1.msra.mxu0 0.0
        %4020 = vmatprep.subr.mxu0 0.0
        %4021 = vmatpush1.msra.mxu0 0.0
        %4022 = vmatprep.subr.mxu0 0.0
        %4023 = vmatpush1.msra.mxu0 0.0
        %4024 = vmatprep.subr.mxu0 0.0
        %4025 = vmatpush1.msra.mxu0 0.0
        %4026 = vmatprep.subr.mxu0 0.0
        %4027 = vmatpush1.msra.mxu0 0.0
        %4028 = vmatprep.subr.mxu0 0.0
        %4029 = vmatpush1.msra.mxu0 %v3998
        %4030 = vmatprep.subr.mxu0 0.0
        %4031 = vmatpush1.msra.mxu0 %v3997
        %4032 = vmatprep.subr.mxu0 0.0
        %4033 = vmatpush1.msra.mxu0 %v3996
        %4034 = vmatprep.subr.mxu0 0.0
        %4035 = vmatpush1.msra.mxu0 %v3995
        %4036 = vmatprep.subr.mxu0 0.0
        %4037 = vmatpush1.msra.mxu0 %v3994
        %4038 = vmatprep.subr.mxu0 0.0
        %4039 = vmatpush1.msra.mxu0 %v3993
        %4040 = vmatprep.subr.mxu0 0.0
        %4041 = vmatpush1.msra.mxu0 %v3992
        %4042 = vmatprep.subr.mxu0 0.0
        %4043 = vmatpush1.msra.mxu0 %v3991
        %4044 = vmatprep.subr.mxu0 0.0
        %4045 = vmatpush2.msra.mxu0 0.0
        %4046 = vmatprep.subr.mxu0 0.0
        %4047 = vmatpush2.msra.mxu0 0.0
        %4048 = vmatprep.subr.mxu0 0.0
        %4049 = vmatpush2.msra.mxu0 0.0
        %4050 = vmatprep.subr.mxu0 0.0
        %4051 = vmatpush2.msra.mxu0 0.0
        %4052 = vmatprep.subr.mxu0 0.0
        %4053 = vmatpush2.msra.mxu0 0.0
        %4054 = vmatprep.subr.mxu0 0.0
        %4055 = vmatpush2.msra.mxu0 0.0
        %4056 = vmatprep.subr.mxu0 0.0
        %4057 = vmatpush2.msra.mxu0 0.0
        %4058 = vmatprep.subr.mxu0 0.0
        %4059 = vmatpush2.msra.mxu0 0.0
        %4060 = vmatprep.subr.mxu0 0.0
        %4061 = vmatpush2.msra.mxu0 0.0
        %4062 = vmatprep.subr.mxu0 0.0
        %4063 = vmatpush2.msra.mxu0 0.0
        %4064 = vmatprep.subr.mxu0 0.0
        %4065 = vmatpush2.msra.mxu0 0.0
        %4066 = vmatprep.subr.mxu0 0.0
        %4067 = vmatpush2.msra.mxu0 0.0
        %4068 = vmatprep.subr.mxu0 0.0
        %4069 = vmatpush2.msra.mxu0 0.0
        %4070 = vmatprep.subr.mxu0 0.0
        %4071 = vmatpush2.msra.mxu0 0.0
        %4072 = vmatprep.subr.mxu0 0.0
        %4073 = vmatpush2.msra.mxu0 0.0
        %4074 = vmatprep.subr.mxu0 0.0
        %4075 = vmatpush2.msra.mxu0 0.0
        %4076 = vmatprep.mubr.f32.mxu0 0.0
        %4077 = vmatmul.mubr.f32.gmra.mxu0 %v4007
        %v4078 = vpop.f32.mrf.mxu0
        %v4079 = vadd.f32 %v4004, %v4078
        %v4080 = vpop.f32.mrf.mxu0
        %4081 = vmatprep.mubr.f32.mxu0 0.0
        %4082 = vmatmul.mubr.f32.gmra.mxu0 %v4010
        %v4083 = vpop.f32.mrf.mxu0
        %v4084 = vadd.f32 %v4004, %v4083
        %v4085 = vpop.f32.mrf.mxu0
        %4086 = vdwg.mxu0
        %v4087 = vld [vmem:[%s872] sm:$0xff]
        %v4088 = vld [vmem:[%s872 + $0x8] sm:$0xff]
        %v4089 = vld [vmem:[%s872 + $0x10] sm:$0xff]
        %v4090 = vld [vmem:[%s872 + $0x18] sm:$0xff]
        %v4091 = vld [vmem:[%s872 + $0x20] sm:$0xff]
        %v4092 = vld [vmem:[%s872 + $0x28] sm:$0xff]
        %v4093 = vld [vmem:[%s872 + $0x30] sm:$0xff]
        %v4094 = vld [vmem:[%s872 + $0x38] sm:$0xff]
        %v4095 = vld [vmem:[%s875] sm:$0x1]
        %v4097 = vsel %vm1041, %v3983, 0
        %v4100 = vsel %vm1041, %v4079, 0
        %4102 = vmatprep.subr.mxu0 0.0
        %4103 = vmatpush1.xpose.msra.mxu0 0.0
        %4104 = vmatprep.subr.mxu0 0.0
        %4105 = vmatpush1.xpose.msra.mxu0 0.0
        %4106 = vmatprep.subr.mxu0 0.0
        %4107 = vmatpush1.xpose.msra.mxu0 0.0
        %4108 = vmatprep.subr.mxu0 0.0
        %4109 = vmatpush1.xpose.msra.mxu0 0.0
        %4110 = vmatprep.subr.mxu0 0.0
        %4111 = vmatpush1.xpose.msra.mxu0 0.0
        %4112 = vmatprep.subr.mxu0 0.0
        %4113 = vmatpush1.xpose.msra.mxu0 0.0
        %4114 = vmatprep.subr.mxu0 0.0
        %4115 = vmatpush1.xpose.msra.mxu0 0.0
        %4116 = vmatprep.subr.mxu0 0.0
        %4117 = vmatpush1.xpose.msra.mxu0 0.0
        %4118 = vmatprep.subr.mxu0 0.0
        %4119 = vmatpush1.xpose.msra.mxu0 0.0
        %4120 = vmatprep.subr.mxu0 0.0
        %4121 = vmatpush1.xpose.msra.mxu0 0.0
        %4122 = vmatprep.subr.mxu0 0.0
        %4123 = vmatpush1.xpose.msra.mxu0 0.0
        %4124 = vmatprep.subr.mxu0 0.0
        %4125 = vmatpush1.xpose.msra.mxu0 0.0
        %4126 = vmatprep.subr.mxu0 0.0
        %4127 = vmatpush1.xpose.msra.mxu0 0.0
        %4128 = vmatprep.subr.mxu0 0.0
        %4129 = vmatpush1.xpose.msra.mxu0 0.0
        %4130 = vmatprep.subr.mxu0 0.0
        %4131 = vmatpush1.xpose.msra.mxu0 0.0
        %4132 = vmatprep.subr.mxu0 0.0
        %4133 = vmatpush1.xpose.msra.mxu0 %v4100
        %4134 = vmatprep.subr.mxu0 0.0
        %4135 = vmatpush2.xpose.msra.mxu0 0.0
        %4136 = vmatprep.subr.mxu0 0.0
        %4137 = vmatpush2.xpose.msra.mxu0 0.0
        %4138 = vmatprep.subr.mxu0 0.0
        %4139 = vmatpush2.xpose.msra.mxu0 0.0
        %4140 = vmatprep.subr.mxu0 0.0
        %4141 = vmatpush2.xpose.msra.mxu0 0.0
        %4142 = vmatprep.subr.mxu0 0.0
        %4143 = vmatpush2.xpose.msra.mxu0 0.0
        %4144 = vmatprep.subr.mxu0 0.0
        %4145 = vmatpush2.xpose.msra.mxu0 0.0
        %4146 = vmatprep.subr.mxu0 0.0
        %4147 = vmatpush2.xpose.msra.mxu0 0.0
        %4148 = vmatprep.subr.mxu0 0.0
        %4149 = vmatpush2.xpose.msra.mxu0 0.0
        %4150 = vmatprep.subr.mxu0 0.0
        %4151 = vmatpush2.xpose.msra.mxu0 0.0
        %4152 = vmatprep.subr.mxu0 0.0
        %4153 = vmatpush2.xpose.msra.mxu0 0.0
        %4154 = vmatprep.subr.mxu0 0.0
        %4155 = vmatpush2.xpose.msra.mxu0 0.0
        %4156 = vmatprep.subr.mxu0 0.0
        %4157 = vmatpush2.xpose.msra.mxu0 0.0
        %4158 = vmatprep.subr.mxu0 0.0
        %4159 = vmatpush2.xpose.msra.mxu0 0.0
        %4160 = vmatprep.subr.mxu0 0.0
        %4161 = vmatpush2.xpose.msra.mxu0 0.0
        %4162 = vmatprep.subr.mxu0 0.0
        %4163 = vmatpush2.xpose.msra.mxu0 0.0
        %4164 = vmatprep.subr.mxu0 0.0
        %4165 = vmatpush2.xpose.msra.mxu0 0.0
        %4166 = vmatprep.mubr.f32.mxu0 0.0
        %4167 = vmatmul.mubr.f32.gmra.mxu0 %v4097
        %v4168 = vpop.f32.mrf.mxu0
        %v4169 = vadd.f32 0.0, %v4168
        %v4170 = vpop.f32.mrf.mxu0
        %4171 = vdwg.mxu0
        %v4173 = vsel %vm1041, %v3988, 0
        %v4176 = vsel %vm1041, %v4084, 0
        %4178 = vmatprep.subr.mxu0 0.0
        %4179 = vmatpush1.xpose.msra.mxu0 0.0
        %4180 = vmatprep.subr.mxu0 0.0
        %4181 = vmatpush1.xpose.msra.mxu0 0.0
        %4182 = vmatprep.subr.mxu0 0.0
        %4183 = vmatpush1.xpose.msra.mxu0 0.0
        %4184 = vmatprep.subr.mxu0 0.0
        %4185 = vmatpush1.xpose.msra.mxu0 0.0
        %4186 = vmatprep.subr.mxu0 0.0
        %4187 = vmatpush1.xpose.msra.mxu0 0.0
        %4188 = vmatprep.subr.mxu0 0.0
        %4189 = vmatpush1.xpose.msra.mxu0 0.0
        %4190 = vmatprep.subr.mxu0 0.0
        %4191 = vmatpush1.xpose.msra.mxu0 0.0
        %4192 = vmatprep.subr.mxu0 0.0
        %4193 = vmatpush1.xpose.msra.mxu0 0.0
        %4194 = vmatprep.subr.mxu0 0.0
        %4195 = vmatpush1.xpose.msra.mxu0 0.0
        %4196 = vmatprep.subr.mxu0 0.0
        %4197 = vmatpush1.xpose.msra.mxu0 0.0
        %4198 = vmatprep.subr.mxu0 0.0
        %4199 = vmatpush1.xpose.msra.mxu0 0.0
        %4200 = vmatprep.subr.mxu0 0.0
        %4201 = vmatpush1.xpose.msra.mxu0 0.0
        %4202 = vmatprep.subr.mxu0 0.0
        %4203 = vmatpush1.xpose.msra.mxu0 0.0
        %4204 = vmatprep.subr.mxu0 0.0
        %4205 = vmatpush1.xpose.msra.mxu0 0.0
        %4206 = vmatprep.subr.mxu0 0.0
        %4207 = vmatpush1.xpose.msra.mxu0 0.0
        %4208 = vmatprep.subr.mxu0 0.0
        %4209 = vmatpush1.xpose.msra.mxu0 %v4176
        %4210 = vmatprep.subr.mxu0 0.0
        %4211 = vmatpush2.xpose.msra.mxu0 0.0
        %4212 = vmatprep.subr.mxu0 0.0
        %4213 = vmatpush2.xpose.msra.mxu0 0.0
        %4214 = vmatprep.subr.mxu0 0.0
        %4215 = vmatpush2.xpose.msra.mxu0 0.0
        %4216 = vmatprep.subr.mxu0 0.0
        %4217 = vmatpush2.xpose.msra.mxu0 0.0
        %4218 = vmatprep.subr.mxu0 0.0
        %4219 = vmatpush2.xpose.msra.mxu0 0.0
        %4220 = vmatprep.subr.mxu0 0.0
        %4221 = vmatpush2.xpose.msra.mxu0 0.0
        %4222 = vmatprep.subr.mxu0 0.0
        %4223 = vmatpush2.xpose.msra.mxu0 0.0
        %4224 = vmatprep.subr.mxu0 0.0
        %4225 = vmatpush2.xpose.msra.mxu0 0.0
        %4226 = vmatprep.subr.mxu0 0.0
        %4227 = vmatpush2.xpose.msra.mxu0 0.0
        %4228 = vmatprep.subr.mxu0 0.0
        %4229 = vmatpush2.xpose.msra.mxu0 0.0
        %4230 = vmatprep.subr.mxu0 0.0
        %4231 = vmatpush2.xpose.msra.mxu0 0.0
        %4232 = vmatprep.subr.mxu0 0.0
        %4233 = vmatpush2.xpose.msra.mxu0 0.0
        %4234 = vmatprep.subr.mxu0 0.0
        %4235 = vmatpush2.xpose.msra.mxu0 0.0
        %4236 = vmatprep.subr.mxu0 0.0
        %4237 = vmatpush2.xpose.msra.mxu0 0.0
        %4238 = vmatprep.subr.mxu0 0.0
        %4239 = vmatpush2.xpose.msra.mxu0 0.0
        %4240 = vmatprep.subr.mxu0 0.0
        %4241 = vmatpush2.xpose.msra.mxu0 0.0
        %4242 = vmatprep.mubr.f32.mxu0 0.0
        %4243 = vmatmul.mubr.f32.gmra.mxu0 %v4173
        %v4244 = vpop.f32.mrf.mxu0
        %v4245 = vadd.f32 0.0, %v4244
        %v4246 = vpop.f32.mrf.mxu0
        %4247 = vdwg.mxu0
        %v4248 = vmul.f32 %v4169, 0.35355338
        %v4249 = vmul.f32 %v4245, 0.35355338
        %v4250 = vsel %vm1041, %v4248, -inf
        %4251 = vmax.xlane.f32.xlu0 %v4250
        %v4252 = vpop.xlane.xlu0 %4251
        %v4253 = vsel %vm1041, %v4249, -inf
        %4254 = vmax.xlane.f32.xlu0 %v4253
        %v4255 = vpop.xlane.xlu0 %4254
        %v4256 = vsub.f32 %v4248, %v4252
        %v4257 = vsub.f32 %v4249, %v4255
        %v4258 = vmul.f32 %v4256, 1.442695
        %v4259 = vpow.pop %v4258
        %v4260 = vmul.f32 %v4257, 1.442695
        %v4261 = vpow.pop %v4260
        %v4262 = vsel %vm1041, %v4259, 0.0
        %4263 = vadd.xlane.f32.xlu0 %v4262
        %v4264 = vpop.xlane.xlu0 %4263
        %v4265 = vsel %vm1041, %v4261, 0.0
        %4266 = vadd.xlane.f32.xlu0 %v4265
        %v4267 = vpop.xlane.xlu0 %4266
        %v4268 = vrcp.pop %v4264
        %v4269 = vrcp.pop %v4267
        %v4270 = vmul.f32 %v4259, %v4268
        %v4271 = vmul.f32 %v4261, %v4269
        %4272 = vrot.lane.b32.xlu0 %v4079, 64
        %v4273 = vpop.permute.xlu0 %4272
        %v4276 = vsel %vm1041, %v4270, 0
        %4278 = vmatprep.subr.mxu0 0.0
        %4279 = vmatpush1.msra.mxu0 0.0
        %4280 = vmatprep.subr.mxu0 0.0
        %4281 = vmatpush1.msra.mxu0 0.0
        %4282 = vmatprep.subr.mxu0 0.0
        %4283 = vmatpush1.msra.mxu0 0.0
        %4284 = vmatprep.subr.mxu0 0.0
        %4285 = vmatpush1.msra.mxu0 0.0
        %4286 = vmatprep.subr.mxu0 0.0
        %4287 = vmatpush1.msra.mxu0 0.0
        %4288 = vmatprep.subr.mxu0 0.0
        %4289 = vmatpush1.msra.mxu0 0.0
        %4290 = vmatprep.subr.mxu0 0.0
        %4291 = vmatpush1.msra.mxu0 0.0
        %4292 = vmatprep.subr.mxu0 0.0
        %4293 = vmatpush1.msra.mxu0 0.0
        %4294 = vmatprep.subr.mxu0 0.0
        %4295 = vmatpush1.msra.mxu0 0.0
        %4296 = vmatprep.subr.mxu0 0.0
        %4297 = vmatpush1.msra.mxu0 0.0
        %4298 = vmatprep.subr.mxu0 0.0
        %4299 = vmatpush1.msra.mxu0 0.0
        %4300 = vmatprep.subr.mxu0 0.0
        %4301 = vmatpush1.msra.mxu0 0.0
        %4302 = vmatprep.subr.mxu0 0.0
        %4303 = vmatpush1.msra.mxu0 0.0
        %4304 = vmatprep.subr.mxu0 0.0
        %4305 = vmatpush1.msra.mxu0 0.0
        %4306 = vmatprep.subr.mxu0 0.0
        %4307 = vmatpush1.msra.mxu0 0.0
        %4308 = vmatprep.subr.mxu0 0.0
        %4309 = vmatpush1.msra.mxu0 %v4273
        %4310 = vmatprep.subr.mxu0 0.0
        %4311 = vmatpush2.msra.mxu0 0.0
        %4312 = vmatprep.subr.mxu0 0.0
        %4313 = vmatpush2.msra.mxu0 0.0
        %4314 = vmatprep.subr.mxu0 0.0
        %4315 = vmatpush2.msra.mxu0 0.0
        %4316 = vmatprep.subr.mxu0 0.0
        %4317 = vmatpush2.msra.mxu0 0.0
        %4318 = vmatprep.subr.mxu0 0.0
        %4319 = vmatpush2.msra.mxu0 0.0
        %4320 = vmatprep.subr.mxu0 0.0
        %4321 = vmatpush2.msra.mxu0 0.0
        %4322 = vmatprep.subr.mxu0 0.0
        %4323 = vmatpush2.msra.mxu0 0.0
        %4324 = vmatprep.subr.mxu0 0.0
        %4325 = vmatpush2.msra.mxu0 0.0
        %4326 = vmatprep.subr.mxu0 0.0
        %4327 = vmatpush2.msra.mxu0 0.0
        %4328 = vmatprep.subr.mxu0 0.0
        %4329 = vmatpush2.msra.mxu0 0.0
        %4330 = vmatprep.subr.mxu0 0.0
        %4331 = vmatpush2.msra.mxu0 0.0
        %4332 = vmatprep.subr.mxu0 0.0
        %4333 = vmatpush2.msra.mxu0 0.0
        %4334 = vmatprep.subr.mxu0 0.0
        %4335 = vmatpush2.msra.mxu0 0.0
        %4336 = vmatprep.subr.mxu0 0.0
        %4337 = vmatpush2.msra.mxu0 0.0
        %4338 = vmatprep.subr.mxu0 0.0
        %4339 = vmatpush2.msra.mxu0 0.0
        %4340 = vmatprep.subr.mxu0 0.0
        %4341 = vmatpush2.msra.mxu0 0.0
        %4342 = vmatprep.mubr.f32.mxu0 0.0
        %4343 = vmatmul.mubr.f32.gmra.mxu0 %v4276
        %v4344 = vpop.f32.mrf.mxu0
        %v4345 = vadd.f32 0.0, %v4344
        %v4346 = vpop.f32.mrf.mxu0
        %4347 = vdwg.mxu0
        %4348 = vrot.lane.b32.xlu0 %v4084, 64
        %v4349 = vpop.permute.xlu0 %4348
        %v4352 = vsel %vm1041, %v4271, 0
        %4354 = vmatprep.subr.mxu0 0.0
        %4355 = vmatpush1.msra.mxu0 0.0
        %4356 = vmatprep.subr.mxu0 0.0
        %4357 = vmatpush1.msra.mxu0 0.0
        %4358 = vmatprep.subr.mxu0 0.0
        %4359 = vmatpush1.msra.mxu0 0.0
        %4360 = vmatprep.subr.mxu0 0.0
        %4361 = vmatpush1.msra.mxu0 0.0
        %4362 = vmatprep.subr.mxu0 0.0
        %4363 = vmatpush1.msra.mxu0 0.0
        %4364 = vmatprep.subr.mxu0 0.0
        %4365 = vmatpush1.msra.mxu0 0.0
        %4366 = vmatprep.subr.mxu0 0.0
        %4367 = vmatpush1.msra.mxu0 0.0
        %4368 = vmatprep.subr.mxu0 0.0
        %4369 = vmatpush1.msra.mxu0 0.0
        %4370 = vmatprep.subr.mxu0 0.0
        %4371 = vmatpush1.msra.mxu0 0.0
        %4372 = vmatprep.subr.mxu0 0.0
        %4373 = vmatpush1.msra.mxu0 0.0
        %4374 = vmatprep.subr.mxu0 0.0
        %4375 = vmatpush1.msra.mxu0 0.0
        %4376 = vmatprep.subr.mxu0 0.0
        %4377 = vmatpush1.msra.mxu0 0.0
        %4378 = vmatprep.subr.mxu0 0.0
        %4379 = vmatpush1.msra.mxu0 0.0
        %4380 = vmatprep.subr.mxu0 0.0
        %4381 = vmatpush1.msra.mxu0 0.0
        %4382 = vmatprep.subr.mxu0 0.0
        %4383 = vmatpush1.msra.mxu0 0.0
        %4384 = vmatprep.subr.mxu0 0.0
        %4385 = vmatpush1.msra.mxu0 %v4349
        %4386 = vmatprep.subr.mxu0 0.0
        %4387 = vmatpush2.msra.mxu0 0.0
        %4388 = vmatprep.subr.mxu0 0.0
        %4389 = vmatpush2.msra.mxu0 0.0
        %4390 = vmatprep.subr.mxu0 0.0
        %4391 = vmatpush2.msra.mxu0 0.0
        %4392 = vmatprep.subr.mxu0 0.0
        %4393 = vmatpush2.msra.mxu0 0.0
        %4394 = vmatprep.subr.mxu0 0.0
        %4395 = vmatpush2.msra.mxu0 0.0
        %4396 = vmatprep.subr.mxu0 0.0
        %4397 = vmatpush2.msra.mxu0 0.0
        %4398 = vmatprep.subr.mxu0 0.0
        %4399 = vmatpush2.msra.mxu0 0.0
        %4400 = vmatprep.subr.mxu0 0.0
        %4401 = vmatpush2.msra.mxu0 0.0
        %4402 = vmatprep.subr.mxu0 0.0
        %4403 = vmatpush2.msra.mxu0 0.0
        %4404 = vmatprep.subr.mxu0 0.0
        %4405 = vmatpush2.msra.mxu0 0.0
        %4406 = vmatprep.subr.mxu0 0.0
        %4407 = vmatpush2.msra.mxu0 0.0
        %4408 = vmatprep.subr.mxu0 0.0
        %4409 = vmatpush2.msra.mxu0 0.0
        %4410 = vmatprep.subr.mxu0 0.0
        %4411 = vmatpush2.msra.mxu0 0.0
        %4412 = vmatprep.subr.mxu0 0.0
        %4413 = vmatpush2.msra.mxu0 0.0
        %4414 = vmatprep.subr.mxu0 0.0
        %4415 = vmatpush2.msra.mxu0 0.0
        %4416 = vmatprep.subr.mxu0 0.0
        %4417 = vmatpush2.msra.mxu0 0.0
        %4418 = vmatprep.mubr.f32.mxu0 0.0
        %4419 = vmatmul.mubr.f32.gmra.mxu0 %v4352
        %v4420 = vpop.f32.mrf.mxu0
        %v4421 = vadd.f32 0.0, %v4420
        %v4422 = vpop.f32.mrf.mxu0
        %4423 = vdwg.mxu0
        %4424 = vrot.lane.b32.xlu0 %v3983, 120
        %v4425 = vpop.permute.xlu0 %4424
        %4426 = vrot.lane.b32.xlu0 %v4079, 120
        %v4427 = vpop.permute.xlu0 %4426
        %v4428 = vsel %vm1041, %v4425, 0
        %v4430 = vsel %vm1041, %v4427, 0
        %4432 = vmatprep.subr.mxu0 0.0
        %4433 = vmatpush1.xpose.msra.mxu0 0.0
        %4434 = vmatprep.subr.mxu0 0.0
        %4435 = vmatpush1.xpose.msra.mxu0 0.0
        %4436 = vmatprep.subr.mxu0 0.0
        %4437 = vmatpush1.xpose.msra.mxu0 0.0
        %4438 = vmatprep.subr.mxu0 0.0
        %4439 = vmatpush1.xpose.msra.mxu0 0.0
        %4440 = vmatprep.subr.mxu0 0.0
        %4441 = vmatpush1.xpose.msra.mxu0 0.0
        %4442 = vmatprep.subr.mxu0 0.0
        %4443 = vmatpush1.xpose.msra.mxu0 0.0
        %4444 = vmatprep.subr.mxu0 0.0
        %4445 = vmatpush1.xpose.msra.mxu0 0.0
        %4446 = vmatprep.subr.mxu0 0.0
        %4447 = vmatpush1.xpose.msra.mxu0 0.0
        %4448 = vmatprep.subr.mxu0 0.0
        %4449 = vmatpush1.xpose.msra.mxu0 0.0
        %4450 = vmatprep.subr.mxu0 0.0
        %4451 = vmatpush1.xpose.msra.mxu0 0.0
        %4452 = vmatprep.subr.mxu0 0.0
        %4453 = vmatpush1.xpose.msra.mxu0 0.0
        %4454 = vmatprep.subr.mxu0 0.0
        %4455 = vmatpush1.xpose.msra.mxu0 0.0
        %4456 = vmatprep.subr.mxu0 0.0
        %4457 = vmatpush1.xpose.msra.mxu0 0.0
        %4458 = vmatprep.subr.mxu0 0.0
        %4459 = vmatpush1.xpose.msra.mxu0 0.0
        %4460 = vmatprep.subr.mxu0 0.0
        %4461 = vmatpush1.xpose.msra.mxu0 0.0
        %4462 = vmatprep.subr.mxu0 0.0
        %4463 = vmatpush1.xpose.msra.mxu0 %v4430
        %4464 = vmatprep.subr.mxu0 0.0
        %4465 = vmatpush2.xpose.msra.mxu0 0.0
        %4466 = vmatprep.subr.mxu0 0.0
        %4467 = vmatpush2.xpose.msra.mxu0 0.0
        %4468 = vmatprep.subr.mxu0 0.0
        %4469 = vmatpush2.xpose.msra.mxu0 0.0
        %4470 = vmatprep.subr.mxu0 0.0
        %4471 = vmatpush2.xpose.msra.mxu0 0.0
        %4472 = vmatprep.subr.mxu0 0.0
        %4473 = vmatpush2.xpose.msra.mxu0 0.0
        %4474 = vmatprep.subr.mxu0 0.0
        %4475 = vmatpush2.xpose.msra.mxu0 0.0
        %4476 = vmatprep.subr.mxu0 0.0
        %4477 = vmatpush2.xpose.msra.mxu0 0.0
        %4478 = vmatprep.subr.mxu0 0.0
        %4479 = vmatpush2.xpose.msra.mxu0 0.0
        %4480 = vmatprep.subr.mxu0 0.0
        %4481 = vmatpush2.xpose.msra.mxu0 0.0
        %4482 = vmatprep.subr.mxu0 0.0
        %4483 = vmatpush2.xpose.msra.mxu0 0.0
        %4484 = vmatprep.subr.mxu0 0.0
        %4485 = vmatpush2.xpose.msra.mxu0 0.0
        %4486 = vmatprep.subr.mxu0 0.0
        %4487 = vmatpush2.xpose.msra.mxu0 0.0
        %4488 = vmatprep.subr.mxu0 0.0
        %4489 = vmatpush2.xpose.msra.mxu0 0.0
        %4490 = vmatprep.subr.mxu0 0.0
        %4491 = vmatpush2.xpose.msra.mxu0 0.0
        %4492 = vmatprep.subr.mxu0 0.0
        %4493 = vmatpush2.xpose.msra.mxu0 0.0
        %4494 = vmatprep.subr.mxu0 0.0
        %4495 = vmatpush2.xpose.msra.mxu0 0.0
        %4496 = vmatprep.mubr.f32.mxu0 0.0
        %4497 = vmatmul.mubr.f32.gmra.mxu0 %v4428
        %v4498 = vpop.f32.mrf.mxu0
        %v4499 = vadd.f32 0.0, %v4498
        %v4500 = vpop.f32.mrf.mxu0
        %4501 = vdwg.mxu0
        %4502 = vrot.lane.b32.xlu0 %v3988, 120
        %v4503 = vpop.permute.xlu0 %4502
        %4504 = vrot.lane.b32.xlu0 %v4084, 120
        %v4505 = vpop.permute.xlu0 %4504
        %v4506 = vsel %vm1041, %v4503, 0
        %v4508 = vsel %vm1041, %v4505, 0
        %4510 = vmatprep.subr.mxu0 0.0
        %4511 = vmatpush1.xpose.msra.mxu0 0.0
        %4512 = vmatprep.subr.mxu0 0.0
        %4513 = vmatpush1.xpose.msra.mxu0 0.0
        %4514 = vmatprep.subr.mxu0 0.0
        %4515 = vmatpush1.xpose.msra.mxu0 0.0
        %4516 = vmatprep.subr.mxu0 0.0
        %4517 = vmatpush1.xpose.msra.mxu0 0.0
        %4518 = vmatprep.subr.mxu0 0.0
        %4519 = vmatpush1.xpose.msra.mxu0 0.0
        %4520 = vmatprep.subr.mxu0 0.0
        %4521 = vmatpush1.xpose.msra.mxu0 0.0
        %4522 = vmatprep.subr.mxu0 0.0
        %4523 = vmatpush1.xpose.msra.mxu0 0.0
        %4524 = vmatprep.subr.mxu0 0.0
        %4525 = vmatpush1.xpose.msra.mxu0 0.0
        %4526 = vmatprep.subr.mxu0 0.0
        %4527 = vmatpush1.xpose.msra.mxu0 0.0
        %4528 = vmatprep.subr.mxu0 0.0
        %4529 = vmatpush1.xpose.msra.mxu0 0.0
        %4530 = vmatprep.subr.mxu0 0.0
        %4531 = vmatpush1.xpose.msra.mxu0 0.0
        %4532 = vmatprep.subr.mxu0 0.0
        %4533 = vmatpush1.xpose.msra.mxu0 0.0
        %4534 = vmatprep.subr.mxu0 0.0
        %4535 = vmatpush1.xpose.msra.mxu0 0.0
        %4536 = vmatprep.subr.mxu0 0.0
        %4537 = vmatpush1.xpose.msra.mxu0 0.0
        %4538 = vmatprep.subr.mxu0 0.0
        %4539 = vmatpush1.xpose.msra.mxu0 0.0
        %4540 = vmatprep.subr.mxu0 0.0
        %4541 = vmatpush1.xpose.msra.mxu0 %v4508
        %4542 = vmatprep.subr.mxu0 0.0
        %4543 = vmatpush2.xpose.msra.mxu0 0.0
        %4544 = vmatprep.subr.mxu0 0.0
        %4545 = vmatpush2.xpose.msra.mxu0 0.0
        %4546 = vmatprep.subr.mxu0 0.0
        %4547 = vmatpush2.xpose.msra.mxu0 0.0
        %4548 = vmatprep.subr.mxu0 0.0
        %4549 = vmatpush2.xpose.msra.mxu0 0.0
        %4550 = vmatprep.subr.mxu0 0.0
        %4551 = vmatpush2.xpose.msra.mxu0 0.0
        %4552 = vmatprep.subr.mxu0 0.0
        %4553 = vmatpush2.xpose.msra.mxu0 0.0
        %4554 = vmatprep.subr.mxu0 0.0
        %4555 = vmatpush2.xpose.msra.mxu0 0.0
        %4556 = vmatprep.subr.mxu0 0.0
        %4557 = vmatpush2.xpose.msra.mxu0 0.0
        %4558 = vmatprep.subr.mxu0 0.0
        %4559 = vmatpush2.xpose.msra.mxu0 0.0
        %4560 = vmatprep.subr.mxu0 0.0
        %4561 = vmatpush2.xpose.msra.mxu0 0.0
        %4562 = vmatprep.subr.mxu0 0.0
        %4563 = vmatpush2.xpose.msra.mxu0 0.0
        %4564 = vmatprep.subr.mxu0 0.0
        %4565 = vmatpush2.xpose.msra.mxu0 0.0
        %4566 = vmatprep.subr.mxu0 0.0
        %4567 = vmatpush2.xpose.msra.mxu0 0.0
        %4568 = vmatprep.subr.mxu0 0.0
        %4569 = vmatpush2.xpose.msra.mxu0 0.0
        %4570 = vmatprep.subr.mxu0 0.0
        %4571 = vmatpush2.xpose.msra.mxu0 0.0
        %4572 = vmatprep.subr.mxu0 0.0
        %4573 = vmatpush2.xpose.msra.mxu0 0.0
        %4574 = vmatprep.mubr.f32.mxu0 0.0
        %4575 = vmatmul.mubr.f32.gmra.mxu0 %v4506
        %v4576 = vpop.f32.mrf.mxu0
        %v4577 = vadd.f32 0.0, %v4576
        %v4578 = vpop.f32.mrf.mxu0
        %4579 = vdwg.mxu0
        %v4580 = vmul.f32 %v4499, 0.35355338
        %v4581 = vmul.f32 %v4577, 0.35355338
        %v4582 = vsel %vm1041, %v4580, -inf
        %4583 = vmax.xlane.f32.xlu0 %v4582
        %v4584 = vpop.xlane.xlu0 %4583
        %v4585 = vsel %vm1041, %v4581, -inf
        %4586 = vmax.xlane.f32.xlu0 %v4585
        %v4587 = vpop.xlane.xlu0 %4586
        %v4588 = vsub.f32 %v4580, %v4584
        %v4589 = vsub.f32 %v4581, %v4587
        %v4590 = vmul.f32 %v4588, 1.442695
        %v4591 = vpow.pop %v4590
        %v4592 = vmul.f32 %v4589, 1.442695
        %v4593 = vpow.pop %v4592
        %v4594 = vsel %vm1041, %v4591, 0.0
        %4595 = vadd.xlane.f32.xlu0 %v4594
        %v4596 = vpop.xlane.xlu0 %4595
        %v4597 = vsel %vm1041, %v4593, 0.0
        %4598 = vadd.xlane.f32.xlu0 %v4597
        %v4599 = vpop.xlane.xlu0 %4598
        %v4600 = vrcp.pop %v4596
        %v4601 = vrcp.pop %v4599
        %v4602 = vmul.f32 %v4591, %v4600
        %v4603 = vmul.f32 %v4593, %v4601
        %4604 = vrot.lane.b32.xlu0 %v4079, 56
        %v4605 = vpop.permute.xlu0 %4604
        %v4608 = vsel %vm1041, %v4602, 0
        %4610 = vmatprep.subr.mxu0 0.0
        %4611 = vmatpush1.msra.mxu0 0.0
        %4612 = vmatprep.subr.mxu0 0.0
        %4613 = vmatpush1.msra.mxu0 0.0
        %4614 = vmatprep.subr.mxu0 0.0
        %4615 = vmatpush1.msra.mxu0 0.0
        %4616 = vmatprep.subr.mxu0 0.0
        %4617 = vmatpush1.msra.mxu0 0.0
        %4618 = vmatprep.subr.mxu0 0.0
        %4619 = vmatpush1.msra.mxu0 0.0
        %4620 = vmatprep.subr.mxu0 0.0
        %4621 = vmatpush1.msra.mxu0 0.0
        %4622 = vmatprep.subr.mxu0 0.0
        %4623 = vmatpush1.msra.mxu0 0.0
        %4624 = vmatprep.subr.mxu0 0.0
        %4625 = vmatpush1.msra.mxu0 0.0
        %4626 = vmatprep.subr.mxu0 0.0
        %4627 = vmatpush1.msra.mxu0 0.0
        %4628 = vmatprep.subr.mxu0 0.0
        %4629 = vmatpush1.msra.mxu0 0.0
        %4630 = vmatprep.subr.mxu0 0.0
        %4631 = vmatpush1.msra.mxu0 0.0
        %4632 = vmatprep.subr.mxu0 0.0
        %4633 = vmatpush1.msra.mxu0 0.0
        %4634 = vmatprep.subr.mxu0 0.0
        %4635 = vmatpush1.msra.mxu0 0.0
        %4636 = vmatprep.subr.mxu0 0.0
        %4637 = vmatpush1.msra.mxu0 0.0
        %4638 = vmatprep.subr.mxu0 0.0
        %4639 = vmatpush1.msra.mxu0 0.0
        %4640 = vmatprep.subr.mxu0 0.0
        %4641 = vmatpush1.msra.mxu0 %v4605
        %4642 = vmatprep.subr.mxu0 0.0
        %4643 = vmatpush2.msra.mxu0 0.0
        %4644 = vmatprep.subr.mxu0 0.0
        %4645 = vmatpush2.msra.mxu0 0.0
        %4646 = vmatprep.subr.mxu0 0.0
        %4647 = vmatpush2.msra.mxu0 0.0
        %4648 = vmatprep.subr.mxu0 0.0
        %4649 = vmatpush2.msra.mxu0 0.0
        %4650 = vmatprep.subr.mxu0 0.0
        %4651 = vmatpush2.msra.mxu0 0.0
        %4652 = vmatprep.subr.mxu0 0.0
        %4653 = vmatpush2.msra.mxu0 0.0
        %4654 = vmatprep.subr.mxu0 0.0
        %4655 = vmatpush2.msra.mxu0 0.0
        %4656 = vmatprep.subr.mxu0 0.0
        %4657 = vmatpush2.msra.mxu0 0.0
        %4658 = vmatprep.subr.mxu0 0.0
        %4659 = vmatpush2.msra.mxu0 0.0
        %4660 = vmatprep.subr.mxu0 0.0
        %4661 = vmatpush2.msra.mxu0 0.0
        %4662 = vmatprep.subr.mxu0 0.0
        %4663 = vmatpush2.msra.mxu0 0.0
        %4664 = vmatprep.subr.mxu0 0.0
        %4665 = vmatpush2.msra.mxu0 0.0
        %4666 = vmatprep.subr.mxu0 0.0
        %4667 = vmatpush2.msra.mxu0 0.0
        %4668 = vmatprep.subr.mxu0 0.0
        %4669 = vmatpush2.msra.mxu0 0.0
        %4670 = vmatprep.subr.mxu0 0.0
        %4671 = vmatpush2.msra.mxu0 0.0
        %4672 = vmatprep.subr.mxu0 0.0
        %4673 = vmatpush2.msra.mxu0 0.0
        %4674 = vmatprep.mubr.f32.mxu0 0.0
        %4675 = vmatmul.mubr.f32.gmra.mxu0 %v4608
        %v4676 = vpop.f32.mrf.mxu0
        %v4677 = vadd.f32 0.0, %v4676
        %v4678 = vpop.f32.mrf.mxu0
        %4679 = vdwg.mxu0
        %4680 = vrot.lane.b32.xlu0 %v4084, 56
        %v4681 = vpop.permute.xlu0 %4680
        %v4684 = vsel %vm1041, %v4603, 0
        %4686 = vmatprep.subr.mxu0 0.0
        %4687 = vmatpush1.msra.mxu0 0.0
        %4688 = vmatprep.subr.mxu0 0.0
        %4689 = vmatpush1.msra.mxu0 0.0
        %4690 = vmatprep.subr.mxu0 0.0
        %4691 = vmatpush1.msra.mxu0 0.0
        %4692 = vmatprep.subr.mxu0 0.0
        %4693 = vmatpush1.msra.mxu0 0.0
        %4694 = vmatprep.subr.mxu0 0.0
        %4695 = vmatpush1.msra.mxu0 0.0
        %4696 = vmatprep.subr.mxu0 0.0
        %4697 = vmatpush1.msra.mxu0 0.0
        %4698 = vmatprep.subr.mxu0 0.0
        %4699 = vmatpush1.msra.mxu0 0.0
        %4700 = vmatprep.subr.mxu0 0.0
        %4701 = vmatpush1.msra.mxu0 0.0
        %4702 = vmatprep.subr.mxu0 0.0
        %4703 = vmatpush1.msra.mxu0 0.0
        %4704 = vmatprep.subr.mxu0 0.0
        %4705 = vmatpush1.msra.mxu0 0.0
        %4706 = vmatprep.subr.mxu0 0.0
        %4707 = vmatpush1.msra.mxu0 0.0
        %4708 = vmatprep.subr.mxu0 0.0
        %4709 = vmatpush1.msra.mxu0 0.0
        %4710 = vmatprep.subr.mxu0 0.0
        %4711 = vmatpush1.msra.mxu0 0.0
        %4712 = vmatprep.subr.mxu0 0.0
        %4713 = vmatpush1.msra.mxu0 0.0
        %4714 = vmatprep.subr.mxu0 0.0
        %4715 = vmatpush1.msra.mxu0 0.0
        %4716 = vmatprep.subr.mxu0 0.0
        %4717 = vmatpush1.msra.mxu0 %v4681
        %4718 = vmatprep.subr.mxu0 0.0
        %4719 = vmatpush2.msra.mxu0 0.0
        %4720 = vmatprep.subr.mxu0 0.0
        %4721 = vmatpush2.msra.mxu0 0.0
        %4722 = vmatprep.subr.mxu0 0.0
        %4723 = vmatpush2.msra.mxu0 0.0
        %4724 = vmatprep.subr.mxu0 0.0
        %4725 = vmatpush2.msra.mxu0 0.0
        %4726 = vmatprep.subr.mxu0 0.0
        %4727 = vmatpush2.msra.mxu0 0.0
        %4728 = vmatprep.subr.mxu0 0.0
        %4729 = vmatpush2.msra.mxu0 0.0
        %4730 = vmatprep.subr.mxu0 0.0
        %4731 = vmatpush2.msra.mxu0 0.0
        %4732 = vmatprep.subr.mxu0 0.0
        %4733 = vmatpush2.msra.mxu0 0.0
        %4734 = vmatprep.subr.mxu0 0.0
        %4735 = vmatpush2.msra.mxu0 0.0
        %4736 = vmatprep.subr.mxu0 0.0
        %4737 = vmatpush2.msra.mxu0 0.0
        %4738 = vmatprep.subr.mxu0 0.0
        %4739 = vmatpush2.msra.mxu0 0.0
        %4740 = vmatprep.subr.mxu0 0.0
        %4741 = vmatpush2.msra.mxu0 0.0
        %4742 = vmatprep.subr.mxu0 0.0
        %4743 = vmatpush2.msra.mxu0 0.0
        %4744 = vmatprep.subr.mxu0 0.0
        %4745 = vmatpush2.msra.mxu0 0.0
        %4746 = vmatprep.subr.mxu0 0.0
        %4747 = vmatpush2.msra.mxu0 0.0
        %4748 = vmatprep.subr.mxu0 0.0
        %4749 = vmatpush2.msra.mxu0 0.0
        %4750 = vmatprep.mubr.f32.mxu0 0.0
        %4751 = vmatmul.mubr.f32.gmra.mxu0 %v4684
        %v4752 = vpop.f32.mrf.mxu0
        %v4753 = vadd.f32 0.0, %v4752
        %v4754 = vpop.f32.mrf.mxu0
        %4755 = vdwg.mxu0
        %4756 = vrot.lane.b32.xlu0 %v3983, 112
        %v4757 = vpop.permute.xlu0 %4756
        %4758 = vrot.lane.b32.xlu0 %v4079, 112
        %v4759 = vpop.permute.xlu0 %4758
        %v4760 = vsel %vm1041, %v4757, 0
        %v4762 = vsel %vm1041, %v4759, 0
        %4764 = vmatprep.subr.mxu0 0.0
        %4765 = vmatpush1.xpose.msra.mxu0 0.0
        %4766 = vmatprep.subr.mxu0 0.0
        %4767 = vmatpush1.xpose.msra.mxu0 0.0
        %4768 = vmatprep.subr.mxu0 0.0
        %4769 = vmatpush1.xpose.msra.mxu0 0.0
        %4770 = vmatprep.subr.mxu0 0.0
        %4771 = vmatpush1.xpose.msra.mxu0 0.0
        %4772 = vmatprep.subr.mxu0 0.0
        %4773 = vmatpush1.xpose.msra.mxu0 0.0
        %4774 = vmatprep.subr.mxu0 0.0
        %4775 = vmatpush1.xpose.msra.mxu0 0.0
        %4776 = vmatprep.subr.mxu0 0.0
        %4777 = vmatpush1.xpose.msra.mxu0 0.0
        %4778 = vmatprep.subr.mxu0 0.0
        %4779 = vmatpush1.xpose.msra.mxu0 0.0
        %4780 = vmatprep.subr.mxu0 0.0
        %4781 = vmatpush1.xpose.msra.mxu0 0.0
        %4782 = vmatprep.subr.mxu0 0.0
        %4783 = vmatpush1.xpose.msra.mxu0 0.0
        %4784 = vmatprep.subr.mxu0 0.0
        %4785 = vmatpush1.xpose.msra.mxu0 0.0
        %4786 = vmatprep.subr.mxu0 0.0
        %4787 = vmatpush1.xpose.msra.mxu0 0.0
        %4788 = vmatprep.subr.mxu0 0.0
        %4789 = vmatpush1.xpose.msra.mxu0 0.0
        %4790 = vmatprep.subr.mxu0 0.0
        %4791 = vmatpush1.xpose.msra.mxu0 0.0
        %4792 = vmatprep.subr.mxu0 0.0
        %4793 = vmatpush1.xpose.msra.mxu0 0.0
        %4794 = vmatprep.subr.mxu0 0.0
        %4795 = vmatpush1.xpose.msra.mxu0 %v4762
        %4796 = vmatprep.subr.mxu0 0.0
        %4797 = vmatpush2.xpose.msra.mxu0 0.0
        %4798 = vmatprep.subr.mxu0 0.0
        %4799 = vmatpush2.xpose.msra.mxu0 0.0
        %4800 = vmatprep.subr.mxu0 0.0
        %4801 = vmatpush2.xpose.msra.mxu0 0.0
        %4802 = vmatprep.subr.mxu0 0.0
        %4803 = vmatpush2.xpose.msra.mxu0 0.0
        %4804 = vmatprep.subr.mxu0 0.0
        %4805 = vmatpush2.xpose.msra.mxu0 0.0
        %4806 = vmatprep.subr.mxu0 0.0
        %4807 = vmatpush2.xpose.msra.mxu0 0.0
        %4808 = vmatprep.subr.mxu0 0.0
        %4809 = vmatpush2.xpose.msra.mxu0 0.0
        %4810 = vmatprep.subr.mxu0 0.0
        %4811 = vmatpush2.xpose.msra.mxu0 0.0
        %4812 = vmatprep.subr.mxu0 0.0
        %4813 = vmatpush2.xpose.msra.mxu0 0.0
        %4814 = vmatprep.subr.mxu0 0.0
        %4815 = vmatpush2.xpose.msra.mxu0 0.0
        %4816 = vmatprep.subr.mxu0 0.0
        %4817 = vmatpush2.xpose.msra.mxu0 0.0
        %4818 = vmatprep.subr.mxu0 0.0
        %4819 = vmatpush2.xpose.msra.mxu0 0.0
        %4820 = vmatprep.subr.mxu0 0.0
        %4821 = vmatpush2.xpose.msra.mxu0 0.0
        %4822 = vmatprep.subr.mxu0 0.0
        %4823 = vmatpush2.xpose.msra.mxu0 0.0
        %4824 = vmatprep.subr.mxu0 0.0
        %4825 = vmatpush2.xpose.msra.mxu0 0.0
        %4826 = vmatprep.subr.mxu0 0.0
        %4827 = vmatpush2.xpose.msra.mxu0 0.0
        %4828 = vmatprep.mubr.f32.mxu0 0.0
        %4829 = vmatmul.mubr.f32.gmra.mxu0 %v4760
        %v4830 = vpop.f32.mrf.mxu0
        %v4831 = vadd.f32 0.0, %v4830
        %v4832 = vpop.f32.mrf.mxu0
        %4833 = vdwg.mxu0
        %4834 = vrot.lane.b32.xlu0 %v3988, 112
        %v4835 = vpop.permute.xlu0 %4834
        %4836 = vrot.lane.b32.xlu0 %v4084, 112
        %v4837 = vpop.permute.xlu0 %4836
        %v4838 = vsel %vm1041, %v4835, 0
        %v4840 = vsel %vm1041, %v4837, 0
        %4842 = vmatprep.subr.mxu0 0.0
        %4843 = vmatpush1.xpose.msra.mxu0 0.0
        %4844 = vmatprep.subr.mxu0 0.0
        %4845 = vmatpush1.xpose.msra.mxu0 0.0
        %4846 = vmatprep.subr.mxu0 0.0
        %4847 = vmatpush1.xpose.msra.mxu0 0.0
        %4848 = vmatprep.subr.mxu0 0.0
        %4849 = vmatpush1.xpose.msra.mxu0 0.0
        %4850 = vmatprep.subr.mxu0 0.0
        %4851 = vmatpush1.xpose.msra.mxu0 0.0
        %4852 = vmatprep.subr.mxu0 0.0
        %4853 = vmatpush1.xpose.msra.mxu0 0.0
        %4854 = vmatprep.subr.mxu0 0.0
        %4855 = vmatpush1.xpose.msra.mxu0 0.0
        %4856 = vmatprep.subr.mxu0 0.0
        %4857 = vmatpush1.xpose.msra.mxu0 0.0
        %4858 = vmatprep.subr.mxu0 0.0
        %4859 = vmatpush1.xpose.msra.mxu0 0.0
        %4860 = vmatprep.subr.mxu0 0.0
        %4861 = vmatpush1.xpose.msra.mxu0 0.0
        %4862 = vmatprep.subr.mxu0 0.0
        %4863 = vmatpush1.xpose.msra.mxu0 0.0
        %4864 = vmatprep.subr.mxu0 0.0
        %4865 = vmatpush1.xpose.msra.mxu0 0.0
        %4866 = vmatprep.subr.mxu0 0.0
        %4867 = vmatpush1.xpose.msra.mxu0 0.0
        %4868 = vmatprep.subr.mxu0 0.0
        %4869 = vmatpush1.xpose.msra.mxu0 0.0
        %4870 = vmatprep.subr.mxu0 0.0
        %4871 = vmatpush1.xpose.msra.mxu0 0.0
        %4872 = vmatprep.subr.mxu0 0.0
        %4873 = vmatpush1.xpose.msra.mxu0 %v4840
        %4874 = vmatprep.subr.mxu0 0.0
        %4875 = vmatpush2.xpose.msra.mxu0 0.0
        %4876 = vmatprep.subr.mxu0 0.0
        %4877 = vmatpush2.xpose.msra.mxu0 0.0
        %4878 = vmatprep.subr.mxu0 0.0
        %4879 = vmatpush2.xpose.msra.mxu0 0.0
        %4880 = vmatprep.subr.mxu0 0.0
        %4881 = vmatpush2.xpose.msra.mxu0 0.0
        %4882 = vmatprep.subr.mxu0 0.0
        %4883 = vmatpush2.xpose.msra.mxu0 0.0
        %4884 = vmatprep.subr.mxu0 0.0
        %4885 = vmatpush2.xpose.msra.mxu0 0.0
        %4886 = vmatprep.subr.mxu0 0.0
        %4887 = vmatpush2.xpose.msra.mxu0 0.0
        %4888 = vmatprep.subr.mxu0 0.0
        %4889 = vmatpush2.xpose.msra.mxu0 0.0
        %4890 = vmatprep.subr.mxu0 0.0
        %4891 = vmatpush2.xpose.msra.mxu0 0.0
        %4892 = vmatprep.subr.mxu0 0.0
        %4893 = vmatpush2.xpose.msra.mxu0 0.0
        %4894 = vmatprep.subr.mxu0 0.0
        %4895 = vmatpush2.xpose.msra.mxu0 0.0
        %4896 = vmatprep.subr.mxu0 0.0
        %4897 = vmatpush2.xpose.msra.mxu0 0.0
        %4898 = vmatprep.subr.mxu0 0.0
        %4899 = vmatpush2.xpose.msra.mxu0 0.0
        %4900 = vmatprep.subr.mxu0 0.0
        %4901 = vmatpush2.xpose.msra.mxu0 0.0
        %4902 = vmatprep.subr.mxu0 0.0
        %4903 = vmatpush2.xpose.msra.mxu0 0.0
        %4904 = vmatprep.subr.mxu0 0.0
        %4905 = vmatpush2.xpose.msra.mxu0 0.0
        %4906 = vmatprep.mubr.f32.mxu0 0.0
        %4907 = vmatmul.mubr.f32.gmra.mxu0 %v4838
        %v4908 = vpop.f32.mrf.mxu0
        %v4909 = vadd.f32 0.0, %v4908
        %v4910 = vpop.f32.mrf.mxu0
        %4911 = vdwg.mxu0
        %v4912 = vmul.f32 %v4831, 0.35355338
        %v4913 = vmul.f32 %v4909, 0.35355338
        %v4914 = vsel %vm1041, %v4912, -inf
        %4915 = vmax.xlane.f32.xlu0 %v4914
        %v4916 = vpop.xlane.xlu0 %4915
        %v4917 = vsel %vm1041, %v4913, -inf
        %4918 = vmax.xlane.f32.xlu0 %v4917
        %v4919 = vpop.xlane.xlu0 %4918
        %v4920 = vsub.f32 %v4912, %v4916
        %v4921 = vsub.f32 %v4913, %v4919
        %v4922 = vmul.f32 %v4920, 1.442695
        %v4923 = vpow.pop %v4922
        %v4924 = vmul.f32 %v4921, 1.442695
        %v4925 = vpow.pop %v4924
        %v4926 = vsel %vm1041, %v4923, 0.0
        %4927 = vadd.xlane.f32.xlu0 %v4926
        %v4928 = vpop.xlane.xlu0 %4927
        %v4929 = vsel %vm1041, %v4925, 0.0
        %4930 = vadd.xlane.f32.xlu0 %v4929
        %v4931 = vpop.xlane.xlu0 %4930
        %v4932 = vrcp.pop %v4928
        %v4933 = vrcp.pop %v4931
        %v4934 = vmul.f32 %v4923, %v4932
        %v4935 = vmul.f32 %v4925, %v4933
        %4936 = vrot.lane.b32.xlu0 %v4079, 48
        %v4937 = vpop.permute.xlu0 %4936
        %v4940 = vsel %vm1041, %v4934, 0
        %4942 = vmatprep.subr.mxu0 0.0
        %4943 = vmatpush1.msra.mxu0 0.0
        %4944 = vmatprep.subr.mxu0 0.0
        %4945 = vmatpush1.msra.mxu0 0.0
        %4946 = vmatprep.subr.mxu0 0.0
        %4947 = vmatpush1.msra.mxu0 0.0
        %4948 = vmatprep.subr.mxu0 0.0
        %4949 = vmatpush1.msra.mxu0 0.0
        %4950 = vmatprep.subr.mxu0 0.0
        %4951 = vmatpush1.msra.mxu0 0.0
        %4952 = vmatprep.subr.mxu0 0.0
        %4953 = vmatpush1.msra.mxu0 0.0
        %4954 = vmatprep.subr.mxu0 0.0
        %4955 = vmatpush1.msra.mxu0 0.0
        %4956 = vmatprep.subr.mxu0 0.0
        %4957 = vmatpush1.msra.mxu0 0.0
        %4958 = vmatprep.subr.mxu0 0.0
        %4959 = vmatpush1.msra.mxu0 0.0
        %4960 = vmatprep.subr.mxu0 0.0
        %4961 = vmatpush1.msra.mxu0 0.0
        %4962 = vmatprep.subr.mxu0 0.0
        %4963 = vmatpush1.msra.mxu0 0.0
        %4964 = vmatprep.subr.mxu0 0.0
        %4965 = vmatpush1.msra.mxu0 0.0
        %4966 = vmatprep.subr.mxu0 0.0
        %4967 = vmatpush1.msra.mxu0 0.0
        %4968 = vmatprep.subr.mxu0 0.0
        %4969 = vmatpush1.msra.mxu0 0.0
        %4970 = vmatprep.subr.mxu0 0.0
        %4971 = vmatpush1.msra.mxu0 0.0
        %4972 = vmatprep.subr.mxu0 0.0
        %4973 = vmatpush1.msra.mxu0 %v4937
        %4974 = vmatprep.subr.mxu0 0.0
        %4975 = vmatpush2.msra.mxu0 0.0
        %4976 = vmatprep.subr.mxu0 0.0
        %4977 = vmatpush2.msra.mxu0 0.0
        %4978 = vmatprep.subr.mxu0 0.0
        %4979 = vmatpush2.msra.mxu0 0.0
        %4980 = vmatprep.subr.mxu0 0.0
        %4981 = vmatpush2.msra.mxu0 0.0
        %4982 = vmatprep.subr.mxu0 0.0
        %4983 = vmatpush2.msra.mxu0 0.0
        %4984 = vmatprep.subr.mxu0 0.0
        %4985 = vmatpush2.msra.mxu0 0.0
        %4986 = vmatprep.subr.mxu0 0.0
        %4987 = vmatpush2.msra.mxu0 0.0
        %4988 = vmatprep.subr.mxu0 0.0
        %4989 = vmatpush2.msra.mxu0 0.0
        %4990 = vmatprep.subr.mxu0 0.0
        %4991 = vmatpush2.msra.mxu0 0.0
        %4992 = vmatprep.subr.mxu0 0.0
        %4993 = vmatpush2.msra.mxu0 0.0
        %4994 = vmatprep.subr.mxu0 0.0
        %4995 = vmatpush2.msra.mxu0 0.0
        %4996 = vmatprep.subr.mxu0 0.0
        %4997 = vmatpush2.msra.mxu0 0.0
        %4998 = vmatprep.subr.mxu0 0.0
        %4999 = vmatpush2.msra.mxu0 0.0
        %5000 = vmatprep.subr.mxu0 0.0
        %5001 = vmatpush2.msra.mxu0 0.0
        %5002 = vmatprep.subr.mxu0 0.0
        %5003 = vmatpush2.msra.mxu0 0.0
        %5004 = vmatprep.subr.mxu0 0.0
        %5005 = vmatpush2.msra.mxu0 0.0
        %5006 = vmatprep.mubr.f32.mxu0 0.0
        %5007 = vmatmul.mubr.f32.gmra.mxu0 %v4940
        %v5008 = vpop.f32.mrf.mxu0
        %v5009 = vadd.f32 0.0, %v5008
        %v5010 = vpop.f32.mrf.mxu0
        %5011 = vdwg.mxu0
        %5012 = vrot.lane.b32.xlu0 %v4084, 48
        %v5013 = vpop.permute.xlu0 %5012
        %v5016 = vsel %vm1041, %v4935, 0
        %5018 = vmatprep.subr.mxu0 0.0
        %5019 = vmatpush1.msra.mxu0 0.0
        %5020 = vmatprep.subr.mxu0 0.0
        %5021 = vmatpush1.msra.mxu0 0.0
        %5022 = vmatprep.subr.mxu0 0.0
        %5023 = vmatpush1.msra.mxu0 0.0
        %5024 = vmatprep.subr.mxu0 0.0
        %5025 = vmatpush1.msra.mxu0 0.0
        %5026 = vmatprep.subr.mxu0 0.0
        %5027 = vmatpush1.msra.mxu0 0.0
        %5028 = vmatprep.subr.mxu0 0.0
        %5029 = vmatpush1.msra.mxu0 0.0
        %5030 = vmatprep.subr.mxu0 0.0
        %5031 = vmatpush1.msra.mxu0 0.0
        %5032 = vmatprep.subr.mxu0 0.0
        %5033 = vmatpush1.msra.mxu0 0.0
        %5034 = vmatprep.subr.mxu0 0.0
        %5035 = vmatpush1.msra.mxu0 0.0
        %5036 = vmatprep.subr.mxu0 0.0
        %5037 = vmatpush1.msra.mxu0 0.0
        %5038 = vmatprep.subr.mxu0 0.0
        %5039 = vmatpush1.msra.mxu0 0.0
        %5040 = vmatprep.subr.mxu0 0.0
        %5041 = vmatpush1.msra.mxu0 0.0
        %5042 = vmatprep.subr.mxu0 0.0
        %5043 = vmatpush1.msra.mxu0 0.0
        %5044 = vmatprep.subr.mxu0 0.0
        %5045 = vmatpush1.msra.mxu0 0.0
        %5046 = vmatprep.subr.mxu0 0.0
        %5047 = vmatpush1.msra.mxu0 0.0
        %5048 = vmatprep.subr.mxu0 0.0
        %5049 = vmatpush1.msra.mxu0 %v5013
        %5050 = vmatprep.subr.mxu0 0.0
        %5051 = vmatpush2.msra.mxu0 0.0
        %5052 = vmatprep.subr.mxu0 0.0
        %5053 = vmatpush2.msra.mxu0 0.0
        %5054 = vmatprep.subr.mxu0 0.0
        %5055 = vmatpush2.msra.mxu0 0.0
        %5056 = vmatprep.subr.mxu0 0.0
        %5057 = vmatpush2.msra.mxu0 0.0
        %5058 = vmatprep.subr.mxu0 0.0
        %5059 = vmatpush2.msra.mxu0 0.0
        %5060 = vmatprep.subr.mxu0 0.0
        %5061 = vmatpush2.msra.mxu0 0.0
        %5062 = vmatprep.subr.mxu0 0.0
        %5063 = vmatpush2.msra.mxu0 0.0
        %5064 = vmatprep.subr.mxu0 0.0
        %5065 = vmatpush2.msra.mxu0 0.0
        %5066 = vmatprep.subr.mxu0 0.0
        %5067 = vmatpush2.msra.mxu0 0.0
        %5068 = vmatprep.subr.mxu0 0.0
        %5069 = vmatpush2.msra.mxu0 0.0
        %5070 = vmatprep.subr.mxu0 0.0
        %5071 = vmatpush2.msra.mxu0 0.0
        %5072 = vmatprep.subr.mxu0 0.0
        %5073 = vmatpush2.msra.mxu0 0.0
        %5074 = vmatprep.subr.mxu0 0.0
        %5075 = vmatpush2.msra.mxu0 0.0
        %5076 = vmatprep.subr.mxu0 0.0
        %5077 = vmatpush2.msra.mxu0 0.0
        %5078 = vmatprep.subr.mxu0 0.0
        %5079 = vmatpush2.msra.mxu0 0.0
        %5080 = vmatprep.subr.mxu0 0.0
        %5081 = vmatpush2.msra.mxu0 0.0
        %5082 = vmatprep.mubr.f32.mxu0 0.0
        %5083 = vmatmul.mubr.f32.gmra.mxu0 %v5016
        %v5084 = vpop.f32.mrf.mxu0
        %v5085 = vadd.f32 0.0, %v5084
        %v5086 = vpop.f32.mrf.mxu0
        %5087 = vdwg.mxu0
        %5088 = vrot.lane.b32.xlu0 %v3983, 104
        %v5089 = vpop.permute.xlu0 %5088
        %5090 = vrot.lane.b32.xlu0 %v4079, 104
        %v5091 = vpop.permute.xlu0 %5090
        %v5092 = vsel %vm1041, %v5089, 0
        %v5094 = vsel %vm1041, %v5091, 0
        %5096 = vmatprep.subr.mxu0 0.0
        %5097 = vmatpush1.xpose.msra.mxu0 0.0
        %5098 = vmatprep.subr.mxu0 0.0
        %5099 = vmatpush1.xpose.msra.mxu0 0.0
        %5100 = vmatprep.subr.mxu0 0.0
        %5101 = vmatpush1.xpose.msra.mxu0 0.0
        %5102 = vmatprep.subr.mxu0 0.0
        %5103 = vmatpush1.xpose.msra.mxu0 0.0
        %5104 = vmatprep.subr.mxu0 0.0
        %5105 = vmatpush1.xpose.msra.mxu0 0.0
        %5106 = vmatprep.subr.mxu0 0.0
        %5107 = vmatpush1.xpose.msra.mxu0 0.0
        %5108 = vmatprep.subr.mxu0 0.0
        %5109 = vmatpush1.xpose.msra.mxu0 0.0
        %5110 = vmatprep.subr.mxu0 0.0
        %5111 = vmatpush1.xpose.msra.mxu0 0.0
        %5112 = vmatprep.subr.mxu0 0.0
        %5113 = vmatpush1.xpose.msra.mxu0 0.0
        %5114 = vmatprep.subr.mxu0 0.0
        %5115 = vmatpush1.xpose.msra.mxu0 0.0
        %5116 = vmatprep.subr.mxu0 0.0
        %5117 = vmatpush1.xpose.msra.mxu0 0.0
        %5118 = vmatprep.subr.mxu0 0.0
        %5119 = vmatpush1.xpose.msra.mxu0 0.0
        %5120 = vmatprep.subr.mxu0 0.0
        %5121 = vmatpush1.xpose.msra.mxu0 0.0
        %5122 = vmatprep.subr.mxu0 0.0
        %5123 = vmatpush1.xpose.msra.mxu0 0.0
        %5124 = vmatprep.subr.mxu0 0.0
        %5125 = vmatpush1.xpose.msra.mxu0 0.0
        %5126 = vmatprep.subr.mxu0 0.0
        %5127 = vmatpush1.xpose.msra.mxu0 %v5094
        %5128 = vmatprep.subr.mxu0 0.0
        %5129 = vmatpush2.xpose.msra.mxu0 0.0
        %5130 = vmatprep.subr.mxu0 0.0
        %5131 = vmatpush2.xpose.msra.mxu0 0.0
        %5132 = vmatprep.subr.mxu0 0.0
        %5133 = vmatpush2.xpose.msra.mxu0 0.0
        %5134 = vmatprep.subr.mxu0 0.0
        %5135 = vmatpush2.xpose.msra.mxu0 0.0
        %5136 = vmatprep.subr.mxu0 0.0
        %5137 = vmatpush2.xpose.msra.mxu0 0.0
        %5138 = vmatprep.subr.mxu0 0.0
        %5139 = vmatpush2.xpose.msra.mxu0 0.0
        %5140 = vmatprep.subr.mxu0 0.0
        %5141 = vmatpush2.xpose.msra.mxu0 0.0
        %5142 = vmatprep.subr.mxu0 0.0
        %5143 = vmatpush2.xpose.msra.mxu0 0.0
        %5144 = vmatprep.subr.mxu0 0.0
        %5145 = vmatpush2.xpose.msra.mxu0 0.0
        %5146 = vmatprep.subr.mxu0 0.0
        %5147 = vmatpush2.xpose.msra.mxu0 0.0
        %5148 = vmatprep.subr.mxu0 0.0
        %5149 = vmatpush2.xpose.msra.mxu0 0.0
        %5150 = vmatprep.subr.mxu0 0.0
        %5151 = vmatpush2.xpose.msra.mxu0 0.0
        %5152 = vmatprep.subr.mxu0 0.0
        %5153 = vmatpush2.xpose.msra.mxu0 0.0
        %5154 = vmatprep.subr.mxu0 0.0
        %5155 = vmatpush2.xpose.msra.mxu0 0.0
        %5156 = vmatprep.subr.mxu0 0.0
        %5157 = vmatpush2.xpose.msra.mxu0 0.0
        %5158 = vmatprep.subr.mxu0 0.0
        %5159 = vmatpush2.xpose.msra.mxu0 0.0
        %5160 = vmatprep.mubr.f32.mxu0 0.0
        %5161 = vmatmul.mubr.f32.gmra.mxu0 %v5092
        %v5162 = vpop.f32.mrf.mxu0
        %v5163 = vadd.f32 0.0, %v5162
        %v5164 = vpop.f32.mrf.mxu0
        %5165 = vdwg.mxu0
        %5166 = vrot.lane.b32.xlu0 %v3988, 104
        %v5167 = vpop.permute.xlu0 %5166
        %5168 = vrot.lane.b32.xlu0 %v4084, 104
        %v5169 = vpop.permute.xlu0 %5168
        %v5170 = vsel %vm1041, %v5167, 0
        %v5172 = vsel %vm1041, %v5169, 0
        %5174 = vmatprep.subr.mxu0 0.0
        %5175 = vmatpush1.xpose.msra.mxu0 0.0
        %5176 = vmatprep.subr.mxu0 0.0
        %5177 = vmatpush1.xpose.msra.mxu0 0.0
        %5178 = vmatprep.subr.mxu0 0.0
        %5179 = vmatpush1.xpose.msra.mxu0 0.0
        %5180 = vmatprep.subr.mxu0 0.0
        %5181 = vmatpush1.xpose.msra.mxu0 0.0
        %5182 = vmatprep.subr.mxu0 0.0
        %5183 = vmatpush1.xpose.msra.mxu0 0.0
        %5184 = vmatprep.subr.mxu0 0.0
        %5185 = vmatpush1.xpose.msra.mxu0 0.0
        %5186 = vmatprep.subr.mxu0 0.0
        %5187 = vmatpush1.xpose.msra.mxu0 0.0
        %5188 = vmatprep.subr.mxu0 0.0
        %5189 = vmatpush1.xpose.msra.mxu0 0.0
        %5190 = vmatprep.subr.mxu0 0.0
        %5191 = vmatpush1.xpose.msra.mxu0 0.0
        %5192 = vmatprep.subr.mxu0 0.0
        %5193 = vmatpush1.xpose.msra.mxu0 0.0
        %5194 = vmatprep.subr.mxu0 0.0
        %5195 = vmatpush1.xpose.msra.mxu0 0.0
        %5196 = vmatprep.subr.mxu0 0.0
        %5197 = vmatpush1.xpose.msra.mxu0 0.0
        %5198 = vmatprep.subr.mxu0 0.0
        %5199 = vmatpush1.xpose.msra.mxu0 0.0
        %5200 = vmatprep.subr.mxu0 0.0
        %5201 = vmatpush1.xpose.msra.mxu0 0.0
        %5202 = vmatprep.subr.mxu0 0.0
        %5203 = vmatpush1.xpose.msra.mxu0 0.0
        %5204 = vmatprep.subr.mxu0 0.0
        %5205 = vmatpush1.xpose.msra.mxu0 %v5172
        %5206 = vmatprep.subr.mxu0 0.0
        %5207 = vmatpush2.xpose.msra.mxu0 0.0
        %5208 = vmatprep.subr.mxu0 0.0
        %5209 = vmatpush2.xpose.msra.mxu0 0.0
        %5210 = vmatprep.subr.mxu0 0.0
        %5211 = vmatpush2.xpose.msra.mxu0 0.0
        %5212 = vmatprep.subr.mxu0 0.0
        %5213 = vmatpush2.xpose.msra.mxu0 0.0
        %5214 = vmatprep.subr.mxu0 0.0
        %5215 = vmatpush2.xpose.msra.mxu0 0.0
        %5216 = vmatprep.subr.mxu0 0.0
        %5217 = vmatpush2.xpose.msra.mxu0 0.0
        %5218 = vmatprep.subr.mxu0 0.0
        %5219 = vmatpush2.xpose.msra.mxu0 0.0
        %5220 = vmatprep.subr.mxu0 0.0
        %5221 = vmatpush2.xpose.msra.mxu0 0.0
        %5222 = vmatprep.subr.mxu0 0.0
        %5223 = vmatpush2.xpose.msra.mxu0 0.0
        %5224 = vmatprep.subr.mxu0 0.0
        %5225 = vmatpush2.xpose.msra.mxu0 0.0
        %5226 = vmatprep.subr.mxu0 0.0
        %5227 = vmatpush2.xpose.msra.mxu0 0.0
        %5228 = vmatprep.subr.mxu0 0.0
        %5229 = vmatpush2.xpose.msra.mxu0 0.0
        %5230 = vmatprep.subr.mxu0 0.0
        %5231 = vmatpush2.xpose.msra.mxu0 0.0
        %5232 = vmatprep.subr.mxu0 0.0
        %5233 = vmatpush2.xpose.msra.mxu0 0.0
        %5234 = vmatprep.subr.mxu0 0.0
        %5235 = vmatpush2.xpose.msra.mxu0 0.0
        %5236 = vmatprep.subr.mxu0 0.0
        %5237 = vmatpush2.xpose.msra.mxu0 0.0
        %5238 = vmatprep.mubr.f32.mxu0 0.0
        %5239 = vmatmul.mubr.f32.gmra.mxu0 %v5170
        %v5240 = vpop.f32.mrf.mxu0
        %v5241 = vadd.f32 0.0, %v5240
        %v5242 = vpop.f32.mrf.mxu0
        %5243 = vdwg.mxu0
        %v5244 = vmul.f32 %v5163, 0.35355338
        %v5245 = vmul.f32 %v5241, 0.35355338
        %v5246 = vsel %vm1041, %v5244, -inf
        %5247 = vmax.xlane.f32.xlu0 %v5246
        %v5248 = vpop.xlane.xlu0 %5247
        %v5249 = vsel %vm1041, %v5245, -inf
        %5250 = vmax.xlane.f32.xlu0 %v5249
        %v5251 = vpop.xlane.xlu0 %5250
        %v5252 = vsub.f32 %v5244, %v5248
        %v5253 = vsub.f32 %v5245, %v5251
        %v5254 = vmul.f32 %v5252, 1.442695
        %v5255 = vpow.pop %v5254
        %v5256 = vmul.f32 %v5253, 1.442695
        %v5257 = vpow.pop %v5256
        %v5258 = vsel %vm1041, %v5255, 0.0
        %5259 = vadd.xlane.f32.xlu0 %v5258
        %v5260 = vpop.xlane.xlu0 %5259
        %v5261 = vsel %vm1041, %v5257, 0.0
        %5262 = vadd.xlane.f32.xlu0 %v5261
        %v5263 = vpop.xlane.xlu0 %5262
        %v5264 = vrcp.pop %v5260
        %v5265 = vrcp.pop %v5263
        %v5266 = vmul.f32 %v5255, %v5264
        %v5267 = vmul.f32 %v5257, %v5265
        %5268 = vrot.lane.b32.xlu0 %v4079, 40
        %v5269 = vpop.permute.xlu0 %5268
        %v5272 = vsel %vm1041, %v5266, 0
        %5274 = vmatprep.subr.mxu0 0.0
        %5275 = vmatpush1.msra.mxu0 0.0
        %5276 = vmatprep.subr.mxu0 0.0
        %5277 = vmatpush1.msra.mxu0 0.0
        %5278 = vmatprep.subr.mxu0 0.0
        %5279 = vmatpush1.msra.mxu0 0.0
        %5280 = vmatprep.subr.mxu0 0.0
        %5281 = vmatpush1.msra.mxu0 0.0
        %5282 = vmatprep.subr.mxu0 0.0
        %5283 = vmatpush1.msra.mxu0 0.0
        %5284 = vmatprep.subr.mxu0 0.0
        %5285 = vmatpush1.msra.mxu0 0.0
        %5286 = vmatprep.subr.mxu0 0.0
        %5287 = vmatpush1.msra.mxu0 0.0
        %5288 = vmatprep.subr.mxu0 0.0
        %5289 = vmatpush1.msra.mxu0 0.0
        %5290 = vmatprep.subr.mxu0 0.0
        %5291 = vmatpush1.msra.mxu0 0.0
        %5292 = vmatprep.subr.mxu0 0.0
        %5293 = vmatpush1.msra.mxu0 0.0
        %5294 = vmatprep.subr.mxu0 0.0
        %5295 = vmatpush1.msra.mxu0 0.0
        %5296 = vmatprep.subr.mxu0 0.0
        %5297 = vmatpush1.msra.mxu0 0.0
        %5298 = vmatprep.subr.mxu0 0.0
        %5299 = vmatpush1.msra.mxu0 0.0
        %5300 = vmatprep.subr.mxu0 0.0
        %5301 = vmatpush1.msra.mxu0 0.0
        %5302 = vmatprep.subr.mxu0 0.0
        %5303 = vmatpush1.msra.mxu0 0.0
        %5304 = vmatprep.subr.mxu0 0.0
        %5305 = vmatpush1.msra.mxu0 %v5269
        %5306 = vmatprep.subr.mxu0 0.0
        %5307 = vmatpush2.msra.mxu0 0.0
        %5308 = vmatprep.subr.mxu0 0.0
        %5309 = vmatpush2.msra.mxu0 0.0
        %5310 = vmatprep.subr.mxu0 0.0
        %5311 = vmatpush2.msra.mxu0 0.0
        %5312 = vmatprep.subr.mxu0 0.0
        %5313 = vmatpush2.msra.mxu0 0.0
        %5314 = vmatprep.subr.mxu0 0.0
        %5315 = vmatpush2.msra.mxu0 0.0
        %5316 = vmatprep.subr.mxu0 0.0
        %5317 = vmatpush2.msra.mxu0 0.0
        %5318 = vmatprep.subr.mxu0 0.0
        %5319 = vmatpush2.msra.mxu0 0.0
        %5320 = vmatprep.subr.mxu0 0.0
        %5321 = vmatpush2.msra.mxu0 0.0
        %5322 = vmatprep.subr.mxu0 0.0
        %5323 = vmatpush2.msra.mxu0 0.0
        %5324 = vmatprep.subr.mxu0 0.0
        %5325 = vmatpush2.msra.mxu0 0.0
        %5326 = vmatprep.subr.mxu0 0.0
        %5327 = vmatpush2.msra.mxu0 0.0
        %5328 = vmatprep.subr.mxu0 0.0
        %5329 = vmatpush2.msra.mxu0 0.0
        %5330 = vmatprep.subr.mxu0 0.0
        %5331 = vmatpush2.msra.mxu0 0.0
        %5332 = vmatprep.subr.mxu0 0.0
        %5333 = vmatpush2.msra.mxu0 0.0
        %5334 = vmatprep.subr.mxu0 0.0
        %5335 = vmatpush2.msra.mxu0 0.0
        %5336 = vmatprep.subr.mxu0 0.0
        %5337 = vmatpush2.msra.mxu0 0.0
        %5338 = vmatprep.mubr.f32.mxu0 0.0
        %5339 = vmatmul.mubr.f32.gmra.mxu0 %v5272
        %v5340 = vpop.f32.mrf.mxu0
        %v5341 = vadd.f32 0.0, %v5340
        %v5342 = vpop.f32.mrf.mxu0
        %5343 = vdwg.mxu0
        %5344 = vrot.lane.b32.xlu0 %v4084, 40
        %v5345 = vpop.permute.xlu0 %5344
        %v5348 = vsel %vm1041, %v5267, 0
        %5350 = vmatprep.subr.mxu0 0.0
        %5351 = vmatpush1.msra.mxu0 0.0
        %5352 = vmatprep.subr.mxu0 0.0
        %5353 = vmatpush1.msra.mxu0 0.0
        %5354 = vmatprep.subr.mxu0 0.0
        %5355 = vmatpush1.msra.mxu0 0.0
        %5356 = vmatprep.subr.mxu0 0.0
        %5357 = vmatpush1.msra.mxu0 0.0
        %5358 = vmatprep.subr.mxu0 0.0
        %5359 = vmatpush1.msra.mxu0 0.0
        %5360 = vmatprep.subr.mxu0 0.0
        %5361 = vmatpush1.msra.mxu0 0.0
        %5362 = vmatprep.subr.mxu0 0.0
        %5363 = vmatpush1.msra.mxu0 0.0
        %5364 = vmatprep.subr.mxu0 0.0
        %5365 = vmatpush1.msra.mxu0 0.0
        %5366 = vmatprep.subr.mxu0 0.0
        %5367 = vmatpush1.msra.mxu0 0.0
        %5368 = vmatprep.subr.mxu0 0.0
        %5369 = vmatpush1.msra.mxu0 0.0
        %5370 = vmatprep.subr.mxu0 0.0
        %5371 = vmatpush1.msra.mxu0 0.0
        %5372 = vmatprep.subr.mxu0 0.0
        %5373 = vmatpush1.msra.mxu0 0.0
        %5374 = vmatprep.subr.mxu0 0.0
        %5375 = vmatpush1.msra.mxu0 0.0
        %5376 = vmatprep.subr.mxu0 0.0
        %5377 = vmatpush1.msra.mxu0 0.0
        %5378 = vmatprep.subr.mxu0 0.0
        %5379 = vmatpush1.msra.mxu0 0.0
        %5380 = vmatprep.subr.mxu0 0.0
        %5381 = vmatpush1.msra.mxu0 %v5345
        %5382 = vmatprep.subr.mxu0 0.0
        %5383 = vmatpush2.msra.mxu0 0.0
        %5384 = vmatprep.subr.mxu0 0.0
        %5385 = vmatpush2.msra.mxu0 0.0
        %5386 = vmatprep.subr.mxu0 0.0
        %5387 = vmatpush2.msra.mxu0 0.0
        %5388 = vmatprep.subr.mxu0 0.0
        %5389 = vmatpush2.msra.mxu0 0.0
        %5390 = vmatprep.subr.mxu0 0.0
        %5391 = vmatpush2.msra.mxu0 0.0
        %5392 = vmatprep.subr.mxu0 0.0
        %5393 = vmatpush2.msra.mxu0 0.0
        %5394 = vmatprep.subr.mxu0 0.0
        %5395 = vmatpush2.msra.mxu0 0.0
        %5396 = vmatprep.subr.mxu0 0.0
        %5397 = vmatpush2.msra.mxu0 0.0
        %5398 = vmatprep.subr.mxu0 0.0
        %5399 = vmatpush2.msra.mxu0 0.0
        %5400 = vmatprep.subr.mxu0 0.0
        %5401 = vmatpush2.msra.mxu0 0.0
        %5402 = vmatprep.subr.mxu0 0.0
        %5403 = vmatpush2.msra.mxu0 0.0
        %5404 = vmatprep.subr.mxu0 0.0
        %5405 = vmatpush2.msra.mxu0 0.0
        %5406 = vmatprep.subr.mxu0 0.0
        %5407 = vmatpush2.msra.mxu0 0.0
        %5408 = vmatprep.subr.mxu0 0.0
        %5409 = vmatpush2.msra.mxu0 0.0
        %5410 = vmatprep.subr.mxu0 0.0
        %5411 = vmatpush2.msra.mxu0 0.0
        %5412 = vmatprep.subr.mxu0 0.0
        %5413 = vmatpush2.msra.mxu0 0.0
        %5414 = vmatprep.mubr.f32.mxu0 0.0
        %5415 = vmatmul.mubr.f32.gmra.mxu0 %v5348
        %v5416 = vpop.f32.mrf.mxu0
        %v5417 = vadd.f32 0.0, %v5416
        %v5418 = vpop.f32.mrf.mxu0
        %5419 = vdwg.mxu0
        %5420 = vrot.lane.b32.xlu0 %v3983, 96
        %v5421 = vpop.permute.xlu0 %5420
        %5422 = vrot.lane.b32.xlu0 %v4079, 96
        %v5423 = vpop.permute.xlu0 %5422
        %v5424 = vsel %vm1041, %v5421, 0
        %v5426 = vsel %vm1041, %v5423, 0
        %5428 = vmatprep.subr.mxu0 0.0
        %5429 = vmatpush1.xpose.msra.mxu0 0.0
        %5430 = vmatprep.subr.mxu0 0.0
        %5431 = vmatpush1.xpose.msra.mxu0 0.0
        %5432 = vmatprep.subr.mxu0 0.0
        %5433 = vmatpush1.xpose.msra.mxu0 0.0
        %5434 = vmatprep.subr.mxu0 0.0
        %5435 = vmatpush1.xpose.msra.mxu0 0.0
        %5436 = vmatprep.subr.mxu0 0.0
        %5437 = vmatpush1.xpose.msra.mxu0 0.0
        %5438 = vmatprep.subr.mxu0 0.0
        %5439 = vmatpush1.xpose.msra.mxu0 0.0
        %5440 = vmatprep.subr.mxu0 0.0
        %5441 = vmatpush1.xpose.msra.mxu0 0.0
        %5442 = vmatprep.subr.mxu0 0.0
        %5443 = vmatpush1.xpose.msra.mxu0 0.0
        %5444 = vmatprep.subr.mxu0 0.0
        %5445 = vmatpush1.xpose.msra.mxu0 0.0
        %5446 = vmatprep.subr.mxu0 0.0
        %5447 = vmatpush1.xpose.msra.mxu0 0.0
        %5448 = vmatprep.subr.mxu0 0.0
        %5449 = vmatpush1.xpose.msra.mxu0 0.0
        %5450 = vmatprep.subr.mxu0 0.0
        %5451 = vmatpush1.xpose.msra.mxu0 0.0
        %5452 = vmatprep.subr.mxu0 0.0
        %5453 = vmatpush1.xpose.msra.mxu0 0.0
        %5454 = vmatprep.subr.mxu0 0.0
        %5455 = vmatpush1.xpose.msra.mxu0 0.0
        %5456 = vmatprep.subr.mxu0 0.0
        %5457 = vmatpush1.xpose.msra.mxu0 0.0
        %5458 = vmatprep.subr.mxu0 0.0
        %5459 = vmatpush1.xpose.msra.mxu0 %v5426
        %5460 = vmatprep.subr.mxu0 0.0
        %5461 = vmatpush2.xpose.msra.mxu0 0.0
        %5462 = vmatprep.subr.mxu0 0.0
        %5463 = vmatpush2.xpose.msra.mxu0 0.0
        %5464 = vmatprep.subr.mxu0 0.0
        %5465 = vmatpush2.xpose.msra.mxu0 0.0
        %5466 = vmatprep.subr.mxu0 0.0
        %5467 = vmatpush2.xpose.msra.mxu0 0.0
        %5468 = vmatprep.subr.mxu0 0.0
        %5469 = vmatpush2.xpose.msra.mxu0 0.0
        %5470 = vmatprep.subr.mxu0 0.0
        %5471 = vmatpush2.xpose.msra.mxu0 0.0
        %5472 = vmatprep.subr.mxu0 0.0
        %5473 = vmatpush2.xpose.msra.mxu0 0.0
        %5474 = vmatprep.subr.mxu0 0.0
        %5475 = vmatpush2.xpose.msra.mxu0 0.0
        %5476 = vmatprep.subr.mxu0 0.0
        %5477 = vmatpush2.xpose.msra.mxu0 0.0
        %5478 = vmatprep.subr.mxu0 0.0
        %5479 = vmatpush2.xpose.msra.mxu0 0.0
        %5480 = vmatprep.subr.mxu0 0.0
        %5481 = vmatpush2.xpose.msra.mxu0 0.0
        %5482 = vmatprep.subr.mxu0 0.0
        %5483 = vmatpush2.xpose.msra.mxu0 0.0
        %5484 = vmatprep.subr.mxu0 0.0
        %5485 = vmatpush2.xpose.msra.mxu0 0.0
        %5486 = vmatprep.subr.mxu0 0.0
        %5487 = vmatpush2.xpose.msra.mxu0 0.0
        %5488 = vmatprep.subr.mxu0 0.0
        %5489 = vmatpush2.xpose.msra.mxu0 0.0
        %5490 = vmatprep.subr.mxu0 0.0
        %5491 = vmatpush2.xpose.msra.mxu0 0.0
        %5492 = vmatprep.mubr.f32.mxu0 0.0
        %5493 = vmatmul.mubr.f32.gmra.mxu0 %v5424
        %v5494 = vpop.f32.mrf.mxu0
        %v5495 = vadd.f32 0.0, %v5494
        %v5496 = vpop.f32.mrf.mxu0
        %5497 = vdwg.mxu0
        %5498 = vrot.lane.b32.xlu0 %v3988, 96
        %v5499 = vpop.permute.xlu0 %5498
        %5500 = vrot.lane.b32.xlu0 %v4084, 96
        %v5501 = vpop.permute.xlu0 %5500
        %v5502 = vsel %vm1041, %v5499, 0
        %v5504 = vsel %vm1041, %v5501, 0
        %5506 = vmatprep.subr.mxu0 0.0
        %5507 = vmatpush1.xpose.msra.mxu0 0.0
        %5508 = vmatprep.subr.mxu0 0.0
        %5509 = vmatpush1.xpose.msra.mxu0 0.0
        %5510 = vmatprep.subr.mxu0 0.0
        %5511 = vmatpush1.xpose.msra.mxu0 0.0
        %5512 = vmatprep.subr.mxu0 0.0
        %5513 = vmatpush1.xpose.msra.mxu0 0.0
        %5514 = vmatprep.subr.mxu0 0.0
        %5515 = vmatpush1.xpose.msra.mxu0 0.0
        %5516 = vmatprep.subr.mxu0 0.0
        %5517 = vmatpush1.xpose.msra.mxu0 0.0
        %5518 = vmatprep.subr.mxu0 0.0
        %5519 = vmatpush1.xpose.msra.mxu0 0.0
        %5520 = vmatprep.subr.mxu0 0.0
        %5521 = vmatpush1.xpose.msra.mxu0 0.0
        %5522 = vmatprep.subr.mxu0 0.0
        %5523 = vmatpush1.xpose.msra.mxu0 0.0
        %5524 = vmatprep.subr.mxu0 0.0
        %5525 = vmatpush1.xpose.msra.mxu0 0.0
        %5526 = vmatprep.subr.mxu0 0.0
        %5527 = vmatpush1.xpose.msra.mxu0 0.0
        %5528 = vmatprep.subr.mxu0 0.0
        %5529 = vmatpush1.xpose.msra.mxu0 0.0
        %5530 = vmatprep.subr.mxu0 0.0
        %5531 = vmatpush1.xpose.msra.mxu0 0.0
        %5532 = vmatprep.subr.mxu0 0.0
        %5533 = vmatpush1.xpose.msra.mxu0 0.0
        %5534 = vmatprep.subr.mxu0 0.0
        %5535 = vmatpush1.xpose.msra.mxu0 0.0
        %5536 = vmatprep.subr.mxu0 0.0
        %5537 = vmatpush1.xpose.msra.mxu0 %v5504
        %5538 = vmatprep.subr.mxu0 0.0
        %5539 = vmatpush2.xpose.msra.mxu0 0.0
        %5540 = vmatprep.subr.mxu0 0.0
        %5541 = vmatpush2.xpose.msra.mxu0 0.0
        %5542 = vmatprep.subr.mxu0 0.0
        %5543 = vmatpush2.xpose.msra.mxu0 0.0
        %5544 = vmatprep.subr.mxu0 0.0
        %5545 = vmatpush2.xpose.msra.mxu0 0.0
        %5546 = vmatprep.subr.mxu0 0.0
        %5547 = vmatpush2.xpose.msra.mxu0 0.0
        %5548 = vmatprep.subr.mxu0 0.0
        %5549 = vmatpush2.xpose.msra.mxu0 0.0
        %5550 = vmatprep.subr.mxu0 0.0
        %5551 = vmatpush2.xpose.msra.mxu0 0.0
        %5552 = vmatprep.subr.mxu0 0.0
        %5553 = vmatpush2.xpose.msra.mxu0 0.0
        %5554 = vmatprep.subr.mxu0 0.0
        %5555 = vmatpush2.xpose.msra.mxu0 0.0
        %5556 = vmatprep.subr.mxu0 0.0
        %5557 = vmatpush2.xpose.msra.mxu0 0.0
        %5558 = vmatprep.subr.mxu0 0.0
        %5559 = vmatpush2.xpose.msra.mxu0 0.0
        %5560 = vmatprep.subr.mxu0 0.0
        %5561 = vmatpush2.xpose.msra.mxu0 0.0
        %5562 = vmatprep.subr.mxu0 0.0
        %5563 = vmatpush2.xpose.msra.mxu0 0.0
        %5564 = vmatprep.subr.mxu0 0.0
        %5565 = vmatpush2.xpose.msra.mxu0 0.0
        %5566 = vmatprep.subr.mxu0 0.0
        %5567 = vmatpush2.xpose.msra.mxu0 0.0
        %5568 = vmatprep.subr.mxu0 0.0
        %5569 = vmatpush2.xpose.msra.mxu0 0.0
        %5570 = vmatprep.mubr.f32.mxu0 0.0
        %5571 = vmatmul.mubr.f32.gmra.mxu0 %v5502
        %v5572 = vpop.f32.mrf.mxu0
        %v5573 = vadd.f32 0.0, %v5572
        %v5574 = vpop.f32.mrf.mxu0
        %5575 = vdwg.mxu0
        %v5576 = vmul.f32 %v5495, 0.35355338
        %v5577 = vmul.f32 %v5573, 0.35355338
        %v5578 = vsel %vm1041, %v5576, -inf
        %5579 = vmax.xlane.f32.xlu0 %v5578
        %v5580 = vpop.xlane.xlu0 %5579
        %v5581 = vsel %vm1041, %v5577, -inf
        %5582 = vmax.xlane.f32.xlu0 %v5581
        %v5583 = vpop.xlane.xlu0 %5582
        %v5584 = vsub.f32 %v5576, %v5580
        %v5585 = vsub.f32 %v5577, %v5583
        %v5586 = vmul.f32 %v5584, 1.442695
        %v5587 = vpow.pop %v5586
        %v5588 = vmul.f32 %v5585, 1.442695
        %v5589 = vpow.pop %v5588
        %v5590 = vsel %vm1041, %v5587, 0.0
        %5591 = vadd.xlane.f32.xlu0 %v5590
        %v5592 = vpop.xlane.xlu0 %5591
        %v5593 = vsel %vm1041, %v5589, 0.0
        %5594 = vadd.xlane.f32.xlu0 %v5593
        %v5595 = vpop.xlane.xlu0 %5594
        %v5596 = vrcp.pop %v5592
        %v5597 = vrcp.pop %v5595
        %v5598 = vmul.f32 %v5587, %v5596
        %v5599 = vmul.f32 %v5589, %v5597
        %5600 = vrot.lane.b32.xlu0 %v4079, 32
        %v5601 = vpop.permute.xlu0 %5600
        %v5604 = vsel %vm1041, %v5598, 0
        %5606 = vmatprep.subr.mxu0 0.0
        %5607 = vmatpush1.msra.mxu0 0.0
        %5608 = vmatprep.subr.mxu0 0.0
        %5609 = vmatpush1.msra.mxu0 0.0
        %5610 = vmatprep.subr.mxu0 0.0
        %5611 = vmatpush1.msra.mxu0 0.0
        %5612 = vmatprep.subr.mxu0 0.0
        %5613 = vmatpush1.msra.mxu0 0.0
        %5614 = vmatprep.subr.mxu0 0.0
        %5615 = vmatpush1.msra.mxu0 0.0
        %5616 = vmatprep.subr.mxu0 0.0
        %5617 = vmatpush1.msra.mxu0 0.0
        %5618 = vmatprep.subr.mxu0 0.0
        %5619 = vmatpush1.msra.mxu0 0.0
        %5620 = vmatprep.subr.mxu0 0.0
        %5621 = vmatpush1.msra.mxu0 0.0
        %5622 = vmatprep.subr.mxu0 0.0
        %5623 = vmatpush1.msra.mxu0 0.0
        %5624 = vmatprep.subr.mxu0 0.0
        %5625 = vmatpush1.msra.mxu0 0.0
        %5626 = vmatprep.subr.mxu0 0.0
        %5627 = vmatpush1.msra.mxu0 0.0
        %5628 = vmatprep.subr.mxu0 0.0
        %5629 = vmatpush1.msra.mxu0 0.0
        %5630 = vmatprep.subr.mxu0 0.0
        %5631 = vmatpush1.msra.mxu0 0.0
        %5632 = vmatprep.subr.mxu0 0.0
        %5633 = vmatpush1.msra.mxu0 0.0
        %5634 = vmatprep.subr.mxu0 0.0
        %5635 = vmatpush1.msra.mxu0 0.0
        %5636 = vmatprep.subr.mxu0 0.0
        %5637 = vmatpush1.msra.mxu0 %v5601
        %5638 = vmatprep.subr.mxu0 0.0
        %5639 = vmatpush2.msra.mxu0 0.0
        %5640 = vmatprep.subr.mxu0 0.0
        %5641 = vmatpush2.msra.mxu0 0.0
        %5642 = vmatprep.subr.mxu0 0.0
        %5643 = vmatpush2.msra.mxu0 0.0
        %5644 = vmatprep.subr.mxu0 0.0
        %5645 = vmatpush2.msra.mxu0 0.0
        %5646 = vmatprep.subr.mxu0 0.0
        %5647 = vmatpush2.msra.mxu0 0.0
        %5648 = vmatprep.subr.mxu0 0.0
        %5649 = vmatpush2.msra.mxu0 0.0
        %5650 = vmatprep.subr.mxu0 0.0
        %5651 = vmatpush2.msra.mxu0 0.0
        %5652 = vmatprep.subr.mxu0 0.0
        %5653 = vmatpush2.msra.mxu0 0.0
        %5654 = vmatprep.subr.mxu0 0.0
        %5655 = vmatpush2.msra.mxu0 0.0
        %5656 = vmatprep.subr.mxu0 0.0
        %5657 = vmatpush2.msra.mxu0 0.0
        %5658 = vmatprep.subr.mxu0 0.0
        %5659 = vmatpush2.msra.mxu0 0.0
        %5660 = vmatprep.subr.mxu0 0.0
        %5661 = vmatpush2.msra.mxu0 0.0
        %5662 = vmatprep.subr.mxu0 0.0
        %5663 = vmatpush2.msra.mxu0 0.0
        %5664 = vmatprep.subr.mxu0 0.0
        %5665 = vmatpush2.msra.mxu0 0.0
        %5666 = vmatprep.subr.mxu0 0.0
        %5667 = vmatpush2.msra.mxu0 0.0
        %5668 = vmatprep.subr.mxu0 0.0
        %5669 = vmatpush2.msra.mxu0 0.0
        %5670 = vmatprep.mubr.f32.mxu0 0.0
        %5671 = vmatmul.mubr.f32.gmra.mxu0 %v5604
        %v5672 = vpop.f32.mrf.mxu0
        %v5673 = vadd.f32 0.0, %v5672
        %v5674 = vpop.f32.mrf.mxu0
        %5675 = vdwg.mxu0
        %5676 = vrot.lane.b32.xlu0 %v4084, 32
        %v5677 = vpop.permute.xlu0 %5676
        %v5680 = vsel %vm1041, %v5599, 0
        %5682 = vmatprep.subr.mxu0 0.0
        %5683 = vmatpush1.msra.mxu0 0.0
        %5684 = vmatprep.subr.mxu0 0.0
        %5685 = vmatpush1.msra.mxu0 0.0
        %5686 = vmatprep.subr.mxu0 0.0
        %5687 = vmatpush1.msra.mxu0 0.0
        %5688 = vmatprep.subr.mxu0 0.0
        %5689 = vmatpush1.msra.mxu0 0.0
        %5690 = vmatprep.subr.mxu0 0.0
        %5691 = vmatpush1.msra.mxu0 0.0
        %5692 = vmatprep.subr.mxu0 0.0
        %5693 = vmatpush1.msra.mxu0 0.0
        %5694 = vmatprep.subr.mxu0 0.0
        %5695 = vmatpush1.msra.mxu0 0.0
        %5696 = vmatprep.subr.mxu0 0.0
        %5697 = vmatpush1.msra.mxu0 0.0
        %5698 = vmatprep.subr.mxu0 0.0
        %5699 = vmatpush1.msra.mxu0 0.0
        %5700 = vmatprep.subr.mxu0 0.0
        %5701 = vmatpush1.msra.mxu0 0.0
        %5702 = vmatprep.subr.mxu0 0.0
        %5703 = vmatpush1.msra.mxu0 0.0
        %5704 = vmatprep.subr.mxu0 0.0
        %5705 = vmatpush1.msra.mxu0 0.0
        %5706 = vmatprep.subr.mxu0 0.0
        %5707 = vmatpush1.msra.mxu0 0.0
        %5708 = vmatprep.subr.mxu0 0.0
        %5709 = vmatpush1.msra.mxu0 0.0
        %5710 = vmatprep.subr.mxu0 0.0
        %5711 = vmatpush1.msra.mxu0 0.0
        %5712 = vmatprep.subr.mxu0 0.0
        %5713 = vmatpush1.msra.mxu0 %v5677
        %5714 = vmatprep.subr.mxu0 0.0
        %5715 = vmatpush2.msra.mxu0 0.0
        %5716 = vmatprep.subr.mxu0 0.0
        %5717 = vmatpush2.msra.mxu0 0.0
        %5718 = vmatprep.subr.mxu0 0.0
        %5719 = vmatpush2.msra.mxu0 0.0
        %5720 = vmatprep.subr.mxu0 0.0
        %5721 = vmatpush2.msra.mxu0 0.0
        %5722 = vmatprep.subr.mxu0 0.0
        %5723 = vmatpush2.msra.mxu0 0.0
        %5724 = vmatprep.subr.mxu0 0.0
        %5725 = vmatpush2.msra.mxu0 0.0
        %5726 = vmatprep.subr.mxu0 0.0
        %5727 = vmatpush2.msra.mxu0 0.0
        %5728 = vmatprep.subr.mxu0 0.0
        %5729 = vmatpush2.msra.mxu0 0.0
        %5730 = vmatprep.subr.mxu0 0.0
        %5731 = vmatpush2.msra.mxu0 0.0
        %5732 = vmatprep.subr.mxu0 0.0
        %5733 = vmatpush2.msra.mxu0 0.0
        %5734 = vmatprep.subr.mxu0 0.0
        %5735 = vmatpush2.msra.mxu0 0.0
        %5736 = vmatprep.subr.mxu0 0.0
        %5737 = vmatpush2.msra.mxu0 0.0
        %5738 = vmatprep.subr.mxu0 0.0
        %5739 = vmatpush2.msra.mxu0 0.0
        %5740 = vmatprep.subr.mxu0 0.0
        %5741 = vmatpush2.msra.mxu0 0.0
        %5742 = vmatprep.subr.mxu0 0.0
        %5743 = vmatpush2.msra.mxu0 0.0
        %5744 = vmatprep.subr.mxu0 0.0
        %5745 = vmatpush2.msra.mxu0 0.0
        %5746 = vmatprep.mubr.f32.mxu0 0.0
        %5747 = vmatmul.mubr.f32.gmra.mxu0 %v5680
        %v5748 = vpop.f32.mrf.mxu0
        %v5749 = vadd.f32 0.0, %v5748
        %v5750 = vpop.f32.mrf.mxu0
        %5751 = vdwg.mxu0
        %5752 = vrot.lane.b32.xlu0 %v3983, 88
        %v5753 = vpop.permute.xlu0 %5752
        %5754 = vrot.lane.b32.xlu0 %v4079, 88
        %v5755 = vpop.permute.xlu0 %5754
        %v5756 = vsel %vm1041, %v5753, 0
        %v5758 = vsel %vm1041, %v5755, 0
        %5760 = vmatprep.subr.mxu0 0.0
        %5761 = vmatpush1.xpose.msra.mxu0 0.0
        %5762 = vmatprep.subr.mxu0 0.0
        %5763 = vmatpush1.xpose.msra.mxu0 0.0
        %5764 = vmatprep.subr.mxu0 0.0
        %5765 = vmatpush1.xpose.msra.mxu0 0.0
        %5766 = vmatprep.subr.mxu0 0.0
        %5767 = vmatpush1.xpose.msra.mxu0 0.0
        %5768 = vmatprep.subr.mxu0 0.0
        %5769 = vmatpush1.xpose.msra.mxu0 0.0
        %5770 = vmatprep.subr.mxu0 0.0
        %5771 = vmatpush1.xpose.msra.mxu0 0.0
        %5772 = vmatprep.subr.mxu0 0.0
        %5773 = vmatpush1.xpose.msra.mxu0 0.0
        %5774 = vmatprep.subr.mxu0 0.0
        %5775 = vmatpush1.xpose.msra.mxu0 0.0
        %5776 = vmatprep.subr.mxu0 0.0
        %5777 = vmatpush1.xpose.msra.mxu0 0.0
        %5778 = vmatprep.subr.mxu0 0.0
        %5779 = vmatpush1.xpose.msra.mxu0 0.0
        %5780 = vmatprep.subr.mxu0 0.0
        %5781 = vmatpush1.xpose.msra.mxu0 0.0
        %5782 = vmatprep.subr.mxu0 0.0
        %5783 = vmatpush1.xpose.msra.mxu0 0.0
        %5784 = vmatprep.subr.mxu0 0.0
        %5785 = vmatpush1.xpose.msra.mxu0 0.0
        %5786 = vmatprep.subr.mxu0 0.0
        %5787 = vmatpush1.xpose.msra.mxu0 0.0
        %5788 = vmatprep.subr.mxu0 0.0
        %5789 = vmatpush1.xpose.msra.mxu0 0.0
        %5790 = vmatprep.subr.mxu0 0.0
        %5791 = vmatpush1.xpose.msra.mxu0 %v5758
        %5792 = vmatprep.subr.mxu0 0.0
        %5793 = vmatpush2.xpose.msra.mxu0 0.0
        %5794 = vmatprep.subr.mxu0 0.0
        %5795 = vmatpush2.xpose.msra.mxu0 0.0
        %5796 = vmatprep.subr.mxu0 0.0
        %5797 = vmatpush2.xpose.msra.mxu0 0.0
        %5798 = vmatprep.subr.mxu0 0.0
        %5799 = vmatpush2.xpose.msra.mxu0 0.0
        %5800 = vmatprep.subr.mxu0 0.0
        %5801 = vmatpush2.xpose.msra.mxu0 0.0
        %5802 = vmatprep.subr.mxu0 0.0
        %5803 = vmatpush2.xpose.msra.mxu0 0.0
        %5804 = vmatprep.subr.mxu0 0.0
        %5805 = vmatpush2.xpose.msra.mxu0 0.0
        %5806 = vmatprep.subr.mxu0 0.0
        %5807 = vmatpush2.xpose.msra.mxu0 0.0
        %5808 = vmatprep.subr.mxu0 0.0
        %5809 = vmatpush2.xpose.msra.mxu0 0.0
        %5810 = vmatprep.subr.mxu0 0.0
        %5811 = vmatpush2.xpose.msra.mxu0 0.0
        %5812 = vmatprep.subr.mxu0 0.0
        %5813 = vmatpush2.xpose.msra.mxu0 0.0
        %5814 = vmatprep.subr.mxu0 0.0
        %5815 = vmatpush2.xpose.msra.mxu0 0.0
        %5816 = vmatprep.subr.mxu0 0.0
        %5817 = vmatpush2.xpose.msra.mxu0 0.0
        %5818 = vmatprep.subr.mxu0 0.0
        %5819 = vmatpush2.xpose.msra.mxu0 0.0
        %5820 = vmatprep.subr.mxu0 0.0
        %5821 = vmatpush2.xpose.msra.mxu0 0.0
        %5822 = vmatprep.subr.mxu0 0.0
        %5823 = vmatpush2.xpose.msra.mxu0 0.0
        %5824 = vmatprep.mubr.f32.mxu0 0.0
        %5825 = vmatmul.mubr.f32.gmra.mxu0 %v5756
        %v5826 = vpop.f32.mrf.mxu0
        %v5827 = vadd.f32 0.0, %v5826
        %v5828 = vpop.f32.mrf.mxu0
        %5829 = vdwg.mxu0
        %5830 = vrot.lane.b32.xlu0 %v3988, 88
        %v5831 = vpop.permute.xlu0 %5830
        %5832 = vrot.lane.b32.xlu0 %v4084, 88
        %v5833 = vpop.permute.xlu0 %5832
        %v5834 = vsel %vm1041, %v5831, 0
        %v5836 = vsel %vm1041, %v5833, 0
        %5838 = vmatprep.subr.mxu0 0.0
        %5839 = vmatpush1.xpose.msra.mxu0 0.0
        %5840 = vmatprep.subr.mxu0 0.0
        %5841 = vmatpush1.xpose.msra.mxu0 0.0
        %5842 = vmatprep.subr.mxu0 0.0
        %5843 = vmatpush1.xpose.msra.mxu0 0.0
        %5844 = vmatprep.subr.mxu0 0.0
        %5845 = vmatpush1.xpose.msra.mxu0 0.0
        %5846 = vmatprep.subr.mxu0 0.0
        %5847 = vmatpush1.xpose.msra.mxu0 0.0
        %5848 = vmatprep.subr.mxu0 0.0
        %5849 = vmatpush1.xpose.msra.mxu0 0.0
        %5850 = vmatprep.subr.mxu0 0.0
        %5851 = vmatpush1.xpose.msra.mxu0 0.0
        %5852 = vmatprep.subr.mxu0 0.0
        %5853 = vmatpush1.xpose.msra.mxu0 0.0
        %5854 = vmatprep.subr.mxu0 0.0
        %5855 = vmatpush1.xpose.msra.mxu0 0.0
        %5856 = vmatprep.subr.mxu0 0.0
        %5857 = vmatpush1.xpose.msra.mxu0 0.0
        %5858 = vmatprep.subr.mxu0 0.0
        %5859 = vmatpush1.xpose.msra.mxu0 0.0
        %5860 = vmatprep.subr.mxu0 0.0
        %5861 = vmatpush1.xpose.msra.mxu0 0.0
        %5862 = vmatprep.subr.mxu0 0.0
        %5863 = vmatpush1.xpose.msra.mxu0 0.0
        %5864 = vmatprep.subr.mxu0 0.0
        %5865 = vmatpush1.xpose.msra.mxu0 0.0
        %5866 = vmatprep.subr.mxu0 0.0
        %5867 = vmatpush1.xpose.msra.mxu0 0.0
        %5868 = vmatprep.subr.mxu0 0.0
        %5869 = vmatpush1.xpose.msra.mxu0 %v5836
        %5870 = vmatprep.subr.mxu0 0.0
        %5871 = vmatpush2.xpose.msra.mxu0 0.0
        %5872 = vmatprep.subr.mxu0 0.0
        %5873 = vmatpush2.xpose.msra.mxu0 0.0
        %5874 = vmatprep.subr.mxu0 0.0
        %5875 = vmatpush2.xpose.msra.mxu0 0.0
        %5876 = vmatprep.subr.mxu0 0.0
        %5877 = vmatpush2.xpose.msra.mxu0 0.0
        %5878 = vmatprep.subr.mxu0 0.0
        %5879 = vmatpush2.xpose.msra.mxu0 0.0
        %5880 = vmatprep.subr.mxu0 0.0
        %5881 = vmatpush2.xpose.msra.mxu0 0.0
        %5882 = vmatprep.subr.mxu0 0.0
        %5883 = vmatpush2.xpose.msra.mxu0 0.0
        %5884 = vmatprep.subr.mxu0 0.0
        %5885 = vmatpush2.xpose.msra.mxu0 0.0
        %5886 = vmatprep.subr.mxu0 0.0
        %5887 = vmatpush2.xpose.msra.mxu0 0.0
        %5888 = vmatprep.subr.mxu0 0.0
        %5889 = vmatpush2.xpose.msra.mxu0 0.0
        %5890 = vmatprep.subr.mxu0 0.0
        %5891 = vmatpush2.xpose.msra.mxu0 0.0
        %5892 = vmatprep.subr.mxu0 0.0
        %5893 = vmatpush2.xpose.msra.mxu0 0.0
        %5894 = vmatprep.subr.mxu0 0.0
        %5895 = vmatpush2.xpose.msra.mxu0 0.0
        %5896 = vmatprep.subr.mxu0 0.0
        %5897 = vmatpush2.xpose.msra.mxu0 0.0
        %5898 = vmatprep.subr.mxu0 0.0
        %5899 = vmatpush2.xpose.msra.mxu0 0.0
        %5900 = vmatprep.subr.mxu0 0.0
        %5901 = vmatpush2.xpose.msra.mxu0 0.0
        %5902 = vmatprep.mubr.f32.mxu0 0.0
        %5903 = vmatmul.mubr.f32.gmra.mxu0 %v5834
        %v5904 = vpop.f32.mrf.mxu0
        %v5905 = vadd.f32 0.0, %v5904
        %v5906 = vpop.f32.mrf.mxu0
        %5907 = vdwg.mxu0
        %v5908 = vmul.f32 %v5827, 0.35355338
        %v5909 = vmul.f32 %v5905, 0.35355338
        %v5910 = vsel %vm1041, %v5908, -inf
        %5911 = vmax.xlane.f32.xlu0 %v5910
        %v5912 = vpop.xlane.xlu0 %5911
        %v5913 = vsel %vm1041, %v5909, -inf
        %5914 = vmax.xlane.f32.xlu0 %v5913
        %v5915 = vpop.xlane.xlu0 %5914
        %v5916 = vsub.f32 %v5908, %v5912
        %v5917 = vsub.f32 %v5909, %v5915
        %v5918 = vmul.f32 %v5916, 1.442695
        %v5919 = vpow.pop %v5918
        %v5920 = vmul.f32 %v5917, 1.442695
        %v5921 = vpow.pop %v5920
        %v5922 = vsel %vm1041, %v5919, 0.0
        %5923 = vadd.xlane.f32.xlu0 %v5922
        %v5924 = vpop.xlane.xlu0 %5923
        %v5925 = vsel %vm1041, %v5921, 0.0
        %5926 = vadd.xlane.f32.xlu0 %v5925
        %v5927 = vpop.xlane.xlu0 %5926
        %v5928 = vrcp.pop %v5924
        %v5929 = vrcp.pop %v5927
        %v5930 = vmul.f32 %v5919, %v5928
        %v5931 = vmul.f32 %v5921, %v5929
        %5932 = vrot.lane.b32.xlu0 %v4079, 24
        %v5933 = vpop.permute.xlu0 %5932
        %v5936 = vsel %vm1041, %v5930, 0
        %5938 = vmatprep.subr.mxu0 0.0
        %5939 = vmatpush1.msra.mxu0 0.0
        %5940 = vmatprep.subr.mxu0 0.0
        %5941 = vmatpush1.msra.mxu0 0.0
        %5942 = vmatprep.subr.mxu0 0.0
        %5943 = vmatpush1.msra.mxu0 0.0
        %5944 = vmatprep.subr.mxu0 0.0
        %5945 = vmatpush1.msra.mxu0 0.0
        %5946 = vmatprep.subr.mxu0 0.0
        %5947 = vmatpush1.msra.mxu0 0.0
        %5948 = vmatprep.subr.mxu0 0.0
        %5949 = vmatpush1.msra.mxu0 0.0
        %5950 = vmatprep.subr.mxu0 0.0
        %5951 = vmatpush1.msra.mxu0 0.0
        %5952 = vmatprep.subr.mxu0 0.0
        %5953 = vmatpush1.msra.mxu0 0.0
        %5954 = vmatprep.subr.mxu0 0.0
        %5955 = vmatpush1.msra.mxu0 0.0
        %5956 = vmatprep.subr.mxu0 0.0
        %5957 = vmatpush1.msra.mxu0 0.0
        %5958 = vmatprep.subr.mxu0 0.0
        %5959 = vmatpush1.msra.mxu0 0.0
        %5960 = vmatprep.subr.mxu0 0.0
        %5961 = vmatpush1.msra.mxu0 0.0
        %5962 = vmatprep.subr.mxu0 0.0
        %5963 = vmatpush1.msra.mxu0 0.0
        %5964 = vmatprep.subr.mxu0 0.0
        %5965 = vmatpush1.msra.mxu0 0.0
        %5966 = vmatprep.subr.mxu0 0.0
        %5967 = vmatpush1.msra.mxu0 0.0
        %5968 = vmatprep.subr.mxu0 0.0
        %5969 = vmatpush1.msra.mxu0 %v5933
        %5970 = vmatprep.subr.mxu0 0.0
        %5971 = vmatpush2.msra.mxu0 0.0
        %5972 = vmatprep.subr.mxu0 0.0
        %5973 = vmatpush2.msra.mxu0 0.0
        %5974 = vmatprep.subr.mxu0 0.0
        %5975 = vmatpush2.msra.mxu0 0.0
        %5976 = vmatprep.subr.mxu0 0.0
        %5977 = vmatpush2.msra.mxu0 0.0
        %5978 = vmatprep.subr.mxu0 0.0
        %5979 = vmatpush2.msra.mxu0 0.0
        %5980 = vmatprep.subr.mxu0 0.0
        %5981 = vmatpush2.msra.mxu0 0.0
        %5982 = vmatprep.subr.mxu0 0.0
        %5983 = vmatpush2.msra.mxu0 0.0
        %5984 = vmatprep.subr.mxu0 0.0
        %5985 = vmatpush2.msra.mxu0 0.0
        %5986 = vmatprep.subr.mxu0 0.0
        %5987 = vmatpush2.msra.mxu0 0.0
        %5988 = vmatprep.subr.mxu0 0.0
        %5989 = vmatpush2.msra.mxu0 0.0
        %5990 = vmatprep.subr.mxu0 0.0
        %5991 = vmatpush2.msra.mxu0 0.0
        %5992 = vmatprep.subr.mxu0 0.0
        %5993 = vmatpush2.msra.mxu0 0.0
        %5994 = vmatprep.subr.mxu0 0.0
        %5995 = vmatpush2.msra.mxu0 0.0
        %5996 = vmatprep.subr.mxu0 0.0
        %5997 = vmatpush2.msra.mxu0 0.0
        %5998 = vmatprep.subr.mxu0 0.0
        %5999 = vmatpush2.msra.mxu0 0.0
        %6000 = vmatprep.subr.mxu0 0.0
        %6001 = vmatpush2.msra.mxu0 0.0
        %6002 = vmatprep.mubr.f32.mxu0 0.0
        %6003 = vmatmul.mubr.f32.gmra.mxu0 %v5936
        %v6004 = vpop.f32.mrf.mxu0
        %v6005 = vadd.f32 0.0, %v6004
        %v6006 = vpop.f32.mrf.mxu0
        %6007 = vdwg.mxu0
        %6008 = vrot.lane.b32.xlu0 %v4084, 24
        %v6009 = vpop.permute.xlu0 %6008
        %v6012 = vsel %vm1041, %v5931, 0
        %6014 = vmatprep.subr.mxu0 0.0
        %6015 = vmatpush1.msra.mxu0 0.0
        %6016 = vmatprep.subr.mxu0 0.0
        %6017 = vmatpush1.msra.mxu0 0.0
        %6018 = vmatprep.subr.mxu0 0.0
        %6019 = vmatpush1.msra.mxu0 0.0
        %6020 = vmatprep.subr.mxu0 0.0
        %6021 = vmatpush1.msra.mxu0 0.0
        %6022 = vmatprep.subr.mxu0 0.0
        %6023 = vmatpush1.msra.mxu0 0.0
        %6024 = vmatprep.subr.mxu0 0.0
        %6025 = vmatpush1.msra.mxu0 0.0
        %6026 = vmatprep.subr.mxu0 0.0
        %6027 = vmatpush1.msra.mxu0 0.0
        %6028 = vmatprep.subr.mxu0 0.0
        %6029 = vmatpush1.msra.mxu0 0.0
        %6030 = vmatprep.subr.mxu0 0.0
        %6031 = vmatpush1.msra.mxu0 0.0
        %6032 = vmatprep.subr.mxu0 0.0
        %6033 = vmatpush1.msra.mxu0 0.0
        %6034 = vmatprep.subr.mxu0 0.0
        %6035 = vmatpush1.msra.mxu0 0.0
        %6036 = vmatprep.subr.mxu0 0.0
        %6037 = vmatpush1.msra.mxu0 0.0
        %6038 = vmatprep.subr.mxu0 0.0
        %6039 = vmatpush1.msra.mxu0 0.0
        %6040 = vmatprep.subr.mxu0 0.0
        %6041 = vmatpush1.msra.mxu0 0.0
        %6042 = vmatprep.subr.mxu0 0.0
        %6043 = vmatpush1.msra.mxu0 0.0
        %6044 = vmatprep.subr.mxu0 0.0
        %6045 = vmatpush1.msra.mxu0 %v6009
        %6046 = vmatprep.subr.mxu0 0.0
        %6047 = vmatpush2.msra.mxu0 0.0
        %6048 = vmatprep.subr.mxu0 0.0
        %6049 = vmatpush2.msra.mxu0 0.0
        %6050 = vmatprep.subr.mxu0 0.0
        %6051 = vmatpush2.msra.mxu0 0.0
        %6052 = vmatprep.subr.mxu0 0.0
        %6053 = vmatpush2.msra.mxu0 0.0
        %6054 = vmatprep.subr.mxu0 0.0
        %6055 = vmatpush2.msra.mxu0 0.0
        %6056 = vmatprep.subr.mxu0 0.0
        %6057 = vmatpush2.msra.mxu0 0.0
        %6058 = vmatprep.subr.mxu0 0.0
        %6059 = vmatpush2.msra.mxu0 0.0
        %6060 = vmatprep.subr.mxu0 0.0
        %6061 = vmatpush2.msra.mxu0 0.0
        %6062 = vmatprep.subr.mxu0 0.0
        %6063 = vmatpush2.msra.mxu0 0.0
        %6064 = vmatprep.subr.mxu0 0.0
        %6065 = vmatpush2.msra.mxu0 0.0
        %6066 = vmatprep.subr.mxu0 0.0
        %6067 = vmatpush2.msra.mxu0 0.0
        %6068 = vmatprep.subr.mxu0 0.0
        %6069 = vmatpush2.msra.mxu0 0.0
        %6070 = vmatprep.subr.mxu0 0.0
        %6071 = vmatpush2.msra.mxu0 0.0
        %6072 = vmatprep.subr.mxu0 0.0
        %6073 = vmatpush2.msra.mxu0 0.0
        %6074 = vmatprep.subr.mxu0 0.0
        %6075 = vmatpush2.msra.mxu0 0.0
        %6076 = vmatprep.subr.mxu0 0.0
        %6077 = vmatpush2.msra.mxu0 0.0
        %6078 = vmatprep.mubr.f32.mxu0 0.0
        %6079 = vmatmul.mubr.f32.gmra.mxu0 %v6012
        %v6080 = vpop.f32.mrf.mxu0
        %v6081 = vadd.f32 0.0, %v6080
        %v6082 = vpop.f32.mrf.mxu0
        %6083 = vdwg.mxu0
        %6084 = vrot.lane.b32.xlu0 %v3983, 80
        %v6085 = vpop.permute.xlu0 %6084
        %6086 = vrot.lane.b32.xlu0 %v4079, 80
        %v6087 = vpop.permute.xlu0 %6086
        %v6088 = vsel %vm1041, %v6085, 0
        %v6090 = vsel %vm1041, %v6087, 0
        %6092 = vmatprep.subr.mxu0 0.0
        %6093 = vmatpush1.xpose.msra.mxu0 0.0
        %6094 = vmatprep.subr.mxu0 0.0
        %6095 = vmatpush1.xpose.msra.mxu0 0.0
        %6096 = vmatprep.subr.mxu0 0.0
        %6097 = vmatpush1.xpose.msra.mxu0 0.0
        %6098 = vmatprep.subr.mxu0 0.0
        %6099 = vmatpush1.xpose.msra.mxu0 0.0
        %6100 = vmatprep.subr.mxu0 0.0
        %6101 = vmatpush1.xpose.msra.mxu0 0.0
        %6102 = vmatprep.subr.mxu0 0.0
        %6103 = vmatpush1.xpose.msra.mxu0 0.0
        %6104 = vmatprep.subr.mxu0 0.0
        %6105 = vmatpush1.xpose.msra.mxu0 0.0
        %6106 = vmatprep.subr.mxu0 0.0
        %6107 = vmatpush1.xpose.msra.mxu0 0.0
        %6108 = vmatprep.subr.mxu0 0.0
        %6109 = vmatpush1.xpose.msra.mxu0 0.0
        %6110 = vmatprep.subr.mxu0 0.0
        %6111 = vmatpush1.xpose.msra.mxu0 0.0
        %6112 = vmatprep.subr.mxu0 0.0
        %6113 = vmatpush1.xpose.msra.mxu0 0.0
        %6114 = vmatprep.subr.mxu0 0.0
        %6115 = vmatpush1.xpose.msra.mxu0 0.0
        %6116 = vmatprep.subr.mxu0 0.0
        %6117 = vmatpush1.xpose.msra.mxu0 0.0
        %6118 = vmatprep.subr.mxu0 0.0
        %6119 = vmatpush1.xpose.msra.mxu0 0.0
        %6120 = vmatprep.subr.mxu0 0.0
        %6121 = vmatpush1.xpose.msra.mxu0 0.0
        %6122 = vmatprep.subr.mxu0 0.0
        %6123 = vmatpush1.xpose.msra.mxu0 %v6090
        %6124 = vmatprep.subr.mxu0 0.0
        %6125 = vmatpush2.xpose.msra.mxu0 0.0
        %6126 = vmatprep.subr.mxu0 0.0
        %6127 = vmatpush2.xpose.msra.mxu0 0.0
        %6128 = vmatprep.subr.mxu0 0.0
        %6129 = vmatpush2.xpose.msra.mxu0 0.0
        %6130 = vmatprep.subr.mxu0 0.0
        %6131 = vmatpush2.xpose.msra.mxu0 0.0
        %6132 = vmatprep.subr.mxu0 0.0
        %6133 = vmatpush2.xpose.msra.mxu0 0.0
        %6134 = vmatprep.subr.mxu0 0.0
        %6135 = vmatpush2.xpose.msra.mxu0 0.0
        %6136 = vmatprep.subr.mxu0 0.0
        %6137 = vmatpush2.xpose.msra.mxu0 0.0
        %6138 = vmatprep.subr.mxu0 0.0
        %6139 = vmatpush2.xpose.msra.mxu0 0.0
        %6140 = vmatprep.subr.mxu0 0.0
        %6141 = vmatpush2.xpose.msra.mxu0 0.0
        %6142 = vmatprep.subr.mxu0 0.0
        %6143 = vmatpush2.xpose.msra.mxu0 0.0
        %6144 = vmatprep.subr.mxu0 0.0
        %6145 = vmatpush2.xpose.msra.mxu0 0.0
        %6146 = vmatprep.subr.mxu0 0.0
        %6147 = vmatpush2.xpose.msra.mxu0 0.0
        %6148 = vmatprep.subr.mxu0 0.0
        %6149 = vmatpush2.xpose.msra.mxu0 0.0
        %6150 = vmatprep.subr.mxu0 0.0
        %6151 = vmatpush2.xpose.msra.mxu0 0.0
        %6152 = vmatprep.subr.mxu0 0.0
        %6153 = vmatpush2.xpose.msra.mxu0 0.0
        %6154 = vmatprep.subr.mxu0 0.0
        %6155 = vmatpush2.xpose.msra.mxu0 0.0
        %6156 = vmatprep.mubr.f32.mxu0 0.0
        %6157 = vmatmul.mubr.f32.gmra.mxu0 %v6088
        %v6158 = vpop.f32.mrf.mxu0
        %v6159 = vadd.f32 0.0, %v6158
        %v6160 = vpop.f32.mrf.mxu0
        %6161 = vdwg.mxu0
        %6162 = vrot.lane.b32.xlu0 %v3988, 80
        %v6163 = vpop.permute.xlu0 %6162
        %6164 = vrot.lane.b32.xlu0 %v4084, 80
        %v6165 = vpop.permute.xlu0 %6164
        %v6166 = vsel %vm1041, %v6163, 0
        %v6168 = vsel %vm1041, %v6165, 0
        %6170 = vmatprep.subr.mxu0 0.0
        %6171 = vmatpush1.xpose.msra.mxu0 0.0
        %6172 = vmatprep.subr.mxu0 0.0
        %6173 = vmatpush1.xpose.msra.mxu0 0.0
        %6174 = vmatprep.subr.mxu0 0.0
        %6175 = vmatpush1.xpose.msra.mxu0 0.0
        %6176 = vmatprep.subr.mxu0 0.0
        %6177 = vmatpush1.xpose.msra.mxu0 0.0
        %6178 = vmatprep.subr.mxu0 0.0
        %6179 = vmatpush1.xpose.msra.mxu0 0.0
        %6180 = vmatprep.subr.mxu0 0.0
        %6181 = vmatpush1.xpose.msra.mxu0 0.0
        %6182 = vmatprep.subr.mxu0 0.0
        %6183 = vmatpush1.xpose.msra.mxu0 0.0
        %6184 = vmatprep.subr.mxu0 0.0
        %6185 = vmatpush1.xpose.msra.mxu0 0.0
        %6186 = vmatprep.subr.mxu0 0.0
        %6187 = vmatpush1.xpose.msra.mxu0 0.0
        %6188 = vmatprep.subr.mxu0 0.0
        %6189 = vmatpush1.xpose.msra.mxu0 0.0
        %6190 = vmatprep.subr.mxu0 0.0
        %6191 = vmatpush1.xpose.msra.mxu0 0.0
        %6192 = vmatprep.subr.mxu0 0.0
        %6193 = vmatpush1.xpose.msra.mxu0 0.0
        %6194 = vmatprep.subr.mxu0 0.0
        %6195 = vmatpush1.xpose.msra.mxu0 0.0
        %6196 = vmatprep.subr.mxu0 0.0
        %6197 = vmatpush1.xpose.msra.mxu0 0.0
        %6198 = vmatprep.subr.mxu0 0.0
        %6199 = vmatpush1.xpose.msra.mxu0 0.0
        %6200 = vmatprep.subr.mxu0 0.0
        %6201 = vmatpush1.xpose.msra.mxu0 %v6168
        %6202 = vmatprep.subr.mxu0 0.0
        %6203 = vmatpush2.xpose.msra.mxu0 0.0
        %6204 = vmatprep.subr.mxu0 0.0
        %6205 = vmatpush2.xpose.msra.mxu0 0.0
        %6206 = vmatprep.subr.mxu0 0.0
        %6207 = vmatpush2.xpose.msra.mxu0 0.0
        %6208 = vmatprep.subr.mxu0 0.0
        %6209 = vmatpush2.xpose.msra.mxu0 0.0
        %6210 = vmatprep.subr.mxu0 0.0
        %6211 = vmatpush2.xpose.msra.mxu0 0.0
        %6212 = vmatprep.subr.mxu0 0.0
        %6213 = vmatpush2.xpose.msra.mxu0 0.0
        %6214 = vmatprep.subr.mxu0 0.0
        %6215 = vmatpush2.xpose.msra.mxu0 0.0
        %6216 = vmatprep.subr.mxu0 0.0
        %6217 = vmatpush2.xpose.msra.mxu0 0.0
        %6218 = vmatprep.subr.mxu0 0.0
        %6219 = vmatpush2.xpose.msra.mxu0 0.0
        %6220 = vmatprep.subr.mxu0 0.0
        %6221 = vmatpush2.xpose.msra.mxu0 0.0
        %6222 = vmatprep.subr.mxu0 0.0
        %6223 = vmatpush2.xpose.msra.mxu0 0.0
        %6224 = vmatprep.subr.mxu0 0.0
        %6225 = vmatpush2.xpose.msra.mxu0 0.0
        %6226 = vmatprep.subr.mxu0 0.0
        %6227 = vmatpush2.xpose.msra.mxu0 0.0
        %6228 = vmatprep.subr.mxu0 0.0
        %6229 = vmatpush2.xpose.msra.mxu0 0.0
        %6230 = vmatprep.subr.mxu0 0.0
        %6231 = vmatpush2.xpose.msra.mxu0 0.0
        %6232 = vmatprep.subr.mxu0 0.0
        %6233 = vmatpush2.xpose.msra.mxu0 0.0
        %6234 = vmatprep.mubr.f32.mxu0 0.0
        %6235 = vmatmul.mubr.f32.gmra.mxu0 %v6166
        %v6236 = vpop.f32.mrf.mxu0
        %v6237 = vadd.f32 0.0, %v6236
        %v6238 = vpop.f32.mrf.mxu0
        %6239 = vdwg.mxu0
        %v6240 = vmul.f32 %v6159, 0.35355338
        %v6241 = vmul.f32 %v6237, 0.35355338
        %v6242 = vsel %vm1041, %v6240, -inf
        %6243 = vmax.xlane.f32.xlu0 %v6242
        %v6244 = vpop.xlane.xlu0 %6243
        %v6245 = vsel %vm1041, %v6241, -inf
        %6246 = vmax.xlane.f32.xlu0 %v6245
        %v6247 = vpop.xlane.xlu0 %6246
        %v6248 = vsub.f32 %v6240, %v6244
        %v6249 = vsub.f32 %v6241, %v6247
        %v6250 = vmul.f32 %v6248, 1.442695
        %v6251 = vpow.pop %v6250
        %v6252 = vmul.f32 %v6249, 1.442695
        %v6253 = vpow.pop %v6252
        %v6254 = vsel %vm1041, %v6251, 0.0
        %6255 = vadd.xlane.f32.xlu0 %v6254
        %v6256 = vpop.xlane.xlu0 %6255
        %v6257 = vsel %vm1041, %v6253, 0.0
        %6258 = vadd.xlane.f32.xlu0 %v6257
        %v6259 = vpop.xlane.xlu0 %6258
        %v6260 = vrcp.pop %v6256
        %v6261 = vrcp.pop %v6259
        %v6262 = vmul.f32 %v6251, %v6260
        %v6263 = vmul.f32 %v6253, %v6261
        %6264 = vrot.lane.b32.xlu0 %v4079, 16
        %v6265 = vpop.permute.xlu0 %6264
        %v6268 = vsel %vm1041, %v6262, 0
        %6270 = vmatprep.subr.mxu0 0.0
        %6271 = vmatpush1.msra.mxu0 0.0
        %6272 = vmatprep.subr.mxu0 0.0
        %6273 = vmatpush1.msra.mxu0 0.0
        %6274 = vmatprep.subr.mxu0 0.0
        %6275 = vmatpush1.msra.mxu0 0.0
        %6276 = vmatprep.subr.mxu0 0.0
        %6277 = vmatpush1.msra.mxu0 0.0
        %6278 = vmatprep.subr.mxu0 0.0
        %6279 = vmatpush1.msra.mxu0 0.0
        %6280 = vmatprep.subr.mxu0 0.0
        %6281 = vmatpush1.msra.mxu0 0.0
        %6282 = vmatprep.subr.mxu0 0.0
        %6283 = vmatpush1.msra.mxu0 0.0
        %6284 = vmatprep.subr.mxu0 0.0
        %6285 = vmatpush1.msra.mxu0 0.0
        %6286 = vmatprep.subr.mxu0 0.0
        %6287 = vmatpush1.msra.mxu0 0.0
        %6288 = vmatprep.subr.mxu0 0.0
        %6289 = vmatpush1.msra.mxu0 0.0
        %6290 = vmatprep.subr.mxu0 0.0
        %6291 = vmatpush1.msra.mxu0 0.0
        %6292 = vmatprep.subr.mxu0 0.0
        %6293 = vmatpush1.msra.mxu0 0.0
        %6294 = vmatprep.subr.mxu0 0.0
        %6295 = vmatpush1.msra.mxu0 0.0
        %6296 = vmatprep.subr.mxu0 0.0
        %6297 = vmatpush1.msra.mxu0 0.0
        %6298 = vmatprep.subr.mxu0 0.0
        %6299 = vmatpush1.msra.mxu0 0.0
        %6300 = vmatprep.subr.mxu0 0.0
        %6301 = vmatpush1.msra.mxu0 %v6265
        %6302 = vmatprep.subr.mxu0 0.0
        %6303 = vmatpush2.msra.mxu0 0.0
        %6304 = vmatprep.subr.mxu0 0.0
        %6305 = vmatpush2.msra.mxu0 0.0
        %6306 = vmatprep.subr.mxu0 0.0
        %6307 = vmatpush2.msra.mxu0 0.0
        %6308 = vmatprep.subr.mxu0 0.0
        %6309 = vmatpush2.msra.mxu0 0.0
        %6310 = vmatprep.subr.mxu0 0.0
        %6311 = vmatpush2.msra.mxu0 0.0
        %6312 = vmatprep.subr.mxu0 0.0
        %6313 = vmatpush2.msra.mxu0 0.0
        %6314 = vmatprep.subr.mxu0 0.0
        %6315 = vmatpush2.msra.mxu0 0.0
        %6316 = vmatprep.subr.mxu0 0.0
        %6317 = vmatpush2.msra.mxu0 0.0
        %6318 = vmatprep.subr.mxu0 0.0
        %6319 = vmatpush2.msra.mxu0 0.0
        %6320 = vmatprep.subr.mxu0 0.0
        %6321 = vmatpush2.msra.mxu0 0.0
        %6322 = vmatprep.subr.mxu0 0.0
        %6323 = vmatpush2.msra.mxu0 0.0
        %6324 = vmatprep.subr.mxu0 0.0
        %6325 = vmatpush2.msra.mxu0 0.0
        %6326 = vmatprep.subr.mxu0 0.0
        %6327 = vmatpush2.msra.mxu0 0.0
        %6328 = vmatprep.subr.mxu0 0.0
        %6329 = vmatpush2.msra.mxu0 0.0
        %6330 = vmatprep.subr.mxu0 0.0
        %6331 = vmatpush2.msra.mxu0 0.0
        %6332 = vmatprep.subr.mxu0 0.0
        %6333 = vmatpush2.msra.mxu0 0.0
        %6334 = vmatprep.mubr.f32.mxu0 0.0
        %6335 = vmatmul.mubr.f32.gmra.mxu0 %v6268
        %v6336 = vpop.f32.mrf.mxu0
        %v6337 = vadd.f32 0.0, %v6336
        %v6338 = vpop.f32.mrf.mxu0
        %6339 = vdwg.mxu0
        %6340 = vrot.lane.b32.xlu0 %v4084, 16
        %v6341 = vpop.permute.xlu0 %6340
        %v6344 = vsel %vm1041, %v6263, 0
        %6346 = vmatprep.subr.mxu0 0.0
        %6347 = vmatpush1.msra.mxu0 0.0
        %6348 = vmatprep.subr.mxu0 0.0
        %6349 = vmatpush1.msra.mxu0 0.0
        %6350 = vmatprep.subr.mxu0 0.0
        %6351 = vmatpush1.msra.mxu0 0.0
        %6352 = vmatprep.subr.mxu0 0.0
        %6353 = vmatpush1.msra.mxu0 0.0
        %6354 = vmatprep.subr.mxu0 0.0
        %6355 = vmatpush1.msra.mxu0 0.0
        %6356 = vmatprep.subr.mxu0 0.0
        %6357 = vmatpush1.msra.mxu0 0.0
        %6358 = vmatprep.subr.mxu0 0.0
        %6359 = vmatpush1.msra.mxu0 0.0
        %6360 = vmatprep.subr.mxu0 0.0
        %6361 = vmatpush1.msra.mxu0 0.0
        %6362 = vmatprep.subr.mxu0 0.0
        %6363 = vmatpush1.msra.mxu0 0.0
        %6364 = vmatprep.subr.mxu0 0.0
        %6365 = vmatpush1.msra.mxu0 0.0
        %6366 = vmatprep.subr.mxu0 0.0
        %6367 = vmatpush1.msra.mxu0 0.0
        %6368 = vmatprep.subr.mxu0 0.0
        %6369 = vmatpush1.msra.mxu0 0.0
        %6370 = vmatprep.subr.mxu0 0.0
        %6371 = vmatpush1.msra.mxu0 0.0
        %6372 = vmatprep.subr.mxu0 0.0
        %6373 = vmatpush1.msra.mxu0 0.0
        %6374 = vmatprep.subr.mxu0 0.0
        %6375 = vmatpush1.msra.mxu0 0.0
        %6376 = vmatprep.subr.mxu0 0.0
        %6377 = vmatpush1.msra.mxu0 %v6341
        %6378 = vmatprep.subr.mxu0 0.0
        %6379 = vmatpush2.msra.mxu0 0.0
        %6380 = vmatprep.subr.mxu0 0.0
        %6381 = vmatpush2.msra.mxu0 0.0
        %6382 = vmatprep.subr.mxu0 0.0
        %6383 = vmatpush2.msra.mxu0 0.0
        %6384 = vmatprep.subr.mxu0 0.0
        %6385 = vmatpush2.msra.mxu0 0.0
        %6386 = vmatprep.subr.mxu0 0.0
        %6387 = vmatpush2.msra.mxu0 0.0
        %6388 = vmatprep.subr.mxu0 0.0
        %6389 = vmatpush2.msra.mxu0 0.0
        %6390 = vmatprep.subr.mxu0 0.0
        %6391 = vmatpush2.msra.mxu0 0.0
        %6392 = vmatprep.subr.mxu0 0.0
        %6393 = vmatpush2.msra.mxu0 0.0
        %6394 = vmatprep.subr.mxu0 0.0
        %6395 = vmatpush2.msra.mxu0 0.0
        %6396 = vmatprep.subr.mxu0 0.0
        %6397 = vmatpush2.msra.mxu0 0.0
        %6398 = vmatprep.subr.mxu0 0.0
        %6399 = vmatpush2.msra.mxu0 0.0
        %6400 = vmatprep.subr.mxu0 0.0
        %6401 = vmatpush2.msra.mxu0 0.0
        %6402 = vmatprep.subr.mxu0 0.0
        %6403 = vmatpush2.msra.mxu0 0.0
        %6404 = vmatprep.subr.mxu0 0.0
        %6405 = vmatpush2.msra.mxu0 0.0
        %6406 = vmatprep.subr.mxu0 0.0
        %6407 = vmatpush2.msra.mxu0 0.0
        %6408 = vmatprep.subr.mxu0 0.0
        %6409 = vmatpush2.msra.mxu0 0.0
        %6410 = vmatprep.mubr.f32.mxu0 0.0
        %6411 = vmatmul.mubr.f32.gmra.mxu0 %v6344
        %v6412 = vpop.f32.mrf.mxu0
        %v6413 = vadd.f32 0.0, %v6412
        %v6414 = vpop.f32.mrf.mxu0
        %6415 = vdwg.mxu0
        %6416 = vrot.lane.b32.xlu0 %v3983, 72
        %v6417 = vpop.permute.xlu0 %6416
        %6418 = vrot.lane.b32.xlu0 %v4079, 72
        %v6419 = vpop.permute.xlu0 %6418
        %v6420 = vsel %vm1041, %v6417, 0
        %v6422 = vsel %vm1041, %v6419, 0
        %6424 = vmatprep.subr.mxu0 0.0
        %6425 = vmatpush1.xpose.msra.mxu0 0.0
        %6426 = vmatprep.subr.mxu0 0.0
        %6427 = vmatpush1.xpose.msra.mxu0 0.0
        %6428 = vmatprep.subr.mxu0 0.0
        %6429 = vmatpush1.xpose.msra.mxu0 0.0
        %6430 = vmatprep.subr.mxu0 0.0
        %6431 = vmatpush1.xpose.msra.mxu0 0.0
        %6432 = vmatprep.subr.mxu0 0.0
        %6433 = vmatpush1.xpose.msra.mxu0 0.0
        %6434 = vmatprep.subr.mxu0 0.0
        %6435 = vmatpush1.xpose.msra.mxu0 0.0
        %6436 = vmatprep.subr.mxu0 0.0
        %6437 = vmatpush1.xpose.msra.mxu0 0.0
        %6438 = vmatprep.subr.mxu0 0.0
        %6439 = vmatpush1.xpose.msra.mxu0 0.0
        %6440 = vmatprep.subr.mxu0 0.0
        %6441 = vmatpush1.xpose.msra.mxu0 0.0
        %6442 = vmatprep.subr.mxu0 0.0
        %6443 = vmatpush1.xpose.msra.mxu0 0.0
        %6444 = vmatprep.subr.mxu0 0.0
        %6445 = vmatpush1.xpose.msra.mxu0 0.0
        %6446 = vmatprep.subr.mxu0 0.0
        %6447 = vmatpush1.xpose.msra.mxu0 0.0
        %6448 = vmatprep.subr.mxu0 0.0
        %6449 = vmatpush1.xpose.msra.mxu0 0.0
        %6450 = vmatprep.subr.mxu0 0.0
        %6451 = vmatpush1.xpose.msra.mxu0 0.0
        %6452 = vmatprep.subr.mxu0 0.0
        %6453 = vmatpush1.xpose.msra.mxu0 0.0
        %6454 = vmatprep.subr.mxu0 0.0
        %6455 = vmatpush1.xpose.msra.mxu0 %v6422
        %6456 = vmatprep.subr.mxu0 0.0
        %6457 = vmatpush2.xpose.msra.mxu0 0.0
        %6458 = vmatprep.subr.mxu0 0.0
        %6459 = vmatpush2.xpose.msra.mxu0 0.0
        %6460 = vmatprep.subr.mxu0 0.0
        %6461 = vmatpush2.xpose.msra.mxu0 0.0
        %6462 = vmatprep.subr.mxu0 0.0
        %6463 = vmatpush2.xpose.msra.mxu0 0.0
        %6464 = vmatprep.subr.mxu0 0.0
        %6465 = vmatpush2.xpose.msra.mxu0 0.0
        %6466 = vmatprep.subr.mxu0 0.0
        %6467 = vmatpush2.xpose.msra.mxu0 0.0
        %6468 = vmatprep.subr.mxu0 0.0
        %6469 = vmatpush2.xpose.msra.mxu0 0.0
        %6470 = vmatprep.subr.mxu0 0.0
        %6471 = vmatpush2.xpose.msra.mxu0 0.0
        %6472 = vmatprep.subr.mxu0 0.0
        %6473 = vmatpush2.xpose.msra.mxu0 0.0
        %6474 = vmatprep.subr.mxu0 0.0
        %6475 = vmatpush2.xpose.msra.mxu0 0.0
        %6476 = vmatprep.subr.mxu0 0.0
        %6477 = vmatpush2.xpose.msra.mxu0 0.0
        %6478 = vmatprep.subr.mxu0 0.0
        %6479 = vmatpush2.xpose.msra.mxu0 0.0
        %6480 = vmatprep.subr.mxu0 0.0
        %6481 = vmatpush2.xpose.msra.mxu0 0.0
        %6482 = vmatprep.subr.mxu0 0.0
        %6483 = vmatpush2.xpose.msra.mxu0 0.0
        %6484 = vmatprep.subr.mxu0 0.0
        %6485 = vmatpush2.xpose.msra.mxu0 0.0
        %6486 = vmatprep.subr.mxu0 0.0
        %6487 = vmatpush2.xpose.msra.mxu0 0.0
        %6488 = vmatprep.mubr.f32.mxu0 0.0
        %6489 = vmatmul.mubr.f32.gmra.mxu0 %v6420
        %v6490 = vpop.f32.mrf.mxu0
        %v6491 = vadd.f32 0.0, %v6490
        %v6492 = vpop.f32.mrf.mxu0
        %6493 = vdwg.mxu0
        %6494 = vrot.lane.b32.xlu0 %v3988, 72
        %v6495 = vpop.permute.xlu0 %6494
        %6496 = vrot.lane.b32.xlu0 %v4084, 72
        %v6497 = vpop.permute.xlu0 %6496
        %v6498 = vsel %vm1041, %v6495, 0
        %v6500 = vsel %vm1041, %v6497, 0
        %6502 = vmatprep.subr.mxu0 0.0
        %6503 = vmatpush1.xpose.msra.mxu0 0.0
        %6504 = vmatprep.subr.mxu0 0.0
        %6505 = vmatpush1.xpose.msra.mxu0 0.0
        %6506 = vmatprep.subr.mxu0 0.0
        %6507 = vmatpush1.xpose.msra.mxu0 0.0
        %6508 = vmatprep.subr.mxu0 0.0
        %6509 = vmatpush1.xpose.msra.mxu0 0.0
        %6510 = vmatprep.subr.mxu0 0.0
        %6511 = vmatpush1.xpose.msra.mxu0 0.0
        %6512 = vmatprep.subr.mxu0 0.0
        %6513 = vmatpush1.xpose.msra.mxu0 0.0
        %6514 = vmatprep.subr.mxu0 0.0
        %6515 = vmatpush1.xpose.msra.mxu0 0.0
        %6516 = vmatprep.subr.mxu0 0.0
        %6517 = vmatpush1.xpose.msra.mxu0 0.0
        %6518 = vmatprep.subr.mxu0 0.0
        %6519 = vmatpush1.xpose.msra.mxu0 0.0
        %6520 = vmatprep.subr.mxu0 0.0
        %6521 = vmatpush1.xpose.msra.mxu0 0.0
        %6522 = vmatprep.subr.mxu0 0.0
        %6523 = vmatpush1.xpose.msra.mxu0 0.0
        %6524 = vmatprep.subr.mxu0 0.0
        %6525 = vmatpush1.xpose.msra.mxu0 0.0
        %6526 = vmatprep.subr.mxu0 0.0
        %6527 = vmatpush1.xpose.msra.mxu0 0.0
        %6528 = vmatprep.subr.mxu0 0.0
        %6529 = vmatpush1.xpose.msra.mxu0 0.0
        %6530 = vmatprep.subr.mxu0 0.0
        %6531 = vmatpush1.xpose.msra.mxu0 0.0
        %6532 = vmatprep.subr.mxu0 0.0
        %6533 = vmatpush1.xpose.msra.mxu0 %v6500
        %6534 = vmatprep.subr.mxu0 0.0
        %6535 = vmatpush2.xpose.msra.mxu0 0.0
        %6536 = vmatprep.subr.mxu0 0.0
        %6537 = vmatpush2.xpose.msra.mxu0 0.0
        %6538 = vmatprep.subr.mxu0 0.0
        %6539 = vmatpush2.xpose.msra.mxu0 0.0
        %6540 = vmatprep.subr.mxu0 0.0
        %6541 = vmatpush2.xpose.msra.mxu0 0.0
        %6542 = vmatprep.subr.mxu0 0.0
        %6543 = vmatpush2.xpose.msra.mxu0 0.0
        %6544 = vmatprep.subr.mxu0 0.0
        %6545 = vmatpush2.xpose.msra.mxu0 0.0
        %6546 = vmatprep.subr.mxu0 0.0
        %6547 = vmatpush2.xpose.msra.mxu0 0.0
        %6548 = vmatprep.subr.mxu0 0.0
        %6549 = vmatpush2.xpose.msra.mxu0 0.0
        %6550 = vmatprep.subr.mxu0 0.0
        %6551 = vmatpush2.xpose.msra.mxu0 0.0
        %6552 = vmatprep.subr.mxu0 0.0
        %6553 = vmatpush2.xpose.msra.mxu0 0.0
        %6554 = vmatprep.subr.mxu0 0.0
        %6555 = vmatpush2.xpose.msra.mxu0 0.0
        %6556 = vmatprep.subr.mxu0 0.0
        %6557 = vmatpush2.xpose.msra.mxu0 0.0
        %6558 = vmatprep.subr.mxu0 0.0
        %6559 = vmatpush2.xpose.msra.mxu0 0.0
        %6560 = vmatprep.subr.mxu0 0.0
        %6561 = vmatpush2.xpose.msra.mxu0 0.0
        %6562 = vmatprep.subr.mxu0 0.0
        %6563 = vmatpush2.xpose.msra.mxu0 0.0
        %6564 = vmatprep.subr.mxu0 0.0
        %6565 = vmatpush2.xpose.msra.mxu0 0.0
        %6566 = vmatprep.mubr.f32.mxu0 0.0
        %6567 = vmatmul.mubr.f32.gmra.mxu0 %v6498
        %v6568 = vpop.f32.mrf.mxu0
        %v6569 = vadd.f32 0.0, %v6568
        %v6570 = vpop.f32.mrf.mxu0
        %6571 = vdwg.mxu0
        %v6572 = vmul.f32 %v6491, 0.35355338
        %v6573 = vmul.f32 %v6569, 0.35355338
        %v6574 = vsel %vm1041, %v6572, -inf
        %6575 = vmax.xlane.f32.xlu0 %v6574
        %v6576 = vpop.xlane.xlu0 %6575
        %v6577 = vsel %vm1041, %v6573, -inf
        %6578 = vmax.xlane.f32.xlu0 %v6577
        %v6579 = vpop.xlane.xlu0 %6578
        %v6580 = vsub.f32 %v6572, %v6576
        %v6581 = vsub.f32 %v6573, %v6579
        %v6582 = vmul.f32 %v6580, 1.442695
        %v6583 = vpow.pop %v6582
        %v6584 = vmul.f32 %v6581, 1.442695
        %v6585 = vpow.pop %v6584
        %v6586 = vsel %vm1041, %v6583, 0.0
        %6587 = vadd.xlane.f32.xlu0 %v6586
        %v6588 = vpop.xlane.xlu0 %6587
        %v6589 = vsel %vm1041, %v6585, 0.0
        %6590 = vadd.xlane.f32.xlu0 %v6589
        %v6591 = vpop.xlane.xlu0 %6590
        %v6592 = vrcp.pop %v6588
        %v6593 = vrcp.pop %v6591
        %v6594 = vmul.f32 %v6583, %v6592
        %v6595 = vmul.f32 %v6585, %v6593
        %6596 = vrot.lane.b32.xlu0 %v4079, 8
        %v6597 = vpop.permute.xlu0 %6596
        %v6600 = vsel %vm1041, %v6594, 0
        %6602 = vmatprep.subr.mxu0 0.0
        %6603 = vmatpush1.msra.mxu0 0.0
        %6604 = vmatprep.subr.mxu0 0.0
        %6605 = vmatpush1.msra.mxu0 0.0
        %6606 = vmatprep.subr.mxu0 0.0
        %6607 = vmatpush1.msra.mxu0 0.0
        %6608 = vmatprep.subr.mxu0 0.0
        %6609 = vmatpush1.msra.mxu0 0.0
        %6610 = vmatprep.subr.mxu0 0.0
        %6611 = vmatpush1.msra.mxu0 0.0
        %6612 = vmatprep.subr.mxu0 0.0
        %6613 = vmatpush1.msra.mxu0 0.0
        %6614 = vmatprep.subr.mxu0 0.0
        %6615 = vmatpush1.msra.mxu0 0.0
        %6616 = vmatprep.subr.mxu0 0.0
        %6617 = vmatpush1.msra.mxu0 0.0
        %6618 = vmatprep.subr.mxu0 0.0
        %6619 = vmatpush1.msra.mxu0 0.0
        %6620 = vmatprep.subr.mxu0 0.0
        %6621 = vmatpush1.msra.mxu0 0.0
        %6622 = vmatprep.subr.mxu0 0.0
        %6623 = vmatpush1.msra.mxu0 0.0
        %6624 = vmatprep.subr.mxu0 0.0
        %6625 = vmatpush1.msra.mxu0 0.0
        %6626 = vmatprep.subr.mxu0 0.0
        %6627 = vmatpush1.msra.mxu0 0.0
        %6628 = vmatprep.subr.mxu0 0.0
        %6629 = vmatpush1.msra.mxu0 0.0
        %6630 = vmatprep.subr.mxu0 0.0
        %6631 = vmatpush1.msra.mxu0 0.0
        %6632 = vmatprep.subr.mxu0 0.0
        %6633 = vmatpush1.msra.mxu0 %v6597
        %6634 = vmatprep.subr.mxu0 0.0
        %6635 = vmatpush2.msra.mxu0 0.0
        %6636 = vmatprep.subr.mxu0 0.0
        %6637 = vmatpush2.msra.mxu0 0.0
        %6638 = vmatprep.subr.mxu0 0.0
        %6639 = vmatpush2.msra.mxu0 0.0
        %6640 = vmatprep.subr.mxu0 0.0
        %6641 = vmatpush2.msra.mxu0 0.0
        %6642 = vmatprep.subr.mxu0 0.0
        %6643 = vmatpush2.msra.mxu0 0.0
        %6644 = vmatprep.subr.mxu0 0.0
        %6645 = vmatpush2.msra.mxu0 0.0
        %6646 = vmatprep.subr.mxu0 0.0
        %6647 = vmatpush2.msra.mxu0 0.0
        %6648 = vmatprep.subr.mxu0 0.0
        %6649 = vmatpush2.msra.mxu0 0.0
        %6650 = vmatprep.subr.mxu0 0.0
        %6651 = vmatpush2.msra.mxu0 0.0
        %6652 = vmatprep.subr.mxu0 0.0
        %6653 = vmatpush2.msra.mxu0 0.0
        %6654 = vmatprep.subr.mxu0 0.0
        %6655 = vmatpush2.msra.mxu0 0.0
        %6656 = vmatprep.subr.mxu0 0.0
        %6657 = vmatpush2.msra.mxu0 0.0
        %6658 = vmatprep.subr.mxu0 0.0
        %6659 = vmatpush2.msra.mxu0 0.0
        %6660 = vmatprep.subr.mxu0 0.0
        %6661 = vmatpush2.msra.mxu0 0.0
        %6662 = vmatprep.subr.mxu0 0.0
        %6663 = vmatpush2.msra.mxu0 0.0
        %6664 = vmatprep.subr.mxu0 0.0
        %6665 = vmatpush2.msra.mxu0 0.0
        %6666 = vmatprep.mubr.f32.mxu0 0.0
        %6667 = vmatmul.mubr.f32.gmra.mxu0 %v6600
        %v6668 = vpop.f32.mrf.mxu0
        %v6669 = vadd.f32 0.0, %v6668
        %v6670 = vpop.f32.mrf.mxu0
        %6671 = vdwg.mxu0
        %6672 = vrot.lane.b32.xlu0 %v4084, 8
        %v6673 = vpop.permute.xlu0 %6672
        %v6676 = vsel %vm1041, %v6595, 0
        %6678 = vmatprep.subr.mxu0 0.0
        %6679 = vmatpush1.msra.mxu0 0.0
        %6680 = vmatprep.subr.mxu0 0.0
        %6681 = vmatpush1.msra.mxu0 0.0
        %6682 = vmatprep.subr.mxu0 0.0
        %6683 = vmatpush1.msra.mxu0 0.0
        %6684 = vmatprep.subr.mxu0 0.0
        %6685 = vmatpush1.msra.mxu0 0.0
        %6686 = vmatprep.subr.mxu0 0.0
        %6687 = vmatpush1.msra.mxu0 0.0
        %6688 = vmatprep.subr.mxu0 0.0
        %6689 = vmatpush1.msra.mxu0 0.0
        %6690 = vmatprep.subr.mxu0 0.0
        %6691 = vmatpush1.msra.mxu0 0.0
        %6692 = vmatprep.subr.mxu0 0.0
        %6693 = vmatpush1.msra.mxu0 0.0
        %6694 = vmatprep.subr.mxu0 0.0
        %6695 = vmatpush1.msra.mxu0 0.0
        %6696 = vmatprep.subr.mxu0 0.0
        %6697 = vmatpush1.msra.mxu0 0.0
        %6698 = vmatprep.subr.mxu0 0.0
        %6699 = vmatpush1.msra.mxu0 0.0
        %6700 = vmatprep.subr.mxu0 0.0
        %6701 = vmatpush1.msra.mxu0 0.0
        %6702 = vmatprep.subr.mxu0 0.0
        %6703 = vmatpush1.msra.mxu0 0.0
        %6704 = vmatprep.subr.mxu0 0.0
        %6705 = vmatpush1.msra.mxu0 0.0
        %6706 = vmatprep.subr.mxu0 0.0
        %6707 = vmatpush1.msra.mxu0 0.0
        %6708 = vmatprep.subr.mxu0 0.0
        %6709 = vmatpush1.msra.mxu0 %v6673
        %6710 = vmatprep.subr.mxu0 0.0
        %6711 = vmatpush2.msra.mxu0 0.0
        %6712 = vmatprep.subr.mxu0 0.0
        %6713 = vmatpush2.msra.mxu0 0.0
        %6714 = vmatprep.subr.mxu0 0.0
        %6715 = vmatpush2.msra.mxu0 0.0
        %6716 = vmatprep.subr.mxu0 0.0
        %6717 = vmatpush2.msra.mxu0 0.0
        %6718 = vmatprep.subr.mxu0 0.0
        %6719 = vmatpush2.msra.mxu0 0.0
        %6720 = vmatprep.subr.mxu0 0.0
        %6721 = vmatpush2.msra.mxu0 0.0
        %6722 = vmatprep.subr.mxu0 0.0
        %6723 = vmatpush2.msra.mxu0 0.0
        %6724 = vmatprep.subr.mxu0 0.0
        %6725 = vmatpush2.msra.mxu0 0.0
        %6726 = vmatprep.subr.mxu0 0.0
        %6727 = vmatpush2.msra.mxu0 0.0
        %6728 = vmatprep.subr.mxu0 0.0
        %6729 = vmatpush2.msra.mxu0 0.0
        %6730 = vmatprep.subr.mxu0 0.0
        %6731 = vmatpush2.msra.mxu0 0.0
        %6732 = vmatprep.subr.mxu0 0.0
        %6733 = vmatpush2.msra.mxu0 0.0
        %6734 = vmatprep.subr.mxu0 0.0
        %6735 = vmatpush2.msra.mxu0 0.0
        %6736 = vmatprep.subr.mxu0 0.0
        %6737 = vmatpush2.msra.mxu0 0.0
        %6738 = vmatprep.subr.mxu0 0.0
        %6739 = vmatpush2.msra.mxu0 0.0
        %6740 = vmatprep.subr.mxu0 0.0
        %6741 = vmatpush2.msra.mxu0 0.0
        %6742 = vmatprep.mubr.f32.mxu0 0.0
        %6743 = vmatmul.mubr.f32.gmra.mxu0 %v6676
        %v6744 = vpop.f32.mrf.mxu0
        %v6745 = vadd.f32 0.0, %v6744
        %v6746 = vpop.f32.mrf.mxu0
        %6747 = vdwg.mxu0
        %6750 = vrot.lane.b32.xlu0 %v4677, 8
        %v6751 = vpop.permute.xlu0 %6750
        %6752 = vrot.lane.b32.xlu0 %v4753, 8
        %v6753 = vpop.permute.xlu0 %6752
        %6758 = vrot.lane.b32.xlu0 %v5009, 16
        %v6759 = vpop.permute.xlu0 %6758
        %6760 = vrot.lane.b32.xlu0 %v5085, 16
        %v6761 = vpop.permute.xlu0 %6760
        %6766 = vrot.lane.b32.xlu0 %v5341, 24
        %v6767 = vpop.permute.xlu0 %6766
        %6768 = vrot.lane.b32.xlu0 %v5417, 24
        %v6769 = vpop.permute.xlu0 %6768
        %6774 = vrot.lane.b32.xlu0 %v5673, 32
        %v6775 = vpop.permute.xlu0 %6774
        %6776 = vrot.lane.b32.xlu0 %v5749, 32
        %v6777 = vpop.permute.xlu0 %6776
        %6782 = vrot.lane.b32.xlu0 %v6005, 40
        %v6783 = vpop.permute.xlu0 %6782
        %6784 = vrot.lane.b32.xlu0 %v6081, 40
        %v6785 = vpop.permute.xlu0 %6784
        %6790 = vrot.lane.b32.xlu0 %v6337, 48
        %v6791 = vpop.permute.xlu0 %6790
        %6792 = vrot.lane.b32.xlu0 %v6413, 48
        %v6793 = vpop.permute.xlu0 %6792
        %6798 = vrot.lane.b32.xlu0 %v6669, 56
        %v6799 = vpop.permute.xlu0 %6798
        %6800 = vrot.lane.b32.xlu0 %v6745, 56
        %v6801 = vpop.permute.xlu0 %6800
        %v6804 = vsel %vm1041, %v4345, %v6751
        %v6805 = vsel %vm1041, %v4421, %v6753
        %v6806 = vsel %vm3747, %v6804, %v6759
        %v6807 = vsel %vm3747, %v6805, %v6761
        %v6808 = vsel %vm3750, %v6806, %v6767
        %v6809 = vsel %vm3750, %v6807, %v6769
        %v6810 = vsel %vm3753, %v6808, %v6775
        %v6811 = vsel %vm3753, %v6809, %v6777
        %v6812 = vsel %vm3756, %v6810, %v6783
        %v6813 = vsel %vm3756, %v6811, %v6785
        %v6814 = vsel %vm3759, %v6812, %v6791
        %v6815 = vsel %vm3759, %v6813, %v6793
        %v6816 = vsel %vm3762, %v6814, %v6799
        %v6817 = vsel %vm3762, %v6815, %v6801
        %v6819 = vlaneseq
        %v6820 = vshrl.u32 %v6819, 7
        %v6821 = vsub.s32 0, %v6820
        %v6822 = vrot.slane %v4095, %v6821
        %v6825 = vsel %vm945, %v6816, 0
        %v6828 = vsel %vm945, %v6817, 0
        %6830 = vmatprep.subr.mxu0 0.0
        %6831 = vmatpush1.msra.mxu0 0.0
        %6832 = vmatprep.subr.mxu0 0.0
        %6833 = vmatpush1.msra.mxu0 0.0
        %6834 = vmatprep.subr.mxu0 0.0
        %6835 = vmatpush1.msra.mxu0 0.0
        %6836 = vmatprep.subr.mxu0 0.0
        %6837 = vmatpush1.msra.mxu0 0.0
        %6838 = vmatprep.subr.mxu0 0.0
        %6839 = vmatpush1.msra.mxu0 0.0
        %6840 = vmatprep.subr.mxu0 0.0
        %6841 = vmatpush1.msra.mxu0 0.0
        %6842 = vmatprep.subr.mxu0 0.0
        %6843 = vmatpush1.msra.mxu0 0.0
        %6844 = vmatprep.subr.mxu0 0.0
        %6845 = vmatpush1.msra.mxu0 0.0
        %6846 = vmatprep.subr.mxu0 0.0
        %6847 = vmatpush1.msra.mxu0 %v4094
        %6848 = vmatprep.subr.mxu0 0.0
        %6849 = vmatpush1.msra.mxu0 %v4093
        %6850 = vmatprep.subr.mxu0 0.0
        %6851 = vmatpush1.msra.mxu0 %v4092
        %6852 = vmatprep.subr.mxu0 0.0
        %6853 = vmatpush1.msra.mxu0 %v4091
        %6854 = vmatprep.subr.mxu0 0.0
        %6855 = vmatpush1.msra.mxu0 %v4090
        %6856 = vmatprep.subr.mxu0 0.0
        %6857 = vmatpush1.msra.mxu0 %v4089
        %6858 = vmatprep.subr.mxu0 0.0
        %6859 = vmatpush1.msra.mxu0 %v4088
        %6860 = vmatprep.subr.mxu0 0.0
        %6861 = vmatpush1.msra.mxu0 %v4087
        %6862 = vmatprep.subr.mxu0 0.0
        %6863 = vmatpush2.msra.mxu0 0.0
        %6864 = vmatprep.subr.mxu0 0.0
        %6865 = vmatpush2.msra.mxu0 0.0
        %6866 = vmatprep.subr.mxu0 0.0
        %6867 = vmatpush2.msra.mxu0 0.0
        %6868 = vmatprep.subr.mxu0 0.0
        %6869 = vmatpush2.msra.mxu0 0.0
        %6870 = vmatprep.subr.mxu0 0.0
        %6871 = vmatpush2.msra.mxu0 0.0
        %6872 = vmatprep.subr.mxu0 0.0
        %6873 = vmatpush2.msra.mxu0 0.0
        %6874 = vmatprep.subr.mxu0 0.0
        %6875 = vmatpush2.msra.mxu0 0.0
        %6876 = vmatprep.subr.mxu0 0.0
        %6877 = vmatpush2.msra.mxu0 0.0
        %6878 = vmatprep.subr.mxu0 0.0
        %6879 = vmatpush2.msra.mxu0 0.0
        %6880 = vmatprep.subr.mxu0 0.0
        %6881 = vmatpush2.msra.mxu0 0.0
        %6882 = vmatprep.subr.mxu0 0.0
        %6883 = vmatpush2.msra.mxu0 0.0
        %6884 = vmatprep.subr.mxu0 0.0
        %6885 = vmatpush2.msra.mxu0 0.0
        %6886 = vmatprep.subr.mxu0 0.0
        %6887 = vmatpush2.msra.mxu0 0.0
        %6888 = vmatprep.subr.mxu0 0.0
        %6889 = vmatpush2.msra.mxu0 0.0
        %6890 = vmatprep.subr.mxu0 0.0
        %6891 = vmatpush2.msra.mxu0 0.0
        %6892 = vmatprep.subr.mxu0 0.0
        %6893 = vmatpush2.msra.mxu0 0.0
        %6894 = vmatprep.mubr.f32.mxu0 0.0
        %6895 = vmatmul.mubr.f32.gmra.mxu0 %v6825
        %v6896 = vpop.f32.mrf.mxu0
        %v6897 = vadd.f32 %v6822, %v6896
        %v6898 = vpop.f32.mrf.mxu0
        %6899 = vmatprep.mubr.f32.mxu0 0.0
        %6900 = vmatmul.mubr.f32.gmra.mxu0 %v6828
        %v6901 = vpop.f32.mrf.mxu0
        %v6902 = vadd.f32 %v6822, %v6901
        %v6903 = vpop.f32.mrf.mxu0
        %6904 = vdwg.mxu0
        %v6905 = vadd.f32 %v3891, %v6897
        %v6906 = vadd.f32 %v3892, %v6902
        %v6907 = vsel %vm945, %v6905, 0.0
        %6908 = vadd.xlane.f32.xlu0 %v6907
        %v6909 = vpop.xlane.xlu0 %6908
        %v6910 = vsel %vm945, %v6906, 0.0
        %6911 = vadd.xlane.f32.xlu0 %v6910
        %v6912 = vpop.xlane.xlu0 %6911
        %v6913 = vmul.f32 %v6909, %v3860
        %v6914 = vmul.f32 %v6912, %v3860
        %v6915 = vsub.f32 %v6905, %v6913
        %v6916 = vsub.f32 %v6906, %v6914
        %v6917 = vmul.f32 %v6915, %v6915
        %v6918 = vmul.f32 %v6916, %v6916
        %v6919 = vsel %vm945, %v6917, 0.0
        %6920 = vadd.xlane.f32.xlu0 %v6919
        %v6921 = vpop.xlane.xlu0 %6920
        %v6922 = vsel %vm945, %v6918, 0.0
        %6923 = vadd.xlane.f32.xlu0 %v6922
        %v6924 = vpop.xlane.xlu0 %6923
        %v6925 = vmul.f32 %v6921, %v3860
        %v6926 = vmul.f32 %v6924, %v3860
        %v6927 = vadd.f32 %v6925, 1e-05
        %v6928 = vadd.f32 %v6926, 1e-05
        %v6929 = vrsqrt.pop %v6927
        %v6930 = vrsqrt.pop %v6928
        %v6931 = vmul.f32 %v6915, %v6929
        %v6932 = vmul.f32 %v6916, %v6930
        %v6933 = vlaneseq
        %v6934 = vshrl.u32 %v6933, 7
        %v6935 = vsub.s32 1, %v6934
        %v6936 = vrot.slane %v913, %v6935
        %v6937 = vmul.f32 %v6931, %v6936
        %v6938 = vmul.f32 %v6932, %v6936
        %v6939 = vlaneseq
        %v6940 = vshrl.u32 %v6939, 7
        %v6941 = vsub.s32 1, %v6940
        %v6942 = vrot.slane %v914, %v6941
        %v6943 = vadd.f32 %v6937, %v6942
        %v6944 = vadd.f32 %v6938, %v6942
        %v6945 = vld [vmem:[%s880] sm:$0xff]
        %v6946 = vld [vmem:[%s880 + $0x8] sm:$0xff]
        %v6947 = vld [vmem:[%s880 + $0x10] sm:$0xff]
        %v6948 = vld [vmem:[%s880 + $0x18] sm:$0xff]
        %v6949 = vld [vmem:[%s880 + $0x20] sm:$0xff]
        %v6950 = vld [vmem:[%s880 + $0x28] sm:$0xff]
        %v6951 = vld [vmem:[%s880 + $0x30] sm:$0xff]
        %v6952 = vld [vmem:[%s880 + $0x38] sm:$0xff]
        %v6953 = vld [vmem:[%s880 + $0x40] sm:$0xff]
        %v6954 = vld [vmem:[%s880 + $0x48] sm:$0xff]
        %v6955 = vld [vmem:[%s880 + $0x50] sm:$0xff]
        %v6956 = vld [vmem:[%s880 + $0x58] sm:$0xff]
        %v6957 = vld [vmem:[%s880 + $0x60] sm:$0xff]
        %v6958 = vld [vmem:[%s880 + $0x68] sm:$0xff]
        %v6959 = vld [vmem:[%s880 + $0x70] sm:$0xff]
        %v6960 = vld [vmem:[%s880 + $0x78] sm:$0xff]
        %v6961 = vld [vmem:[%s880 + $0x80] sm:$0xff]
        %v6962 = vld [vmem:[%s880 + $0x88] sm:$0xff]
        %v6963 = vld [vmem:[%s880 + $0x90] sm:$0xff]
        %v6964 = vld [vmem:[%s880 + $0x98] sm:$0xff]
        %v6965 = vld [vmem:[%s880 + $0xa0] sm:$0xff]
        %v6966 = vld [vmem:[%s880 + $0xa8] sm:$0xff]
        %v6967 = vld [vmem:[%s880 + $0xb0] sm:$0xff]
        %v6968 = vld [vmem:[%s880 + $0xb8] sm:$0xff]
        %v6969 = vld [vmem:[%s880 + $0xc0] sm:$0xff]
        %v6970 = vld [vmem:[%s880 + $0xc8] sm:$0xff]
        %v6971 = vld [vmem:[%s880 + $0xd0] sm:$0xff]
        %v6972 = vld [vmem:[%s880 + $0xd8] sm:$0xff]
        %v6973 = vld [vmem:[%s880 + $0xe0] sm:$0xff]
        %v6974 = vld [vmem:[%s880 + $0xe8] sm:$0xff]
        %v6975 = vld [vmem:[%s880 + $0xf0] sm:$0xff]
        %v6976 = vld [vmem:[%s880 + $0xf8] sm:$0xff]
        %v6977 = vld [vmem:[%s880 + $0x100] sm:$0xff]
        %v6978 = vld [vmem:[%s880 + $0x108] sm:$0xff]
        %v6979 = vld [vmem:[%s880 + $0x110] sm:$0xff]
        %v6980 = vld [vmem:[%s880 + $0x118] sm:$0xff]
        %v6981 = vld [vmem:[%s880 + $0x120] sm:$0xff]
        %v6982 = vld [vmem:[%s880 + $0x128] sm:$0xff]
        %v6983 = vld [vmem:[%s880 + $0x130] sm:$0xff]
        %v6984 = vld [vmem:[%s880 + $0x138] sm:$0xff]
        %v6985 = vld [vmem:[%s880 + $0x140] sm:$0xff]
        %v6986 = vld [vmem:[%s880 + $0x148] sm:$0xff]
        %v6987 = vld [vmem:[%s880 + $0x150] sm:$0xff]
        %v6988 = vld [vmem:[%s880 + $0x158] sm:$0xff]
        %v6989 = vld [vmem:[%s880 + $0x160] sm:$0xff]
        %v6990 = vld [vmem:[%s880 + $0x168] sm:$0xff]
        %v6991 = vld [vmem:[%s880 + $0x170] sm:$0xff]
        %v6992 = vld [vmem:[%s880 + $0x178] sm:$0xff]
        %v6993 = vld [vmem:[%s880 + $0x180] sm:$0xff]
        %v6994 = vld [vmem:[%s880 + $0x188] sm:$0xff]
        %v6995 = vld [vmem:[%s880 + $0x190] sm:$0xff]
        %v6996 = vld [vmem:[%s880 + $0x198] sm:$0xff]
        %v6997 = vld [vmem:[%s880 + $0x1a0] sm:$0xff]
        %v6998 = vld [vmem:[%s880 + $0x1a8] sm:$0xff]
        %v6999 = vld [vmem:[%s880 + $0x1b0] sm:$0xff]
        %v7000 = vld [vmem:[%s880 + $0x1b8] sm:$0xff]
        %v7001 = vld [vmem:[%s880 + $0x1c0] sm:$0xff]
        %v7002 = vld [vmem:[%s880 + $0x1c8] sm:$0xff]
        %v7003 = vld [vmem:[%s880 + $0x1d0] sm:$0xff]
        %v7004 = vld [vmem:[%s880 + $0x1d8] sm:$0xff]
        %v7005 = vld [vmem:[%s880 + $0x1e0] sm:$0xff]
        %v7006 = vld [vmem:[%s880 + $0x1e8] sm:$0xff]
        %v7007 = vld [vmem:[%s880 + $0x1f0] sm:$0xff]
        %v7008 = vld [vmem:[%s880 + $0x1f8] sm:$0xff]
        %v7009 = vld [vmem:[%s880 + $0x200] sm:$0xff]
        %v7010 = vld [vmem:[%s880 + $0x208] sm:$0xff]
        %v7011 = vld [vmem:[%s880 + $0x210] sm:$0xff]
        %v7012 = vld [vmem:[%s880 + $0x218] sm:$0xff]
        %v7013 = vld [vmem:[%s880 + $0x220] sm:$0xff]
        %v7014 = vld [vmem:[%s880 + $0x228] sm:$0xff]
        %v7015 = vld [vmem:[%s880 + $0x230] sm:$0xff]
        %v7016 = vld [vmem:[%s880 + $0x238] sm:$0xff]
        %v7017 = vld [vmem:[%s880 + $0x240] sm:$0xff]
        %v7018 = vld [vmem:[%s880 + $0x248] sm:$0xff]
        %v7019 = vld [vmem:[%s880 + $0x250] sm:$0xff]
        %v7020 = vld [vmem:[%s880 + $0x258] sm:$0xff]
        %v7021 = vld [vmem:[%s880 + $0x260] sm:$0xff]
        %v7022 = vld [vmem:[%s880 + $0x268] sm:$0xff]
        %v7023 = vld [vmem:[%s880 + $0x270] sm:$0xff]
        %v7024 = vld [vmem:[%s880 + $0x278] sm:$0xff]
        %v7025 = vld [vmem:[%s880 + $0x280] sm:$0xff]
        %v7026 = vld [vmem:[%s880 + $0x288] sm:$0xff]
        %v7027 = vld [vmem:[%s880 + $0x290] sm:$0xff]
        %v7028 = vld [vmem:[%s880 + $0x298] sm:$0xff]
        %v7029 = vld [vmem:[%s880 + $0x2a0] sm:$0xff]
        %v7030 = vld [vmem:[%s880 + $0x2a8] sm:$0xff]
        %v7031 = vld [vmem:[%s880 + $0x2b0] sm:$0xff]
        %v7032 = vld [vmem:[%s880 + $0x2b8] sm:$0xff]
        %v7033 = vld [vmem:[%s880 + $0x2c0] sm:$0xff]
        %v7034 = vld [vmem:[%s880 + $0x2c8] sm:$0xff]
        %v7035 = vld [vmem:[%s880 + $0x2d0] sm:$0xff]
        %v7036 = vld [vmem:[%s880 + $0x2d8] sm:$0xff]
        %v7037 = vld [vmem:[%s880 + $0x2e0] sm:$0xff]
        %v7038 = vld [vmem:[%s880 + $0x2e8] sm:$0xff]
        %v7039 = vld [vmem:[%s880 + $0x2f0] sm:$0xff]
        %v7040 = vld [vmem:[%s880 + $0x2f8] sm:$0xff]
        %v7041 = vld [vmem:[%s880 + $0x300] sm:$0xff]
        %v7042 = vld [vmem:[%s880 + $0x308] sm:$0xff]
        %v7043 = vld [vmem:[%s880 + $0x310] sm:$0xff]
        %v7044 = vld [vmem:[%s880 + $0x318] sm:$0xff]
        %v7045 = vld [vmem:[%s880 + $0x320] sm:$0xff]
        %v7046 = vld [vmem:[%s880 + $0x328] sm:$0xff]
        %v7047 = vld [vmem:[%s880 + $0x330] sm:$0xff]
        %v7048 = vld [vmem:[%s880 + $0x338] sm:$0xff]
        %v7049 = vld [vmem:[%s880 + $0x340] sm:$0xff]
        %v7050 = vld [vmem:[%s880 + $0x348] sm:$0xff]
        %v7051 = vld [vmem:[%s880 + $0x350] sm:$0xff]
        %v7052 = vld [vmem:[%s880 + $0x358] sm:$0xff]
        %v7053 = vld [vmem:[%s880 + $0x360] sm:$0xff]
        %v7054 = vld [vmem:[%s880 + $0x368] sm:$0xff]
        %v7055 = vld [vmem:[%s880 + $0x370] sm:$0xff]
        %v7056 = vld [vmem:[%s880 + $0x378] sm:$0xff]
        %v7057 = vld [vmem:[%s880 + $0x380] sm:$0xff]
        %v7058 = vld [vmem:[%s880 + $0x388] sm:$0xff]
        %v7059 = vld [vmem:[%s880 + $0x390] sm:$0xff]
        %v7060 = vld [vmem:[%s880 + $0x398] sm:$0xff]
        %v7061 = vld [vmem:[%s880 + $0x3a0] sm:$0xff]
        %v7062 = vld [vmem:[%s880 + $0x3a8] sm:$0xff]
        %v7063 = vld [vmem:[%s880 + $0x3b0] sm:$0xff]
        %v7064 = vld [vmem:[%s880 + $0x3b8] sm:$0xff]
        %v7065 = vld [vmem:[%s880 + $0x3c0] sm:$0xff]
        %v7066 = vld [vmem:[%s880 + $0x3c8] sm:$0xff]
        %v7067 = vld [vmem:[%s880 + $0x3d0] sm:$0xff]
        %v7068 = vld [vmem:[%s880 + $0x3d8] sm:$0xff]
        %v7069 = vld [vmem:[%s880 + $0x3e0] sm:$0xff]
        %v7070 = vld [vmem:[%s880 + $0x3e8] sm:$0xff]
        %v7071 = vld [vmem:[%s880 + $0x3f0] sm:$0xff]
        %v7072 = vld [vmem:[%s880 + $0x3f8] sm:$0xff]
        %v7073 = vld [vmem:[%s884] sm:$0xff]
        %v7074 = vld [vmem:[%s884 + $0x8] sm:$0xff]
        %v7077 = vlaneseq
        %v7078 = vshrl.u32 %v7077, 7
        %v7079 = vsub.s32 0, %v7078
        %v7080 = vrot.slane %v7073, %v7079
        %v7081 = vlaneseq
        %v7082 = vshrl.u32 %v7081, 7
        %v7083 = vsub.s32 1, %v7082
        %v7084 = vrot.slane %v7073, %v7083
        %v7085 = vlaneseq
        %v7086 = vshrl.u32 %v7085, 7
        %v7087 = vsub.s32 2, %v7086
        %v7088 = vrot.slane %v7073, %v7087
        %v7089 = vlaneseq
        %v7090 = vshrl.u32 %v7089, 7
        %v7091 = vsub.s32 3, %v7090
        %v7092 = vrot.slane %v7073, %v7091
        %v7093 = vlaneseq
        %v7094 = vshrl.u32 %v7093, 7
        %v7095 = vsub.s32 4, %v7094
        %v7096 = vrot.slane %v7073, %v7095
        %v7097 = vlaneseq
        %v7098 = vshrl.u32 %v7097, 7
        %v7099 = vsub.s32 5, %v7098
        %v7100 = vrot.slane %v7073, %v7099
        %v7101 = vlaneseq
        %v7102 = vshrl.u32 %v7101, 7
        %v7103 = vsub.s32 6, %v7102
        %v7104 = vrot.slane %v7073, %v7103
        %v7105 = vlaneseq
        %v7106 = vshrl.u32 %v7105, 7
        %v7107 = vsub.s32 7, %v7106
        %v7108 = vrot.slane %v7073, %v7107
        %v7109 = vlaneseq
        %v7110 = vshrl.u32 %v7109, 7
        %v7111 = vsub.s32 0, %v7110
        %v7112 = vrot.slane %v7074, %v7111
        %v7113 = vlaneseq
        %v7114 = vshrl.u32 %v7113, 7
        %v7115 = vsub.s32 1, %v7114
        %v7116 = vrot.slane %v7074, %v7115
        %v7117 = vlaneseq
        %v7118 = vshrl.u32 %v7117, 7
        %v7119 = vsub.s32 2, %v7118
        %v7120 = vrot.slane %v7074, %v7119
        %v7121 = vlaneseq
        %v7122 = vshrl.u32 %v7121, 7
        %v7123 = vsub.s32 3, %v7122
        %v7124 = vrot.slane %v7074, %v7123
        %v7125 = vlaneseq
        %v7126 = vshrl.u32 %v7125, 7
        %v7127 = vsub.s32 4, %v7126
        %v7128 = vrot.slane %v7074, %v7127
        %v7129 = vlaneseq
        %v7130 = vshrl.u32 %v7129, 7
        %v7131 = vsub.s32 5, %v7130
        %v7132 = vrot.slane %v7074, %v7131
        %v7133 = vlaneseq
        %v7134 = vshrl.u32 %v7133, 7
        %v7135 = vsub.s32 6, %v7134
        %v7136 = vrot.slane %v7074, %v7135
        %v7137 = vlaneseq
        %v7138 = vshrl.u32 %v7137, 7
        %v7139 = vsub.s32 7, %v7138
        %v7140 = vrot.slane %v7074, %v7139
        %v7158 = vsel %vm945, %v6943, 0
        %v7161 = vsel %vm945, %v6944, 0
        %7163 = vmatprep.subr.mxu0 0.0
        %7164 = vmatpush1.msra.mxu0 0.0
        %7165 = vmatprep.subr.mxu0 0.0
        %7166 = vmatpush1.msra.mxu0 0.0
        %7167 = vmatprep.subr.mxu0 0.0
        %7168 = vmatpush1.msra.mxu0 0.0
        %7169 = vmatprep.subr.mxu0 0.0
        %7170 = vmatpush1.msra.mxu0 0.0
        %7171 = vmatprep.subr.mxu0 0.0
        %7172 = vmatpush1.msra.mxu0 0.0
        %7173 = vmatprep.subr.mxu0 0.0
        %7174 = vmatpush1.msra.mxu0 0.0
        %7175 = vmatprep.subr.mxu0 0.0
        %7176 = vmatpush1.msra.mxu0 0.0
        %7177 = vmatprep.subr.mxu0 0.0
        %7178 = vmatpush1.msra.mxu0 0.0
        %7179 = vmatprep.subr.mxu0 %v7058
        %7180 = vmatpush1.msra.mxu0 %v7057
        %7181 = vmatprep.subr.mxu0 %v7042
        %7182 = vmatpush1.msra.mxu0 %v7041
        %7183 = vmatprep.subr.mxu0 %v7026
        %7184 = vmatpush1.msra.mxu0 %v7025
        %7185 = vmatprep.subr.mxu0 %v7010
        %7186 = vmatpush1.msra.mxu0 %v7009
        %7187 = vmatprep.subr.mxu0 %v6994
        %7188 = vmatpush1.msra.mxu0 %v6993
        %7189 = vmatprep.subr.mxu0 %v6978
        %7190 = vmatpush1.msra.mxu0 %v6977
        %7191 = vmatprep.subr.mxu0 %v6962
        %7192 = vmatpush1.msra.mxu0 %v6961
        %7193 = vmatprep.subr.mxu0 %v6946
        %7194 = vmatpush1.msra.mxu0 %v6945
        %7195 = vmatprep.subr.mxu0 0.0
        %7196 = vmatpush2.msra.mxu0 0.0
        %7197 = vmatprep.subr.mxu0 0.0
        %7198 = vmatpush2.msra.mxu0 0.0
        %7199 = vmatprep.subr.mxu0 0.0
        %7200 = vmatpush2.msra.mxu0 0.0
        %7201 = vmatprep.subr.mxu0 0.0
        %7202 = vmatpush2.msra.mxu0 0.0
        %7203 = vmatprep.subr.mxu0 0.0
        %7204 = vmatpush2.msra.mxu0 0.0
        %7205 = vmatprep.subr.mxu0 0.0
        %7206 = vmatpush2.msra.mxu0 0.0
        %7207 = vmatprep.subr.mxu0 0.0
        %7208 = vmatpush2.msra.mxu0 0.0
        %7209 = vmatprep.subr.mxu0 0.0
        %7210 = vmatpush2.msra.mxu0 0.0
        %7211 = vmatprep.subr.mxu0 0.0
        %7212 = vmatpush2.msra.mxu0 0.0
        %7213 = vmatprep.subr.mxu0 0.0
        %7214 = vmatpush2.msra.mxu0 0.0
        %7215 = vmatprep.subr.mxu0 0.0
        %7216 = vmatpush2.msra.mxu0 0.0
        %7217 = vmatprep.subr.mxu0 0.0
        %7218 = vmatpush2.msra.mxu0 0.0
        %7219 = vmatprep.subr.mxu0 0.0
        %7220 = vmatpush2.msra.mxu0 0.0
        %7221 = vmatprep.subr.mxu0 0.0
        %7222 = vmatpush2.msra.mxu0 0.0
        %7223 = vmatprep.subr.mxu0 0.0
        %7224 = vmatpush2.msra.mxu0 0.0
        %7225 = vmatprep.subr.mxu0 0.0
        %7226 = vmatpush2.msra.mxu0 0.0
        %7227 = vmatprep.mubr.f32.mxu0 0.0
        %7228 = vmatmul.mubr.f32.gmra.mxu0 %v7158
        %v7229 = vpop.f32.mrf.mxu0
        %v7230 = vadd.f32 %v7080, %v7229
        %v7231 = vpop.f32.mrf.mxu0
        %v7232 = vadd.f32 %v7084, %v7231
        %7233 = vmatprep.mubr.f32.mxu0 0.0
        %7234 = vmatmul.mubr.f32.gmra.mxu0 %v7161
        %v7235 = vpop.f32.mrf.mxu0
        %v7236 = vadd.f32 %v7080, %v7235
        %v7237 = vpop.f32.mrf.mxu0
        %v7238 = vadd.f32 %v7084, %v7237
        %7239 = vdwg.mxu0
        %7240 = vmatprep.subr.mxu0 0.0
        %7241 = vmatpush1.msra.mxu0 0.0
        %7242 = vmatprep.subr.mxu0 0.0
        %7243 = vmatpush1.msra.mxu0 0.0
        %7244 = vmatprep.subr.mxu0 0.0
        %7245 = vmatpush1.msra.mxu0 0.0
        %7246 = vmatprep.subr.mxu0 0.0
        %7247 = vmatpush1.msra.mxu0 0.0
        %7248 = vmatprep.subr.mxu0 0.0
        %7249 = vmatpush1.msra.mxu0 0.0
        %7250 = vmatprep.subr.mxu0 0.0
        %7251 = vmatpush1.msra.mxu0 0.0
        %7252 = vmatprep.subr.mxu0 0.0
        %7253 = vmatpush1.msra.mxu0 0.0
        %7254 = vmatprep.subr.mxu0 0.0
        %7255 = vmatpush1.msra.mxu0 0.0
        %7256 = vmatprep.subr.mxu0 %v7060
        %7257 = vmatpush1.msra.mxu0 %v7059
        %7258 = vmatprep.subr.mxu0 %v7044
        %7259 = vmatpush1.msra.mxu0 %v7043
        %7260 = vmatprep.subr.mxu0 %v7028
        %7261 = vmatpush1.msra.mxu0 %v7027
        %7262 = vmatprep.subr.mxu0 %v7012
        %7263 = vmatpush1.msra.mxu0 %v7011
        %7264 = vmatprep.subr.mxu0 %v6996
        %7265 = vmatpush1.msra.mxu0 %v6995
        %7266 = vmatprep.subr.mxu0 %v6980
        %7267 = vmatpush1.msra.mxu0 %v6979
        %7268 = vmatprep.subr.mxu0 %v6964
        %7269 = vmatpush1.msra.mxu0 %v6963
        %7270 = vmatprep.subr.mxu0 %v6948
        %7271 = vmatpush1.msra.mxu0 %v6947
        %7272 = vmatprep.subr.mxu0 0.0
        %7273 = vmatpush2.msra.mxu0 0.0
        %7274 = vmatprep.subr.mxu0 0.0
        %7275 = vmatpush2.msra.mxu0 0.0
        %7276 = vmatprep.subr.mxu0 0.0
        %7277 = vmatpush2.msra.mxu0 0.0
        %7278 = vmatprep.subr.mxu0 0.0
        %7279 = vmatpush2.msra.mxu0 0.0
        %7280 = vmatprep.subr.mxu0 0.0
        %7281 = vmatpush2.msra.mxu0 0.0
        %7282 = vmatprep.subr.mxu0 0.0
        %7283 = vmatpush2.msra.mxu0 0.0
        %7284 = vmatprep.subr.mxu0 0.0
        %7285 = vmatpush2.msra.mxu0 0.0
        %7286 = vmatprep.subr.mxu0 0.0
        %7287 = vmatpush2.msra.mxu0 0.0
        %7288 = vmatprep.subr.mxu0 0.0
        %7289 = vmatpush2.msra.mxu0 0.0
        %7290 = vmatprep.subr.mxu0 0.0
        %7291 = vmatpush2.msra.mxu0 0.0
        %7292 = vmatprep.subr.mxu0 0.0
        %7293 = vmatpush2.msra.mxu0 0.0
        %7294 = vmatprep.subr.mxu0 0.0
        %7295 = vmatpush2.msra.mxu0 0.0
        %7296 = vmatprep.subr.mxu0 0.0
        %7297 = vmatpush2.msra.mxu0 0.0
        %7298 = vmatprep.subr.mxu0 0.0
        %7299 = vmatpush2.msra.mxu0 0.0
        %7300 = vmatprep.subr.mxu0 0.0
        %7301 = vmatpush2.msra.mxu0 0.0
        %7302 = vmatprep.subr.mxu0 0.0
        %7303 = vmatpush2.msra.mxu0 0.0
        %7304 = vmatprep.mubr.f32.mxu0 0.0
        %7305 = vmatmul.mubr.f32.gmra.mxu0 %v7158
        %v7306 = vpop.f32.mrf.mxu0
        %v7307 = vadd.f32 %v7088, %v7306
        %v7308 = vpop.f32.mrf.mxu0
        %v7309 = vadd.f32 %v7092, %v7308
        %7310 = vmatprep.mubr.f32.mxu0 0.0
        %7311 = vmatmul.mubr.f32.gmra.mxu0 %v7161
        %v7312 = vpop.f32.mrf.mxu0
        %v7313 = vadd.f32 %v7088, %v7312
        %v7314 = vpop.f32.mrf.mxu0
        %v7315 = vadd.f32 %v7092, %v7314
        %7316 = vdwg.mxu0
        %7317 = vmatprep.subr.mxu0 0.0
        %7318 = vmatpush1.msra.mxu0 0.0
        %7319 = vmatprep.subr.mxu0 0.0
        %7320 = vmatpush1.msra.mxu0 0.0
        %7321 = vmatprep.subr.mxu0 0.0
        %7322 = vmatpush1.msra.mxu0 0.0
        %7323 = vmatprep.subr.mxu0 0.0
        %7324 = vmatpush1.msra.mxu0 0.0
        %7325 = vmatprep.subr.mxu0 0.0
        %7326 = vmatpush1.msra.mxu0 0.0
        %7327 = vmatprep.subr.mxu0 0.0
        %7328 = vmatpush1.msra.mxu0 0.0
        %7329 = vmatprep.subr.mxu0 0.0
        %7330 = vmatpush1.msra.mxu0 0.0
        %7331 = vmatprep.subr.mxu0 0.0
        %7332 = vmatpush1.msra.mxu0 0.0
        %7333 = vmatprep.subr.mxu0 %v7062
        %7334 = vmatpush1.msra.mxu0 %v7061
        %7335 = vmatprep.subr.mxu0 %v7046
        %7336 = vmatpush1.msra.mxu0 %v7045
        %7337 = vmatprep.subr.mxu0 %v7030
        %7338 = vmatpush1.msra.mxu0 %v7029
        %7339 = vmatprep.subr.mxu0 %v7014
        %7340 = vmatpush1.msra.mxu0 %v7013
        %7341 = vmatprep.subr.mxu0 %v6998
        %7342 = vmatpush1.msra.mxu0 %v6997
        %7343 = vmatprep.subr.mxu0 %v6982
        %7344 = vmatpush1.msra.mxu0 %v6981
        %7345 = vmatprep.subr.mxu0 %v6966
        %7346 = vmatpush1.msra.mxu0 %v6965
        %7347 = vmatprep.subr.mxu0 %v6950
        %7348 = vmatpush1.msra.mxu0 %v6949
        %7349 = vmatprep.subr.mxu0 0.0
        %7350 = vmatpush2.msra.mxu0 0.0
        %7351 = vmatprep.subr.mxu0 0.0
        %7352 = vmatpush2.msra.mxu0 0.0
        %7353 = vmatprep.subr.mxu0 0.0
        %7354 = vmatpush2.msra.mxu0 0.0
        %7355 = vmatprep.subr.mxu0 0.0
        %7356 = vmatpush2.msra.mxu0 0.0
        %7357 = vmatprep.subr.mxu0 0.0
        %7358 = vmatpush2.msra.mxu0 0.0
        %7359 = vmatprep.subr.mxu0 0.0
        %7360 = vmatpush2.msra.mxu0 0.0
        %7361 = vmatprep.subr.mxu0 0.0
        %7362 = vmatpush2.msra.mxu0 0.0
        %7363 = vmatprep.subr.mxu0 0.0
        %7364 = vmatpush2.msra.mxu0 0.0
        %7365 = vmatprep.subr.mxu0 0.0
        %7366 = vmatpush2.msra.mxu0 0.0
        %7367 = vmatprep.subr.mxu0 0.0
        %7368 = vmatpush2.msra.mxu0 0.0
        %7369 = vmatprep.subr.mxu0 0.0
        %7370 = vmatpush2.msra.mxu0 0.0
        %7371 = vmatprep.subr.mxu0 0.0
        %7372 = vmatpush2.msra.mxu0 0.0
        %7373 = vmatprep.subr.mxu0 0.0
        %7374 = vmatpush2.msra.mxu0 0.0
        %7375 = vmatprep.subr.mxu0 0.0
        %7376 = vmatpush2.msra.mxu0 0.0
        %7377 = vmatprep.subr.mxu0 0.0
        %7378 = vmatpush2.msra.mxu0 0.0
        %7379 = vmatprep.subr.mxu0 0.0
        %7380 = vmatpush2.msra.mxu0 0.0
        %7381 = vmatprep.mubr.f32.mxu0 0.0
        %7382 = vmatmul.mubr.f32.gmra.mxu0 %v7158
        %v7383 = vpop.f32.mrf.mxu0
        %v7384 = vadd.f32 %v7096, %v7383
        %v7385 = vpop.f32.mrf.mxu0
        %v7386 = vadd.f32 %v7100, %v7385
        %7387 = vmatprep.mubr.f32.mxu0 0.0
        %7388 = vmatmul.mubr.f32.gmra.mxu0 %v7161
        %v7389 = vpop.f32.mrf.mxu0
        %v7390 = vadd.f32 %v7096, %v7389
        %v7391 = vpop.f32.mrf.mxu0
        %v7392 = vadd.f32 %v7100, %v7391
        %7393 = vdwg.mxu0
        %7394 = vmatprep.subr.mxu0 0.0
        %7395 = vmatpush1.msra.mxu0 0.0
        %7396 = vmatprep.subr.mxu0 0.0
        %7397 = vmatpush1.msra.mxu0 0.0
        %7398 = vmatprep.subr.mxu0 0.0
        %7399 = vmatpush1.msra.mxu0 0.0
        %7400 = vmatprep.subr.mxu0 0.0
        %7401 = vmatpush1.msra.mxu0 0.0
        %7402 = vmatprep.subr.mxu0 0.0
        %7403 = vmatpush1.msra.mxu0 0.0
        %7404 = vmatprep.subr.mxu0 0.0
        %7405 = vmatpush1.msra.mxu0 0.0
        %7406 = vmatprep.subr.mxu0 0.0
        %7407 = vmatpush1.msra.mxu0 0.0
        %7408 = vmatprep.subr.mxu0 0.0
        %7409 = vmatpush1.msra.mxu0 0.0
        %7410 = vmatprep.subr.mxu0 %v7064
        %7411 = vmatpush1.msra.mxu0 %v7063
        %7412 = vmatprep.subr.mxu0 %v7048
        %7413 = vmatpush1.msra.mxu0 %v7047
        %7414 = vmatprep.subr.mxu0 %v7032
        %7415 = vmatpush1.msra.mxu0 %v7031
        %7416 = vmatprep.subr.mxu0 %v7016
        %7417 = vmatpush1.msra.mxu0 %v7015
        %7418 = vmatprep.subr.mxu0 %v7000
        %7419 = vmatpush1.msra.mxu0 %v6999
        %7420 = vmatprep.subr.mxu0 %v6984
        %7421 = vmatpush1.msra.mxu0 %v6983
        %7422 = vmatprep.subr.mxu0 %v6968
        %7423 = vmatpush1.msra.mxu0 %v6967
        %7424 = vmatprep.subr.mxu0 %v6952
        %7425 = vmatpush1.msra.mxu0 %v6951
        %7426 = vmatprep.subr.mxu0 0.0
        %7427 = vmatpush2.msra.mxu0 0.0
        %7428 = vmatprep.subr.mxu0 0.0
        %7429 = vmatpush2.msra.mxu0 0.0
        %7430 = vmatprep.subr.mxu0 0.0
        %7431 = vmatpush2.msra.mxu0 0.0
        %7432 = vmatprep.subr.mxu0 0.0
        %7433 = vmatpush2.msra.mxu0 0.0
        %7434 = vmatprep.subr.mxu0 0.0
        %7435 = vmatpush2.msra.mxu0 0.0
        %7436 = vmatprep.subr.mxu0 0.0
        %7437 = vmatpush2.msra.mxu0 0.0
        %7438 = vmatprep.subr.mxu0 0.0
        %7439 = vmatpush2.msra.mxu0 0.0
        %7440 = vmatprep.subr.mxu0 0.0
        %7441 = vmatpush2.msra.mxu0 0.0
        %7442 = vmatprep.subr.mxu0 0.0
        %7443 = vmatpush2.msra.mxu0 0.0
        %7444 = vmatprep.subr.mxu0 0.0
        %7445 = vmatpush2.msra.mxu0 0.0
        %7446 = vmatprep.subr.mxu0 0.0
        %7447 = vmatpush2.msra.mxu0 0.0
        %7448 = vmatprep.subr.mxu0 0.0
        %7449 = vmatpush2.msra.mxu0 0.0
        %7450 = vmatprep.subr.mxu0 0.0
        %7451 = vmatpush2.msra.mxu0 0.0
        %7452 = vmatprep.subr.mxu0 0.0
        %7453 = vmatpush2.msra.mxu0 0.0
        %7454 = vmatprep.subr.mxu0 0.0
        %7455 = vmatpush2.msra.mxu0 0.0
        %7456 = vmatprep.subr.mxu0 0.0
        %7457 = vmatpush2.msra.mxu0 0.0
        %7458 = vmatprep.mubr.f32.mxu0 0.0
        %7459 = vmatmul.mubr.f32.gmra.mxu0 %v7158
        %v7460 = vpop.f32.mrf.mxu0
        %v7461 = vadd.f32 %v7104, %v7460
        %v7462 = vpop.f32.mrf.mxu0
        %v7463 = vadd.f32 %v7108, %v7462
        %7464 = vmatprep.mubr.f32.mxu0 0.0
        %7465 = vmatmul.mubr.f32.gmra.mxu0 %v7161
        %v7466 = vpop.f32.mrf.mxu0
        %v7467 = vadd.f32 %v7104, %v7466
        %v7468 = vpop.f32.mrf.mxu0
        %v7469 = vadd.f32 %v7108, %v7468
        %7470 = vdwg.mxu0
        %7471 = vmatprep.subr.mxu0 0.0
        %7472 = vmatpush1.msra.mxu0 0.0
        %7473 = vmatprep.subr.mxu0 0.0
        %7474 = vmatpush1.msra.mxu0 0.0
        %7475 = vmatprep.subr.mxu0 0.0
        %7476 = vmatpush1.msra.mxu0 0.0
        %7477 = vmatprep.subr.mxu0 0.0
        %7478 = vmatpush1.msra.mxu0 0.0
        %7479 = vmatprep.subr.mxu0 0.0
        %7480 = vmatpush1.msra.mxu0 0.0
        %7481 = vmatprep.subr.mxu0 0.0
        %7482 = vmatpush1.msra.mxu0 0.0
        %7483 = vmatprep.subr.mxu0 0.0
        %7484 = vmatpush1.msra.mxu0 0.0
        %7485 = vmatprep.subr.mxu0 0.0
        %7486 = vmatpush1.msra.mxu0 0.0
        %7487 = vmatprep.subr.mxu0 %v7066
        %7488 = vmatpush1.msra.mxu0 %v7065
        %7489 = vmatprep.subr.mxu0 %v7050
        %7490 = vmatpush1.msra.mxu0 %v7049
        %7491 = vmatprep.subr.mxu0 %v7034
        %7492 = vmatpush1.msra.mxu0 %v7033
        %7493 = vmatprep.subr.mxu0 %v7018
        %7494 = vmatpush1.msra.mxu0 %v7017
        %7495 = vmatprep.subr.mxu0 %v7002
        %7496 = vmatpush1.msra.mxu0 %v7001
        %7497 = vmatprep.subr.mxu0 %v6986
        %7498 = vmatpush1.msra.mxu0 %v6985
        %7499 = vmatprep.subr.mxu0 %v6970
        %7500 = vmatpush1.msra.mxu0 %v6969
        %7501 = vmatprep.subr.mxu0 %v6954
        %7502 = vmatpush1.msra.mxu0 %v6953
        %7503 = vmatprep.subr.mxu0 0.0
        %7504 = vmatpush2.msra.mxu0 0.0
        %7505 = vmatprep.subr.mxu0 0.0
        %7506 = vmatpush2.msra.mxu0 0.0
        %7507 = vmatprep.subr.mxu0 0.0
        %7508 = vmatpush2.msra.mxu0 0.0
        %7509 = vmatprep.subr.mxu0 0.0
        %7510 = vmatpush2.msra.mxu0 0.0
        %7511 = vmatprep.subr.mxu0 0.0
        %7512 = vmatpush2.msra.mxu0 0.0
        %7513 = vmatprep.subr.mxu0 0.0
        %7514 = vmatpush2.msra.mxu0 0.0
        %7515 = vmatprep.subr.mxu0 0.0
        %7516 = vmatpush2.msra.mxu0 0.0
        %7517 = vmatprep.subr.mxu0 0.0
        %7518 = vmatpush2.msra.mxu0 0.0
        %7519 = vmatprep.subr.mxu0 0.0
        %7520 = vmatpush2.msra.mxu0 0.0
        %7521 = vmatprep.subr.mxu0 0.0
        %7522 = vmatpush2.msra.mxu0 0.0
        %7523 = vmatprep.subr.mxu0 0.0
        %7524 = vmatpush2.msra.mxu0 0.0
        %7525 = vmatprep.subr.mxu0 0.0
        %7526 = vmatpush2.msra.mxu0 0.0
        %7527 = vmatprep.subr.mxu0 0.0
        %7528 = vmatpush2.msra.mxu0 0.0
        %7529 = vmatprep.subr.mxu0 0.0
        %7530 = vmatpush2.msra.mxu0 0.0
        %7531 = vmatprep.subr.mxu0 0.0
        %7532 = vmatpush2.msra.mxu0 0.0
        %7533 = vmatprep.subr.mxu0 0.0
        %7534 = vmatpush2.msra.mxu0 0.0
        %7535 = vmatprep.mubr.f32.mxu0 0.0
        %7536 = vmatmul.mubr.f32.gmra.mxu0 %v7158
        %v7537 = vpop.f32.mrf.mxu0
        %v7538 = vadd.f32 %v7112, %v7537
        %v7539 = vpop.f32.mrf.mxu0
        %v7540 = vadd.f32 %v7116, %v7539
        %7541 = vmatprep.mubr.f32.mxu0 0.0
        %7542 = vmatmul.mubr.f32.gmra.mxu0 %v7161
        %v7543 = vpop.f32.mrf.mxu0
        %v7544 = vadd.f32 %v7112, %v7543
        %v7545 = vpop.f32.mrf.mxu0
        %v7546 = vadd.f32 %v7116, %v7545
        %7547 = vdwg.mxu0
        %7548 = vmatprep.subr.mxu0 0.0
        %7549 = vmatpush1.msra.mxu0 0.0
        %7550 = vmatprep.subr.mxu0 0.0
        %7551 = vmatpush1.msra.mxu0 0.0
        %7552 = vmatprep.subr.mxu0 0.0
        %7553 = vmatpush1.msra.mxu0 0.0
        %7554 = vmatprep.subr.mxu0 0.0
        %7555 = vmatpush1.msra.mxu0 0.0
        %7556 = vmatprep.subr.mxu0 0.0
        %7557 = vmatpush1.msra.mxu0 0.0
        %7558 = vmatprep.subr.mxu0 0.0
        %7559 = vmatpush1.msra.mxu0 0.0
        %7560 = vmatprep.subr.mxu0 0.0
        %7561 = vmatpush1.msra.mxu0 0.0
        %7562 = vmatprep.subr.mxu0 0.0
        %7563 = vmatpush1.msra.mxu0 0.0
        %7564 = vmatprep.subr.mxu0 %v7068
        %7565 = vmatpush1.msra.mxu0 %v7067
        %7566 = vmatprep.subr.mxu0 %v7052
        %7567 = vmatpush1.msra.mxu0 %v7051
        %7568 = vmatprep.subr.mxu0 %v7036
        %7569 = vmatpush1.msra.mxu0 %v7035
        %7570 = vmatprep.subr.mxu0 %v7020
        %7571 = vmatpush1.msra.mxu0 %v7019
        %7572 = vmatprep.subr.mxu0 %v7004
        %7573 = vmatpush1.msra.mxu0 %v7003
        %7574 = vmatprep.subr.mxu0 %v6988
        %7575 = vmatpush1.msra.mxu0 %v6987
        %7576 = vmatprep.subr.mxu0 %v6972
        %7577 = vmatpush1.msra.mxu0 %v6971
        %7578 = vmatprep.subr.mxu0 %v6956
        %7579 = vmatpush1.msra.mxu0 %v6955
        %7580 = vmatprep.subr.mxu0 0.0
        %7581 = vmatpush2.msra.mxu0 0.0
        %7582 = vmatprep.subr.mxu0 0.0
        %7583 = vmatpush2.msra.mxu0 0.0
        %7584 = vmatprep.subr.mxu0 0.0
        %7585 = vmatpush2.msra.mxu0 0.0
        %7586 = vmatprep.subr.mxu0 0.0
        %7587 = vmatpush2.msra.mxu0 0.0
        %7588 = vmatprep.subr.mxu0 0.0
        %7589 = vmatpush2.msra.mxu0 0.0
        %7590 = vmatprep.subr.mxu0 0.0
        %7591 = vmatpush2.msra.mxu0 0.0
        %7592 = vmatprep.subr.mxu0 0.0
        %7593 = vmatpush2.msra.mxu0 0.0
        %7594 = vmatprep.subr.mxu0 0.0
        %7595 = vmatpush2.msra.mxu0 0.0
        %7596 = vmatprep.subr.mxu0 0.0
        %7597 = vmatpush2.msra.mxu0 0.0
        %7598 = vmatprep.subr.mxu0 0.0
        %7599 = vmatpush2.msra.mxu0 0.0
        %7600 = vmatprep.subr.mxu0 0.0
        %7601 = vmatpush2.msra.mxu0 0.0
        %7602 = vmatprep.subr.mxu0 0.0
        %7603 = vmatpush2.msra.mxu0 0.0
        %7604 = vmatprep.subr.mxu0 0.0
        %7605 = vmatpush2.msra.mxu0 0.0
        %7606 = vmatprep.subr.mxu0 0.0
        %7607 = vmatpush2.msra.mxu0 0.0
        %7608 = vmatprep.subr.mxu0 0.0
        %7609 = vmatpush2.msra.mxu0 0.0
        %7610 = vmatprep.subr.mxu0 0.0
        %7611 = vmatpush2.msra.mxu0 0.0
        %7612 = vmatprep.mubr.f32.mxu0 0.0
        %7613 = vmatmul.mubr.f32.gmra.mxu0 %v7158
        %v7614 = vpop.f32.mrf.mxu0
        %v7615 = vadd.f32 %v7120, %v7614
        %v7616 = vpop.f32.mrf.mxu0
        %v7617 = vadd.f32 %v7124, %v7616
        %7618 = vmatprep.mubr.f32.mxu0 0.0
        %7619 = vmatmul.mubr.f32.gmra.mxu0 %v7161
        %v7620 = vpop.f32.mrf.mxu0
        %v7621 = vadd.f32 %v7120, %v7620
        %v7622 = vpop.f32.mrf.mxu0
        %v7623 = vadd.f32 %v7124, %v7622
        %7624 = vdwg.mxu0
        %7625 = vmatprep.subr.mxu0 0.0
        %7626 = vmatpush1.msra.mxu0 0.0
        %7627 = vmatprep.subr.mxu0 0.0
        %7628 = vmatpush1.msra.mxu0 0.0
        %7629 = vmatprep.subr.mxu0 0.0
        %7630 = vmatpush1.msra.mxu0 0.0
        %7631 = vmatprep.subr.mxu0 0.0
        %7632 = vmatpush1.msra.mxu0 0.0
        %7633 = vmatprep.subr.mxu0 0.0
        %7634 = vmatpush1.msra.mxu0 0.0
        %7635 = vmatprep.subr.mxu0 0.0
        %7636 = vmatpush1.msra.mxu0 0.0
        %7637 = vmatprep.subr.mxu0 0.0
        %7638 = vmatpush1.msra.mxu0 0.0
        %7639 = vmatprep.subr.mxu0 0.0
        %7640 = vmatpush1.msra.mxu0 0.0
        %7641 = vmatprep.subr.mxu0 %v7070
        %7642 = vmatpush1.msra.mxu0 %v7069
        %7643 = vmatprep.subr.mxu0 %v7054
        %7644 = vmatpush1.msra.mxu0 %v7053
        %7645 = vmatprep.subr.mxu0 %v7038
        %7646 = vmatpush1.msra.mxu0 %v7037
        %7647 = vmatprep.subr.mxu0 %v7022
        %7648 = vmatpush1.msra.mxu0 %v7021
        %7649 = vmatprep.subr.mxu0 %v7006
        %7650 = vmatpush1.msra.mxu0 %v7005
        %7651 = vmatprep.subr.mxu0 %v6990
        %7652 = vmatpush1.msra.mxu0 %v6989
        %7653 = vmatprep.subr.mxu0 %v6974
        %7654 = vmatpush1.msra.mxu0 %v6973
        %7655 = vmatprep.subr.mxu0 %v6958
        %7656 = vmatpush1.msra.mxu0 %v6957
        %7657 = vmatprep.subr.mxu0 0.0
        %7658 = vmatpush2.msra.mxu0 0.0
        %7659 = vmatprep.subr.mxu0 0.0
        %7660 = vmatpush2.msra.mxu0 0.0
        %7661 = vmatprep.subr.mxu0 0.0
        %7662 = vmatpush2.msra.mxu0 0.0
        %7663 = vmatprep.subr.mxu0 0.0
        %7664 = vmatpush2.msra.mxu0 0.0
        %7665 = vmatprep.subr.mxu0 0.0
        %7666 = vmatpush2.msra.mxu0 0.0
        %7667 = vmatprep.subr.mxu0 0.0
        %7668 = vmatpush2.msra.mxu0 0.0
        %7669 = vmatprep.subr.mxu0 0.0
        %7670 = vmatpush2.msra.mxu0 0.0
        %7671 = vmatprep.subr.mxu0 0.0
        %7672 = vmatpush2.msra.mxu0 0.0
        %7673 = vmatprep.subr.mxu0 0.0
        %7674 = vmatpush2.msra.mxu0 0.0
        %7675 = vmatprep.subr.mxu0 0.0
        %7676 = vmatpush2.msra.mxu0 0.0
        %7677 = vmatprep.subr.mxu0 0.0
        %7678 = vmatpush2.msra.mxu0 0.0
        %7679 = vmatprep.subr.mxu0 0.0
        %7680 = vmatpush2.msra.mxu0 0.0
        %7681 = vmatprep.subr.mxu0 0.0
        %7682 = vmatpush2.msra.mxu0 0.0
        %7683 = vmatprep.subr.mxu0 0.0
        %7684 = vmatpush2.msra.mxu0 0.0
        %7685 = vmatprep.subr.mxu0 0.0
        %7686 = vmatpush2.msra.mxu0 0.0
        %7687 = vmatprep.subr.mxu0 0.0
        %7688 = vmatpush2.msra.mxu0 0.0
        %7689 = vmatprep.mubr.f32.mxu0 0.0
        %7690 = vmatmul.mubr.f32.gmra.mxu0 %v7158
        %v7691 = vpop.f32.mrf.mxu0
        %v7692 = vadd.f32 %v7128, %v7691
        %v7693 = vpop.f32.mrf.mxu0
        %v7694 = vadd.f32 %v7132, %v7693
        %7695 = vmatprep.mubr.f32.mxu0 0.0
        %7696 = vmatmul.mubr.f32.gmra.mxu0 %v7161
        %v7697 = vpop.f32.mrf.mxu0
        %v7698 = vadd.f32 %v7128, %v7697
        %v7699 = vpop.f32.mrf.mxu0
        %v7700 = vadd.f32 %v7132, %v7699
        %7701 = vdwg.mxu0
        %7702 = vmatprep.subr.mxu0 0.0
        %7703 = vmatpush1.msra.mxu0 0.0
        %7704 = vmatprep.subr.mxu0 0.0
        %7705 = vmatpush1.msra.mxu0 0.0
        %7706 = vmatprep.subr.mxu0 0.0
        %7707 = vmatpush1.msra.mxu0 0.0
        %7708 = vmatprep.subr.mxu0 0.0
        %7709 = vmatpush1.msra.mxu0 0.0
        %7710 = vmatprep.subr.mxu0 0.0
        %7711 = vmatpush1.msra.mxu0 0.0
        %7712 = vmatprep.subr.mxu0 0.0
        %7713 = vmatpush1.msra.mxu0 0.0
        %7714 = vmatprep.subr.mxu0 0.0
        %7715 = vmatpush1.msra.mxu0 0.0
        %7716 = vmatprep.subr.mxu0 0.0
        %7717 = vmatpush1.msra.mxu0 0.0
        %7718 = vmatprep.subr.mxu0 %v7072
        %7719 = vmatpush1.msra.mxu0 %v7071
        %7720 = vmatprep.subr.mxu0 %v7056
        %7721 = vmatpush1.msra.mxu0 %v7055
        %7722 = vmatprep.subr.mxu0 %v7040
        %7723 = vmatpush1.msra.mxu0 %v7039
        %7724 = vmatprep.subr.mxu0 %v7024
        %7725 = vmatpush1.msra.mxu0 %v7023
        %7726 = vmatprep.subr.mxu0 %v7008
        %7727 = vmatpush1.msra.mxu0 %v7007
        %7728 = vmatprep.subr.mxu0 %v6992
        %7729 = vmatpush1.msra.mxu0 %v6991
        %7730 = vmatprep.subr.mxu0 %v6976
        %7731 = vmatpush1.msra.mxu0 %v6975
        %7732 = vmatprep.subr.mxu0 %v6960
        %7733 = vmatpush1.msra.mxu0 %v6959
        %7734 = vmatprep.subr.mxu0 0.0
        %7735 = vmatpush2.msra.mxu0 0.0
        %7736 = vmatprep.subr.mxu0 0.0
        %7737 = vmatpush2.msra.mxu0 0.0
        %7738 = vmatprep.subr.mxu0 0.0
        %7739 = vmatpush2.msra.mxu0 0.0
        %7740 = vmatprep.subr.mxu0 0.0
        %7741 = vmatpush2.msra.mxu0 0.0
        %7742 = vmatprep.subr.mxu0 0.0
        %7743 = vmatpush2.msra.mxu0 0.0
        %7744 = vmatprep.subr.mxu0 0.0
        %7745 = vmatpush2.msra.mxu0 0.0
        %7746 = vmatprep.subr.mxu0 0.0
        %7747 = vmatpush2.msra.mxu0 0.0
        %7748 = vmatprep.subr.mxu0 0.0
        %7749 = vmatpush2.msra.mxu0 0.0
        %7750 = vmatprep.subr.mxu0 0.0
        %7751 = vmatpush2.msra.mxu0 0.0
        %7752 = vmatprep.subr.mxu0 0.0
        %7753 = vmatpush2.msra.mxu0 0.0
        %7754 = vmatprep.subr.mxu0 0.0
        %7755 = vmatpush2.msra.mxu0 0.0
        %7756 = vmatprep.subr.mxu0 0.0
        %7757 = vmatpush2.msra.mxu0 0.0
        %7758 = vmatprep.subr.mxu0 0.0
        %7759 = vmatpush2.msra.mxu0 0.0
        %7760 = vmatprep.subr.mxu0 0.0
        %7761 = vmatpush2.msra.mxu0 0.0
        %7762 = vmatprep.subr.mxu0 0.0
        %7763 = vmatpush2.msra.mxu0 0.0
        %7764 = vmatprep.subr.mxu0 0.0
        %7765 = vmatpush2.msra.mxu0 0.0
        %7766 = vmatprep.mubr.f32.mxu0 0.0
        %7767 = vmatmul.mubr.f32.gmra.mxu0 %v7158
        %v7768 = vpop.f32.mrf.mxu0
        %v7769 = vadd.f32 %v7136, %v7768
        %v7770 = vpop.f32.mrf.mxu0
        %v7771 = vadd.f32 %v7140, %v7770
        %7772 = vmatprep.mubr.f32.mxu0 0.0
        %7773 = vmatmul.mubr.f32.gmra.mxu0 %v7161
        %v7774 = vpop.f32.mrf.mxu0
        %v7775 = vadd.f32 %v7136, %v7774
        %v7776 = vpop.f32.mrf.mxu0
        %v7777 = vadd.f32 %v7140, %v7776
        %7778 = vdwg.mxu0
        %v7779 = vmax.f32 %v7230, 0.0
        %v7780 = vmax.f32 %v7232, 0.0
        %v7781 = vmax.f32 %v7307, 0.0
        %v7782 = vmax.f32 %v7309, 0.0
        %v7783 = vmax.f32 %v7384, 0.0
        %v7784 = vmax.f32 %v7386, 0.0
        %v7785 = vmax.f32 %v7461, 0.0
        %v7786 = vmax.f32 %v7463, 0.0
        %v7787 = vmax.f32 %v7538, 0.0
        %v7788 = vmax.f32 %v7540, 0.0
        %v7789 = vmax.f32 %v7615, 0.0
        %v7790 = vmax.f32 %v7617, 0.0
        %v7791 = vmax.f32 %v7692, 0.0
        %v7792 = vmax.f32 %v7694, 0.0
        %v7793 = vmax.f32 %v7769, 0.0
        %v7794 = vmax.f32 %v7771, 0.0
        %v7795 = vmax.f32 %v7236, 0.0
        %v7796 = vmax.f32 %v7238, 0.0
        %v7797 = vmax.f32 %v7313, 0.0
        %v7798 = vmax.f32 %v7315, 0.0
        %v7799 = vmax.f32 %v7390, 0.0
        %v7800 = vmax.f32 %v7392, 0.0
        %v7801 = vmax.f32 %v7467, 0.0
        %v7802 = vmax.f32 %v7469, 0.0
        %v7803 = vmax.f32 %v7544, 0.0
        %v7804 = vmax.f32 %v7546, 0.0
        %v7805 = vmax.f32 %v7621, 0.0
        %v7806 = vmax.f32 %v7623, 0.0
        %v7807 = vmax.f32 %v7698, 0.0
        %v7808 = vmax.f32 %v7700, 0.0
        %v7809 = vmax.f32 %v7775, 0.0
        %v7810 = vmax.f32 %v7777, 0.0
        %v7811 = vld [vmem:[%s889] sm:$0xff]
        %v7812 = vld [vmem:[%s889 + $0x8] sm:$0xff]
        %v7813 = vld [vmem:[%s889 + $0x10] sm:$0xff]
        %v7814 = vld [vmem:[%s889 + $0x18] sm:$0xff]
        %v7815 = vld [vmem:[%s889 + $0x20] sm:$0xff]
        %v7816 = vld [vmem:[%s889 + $0x28] sm:$0xff]
        %v7817 = vld [vmem:[%s889 + $0x30] sm:$0xff]
        %v7818 = vld [vmem:[%s889 + $0x38] sm:$0xff]
        %v7819 = vld [vmem:[%s889 + $0x40] sm:$0xff]
        %v7820 = vld [vmem:[%s889 + $0x48] sm:$0xff]
        %v7821 = vld [vmem:[%s889 + $0x50] sm:$0xff]
        %v7822 = vld [vmem:[%s889 + $0x58] sm:$0xff]
        %v7823 = vld [vmem:[%s889 + $0x60] sm:$0xff]
        %v7824 = vld [vmem:[%s889 + $0x68] sm:$0xff]
        %v7825 = vld [vmem:[%s889 + $0x70] sm:$0xff]
        %v7826 = vld [vmem:[%s889 + $0x78] sm:$0xff]
        %v7827 = vld [vmem:[%s889 + $0x80] sm:$0xff]
        %v7828 = vld [vmem:[%s889 + $0x88] sm:$0xff]
        %v7829 = vld [vmem:[%s889 + $0x90] sm:$0xff]
        %v7830 = vld [vmem:[%s889 + $0x98] sm:$0xff]
        %v7831 = vld [vmem:[%s889 + $0xa0] sm:$0xff]
        %v7832 = vld [vmem:[%s889 + $0xa8] sm:$0xff]
        %v7833 = vld [vmem:[%s889 + $0xb0] sm:$0xff]
        %v7834 = vld [vmem:[%s889 + $0xb8] sm:$0xff]
        %v7835 = vld [vmem:[%s889 + $0xc0] sm:$0xff]
        %v7836 = vld [vmem:[%s889 + $0xc8] sm:$0xff]
        %v7837 = vld [vmem:[%s889 + $0xd0] sm:$0xff]
        %v7838 = vld [vmem:[%s889 + $0xd8] sm:$0xff]
        %v7839 = vld [vmem:[%s889 + $0xe0] sm:$0xff]
        %v7840 = vld [vmem:[%s889 + $0xe8] sm:$0xff]
        %v7841 = vld [vmem:[%s889 + $0xf0] sm:$0xff]
        %v7842 = vld [vmem:[%s889 + $0xf8] sm:$0xff]
        %v7843 = vld [vmem:[%s889 + $0x100] sm:$0xff]
        %v7844 = vld [vmem:[%s889 + $0x108] sm:$0xff]
        %v7845 = vld [vmem:[%s889 + $0x110] sm:$0xff]
        %v7846 = vld [vmem:[%s889 + $0x118] sm:$0xff]
        %v7847 = vld [vmem:[%s889 + $0x120] sm:$0xff]
        %v7848 = vld [vmem:[%s889 + $0x128] sm:$0xff]
        %v7849 = vld [vmem:[%s889 + $0x130] sm:$0xff]
        %v7850 = vld [vmem:[%s889 + $0x138] sm:$0xff]
        %v7851 = vld [vmem:[%s889 + $0x140] sm:$0xff]
        %v7852 = vld [vmem:[%s889 + $0x148] sm:$0xff]
        %v7853 = vld [vmem:[%s889 + $0x150] sm:$0xff]
        %v7854 = vld [vmem:[%s889 + $0x158] sm:$0xff]
        %v7855 = vld [vmem:[%s889 + $0x160] sm:$0xff]
        %v7856 = vld [vmem:[%s889 + $0x168] sm:$0xff]
        %v7857 = vld [vmem:[%s889 + $0x170] sm:$0xff]
        %v7858 = vld [vmem:[%s889 + $0x178] sm:$0xff]
        %v7859 = vld [vmem:[%s889 + $0x180] sm:$0xff]
        %v7860 = vld [vmem:[%s889 + $0x188] sm:$0xff]
        %v7861 = vld [vmem:[%s889 + $0x190] sm:$0xff]
        %v7862 = vld [vmem:[%s889 + $0x198] sm:$0xff]
        %v7863 = vld [vmem:[%s889 + $0x1a0] sm:$0xff]
        %v7864 = vld [vmem:[%s889 + $0x1a8] sm:$0xff]
        %v7865 = vld [vmem:[%s889 + $0x1b0] sm:$0xff]
        %v7866 = vld [vmem:[%s889 + $0x1b8] sm:$0xff]
        %v7867 = vld [vmem:[%s889 + $0x1c0] sm:$0xff]
        %v7868 = vld [vmem:[%s889 + $0x1c8] sm:$0xff]
        %v7869 = vld [vmem:[%s889 + $0x1d0] sm:$0xff]
        %v7870 = vld [vmem:[%s889 + $0x1d8] sm:$0xff]
        %v7871 = vld [vmem:[%s889 + $0x1e0] sm:$0xff]
        %v7872 = vld [vmem:[%s889 + $0x1e8] sm:$0xff]
        %v7873 = vld [vmem:[%s889 + $0x1f0] sm:$0xff]
        %v7874 = vld [vmem:[%s889 + $0x1f8] sm:$0xff]
        %v7875 = vld [vmem:[%s889 + $0x200] sm:$0xff]
        %v7876 = vld [vmem:[%s889 + $0x208] sm:$0xff]
        %v7877 = vld [vmem:[%s889 + $0x210] sm:$0xff]
        %v7878 = vld [vmem:[%s889 + $0x218] sm:$0xff]
        %v7879 = vld [vmem:[%s889 + $0x220] sm:$0xff]
        %v7880 = vld [vmem:[%s889 + $0x228] sm:$0xff]
        %v7881 = vld [vmem:[%s889 + $0x230] sm:$0xff]
        %v7882 = vld [vmem:[%s889 + $0x238] sm:$0xff]
        %v7883 = vld [vmem:[%s889 + $0x240] sm:$0xff]
        %v7884 = vld [vmem:[%s889 + $0x248] sm:$0xff]
        %v7885 = vld [vmem:[%s889 + $0x250] sm:$0xff]
        %v7886 = vld [vmem:[%s889 + $0x258] sm:$0xff]
        %v7887 = vld [vmem:[%s889 + $0x260] sm:$0xff]
        %v7888 = vld [vmem:[%s889 + $0x268] sm:$0xff]
        %v7889 = vld [vmem:[%s889 + $0x270] sm:$0xff]
        %v7890 = vld [vmem:[%s889 + $0x278] sm:$0xff]
        %v7891 = vld [vmem:[%s889 + $0x280] sm:$0xff]
        %v7892 = vld [vmem:[%s889 + $0x288] sm:$0xff]
        %v7893 = vld [vmem:[%s889 + $0x290] sm:$0xff]
        %v7894 = vld [vmem:[%s889 + $0x298] sm:$0xff]
        %v7895 = vld [vmem:[%s889 + $0x2a0] sm:$0xff]
        %v7896 = vld [vmem:[%s889 + $0x2a8] sm:$0xff]
        %v7897 = vld [vmem:[%s889 + $0x2b0] sm:$0xff]
        %v7898 = vld [vmem:[%s889 + $0x2b8] sm:$0xff]
        %v7899 = vld [vmem:[%s889 + $0x2c0] sm:$0xff]
        %v7900 = vld [vmem:[%s889 + $0x2c8] sm:$0xff]
        %v7901 = vld [vmem:[%s889 + $0x2d0] sm:$0xff]
        %v7902 = vld [vmem:[%s889 + $0x2d8] sm:$0xff]
        %v7903 = vld [vmem:[%s889 + $0x2e0] sm:$0xff]
        %v7904 = vld [vmem:[%s889 + $0x2e8] sm:$0xff]
        %v7905 = vld [vmem:[%s889 + $0x2f0] sm:$0xff]
        %v7906 = vld [vmem:[%s889 + $0x2f8] sm:$0xff]
        %v7907 = vld [vmem:[%s889 + $0x300] sm:$0xff]
        %v7908 = vld [vmem:[%s889 + $0x308] sm:$0xff]
        %v7909 = vld [vmem:[%s889 + $0x310] sm:$0xff]
        %v7910 = vld [vmem:[%s889 + $0x318] sm:$0xff]
        %v7911 = vld [vmem:[%s889 + $0x320] sm:$0xff]
        %v7912 = vld [vmem:[%s889 + $0x328] sm:$0xff]
        %v7913 = vld [vmem:[%s889 + $0x330] sm:$0xff]
        %v7914 = vld [vmem:[%s889 + $0x338] sm:$0xff]
        %v7915 = vld [vmem:[%s889 + $0x340] sm:$0xff]
        %v7916 = vld [vmem:[%s889 + $0x348] sm:$0xff]
        %v7917 = vld [vmem:[%s889 + $0x350] sm:$0xff]
        %v7918 = vld [vmem:[%s889 + $0x358] sm:$0xff]
        %v7919 = vld [vmem:[%s889 + $0x360] sm:$0xff]
        %v7920 = vld [vmem:[%s889 + $0x368] sm:$0xff]
        %v7921 = vld [vmem:[%s889 + $0x370] sm:$0xff]
        %v7922 = vld [vmem:[%s889 + $0x378] sm:$0xff]
        %v7923 = vld [vmem:[%s889 + $0x380] sm:$0xff]
        %v7924 = vld [vmem:[%s889 + $0x388] sm:$0xff]
        %v7925 = vld [vmem:[%s889 + $0x390] sm:$0xff]
        %v7926 = vld [vmem:[%s889 + $0x398] sm:$0xff]
        %v7927 = vld [vmem:[%s889 + $0x3a0] sm:$0xff]
        %v7928 = vld [vmem:[%s889 + $0x3a8] sm:$0xff]
        %v7929 = vld [vmem:[%s889 + $0x3b0] sm:$0xff]
        %v7930 = vld [vmem:[%s889 + $0x3b8] sm:$0xff]
        %v7931 = vld [vmem:[%s889 + $0x3c0] sm:$0xff]
        %v7932 = vld [vmem:[%s889 + $0x3c8] sm:$0xff]
        %v7933 = vld [vmem:[%s889 + $0x3d0] sm:$0xff]
        %v7934 = vld [vmem:[%s889 + $0x3d8] sm:$0xff]
        %v7935 = vld [vmem:[%s889 + $0x3e0] sm:$0xff]
        %v7936 = vld [vmem:[%s889 + $0x3e8] sm:$0xff]
        %v7937 = vld [vmem:[%s889 + $0x3f0] sm:$0xff]
        %v7938 = vld [vmem:[%s889 + $0x3f8] sm:$0xff]
        %v7939 = vld [vmem:[%s889 + $0x400] sm:$0xff]
        %v7940 = vld [vmem:[%s889 + $0x408] sm:$0xff]
        %v7941 = vld [vmem:[%s889 + $0x410] sm:$0xff]
        %v7942 = vld [vmem:[%s889 + $0x418] sm:$0xff]
        %v7943 = vld [vmem:[%s889 + $0x420] sm:$0xff]
        %v7944 = vld [vmem:[%s889 + $0x428] sm:$0xff]
        %v7945 = vld [vmem:[%s889 + $0x430] sm:$0xff]
        %v7946 = vld [vmem:[%s889 + $0x438] sm:$0xff]
        %v7947 = vld [vmem:[%s889 + $0x440] sm:$0xff]
        %v7948 = vld [vmem:[%s889 + $0x448] sm:$0xff]
        %v7949 = vld [vmem:[%s889 + $0x450] sm:$0xff]
        %v7950 = vld [vmem:[%s889 + $0x458] sm:$0xff]
        %v7951 = vld [vmem:[%s889 + $0x460] sm:$0xff]
        %v7952 = vld [vmem:[%s889 + $0x468] sm:$0xff]
        %v7953 = vld [vmem:[%s889 + $0x470] sm:$0xff]
        %v7954 = vld [vmem:[%s889 + $0x478] sm:$0xff]
        %v7955 = vld [vmem:[%s889 + $0x480] sm:$0xff]
        %v7956 = vld [vmem:[%s889 + $0x488] sm:$0xff]
        %v7957 = vld [vmem:[%s889 + $0x490] sm:$0xff]
        %v7958 = vld [vmem:[%s889 + $0x498] sm:$0xff]
        %v7959 = vld [vmem:[%s889 + $0x4a0] sm:$0xff]
        %v7960 = vld [vmem:[%s889 + $0x4a8] sm:$0xff]
        %v7961 = vld [vmem:[%s889 + $0x4b0] sm:$0xff]
        %v7962 = vld [vmem:[%s889 + $0x4b8] sm:$0xff]
        %v7963 = vld [vmem:[%s889 + $0x4c0] sm:$0xff]
        %v7964 = vld [vmem:[%s889 + $0x4c8] sm:$0xff]
        %v7965 = vld [vmem:[%s889 + $0x4d0] sm:$0xff]
        %v7966 = vld [vmem:[%s889 + $0x4d8] sm:$0xff]
        %v7967 = vld [vmem:[%s889 + $0x4e0] sm:$0xff]
        %v7968 = vld [vmem:[%s889 + $0x4e8] sm:$0xff]
        %v7969 = vld [vmem:[%s889 + $0x4f0] sm:$0xff]
        %v7970 = vld [vmem:[%s889 + $0x4f8] sm:$0xff]
        %v7971 = vld [vmem:[%s889 + $0x500] sm:$0xff]
        %v7972 = vld [vmem:[%s889 + $0x508] sm:$0xff]
        %v7973 = vld [vmem:[%s889 + $0x510] sm:$0xff]
        %v7974 = vld [vmem:[%s889 + $0x518] sm:$0xff]
        %v7975 = vld [vmem:[%s889 + $0x520] sm:$0xff]
        %v7976 = vld [vmem:[%s889 + $0x528] sm:$0xff]
        %v7977 = vld [vmem:[%s889 + $0x530] sm:$0xff]
        %v7978 = vld [vmem:[%s889 + $0x538] sm:$0xff]
        %v7979 = vld [vmem:[%s889 + $0x540] sm:$0xff]
        %v7980 = vld [vmem:[%s889 + $0x548] sm:$0xff]
        %v7981 = vld [vmem:[%s889 + $0x550] sm:$0xff]
        %v7982 = vld [vmem:[%s889 + $0x558] sm:$0xff]
        %v7983 = vld [vmem:[%s889 + $0x560] sm:$0xff]
        %v7984 = vld [vmem:[%s889 + $0x568] sm:$0xff]
        %v7985 = vld [vmem:[%s889 + $0x570] sm:$0xff]
        %v7986 = vld [vmem:[%s889 + $0x578] sm:$0xff]
        %v7987 = vld [vmem:[%s889 + $0x580] sm:$0xff]
        %v7988 = vld [vmem:[%s889 + $0x588] sm:$0xff]
        %v7989 = vld [vmem:[%s889 + $0x590] sm:$0xff]
        %v7990 = vld [vmem:[%s889 + $0x598] sm:$0xff]
        %v7991 = vld [vmem:[%s889 + $0x5a0] sm:$0xff]
        %v7992 = vld [vmem:[%s889 + $0x5a8] sm:$0xff]
        %v7993 = vld [vmem:[%s889 + $0x5b0] sm:$0xff]
        %v7994 = vld [vmem:[%s889 + $0x5b8] sm:$0xff]
        %v7995 = vld [vmem:[%s889 + $0x5c0] sm:$0xff]
        %v7996 = vld [vmem:[%s889 + $0x5c8] sm:$0xff]
        %v7997 = vld [vmem:[%s889 + $0x5d0] sm:$0xff]
        %v7998 = vld [vmem:[%s889 + $0x5d8] sm:$0xff]
        %v7999 = vld [vmem:[%s889 + $0x5e0] sm:$0xff]
        %v8000 = vld [vmem:[%s889 + $0x5e8] sm:$0xff]
        %v8001 = vld [vmem:[%s889 + $0x5f0] sm:$0xff]
        %v8002 = vld [vmem:[%s889 + $0x5f8] sm:$0xff]
        %v8003 = vld [vmem:[%s889 + $0x600] sm:$0xff]
        %v8004 = vld [vmem:[%s889 + $0x608] sm:$0xff]
        %v8005 = vld [vmem:[%s889 + $0x610] sm:$0xff]
        %v8006 = vld [vmem:[%s889 + $0x618] sm:$0xff]
        %v8007 = vld [vmem:[%s889 + $0x620] sm:$0xff]
        %v8008 = vld [vmem:[%s889 + $0x628] sm:$0xff]
        %v8009 = vld [vmem:[%s889 + $0x630] sm:$0xff]
        %v8010 = vld [vmem:[%s889 + $0x638] sm:$0xff]
        %v8011 = vld [vmem:[%s889 + $0x640] sm:$0xff]
        %v8012 = vld [vmem:[%s889 + $0x648] sm:$0xff]
        %v8013 = vld [vmem:[%s889 + $0x650] sm:$0xff]
        %v8014 = vld [vmem:[%s889 + $0x658] sm:$0xff]
        %v8015 = vld [vmem:[%s889 + $0x660] sm:$0xff]
        %v8016 = vld [vmem:[%s889 + $0x668] sm:$0xff]
        %v8017 = vld [vmem:[%s889 + $0x670] sm:$0xff]
        %v8018 = vld [vmem:[%s889 + $0x678] sm:$0xff]
        %v8019 = vld [vmem:[%s889 + $0x680] sm:$0xff]
        %v8020 = vld [vmem:[%s889 + $0x688] sm:$0xff]
        %v8021 = vld [vmem:[%s889 + $0x690] sm:$0xff]
        %v8022 = vld [vmem:[%s889 + $0x698] sm:$0xff]
        %v8023 = vld [vmem:[%s889 + $0x6a0] sm:$0xff]
        %v8024 = vld [vmem:[%s889 + $0x6a8] sm:$0xff]
        %v8025 = vld [vmem:[%s889 + $0x6b0] sm:$0xff]
        %v8026 = vld [vmem:[%s889 + $0x6b8] sm:$0xff]
        %v8027 = vld [vmem:[%s889 + $0x6c0] sm:$0xff]
        %v8028 = vld [vmem:[%s889 + $0x6c8] sm:$0xff]
        %v8029 = vld [vmem:[%s889 + $0x6d0] sm:$0xff]
        %v8030 = vld [vmem:[%s889 + $0x6d8] sm:$0xff]
        %v8031 = vld [vmem:[%s889 + $0x6e0] sm:$0xff]
        %v8032 = vld [vmem:[%s889 + $0x6e8] sm:$0xff]
        %v8033 = vld [vmem:[%s889 + $0x6f0] sm:$0xff]
        %v8034 = vld [vmem:[%s889 + $0x6f8] sm:$0xff]
        %v8035 = vld [vmem:[%s889 + $0x700] sm:$0xff]
        %v8036 = vld [vmem:[%s889 + $0x708] sm:$0xff]
        %v8037 = vld [vmem:[%s889 + $0x710] sm:$0xff]
        %v8038 = vld [vmem:[%s889 + $0x718] sm:$0xff]
        %v8039 = vld [vmem:[%s889 + $0x720] sm:$0xff]
        %v8040 = vld [vmem:[%s889 + $0x728] sm:$0xff]
        %v8041 = vld [vmem:[%s889 + $0x730] sm:$0xff]
        %v8042 = vld [vmem:[%s889 + $0x738] sm:$0xff]
        %v8043 = vld [vmem:[%s889 + $0x740] sm:$0xff]
        %v8044 = vld [vmem:[%s889 + $0x748] sm:$0xff]
        %v8045 = vld [vmem:[%s889 + $0x750] sm:$0xff]
        %v8046 = vld [vmem:[%s889 + $0x758] sm:$0xff]
        %v8047 = vld [vmem:[%s889 + $0x760] sm:$0xff]
        %v8048 = vld [vmem:[%s889 + $0x768] sm:$0xff]
        %v8049 = vld [vmem:[%s889 + $0x770] sm:$0xff]
        %v8050 = vld [vmem:[%s889 + $0x778] sm:$0xff]
        %v8051 = vld [vmem:[%s889 + $0x780] sm:$0xff]
        %v8052 = vld [vmem:[%s889 + $0x788] sm:$0xff]
        %v8053 = vld [vmem:[%s889 + $0x790] sm:$0xff]
        %v8054 = vld [vmem:[%s889 + $0x798] sm:$0xff]
        %v8055 = vld [vmem:[%s889 + $0x7a0] sm:$0xff]
        %v8056 = vld [vmem:[%s889 + $0x7a8] sm:$0xff]
        %v8057 = vld [vmem:[%s889 + $0x7b0] sm:$0xff]
        %v8058 = vld [vmem:[%s889 + $0x7b8] sm:$0xff]
        %v8059 = vld [vmem:[%s889 + $0x7c0] sm:$0xff]
        %v8060 = vld [vmem:[%s889 + $0x7c8] sm:$0xff]
        %v8061 = vld [vmem:[%s889 + $0x7d0] sm:$0xff]
        %v8062 = vld [vmem:[%s889 + $0x7d8] sm:$0xff]
        %v8063 = vld [vmem:[%s889 + $0x7e0] sm:$0xff]
        %v8064 = vld [vmem:[%s889 + $0x7e8] sm:$0xff]
        %v8065 = vld [vmem:[%s889 + $0x7f0] sm:$0xff]
        %v8066 = vld [vmem:[%s889 + $0x7f8] sm:$0xff]
        %v8067 = vld [vmem:[%s892] sm:$0x1]
        %v8069 = vlaneseq
        %v8070 = vshrl.u32 %v8069, 7
        %v8071 = vsub.s32 0, %v8070
        %v8072 = vrot.slane %v8067, %v8071
        %8074 = vmatprep.subr.mxu0 0.0
        %8075 = vmatpush1.msra.mxu0 %v7826
        %8076 = vmatprep.subr.mxu0 0.0
        %8077 = vmatpush1.msra.mxu0 %v7825
        %8078 = vmatprep.subr.mxu0 0.0
        %8079 = vmatpush1.msra.mxu0 %v7824
        %8080 = vmatprep.subr.mxu0 0.0
        %8081 = vmatpush1.msra.mxu0 %v7823
        %8082 = vmatprep.subr.mxu0 0.0
        %8083 = vmatpush1.msra.mxu0 %v7822
        %8084 = vmatprep.subr.mxu0 0.0
        %8085 = vmatpush1.msra.mxu0 %v7821
        %8086 = vmatprep.subr.mxu0 0.0
        %8087 = vmatpush1.msra.mxu0 %v7820
        %8088 = vmatprep.subr.mxu0 0.0
        %8089 = vmatpush1.msra.mxu0 %v7819
        %8090 = vmatprep.subr.mxu0 0.0
        %8091 = vmatpush1.msra.mxu0 %v7818
        %8092 = vmatprep.subr.mxu0 0.0
        %8093 = vmatpush1.msra.mxu0 %v7817
        %8094 = vmatprep.subr.mxu0 0.0
        %8095 = vmatpush1.msra.mxu0 %v7816
        %8096 = vmatprep.subr.mxu0 0.0
        %8097 = vmatpush1.msra.mxu0 %v7815
        %8098 = vmatprep.subr.mxu0 0.0
        %8099 = vmatpush1.msra.mxu0 %v7814
        %8100 = vmatprep.subr.mxu0 0.0
        %8101 = vmatpush1.msra.mxu0 %v7813
        %8102 = vmatprep.subr.mxu0 0.0
        %8103 = vmatpush1.msra.mxu0 %v7812
        %8104 = vmatprep.subr.mxu0 0.0
        %8105 = vmatpush1.msra.mxu0 %v7811
        %8106 = vmatprep.subr.mxu0 0.0
        %8107 = vmatpush2.msra.mxu0 %v7842
        %8108 = vmatprep.subr.mxu0 0.0
        %8109 = vmatpush2.msra.mxu0 %v7841
        %8110 = vmatprep.subr.mxu0 0.0
        %8111 = vmatpush2.msra.mxu0 %v7840
        %8112 = vmatprep.subr.mxu0 0.0
        %8113 = vmatpush2.msra.mxu0 %v7839
        %8114 = vmatprep.subr.mxu0 0.0
        %8115 = vmatpush2.msra.mxu0 %v7838
        %8116 = vmatprep.subr.mxu0 0.0
        %8117 = vmatpush2.msra.mxu0 %v7837
        %8118 = vmatprep.subr.mxu0 0.0
        %8119 = vmatpush2.msra.mxu0 %v7836
        %8120 = vmatprep.subr.mxu0 0.0
        %8121 = vmatpush2.msra.mxu0 %v7835
        %8122 = vmatprep.subr.mxu0 0.0
        %8123 = vmatpush2.msra.mxu0 %v7834
        %8124 = vmatprep.subr.mxu0 0.0
        %8125 = vmatpush2.msra.mxu0 %v7833
        %8126 = vmatprep.subr.mxu0 0.0
        %8127 = vmatpush2.msra.mxu0 %v7832
        %8128 = vmatprep.subr.mxu0 0.0
        %8129 = vmatpush2.msra.mxu0 %v7831
        %8130 = vmatprep.subr.mxu0 0.0
        %8131 = vmatpush2.msra.mxu0 %v7830
        %8132 = vmatprep.subr.mxu0 0.0
        %8133 = vmatpush2.msra.mxu0 %v7829
        %8134 = vmatprep.subr.mxu0 0.0
        %8135 = vmatpush2.msra.mxu0 %v7828
        %8136 = vmatprep.subr.mxu0 0.0
        %8137 = vmatpush2.msra.mxu0 %v7827
        %8138 = vmatprep.mubr.f32.mxu0 %v7780
        %8139 = vmatmul.mubr.f32.gmra.mxu0 %v7779
        %v8140 = vpop.f32.mrf.mxu0
        %v8141 = vadd.f32 %v8072, %v8140
        %v8142 = vpop.f32.mrf.mxu0
        %8143 = vmatprep.mubr.f32.mxu0 %v7796
        %8144 = vmatmul.mubr.f32.gmra.mxu0 %v7795
        %v8145 = vpop.f32.mrf.mxu0
        %v8146 = vadd.f32 %v8072, %v8145
        %v8147 = vpop.f32.mrf.mxu0
        %8148 = vdwg.mxu0
        %8149 = vmatprep.subr.mxu0 0.0
        %8150 = vmatpush1.msra.mxu0 %v7858
        %8151 = vmatprep.subr.mxu0 0.0
        %8152 = vmatpush1.msra.mxu0 %v7857
        %8153 = vmatprep.subr.mxu0 0.0
        %8154 = vmatpush1.msra.mxu0 %v7856
        %8155 = vmatprep.subr.mxu0 0.0
        %8156 = vmatpush1.msra.mxu0 %v7855
        %8157 = vmatprep.subr.mxu0 0.0
        %8158 = vmatpush1.msra.mxu0 %v7854
        %8159 = vmatprep.subr.mxu0 0.0
        %8160 = vmatpush1.msra.mxu0 %v7853
        %8161 = vmatprep.subr.mxu0 0.0
        %8162 = vmatpush1.msra.mxu0 %v7852
        %8163 = vmatprep.subr.mxu0 0.0
        %8164 = vmatpush1.msra.mxu0 %v7851
        %8165 = vmatprep.subr.mxu0 0.0
        %8166 = vmatpush1.msra.mxu0 %v7850
        %8167 = vmatprep.subr.mxu0 0.0
        %8168 = vmatpush1.msra.mxu0 %v7849
        %8169 = vmatprep.subr.mxu0 0.0
        %8170 = vmatpush1.msra.mxu0 %v7848
        %8171 = vmatprep.subr.mxu0 0.0
        %8172 = vmatpush1.msra.mxu0 %v7847
        %8173 = vmatprep.subr.mxu0 0.0
        %8174 = vmatpush1.msra.mxu0 %v7846
        %8175 = vmatprep.subr.mxu0 0.0
        %8176 = vmatpush1.msra.mxu0 %v7845
        %8177 = vmatprep.subr.mxu0 0.0
        %8178 = vmatpush1.msra.mxu0 %v7844
        %8179 = vmatprep.subr.mxu0 0.0
        %8180 = vmatpush1.msra.mxu0 %v7843
        %8181 = vmatprep.subr.mxu0 0.0
        %8182 = vmatpush2.msra.mxu0 %v7874
        %8183 = vmatprep.subr.mxu0 0.0
        %8184 = vmatpush2.msra.mxu0 %v7873
        %8185 = vmatprep.subr.mxu0 0.0
        %8186 = vmatpush2.msra.mxu0 %v7872
        %8187 = vmatprep.subr.mxu0 0.0
        %8188 = vmatpush2.msra.mxu0 %v7871
        %8189 = vmatprep.subr.mxu0 0.0
        %8190 = vmatpush2.msra.mxu0 %v7870
        %8191 = vmatprep.subr.mxu0 0.0
        %8192 = vmatpush2.msra.mxu0 %v7869
        %8193 = vmatprep.subr.mxu0 0.0
        %8194 = vmatpush2.msra.mxu0 %v7868
        %8195 = vmatprep.subr.mxu0 0.0
        %8196 = vmatpush2.msra.mxu0 %v7867
        %8197 = vmatprep.subr.mxu0 0.0
        %8198 = vmatpush2.msra.mxu0 %v7866
        %8199 = vmatprep.subr.mxu0 0.0
        %8200 = vmatpush2.msra.mxu0 %v7865
        %8201 = vmatprep.subr.mxu0 0.0
        %8202 = vmatpush2.msra.mxu0 %v7864
        %8203 = vmatprep.subr.mxu0 0.0
        %8204 = vmatpush2.msra.mxu0 %v7863
        %8205 = vmatprep.subr.mxu0 0.0
        %8206 = vmatpush2.msra.mxu0 %v7862
        %8207 = vmatprep.subr.mxu0 0.0
        %8208 = vmatpush2.msra.mxu0 %v7861
        %8209 = vmatprep.subr.mxu0 0.0
        %8210 = vmatpush2.msra.mxu0 %v7860
        %8211 = vmatprep.subr.mxu0 0.0
        %8212 = vmatpush2.msra.mxu0 %v7859
        %8213 = vmatprep.mubr.f32.mxu0 %v7782
        %8214 = vmatmul.mubr.f32.gmra.mxu0 %v7781
        %v8215 = vpop.f32.mrf.mxu0
        %v8216 = vadd.f32 %v8141, %v8215
        %v8217 = vpop.f32.mrf.mxu0
        %8218 = vmatprep.mubr.f32.mxu0 %v7798
        %8219 = vmatmul.mubr.f32.gmra.mxu0 %v7797
        %v8220 = vpop.f32.mrf.mxu0
        %v8221 = vadd.f32 %v8146, %v8220
        %v8222 = vpop.f32.mrf.mxu0
        %8223 = vdwg.mxu0
        %8224 = vmatprep.subr.mxu0 0.0
        %8225 = vmatpush1.msra.mxu0 %v7890
        %8226 = vmatprep.subr.mxu0 0.0
        %8227 = vmatpush1.msra.mxu0 %v7889
        %8228 = vmatprep.subr.mxu0 0.0
        %8229 = vmatpush1.msra.mxu0 %v7888
        %8230 = vmatprep.subr.mxu0 0.0
        %8231 = vmatpush1.msra.mxu0 %v7887
        %8232 = vmatprep.subr.mxu0 0.0
        %8233 = vmatpush1.msra.mxu0 %v7886
        %8234 = vmatprep.subr.mxu0 0.0
        %8235 = vmatpush1.msra.mxu0 %v7885
        %8236 = vmatprep.subr.mxu0 0.0
        %8237 = vmatpush1.msra.mxu0 %v7884
        %8238 = vmatprep.subr.mxu0 0.0
        %8239 = vmatpush1.msra.mxu0 %v7883
        %8240 = vmatprep.subr.mxu0 0.0
        %8241 = vmatpush1.msra.mxu0 %v7882
        %8242 = vmatprep.subr.mxu0 0.0
        %8243 = vmatpush1.msra.mxu0 %v7881
        %8244 = vmatprep.subr.mxu0 0.0
        %8245 = vmatpush1.msra.mxu0 %v7880
        %8246 = vmatprep.subr.mxu0 0.0
        %8247 = vmatpush1.msra.mxu0 %v7879
        %8248 = vmatprep.subr.mxu0 0.0
        %8249 = vmatpush1.msra.mxu0 %v7878
        %8250 = vmatprep.subr.mxu0 0.0
        %8251 = vmatpush1.msra.mxu0 %v7877
        %8252 = vmatprep.subr.mxu0 0.0
        %8253 = vmatpush1.msra.mxu0 %v7876
        %8254 = vmatprep.subr.mxu0 0.0
        %8255 = vmatpush1.msra.mxu0 %v7875
        %8256 = vmatprep.subr.mxu0 0.0
        %8257 = vmatpush2.msra.mxu0 %v7906
        %8258 = vmatprep.subr.mxu0 0.0
        %8259 = vmatpush2.msra.mxu0 %v7905
        %8260 = vmatprep.subr.mxu0 0.0
        %8261 = vmatpush2.msra.mxu0 %v7904
        %8262 = vmatprep.subr.mxu0 0.0
        %8263 = vmatpush2.msra.mxu0 %v7903
        %8264 = vmatprep.subr.mxu0 0.0
        %8265 = vmatpush2.msra.mxu0 %v7902
        %8266 = vmatprep.subr.mxu0 0.0
        %8267 = vmatpush2.msra.mxu0 %v7901
        %8268 = vmatprep.subr.mxu0 0.0
        %8269 = vmatpush2.msra.mxu0 %v7900
        %8270 = vmatprep.subr.mxu0 0.0
        %8271 = vmatpush2.msra.mxu0 %v7899
        %8272 = vmatprep.subr.mxu0 0.0
        %8273 = vmatpush2.msra.mxu0 %v7898
        %8274 = vmatprep.subr.mxu0 0.0
        %8275 = vmatpush2.msra.mxu0 %v7897
        %8276 = vmatprep.subr.mxu0 0.0
        %8277 = vmatpush2.msra.mxu0 %v7896
        %8278 = vmatprep.subr.mxu0 0.0
        %8279 = vmatpush2.msra.mxu0 %v7895
        %8280 = vmatprep.subr.mxu0 0.0
        %8281 = vmatpush2.msra.mxu0 %v7894
        %8282 = vmatprep.subr.mxu0 0.0
        %8283 = vmatpush2.msra.mxu0 %v7893
        %8284 = vmatprep.subr.mxu0 0.0
        %8285 = vmatpush2.msra.mxu0 %v7892
        %8286 = vmatprep.subr.mxu0 0.0
        %8287 = vmatpush2.msra.mxu0 %v7891
        %8288 = vmatprep.mubr.f32.mxu0 %v7784
        %8289 = vmatmul.mubr.f32.gmra.mxu0 %v7783
        %v8290 = vpop.f32.mrf.mxu0
        %v8291 = vadd.f32 %v8216, %v8290
        %v8292 = vpop.f32.mrf.mxu0
        %8293 = vmatprep.mubr.f32.mxu0 %v7800
        %8294 = vmatmul.mubr.f32.gmra.mxu0 %v7799
        %v8295 = vpop.f32.mrf.mxu0
        %v8296 = vadd.f32 %v8221, %v8295
        %v8297 = vpop.f32.mrf.mxu0
        %8298 = vdwg.mxu0
        %8299 = vmatprep.subr.mxu0 0.0
        %8300 = vmatpush1.msra.mxu0 %v7922
        %8301 = vmatprep.subr.mxu0 0.0
        %8302 = vmatpush1.msra.mxu0 %v7921
        %8303 = vmatprep.subr.mxu0 0.0
        %8304 = vmatpush1.msra.mxu0 %v7920
        %8305 = vmatprep.subr.mxu0 0.0
        %8306 = vmatpush1.msra.mxu0 %v7919
        %8307 = vmatprep.subr.mxu0 0.0
        %8308 = vmatpush1.msra.mxu0 %v7918
        %8309 = vmatprep.subr.mxu0 0.0
        %8310 = vmatpush1.msra.mxu0 %v7917
        %8311 = vmatprep.subr.mxu0 0.0
        %8312 = vmatpush1.msra.mxu0 %v7916
        %8313 = vmatprep.subr.mxu0 0.0
        %8314 = vmatpush1.msra.mxu0 %v7915
        %8315 = vmatprep.subr.mxu0 0.0
        %8316 = vmatpush1.msra.mxu0 %v7914
        %8317 = vmatprep.subr.mxu0 0.0
        %8318 = vmatpush1.msra.mxu0 %v7913
        %8319 = vmatprep.subr.mxu0 0.0
        %8320 = vmatpush1.msra.mxu0 %v7912
        %8321 = vmatprep.subr.mxu0 0.0
        %8322 = vmatpush1.msra.mxu0 %v7911
        %8323 = vmatprep.subr.mxu0 0.0
        %8324 = vmatpush1.msra.mxu0 %v7910
        %8325 = vmatprep.subr.mxu0 0.0
        %8326 = vmatpush1.msra.mxu0 %v7909
        %8327 = vmatprep.subr.mxu0 0.0
        %8328 = vmatpush1.msra.mxu0 %v7908
        %8329 = vmatprep.subr.mxu0 0.0
        %8330 = vmatpush1.msra.mxu0 %v7907
        %8331 = vmatprep.subr.mxu0 0.0
        %8332 = vmatpush2.msra.mxu0 %v7938
        %8333 = vmatprep.subr.mxu0 0.0
        %8334 = vmatpush2.msra.mxu0 %v7937
        %8335 = vmatprep.subr.mxu0 0.0
        %8336 = vmatpush2.msra.mxu0 %v7936
        %8337 = vmatprep.subr.mxu0 0.0
        %8338 = vmatpush2.msra.mxu0 %v7935
        %8339 = vmatprep.subr.mxu0 0.0
        %8340 = vmatpush2.msra.mxu0 %v7934
        %8341 = vmatprep.subr.mxu0 0.0
        %8342 = vmatpush2.msra.mxu0 %v7933
        %8343 = vmatprep.subr.mxu0 0.0
        %8344 = vmatpush2.msra.mxu0 %v7932
        %8345 = vmatprep.subr.mxu0 0.0
        %8346 = vmatpush2.msra.mxu0 %v7931
        %8347 = vmatprep.subr.mxu0 0.0
        %8348 = vmatpush2.msra.mxu0 %v7930
        %8349 = vmatprep.subr.mxu0 0.0
        %8350 = vmatpush2.msra.mxu0 %v7929
        %8351 = vmatprep.subr.mxu0 0.0
        %8352 = vmatpush2.msra.mxu0 %v7928
        %8353 = vmatprep.subr.mxu0 0.0
        %8354 = vmatpush2.msra.mxu0 %v7927
        %8355 = vmatprep.subr.mxu0 0.0
        %8356 = vmatpush2.msra.mxu0 %v7926
        %8357 = vmatprep.subr.mxu0 0.0
        %8358 = vmatpush2.msra.mxu0 %v7925
        %8359 = vmatprep.subr.mxu0 0.0
        %8360 = vmatpush2.msra.mxu0 %v7924
        %8361 = vmatprep.subr.mxu0 0.0
        %8362 = vmatpush2.msra.mxu0 %v7923
        %8363 = vmatprep.mubr.f32.mxu0 %v7786
        %8364 = vmatmul.mubr.f32.gmra.mxu0 %v7785
        %v8365 = vpop.f32.mrf.mxu0
        %v8366 = vadd.f32 %v8291, %v8365
        %v8367 = vpop.f32.mrf.mxu0
        %8368 = vmatprep.mubr.f32.mxu0 %v7802
        %8369 = vmatmul.mubr.f32.gmra.mxu0 %v7801
        %v8370 = vpop.f32.mrf.mxu0
        %v8371 = vadd.f32 %v8296, %v8370
        %v8372 = vpop.f32.mrf.mxu0
        %8373 = vdwg.mxu0
        %8374 = vmatprep.subr.mxu0 0.0
        %8375 = vmatpush1.msra.mxu0 %v7954
        %8376 = vmatprep.subr.mxu0 0.0
        %8377 = vmatpush1.msra.mxu0 %v7953
        %8378 = vmatprep.subr.mxu0 0.0
        %8379 = vmatpush1.msra.mxu0 %v7952
        %8380 = vmatprep.subr.mxu0 0.0
        %8381 = vmatpush1.msra.mxu0 %v7951
        %8382 = vmatprep.subr.mxu0 0.0
        %8383 = vmatpush1.msra.mxu0 %v7950
        %8384 = vmatprep.subr.mxu0 0.0
        %8385 = vmatpush1.msra.mxu0 %v7949
        %8386 = vmatprep.subr.mxu0 0.0
        %8387 = vmatpush1.msra.mxu0 %v7948
        %8388 = vmatprep.subr.mxu0 0.0
        %8389 = vmatpush1.msra.mxu0 %v7947
        %8390 = vmatprep.subr.mxu0 0.0
        %8391 = vmatpush1.msra.mxu0 %v7946
        %8392 = vmatprep.subr.mxu0 0.0
        %8393 = vmatpush1.msra.mxu0 %v7945
        %8394 = vmatprep.subr.mxu0 0.0
        %8395 = vmatpush1.msra.mxu0 %v7944
        %8396 = vmatprep.subr.mxu0 0.0
        %8397 = vmatpush1.msra.mxu0 %v7943
        %8398 = vmatprep.subr.mxu0 0.0
        %8399 = vmatpush1.msra.mxu0 %v7942
        %8400 = vmatprep.subr.mxu0 0.0
        %8401 = vmatpush1.msra.mxu0 %v7941
        %8402 = vmatprep.subr.mxu0 0.0
        %8403 = vmatpush1.msra.mxu0 %v7940
        %8404 = vmatprep.subr.mxu0 0.0
        %8405 = vmatpush1.msra.mxu0 %v7939
        %8406 = vmatprep.subr.mxu0 0.0
        %8407 = vmatpush2.msra.mxu0 %v7970
        %8408 = vmatprep.subr.mxu0 0.0
        %8409 = vmatpush2.msra.mxu0 %v7969
        %8410 = vmatprep.subr.mxu0 0.0
        %8411 = vmatpush2.msra.mxu0 %v7968
        %8412 = vmatprep.subr.mxu0 0.0
        %8413 = vmatpush2.msra.mxu0 %v7967
        %8414 = vmatprep.subr.mxu0 0.0
        %8415 = vmatpush2.msra.mxu0 %v7966
        %8416 = vmatprep.subr.mxu0 0.0
        %8417 = vmatpush2.msra.mxu0 %v7965
        %8418 = vmatprep.subr.mxu0 0.0
        %8419 = vmatpush2.msra.mxu0 %v7964
        %8420 = vmatprep.subr.mxu0 0.0
        %8421 = vmatpush2.msra.mxu0 %v7963
        %8422 = vmatprep.subr.mxu0 0.0
        %8423 = vmatpush2.msra.mxu0 %v7962
        %8424 = vmatprep.subr.mxu0 0.0
        %8425 = vmatpush2.msra.mxu0 %v7961
        %8426 = vmatprep.subr.mxu0 0.0
        %8427 = vmatpush2.msra.mxu0 %v7960
        %8428 = vmatprep.subr.mxu0 0.0
        %8429 = vmatpush2.msra.mxu0 %v7959
        %8430 = vmatprep.subr.mxu0 0.0
        %8431 = vmatpush2.msra.mxu0 %v7958
        %8432 = vmatprep.subr.mxu0 0.0
        %8433 = vmatpush2.msra.mxu0 %v7957
        %8434 = vmatprep.subr.mxu0 0.0
        %8435 = vmatpush2.msra.mxu0 %v7956
        %8436 = vmatprep.subr.mxu0 0.0
        %8437 = vmatpush2.msra.mxu0 %v7955
        %8438 = vmatprep.mubr.f32.mxu0 %v7788
        %8439 = vmatmul.mubr.f32.gmra.mxu0 %v7787
        %v8440 = vpop.f32.mrf.mxu0
        %v8441 = vadd.f32 %v8366, %v8440
        %v8442 = vpop.f32.mrf.mxu0
        %8443 = vmatprep.mubr.f32.mxu0 %v7804
        %8444 = vmatmul.mubr.f32.gmra.mxu0 %v7803
        %v8445 = vpop.f32.mrf.mxu0
        %v8446 = vadd.f32 %v8371, %v8445
        %v8447 = vpop.f32.mrf.mxu0
        %8448 = vdwg.mxu0
        %8449 = vmatprep.subr.mxu0 0.0
        %8450 = vmatpush1.msra.mxu0 %v7986
        %8451 = vmatprep.subr.mxu0 0.0
        %8452 = vmatpush1.msra.mxu0 %v7985
        %8453 = vmatprep.subr.mxu0 0.0
        %8454 = vmatpush1.msra.mxu0 %v7984
        %8455 = vmatprep.subr.mxu0 0.0
        %8456 = vmatpush1.msra.mxu0 %v7983
        %8457 = vmatprep.subr.mxu0 0.0
        %8458 = vmatpush1.msra.mxu0 %v7982
        %8459 = vmatprep.subr.mxu0 0.0
        %8460 = vmatpush1.msra.mxu0 %v7981
        %8461 = vmatprep.subr.mxu0 0.0
        %8462 = vmatpush1.msra.mxu0 %v7980
        %8463 = vmatprep.subr.mxu0 0.0
        %8464 = vmatpush1.msra.mxu0 %v7979
        %8465 = vmatprep.subr.mxu0 0.0
        %8466 = vmatpush1.msra.mxu0 %v7978
        %8467 = vmatprep.subr.mxu0 0.0
        %8468 = vmatpush1.msra.mxu0 %v7977
        %8469 = vmatprep.subr.mxu0 0.0
        %8470 = vmatpush1.msra.mxu0 %v7976
        %8471 = vmatprep.subr.mxu0 0.0
        %8472 = vmatpush1.msra.mxu0 %v7975
        %8473 = vmatprep.subr.mxu0 0.0
        %8474 = vmatpush1.msra.mxu0 %v7974
        %8475 = vmatprep.subr.mxu0 0.0
        %8476 = vmatpush1.msra.mxu0 %v7973
        %8477 = vmatprep.subr.mxu0 0.0
        %8478 = vmatpush1.msra.mxu0 %v7972
        %8479 = vmatprep.subr.mxu0 0.0
        %8480 = vmatpush1.msra.mxu0 %v7971
        %8481 = vmatprep.subr.mxu0 0.0
        %8482 = vmatpush2.msra.mxu0 %v8002
        %8483 = vmatprep.subr.mxu0 0.0
        %8484 = vmatpush2.msra.mxu0 %v8001
        %8485 = vmatprep.subr.mxu0 0.0
        %8486 = vmatpush2.msra.mxu0 %v8000
        %8487 = vmatprep.subr.mxu0 0.0
        %8488 = vmatpush2.msra.mxu0 %v7999
        %8489 = vmatprep.subr.mxu0 0.0
        %8490 = vmatpush2.msra.mxu0 %v7998
        %8491 = vmatprep.subr.mxu0 0.0
        %8492 = vmatpush2.msra.mxu0 %v7997
        %8493 = vmatprep.subr.mxu0 0.0
        %8494 = vmatpush2.msra.mxu0 %v7996
        %8495 = vmatprep.subr.mxu0 0.0
        %8496 = vmatpush2.msra.mxu0 %v7995
        %8497 = vmatprep.subr.mxu0 0.0
        %8498 = vmatpush2.msra.mxu0 %v7994
        %8499 = vmatprep.subr.mxu0 0.0
        %8500 = vmatpush2.msra.mxu0 %v7993
        %8501 = vmatprep.subr.mxu0 0.0
        %8502 = vmatpush2.msra.mxu0 %v7992
        %8503 = vmatprep.subr.mxu0 0.0
        %8504 = vmatpush2.msra.mxu0 %v7991
        %8505 = vmatprep.subr.mxu0 0.0
        %8506 = vmatpush2.msra.mxu0 %v7990
        %8507 = vmatprep.subr.mxu0 0.0
        %8508 = vmatpush2.msra.mxu0 %v7989
        %8509 = vmatprep.subr.mxu0 0.0
        %8510 = vmatpush2.msra.mxu0 %v7988
        %8511 = vmatprep.subr.mxu0 0.0
        %8512 = vmatpush2.msra.mxu0 %v7987
        %8513 = vmatprep.mubr.f32.mxu0 %v7790
        %8514 = vmatmul.mubr.f32.gmra.mxu0 %v7789
        %v8515 = vpop.f32.mrf.mxu0
        %v8516 = vadd.f32 %v8441, %v8515
        %v8517 = vpop.f32.mrf.mxu0
        %8518 = vmatprep.mubr.f32.mxu0 %v7806
        %8519 = vmatmul.mubr.f32.gmra.mxu0 %v7805
        %v8520 = vpop.f32.mrf.mxu0
        %v8521 = vadd.f32 %v8446, %v8520
        %v8522 = vpop.f32.mrf.mxu0
        %8523 = vdwg.mxu0
        %8524 = vmatprep.subr.mxu0 0.0
        %8525 = vmatpush1.msra.mxu0 %v8018
        %8526 = vmatprep.subr.mxu0 0.0
        %8527 = vmatpush1.msra.mxu0 %v8017
        %8528 = vmatprep.subr.mxu0 0.0
        %8529 = vmatpush1.msra.mxu0 %v8016
        %8530 = vmatprep.subr.mxu0 0.0
        %8531 = vmatpush1.msra.mxu0 %v8015
        %8532 = vmatprep.subr.mxu0 0.0
        %8533 = vmatpush1.msra.mxu0 %v8014
        %8534 = vmatprep.subr.mxu0 0.0
        %8535 = vmatpush1.msra.mxu0 %v8013
        %8536 = vmatprep.subr.mxu0 0.0
        %8537 = vmatpush1.msra.mxu0 %v8012
        %8538 = vmatprep.subr.mxu0 0.0
        %8539 = vmatpush1.msra.mxu0 %v8011
        %8540 = vmatprep.subr.mxu0 0.0
        %8541 = vmatpush1.msra.mxu0 %v8010
        %8542 = vmatprep.subr.mxu0 0.0
        %8543 = vmatpush1.msra.mxu0 %v8009
        %8544 = vmatprep.subr.mxu0 0.0
        %8545 = vmatpush1.msra.mxu0 %v8008
        %8546 = vmatprep.subr.mxu0 0.0
        %8547 = vmatpush1.msra.mxu0 %v8007
        %8548 = vmatprep.subr.mxu0 0.0
        %8549 = vmatpush1.msra.mxu0 %v8006
        %8550 = vmatprep.subr.mxu0 0.0
        %8551 = vmatpush1.msra.mxu0 %v8005
        %8552 = vmatprep.subr.mxu0 0.0
        %8553 = vmatpush1.msra.mxu0 %v8004
        %8554 = vmatprep.subr.mxu0 0.0
        %8555 = vmatpush1.msra.mxu0 %v8003
        %8556 = vmatprep.subr.mxu0 0.0
        %8557 = vmatpush2.msra.mxu0 %v8034
        %8558 = vmatprep.subr.mxu0 0.0
        %8559 = vmatpush2.msra.mxu0 %v8033
        %8560 = vmatprep.subr.mxu0 0.0
        %8561 = vmatpush2.msra.mxu0 %v8032
        %8562 = vmatprep.subr.mxu0 0.0
        %8563 = vmatpush2.msra.mxu0 %v8031
        %8564 = vmatprep.subr.mxu0 0.0
        %8565 = vmatpush2.msra.mxu0 %v8030
        %8566 = vmatprep.subr.mxu0 0.0
        %8567 = vmatpush2.msra.mxu0 %v8029
        %8568 = vmatprep.subr.mxu0 0.0
        %8569 = vmatpush2.msra.mxu0 %v8028
        %8570 = vmatprep.subr.mxu0 0.0
        %8571 = vmatpush2.msra.mxu0 %v8027
        %8572 = vmatprep.subr.mxu0 0.0
        %8573 = vmatpush2.msra.mxu0 %v8026
        %8574 = vmatprep.subr.mxu0 0.0
        %8575 = vmatpush2.msra.mxu0 %v8025
        %8576 = vmatprep.subr.mxu0 0.0
        %8577 = vmatpush2.msra.mxu0 %v8024
        %8578 = vmatprep.subr.mxu0 0.0
        %8579 = vmatpush2.msra.mxu0 %v8023
        %8580 = vmatprep.subr.mxu0 0.0
        %8581 = vmatpush2.msra.mxu0 %v8022
        %8582 = vmatprep.subr.mxu0 0.0
        %8583 = vmatpush2.msra.mxu0 %v8021
        %8584 = vmatprep.subr.mxu0 0.0
        %8585 = vmatpush2.msra.mxu0 %v8020
        %8586 = vmatprep.subr.mxu0 0.0
        %8587 = vmatpush2.msra.mxu0 %v8019
        %8588 = vmatprep.mubr.f32.mxu0 %v7792
        %8589 = vmatmul.mubr.f32.gmra.mxu0 %v7791
        %v8590 = vpop.f32.mrf.mxu0
        %v8591 = vadd.f32 %v8516, %v8590
        %v8592 = vpop.f32.mrf.mxu0
        %8593 = vmatprep.mubr.f32.mxu0 %v7808
        %8594 = vmatmul.mubr.f32.gmra.mxu0 %v7807
        %v8595 = vpop.f32.mrf.mxu0
        %v8596 = vadd.f32 %v8521, %v8595
        %v8597 = vpop.f32.mrf.mxu0
        %8598 = vdwg.mxu0
        %8599 = vmatprep.subr.mxu0 0.0
        %8600 = vmatpush1.msra.mxu0 %v8050
        %8601 = vmatprep.subr.mxu0 0.0
        %8602 = vmatpush1.msra.mxu0 %v8049
        %8603 = vmatprep.subr.mxu0 0.0
        %8604 = vmatpush1.msra.mxu0 %v8048
        %8605 = vmatprep.subr.mxu0 0.0
        %8606 = vmatpush1.msra.mxu0 %v8047
        %8607 = vmatprep.subr.mxu0 0.0
        %8608 = vmatpush1.msra.mxu0 %v8046
        %8609 = vmatprep.subr.mxu0 0.0
        %8610 = vmatpush1.msra.mxu0 %v8045
        %8611 = vmatprep.subr.mxu0 0.0
        %8612 = vmatpush1.msra.mxu0 %v8044
        %8613 = vmatprep.subr.mxu0 0.0
        %8614 = vmatpush1.msra.mxu0 %v8043
        %8615 = vmatprep.subr.mxu0 0.0
        %8616 = vmatpush1.msra.mxu0 %v8042
        %8617 = vmatprep.subr.mxu0 0.0
        %8618 = vmatpush1.msra.mxu0 %v8041
        %8619 = vmatprep.subr.mxu0 0.0
        %8620 = vmatpush1.msra.mxu0 %v8040
        %8621 = vmatprep.subr.mxu0 0.0
        %8622 = vmatpush1.msra.mxu0 %v8039
        %8623 = vmatprep.subr.mxu0 0.0
        %8624 = vmatpush1.msra.mxu0 %v8038
        %8625 = vmatprep.subr.mxu0 0.0
        %8626 = vmatpush1.msra.mxu0 %v8037
        %8627 = vmatprep.subr.mxu0 0.0
        %8628 = vmatpush1.msra.mxu0 %v8036
        %8629 = vmatprep.subr.mxu0 0.0
        %8630 = vmatpush1.msra.mxu0 %v8035
        %8631 = vmatprep.subr.mxu0 0.0
        %8632 = vmatpush2.msra.mxu0 %v8066
        %8633 = vmatprep.subr.mxu0 0.0
        %8634 = vmatpush2.msra.mxu0 %v8065
        %8635 = vmatprep.subr.mxu0 0.0
        %8636 = vmatpush2.msra.mxu0 %v8064
        %8637 = vmatprep.subr.mxu0 0.0
        %8638 = vmatpush2.msra.mxu0 %v8063
        %8639 = vmatprep.subr.mxu0 0.0
        %8640 = vmatpush2.msra.mxu0 %v8062
        %8641 = vmatprep.subr.mxu0 0.0
        %8642 = vmatpush2.msra.mxu0 %v8061
        %8643 = vmatprep.subr.mxu0 0.0
        %8644 = vmatpush2.msra.mxu0 %v8060
        %8645 = vmatprep.subr.mxu0 0.0
        %8646 = vmatpush2.msra.mxu0 %v8059
        %8647 = vmatprep.subr.mxu0 0.0
        %8648 = vmatpush2.msra.mxu0 %v8058
        %8649 = vmatprep.subr.mxu0 0.0
        %8650 = vmatpush2.msra.mxu0 %v8057
        %8651 = vmatprep.subr.mxu0 0.0
        %8652 = vmatpush2.msra.mxu0 %v8056
        %8653 = vmatprep.subr.mxu0 0.0
        %8654 = vmatpush2.msra.mxu0 %v8055
        %8655 = vmatprep.subr.mxu0 0.0
        %8656 = vmatpush2.msra.mxu0 %v8054
        %8657 = vmatprep.subr.mxu0 0.0
        %8658 = vmatpush2.msra.mxu0 %v8053
        %8659 = vmatprep.subr.mxu0 0.0
        %8660 = vmatpush2.msra.mxu0 %v8052
        %8661 = vmatprep.subr.mxu0 0.0
        %8662 = vmatpush2.msra.mxu0 %v8051
        %8663 = vmatprep.mubr.f32.mxu0 %v7794
        %8664 = vmatmul.mubr.f32.gmra.mxu0 %v7793
        %v8665 = vpop.f32.mrf.mxu0
        %v8666 = vadd.f32 %v8591, %v8665
        %v8667 = vpop.f32.mrf.mxu0
        %8668 = vmatprep.mubr.f32.mxu0 %v7810
        %8669 = vmatmul.mubr.f32.gmra.mxu0 %v7809
        %v8670 = vpop.f32.mrf.mxu0
        %v8671 = vadd.f32 %v8596, %v8670
        %v8672 = vpop.f32.mrf.mxu0
        %8673 = vdwg.mxu0
        %v8674 = vadd.f32 %v6943, %v8666
        %v8675 = vadd.f32 %v6944, %v8671
        %v8676 = vsel %vm945, %v8674, 0.0
        %8677 = vadd.xlane.f32.xlu0 %v8676
        %v8678 = vpop.xlane.xlu0 %8677
        %v8679 = vsel %vm945, %v8675, 0.0
        %8680 = vadd.xlane.f32.xlu0 %v8679
        %v8681 = vpop.xlane.xlu0 %8680
        %v8682 = vmul.f32 %v8678, %v3860
        %v8683 = vmul.f32 %v8681, %v3860
        %v8684 = vsub.f32 %v8674, %v8682
        %v8685 = vsub.f32 %v8675, %v8683
        %v8686 = vmul.f32 %v8684, %v8684
        %v8687 = vmul.f32 %v8685, %v8685
        %v8688 = vsel %vm945, %v8686, 0.0
        %8689 = vadd.xlane.f32.xlu0 %v8688
        %v8690 = vpop.xlane.xlu0 %8689
        %v8691 = vsel %vm945, %v8687, 0.0
        %8692 = vadd.xlane.f32.xlu0 %v8691
        %v8693 = vpop.xlane.xlu0 %8692
        %v8694 = vmul.f32 %v8690, %v3860
        %v8695 = vmul.f32 %v8693, %v3860
        %v8696 = vadd.f32 %v8694, 1e-05
        %v8697 = vadd.f32 %v8695, 1e-05
        %v8698 = vrsqrt.pop %v8696
        %v8699 = vrsqrt.pop %v8697
        %v8700 = vmul.f32 %v8684, %v8698
        %v8701 = vmul.f32 %v8685, %v8699
        %v8702 = vlaneseq
        %v8703 = vshrl.u32 %v8702, 7
        %v8704 = vsub.s32 2, %v8703
        %v8705 = vrot.slane %v913, %v8704
        %v8706 = vmul.f32 %v8700, %v8705
        %v8707 = vmul.f32 %v8701, %v8705
        %v8708 = vlaneseq
        %v8709 = vshrl.u32 %v8708, 7
        %v8710 = vsub.s32 2, %v8709
        %v8711 = vrot.slane %v914, %v8710
        %v8712 = vadd.f32 %v8706, %v8711
        %v8713 = vadd.f32 %v8707, %v8711
        %8714 = vst.msk [vmem:[#allocation2] sm:$0xff] %vm945, %v8712
        %8715 = vst.msk [vmem:[#allocation2 + $0x8] sm:$0xff] %vm945, %v8713
        %p8716 = scmp.eq.s32.totalorder %s33, 5
        // Predicated region
        $region109: #{dvqvae_decoder_forward.1} parent=103 // pred_check
          %p8717 = pneg %p8716
        $region110: #{dvqvae_decoder_forward.1} parent=103 // pred_check_branch
          %8719 = sbr.rel (%p8717) target = $region112
        $region111: #{dvqvae_decoder_forward.1} parent=103 // pred_region
          %v8720 = vld [vmem:[%s19] sm:$0xff]
          %v8721 = vld [vmem:[%s19 + $0x8] sm:$0xff]
          %v8722 = vld [vmem:[%s19 + $0x10] sm:$0xff]
          %v8723 = vld [vmem:[%s19 + $0x18] sm:$0xff]
          %v8724 = vld [vmem:[%s19 + $0x20] sm:$0xff]
          %v8725 = vld [vmem:[%s19 + $0x28] sm:$0xff]
          %v8726 = vld [vmem:[%s19 + $0x30] sm:$0xff]
          %v8727 = vld [vmem:[%s19 + $0x38] sm:$0xff]
          %v8728 = vld [vmem:[%s20] sm:$0x1]
          %v8730 = vlaneseq
          %v8731 = vshrl.u32 %v8730, 7
          %v8732 = vsub.s32 0, %v8731
          %v8733 = vrot.slane %v8728, %v8732
          %v8736 = vsel %vm945, %v8712, 0
          %v8739 = vsel %vm945, %v8713, 0
          %8741 = vmatprep.subr.mxu0 0.0
          %8742 = vmatpush1.msra.mxu0 0.0
          %8743 = vmatprep.subr.mxu0 0.0
          %8744 = vmatpush1.msra.mxu0 0.0
          %8745 = vmatprep.subr.mxu0 0.0
          %8746 = vmatpush1.msra.mxu0 0.0
          %8747 = vmatprep.subr.mxu0 0.0
          %8748 = vmatpush1.msra.mxu0 0.0
          %8749 = vmatprep.subr.mxu0 0.0
          %8750 = vmatpush1.msra.mxu0 0.0
          %8751 = vmatprep.subr.mxu0 0.0
          %8752 = vmatpush1.msra.mxu0 0.0
          %8753 = vmatprep.subr.mxu0 0.0
          %8754 = vmatpush1.msra.mxu0 0.0
          %8755 = vmatprep.subr.mxu0 0.0
          %8756 = vmatpush1.msra.mxu0 0.0
          %8757 = vmatprep.subr.mxu0 0.0
          %8758 = vmatpush1.msra.mxu0 %v8727
          %8759 = vmatprep.subr.mxu0 0.0
          %8760 = vmatpush1.msra.mxu0 %v8726
          %8761 = vmatprep.subr.mxu0 0.0
          %8762 = vmatpush1.msra.mxu0 %v8725
          %8763 = vmatprep.subr.mxu0 0.0
          %8764 = vmatpush1.msra.mxu0 %v8724
          %8765 = vmatprep.subr.mxu0 0.0
          %8766 = vmatpush1.msra.mxu0 %v8723
          %8767 = vmatprep.subr.mxu0 0.0
          %8768 = vmatpush1.msra.mxu0 %v8722
          %8769 = vmatprep.subr.mxu0 0.0
          %8770 = vmatpush1.msra.mxu0 %v8721
          %8771 = vmatprep.subr.mxu0 0.0
          %8772 = vmatpush1.msra.mxu0 %v8720
          %8773 = vmatprep.subr.mxu0 0.0
          %8774 = vmatpush2.msra.mxu0 0.0
          %8775 = vmatprep.subr.mxu0 0.0
          %8776 = vmatpush2.msra.mxu0 0.0
          %8777 = vmatprep.subr.mxu0 0.0
          %8778 = vmatpush2.msra.mxu0 0.0
          %8779 = vmatprep.subr.mxu0 0.0
          %8780 = vmatpush2.msra.mxu0 0.0
          %8781 = vmatprep.subr.mxu0 0.0
          %8782 = vmatpush2.msra.mxu0 0.0
          %8783 = vmatprep.subr.mxu0 0.0
          %8784 = vmatpush2.msra.mxu0 0.0
          %8785 = vmatprep.subr.mxu0 0.0
          %8786 = vmatpush2.msra.mxu0 0.0
          %8787 = vmatprep.subr.mxu0 0.0
          %8788 = vmatpush2.msra.mxu0 0.0
          %8789 = vmatprep.subr.mxu0 0.0
          %8790 = vmatpush2.msra.mxu0 0.0
          %8791 = vmatprep.subr.mxu0 0.0
          %8792 = vmatpush2.msra.mxu0 0.0
          %8793 = vmatprep.subr.mxu0 0.0
          %8794 = vmatpush2.msra.mxu0 0.0
          %8795 = vmatprep.subr.mxu0 0.0
          %8796 = vmatpush2.msra.mxu0 0.0
          %8797 = vmatprep.subr.mxu0 0.0
          %8798 = vmatpush2.msra.mxu0 0.0
          %8799 = vmatprep.subr.mxu0 0.0
          %8800 = vmatpush2.msra.mxu0 0.0
          %8801 = vmatprep.subr.mxu0 0.0
          %8802 = vmatpush2.msra.mxu0 0.0
          %8803 = vmatprep.subr.mxu0 0.0
          %8804 = vmatpush2.msra.mxu0 0.0
          %8805 = vmatprep.mubr.f32.mxu0 0.0
          %8806 = vmatmul.mubr.f32.gmra.mxu0 %v8736
          %v8807 = vpop.f32.mrf.mxu0
          %v8808 = vadd.f32 %v8733, %v8807
          %v8809 = vpop.f32.mrf.mxu0
          %8810 = vmatprep.mubr.f32.mxu0 0.0
          %8811 = vmatmul.mubr.f32.gmra.mxu0 %v8739
          %v8812 = vpop.f32.mrf.mxu0
          %v8813 = vadd.f32 %v8733, %v8812
          %v8814 = vpop.f32.mrf.mxu0
          %8815 = vdwg.mxu0
          %8816 = vst [vmem:[#allocation3] sm:$0xff] %v8808
          %8817 = vst [vmem:[#allocation3 + $0x8] sm:$0xff] %v8813
        $region112: #{dvqvae_decoder_forward.1} parent=103 // pred_fallthru
          _
        // Predicated region
        $region113: #{dvqvae_decoder_forward.1} parent=103 // pred_check
          %p8818 = pneg %p567
        $region114: #{dvqvae_decoder_forward.1} parent=103 // pred_check_branch
          %8820 = sbr.rel (%p8818) target = $region116
        $region115: #{dvqvae_decoder_forward.1} parent=103 // pred_region
          %s8822 = ssub.s32 256, 256
          %8823 = vsyncadd [#allocation4], %s8822
          %s8824 = sshll.u32 [#allocation3], 4
          %s8825 = int_to_ptr.vmem [resolvable:$true] %s8824
          %8830 = dma.vmem_to_hbm [thread:$0]  %s8825, 256, %s21, [#allocation4], 128, 128, 8
        $region116: #{dvqvae_decoder_forward.1} parent=103 // pred_fallthru
          _
        // Predicated region
        $region117: #{dvqvae_decoder_forward.1} parent=103 // pred_check
          %p8831 = pneg %p567
        $region118: #{dvqvae_decoder_forward.1} parent=103 // pred_check_branch
          %8833 = sbr.rel (%p8831) target = $region120
        $region119: #{dvqvae_decoder_forward.1} parent=103 // pred_region
          %8834 = dma.done [#allocation4], 256
        $region120: #{dvqvae_decoder_forward.1} parent=103 // pred_fallthru
          _
      $region104: #{dvqvae_decoder_forward.1} parent=5 // pred_fallthru
        _
      %p8835 = scmp.le.s32.totalorder 2, %s28
      // Predicated region
      $region121: #{dvqvae_decoder_forward.1} parent=5 // pred_check
        %p8836 = pneg %p8835
      $region122: #{dvqvae_decoder_forward.1} parent=5 // pred_check_branch
        %8838 = sbr.rel (%p8836) target = $region124
      $region123: #{dvqvae_decoder_forward.1} parent=5 // pred_region
        %s8839 = ssub.s32 %s28, 2
      $region124: #{dvqvae_decoder_forward.1} parent=5 // pred_fallthru
        _
    $region6: #{dvqvae_decoder_forward.1} parent=1 // loop_footer
      %s32 = sadd.s32 1, %s28
    $region7: #{dvqvae_decoder_forward.1} parent=1 // loop_footer_branch
      %27 = sbr.rel target = $region3
    $region8: #{dvqvae_decoder_forward.1} parent=1 // loop_exit
      _
    %8840 = vsyncpa [#allocation4], 1
    %s8841 = scalar_lea.sflag [#allocation4], 1
    %8842 = vsyncpa %s8841, 1

</llo_original>
